<compile_context>
chip_gen: v7x
topology: tpu7x:2x2x1
jax: 0.10.0
libtpu: 0.0.40
codegen_flags: <defaults>
</compile_context>

<pallas_src>
import functools

import jax
import jax.numpy as jnp
from jax import lax
from jax.experimental import pallas as pl
from jax.experimental.pallas import tpu as pltpu


def _mha_kernel(x_ref, wqkv_ref, wp_ref, bp_ref, o_ref, att_ref,
                *, num_heads, head_size, scale):
    """One grid step = one batch element. Everything for that batch is fused."""
    H, hs = num_heads, head_size
    T = x_ref.shape[0]

    x = x_ref[...].astype(jnp.bfloat16)                              # (T, D)

    # One wide QKV projection on the MXU: (T, D) @ (D, 3*H*hs), f32 accumulate.
    qkv = jnp.dot(x, wqkv_ref[...], preferred_element_type=jnp.float32)

    q_all = qkv[:, 0 * H * hs:1 * H * hs]                            # (T, H*hs)
    k_all = qkv[:, 1 * H * hs:2 * H * hs]
    v_all = qkv[:, 2 * H * hs:3 * H * hs]

    # Causal mask built ONCE per grid step, as a finite additive bias.
    row = lax.broadcasted_iota(jnp.int32, (T, T), 0)
    col = lax.broadcasted_iota(jnp.int32, (T, T), 1)
    mask_bias = jnp.where(col <= row, 0.0, -1e30).astype(jnp.float32)

    # Per-head attention (static unroll over H=6 heads).
    for h in range(H):
        sl = slice(h * hs, (h + 1) * hs)
        # Pre-scale q on the small (T, hs) block instead of the (T, T) scores.
        q = (q_all[:, sl] * scale).astype(jnp.bfloat16)              # (T, hs)
        k = k_all[:, sl].astype(jnp.bfloat16)                        # (T, hs)
        v = v_all[:, sl].astype(jnp.bfloat16)                        # (T, hs)

        # Scores: contract the head dim (no explicit transpose), f32 accumulate.
        s = lax.dot_general(q, k, (((1,), (1,)), ((), ())),
                            preferred_element_type=jnp.float32)      # (T, T)
        s = s + mask_bias

        # Numerically-stable softmax stats in f32; normalization deferred.
        m = jnp.max(s, axis=-1, keepdims=True)
        p = jnp.exp(s - m)
        denom = jnp.sum(p, axis=-1, keepdims=True)

        att = jnp.dot(p.astype(jnp.bfloat16), v,
                      preferred_element_type=jnp.float32)            # (T, hs)
        # Deferred normalization: divide the small (T, hs) block via EUP vrcp.
        att_ref[:, sl] = att * pl.reciprocal(denom, approx=True)
        # TODO(synk): training-mode Dropout(0.2) on the attention weights
        # omitted (eval-mode identity).

    # Fused output projection across ALL heads: (T, H*hs) @ (H*hs, D) + bias.
    att_cat = att_ref[...].astype(jnp.bfloat16)                      # (T, H*hs)
    out = jnp.dot(att_cat, wp_ref[...],
                  preferred_element_type=jnp.float32) + bp_ref[...]
    o_ref[...] = out.astype(o_ref.dtype)
    # TODO(synk): training-mode Dropout(0.2) on the projected output omitted
    # (eval-mode identity).


def multi_head_attention(x, wqkv, wp, bp, *, num_heads, head_size):
    """x: (B, T, D).  wqkv: (D, 3*H*hs) packed [Q heads | K heads | V heads].
    wp: (H*hs, D).  bp: (1, D)."""
    B, T, D = x.shape
    Hhs = num_heads * head_size
    assert wqkv.shape == (D, 3 * Hhs)
    assert wp.shape == (Hhs, D)
    scale = float(head_size) ** -0.5

    # bf16 MXU operands; also halves resident-weight DMA bytes.
    wqkv_bf = wqkv.astype(jnp.bfloat16)
    wp_bf = wp.astype(jnp.bfloat16)

    # Advisory cost estimate (weights read once, output written once).
    flops_per_batch = (2 * T * D * 3 * Hhs          # fused QKV projection
                       + num_heads * 4 * T * T * head_size  # scores + p@v
                       + 2 * T * Hhs * D)           # output projection
    cost = pl.CostEstimate(
        flops=B * flops_per_batch,
        transcendentals=B * num_heads * T * T,
        bytes_accessed=(4 * x.size + 4 * B * T * D
                        + 2 * (wqkv.size + wp.size) + 4 * bp.size),
    )

    kernel = functools.partial(_mha_kernel, num_heads=num_heads,
                               head_size=head_size, scale=scale)
    return pl.pallas_call(
        kernel,
        out_shape=jax.ShapeDtypeStruct((B, T, D), x.dtype),
        grid_spec=pltpu.PrefetchScalarGridSpec(
            num_scalar_prefetch=0,
            grid=(B,),
            in_specs=[
                pl.BlockSpec((None, T, D), lambda b: (b, 0, 0)),   # x[b]
                pl.BlockSpec((D, 3 * Hhs), lambda b: (0, 0)),      # Wqkv (resident)
                pl.BlockSpec((Hhs, D), lambda b: (0, 0)),          # Wp   (resident)
                pl.BlockSpec((1, D), lambda b: (0, 0)),            # b_p  (resident)
            ],
            out_specs=pl.BlockSpec((None, T, D), lambda b: (b, 0, 0)),
            scratch_shapes=[pltpu.VMEM((T, Hhs), jnp.float32)],    # concat buffer
        ),
        compiler_params=pltpu.CompilerParams(
            dimension_semantics=("parallel",)),
        cost_estimate=cost,
    )(x, wqkv_bf, wp_bf, bp)


def init_params(key, n_embd, num_heads, head_size):
    """nn.Linear-style U(-1/sqrt(fan_in), 1/sqrt(fan_in)).
    QKV weights are packed pre-transposed as (n_embd, 3*H*hs) with layout
    [Q heads 0..H-1 | K heads 0..H-1 | V heads 0..H-1]; the output projection
    as (H*hs, n_embd) (== PyTorch proj.weight.T)."""
    kqkv, kp, kb = jax.random.split(key, 3)
    Hhs = num_heads * head_size
    bound_in = 1.0 / jnp.sqrt(n_embd)
    bound_p = 1.0 / jnp.sqrt(Hhs)
    wqkv = jax.random.uniform(kqkv, (n_embd, 3 * Hhs), jnp.float32,
                              -bound_in, bound_in)
    wp = jax.random.uniform(kp, (Hhs, n_embd), jnp.float32, -bound_p, bound_p)
    bp = jax.random.uniform(kb, (1, n_embd), jnp.float32, -bound_p, bound_p)
    return wqkv, wp, bp


def _reference_mha(x, wqkv, wp, bp, num_heads, head_size):
    """Pure-JAX f32 reference (eval-mode dropout == identity)."""
    B, T, D = x.shape
    H, hs = num_heads, head_size
    qkv = jnp.einsum('btd,de->bte', x, wqkv)                     # (B, T, 3*H*hs)
    q, k, v = jnp.split(qkv, 3, axis=-1)
    q = q.reshape(B, T, H, hs)
    k = k.reshape(B, T, H, hs)
    v = v.reshape(B, T, H, hs)
    s = jnp.einsum('bqhd,bkhd->bhqk', q, k) * (hs ** -0.5)
    mask = jnp.tril(jnp.ones((T, T), dtype=bool))
    s = jnp.where(mask[None, None], s, -jnp.inf)
    wei = jax.nn.softmax(s, axis=-1)
    att = jnp.einsum('bhqk,bkhd->bqhd', wei, v).reshape(B, T, H * hs)
    return att @ wp + bp


if __name__ == "__main__":
    # Shapes consistent with the module: n_embd=384, seq = block_size=128,
    # 6 heads of size 64 (num_heads * head_size == n_embd).
    B, T, n_embd = 2, 128, 384
    num_heads, head_size = 6, 64

    key = jax.random.PRNGKey(0)
    kx, kp = jax.random.split(key)
    x = jax.random.normal(kx, (B, T, n_embd), jnp.float32)
    wqkv, wp, bp = init_params(kp, n_embd, num_heads, head_size)

    y = multi_head_attention(x, wqkv, wp, bp,
                             num_heads=num_heads, head_size=head_size)
    y = jax.block_until_ready(y)

    ref = _reference_mha(x, wqkv, wp, bp, num_heads, head_size)
    # bf16 MXU operands (f32 accumulation) vs. a pure-f32 reference.
    assert jnp.allclose(y, ref, atol=2e-2, rtol=2e-2), "mismatch vs reference"

    print("KERNEL_OK")
</pallas_src>

<mosaic_0001>
module attributes {stable_mosaic.version = 11 : i64} {
  func.func @_mha_kernel(%arg0: i32, %arg1: memref<1x128x384xf32, #tpu.memory_space<vmem>>, %arg2: memref<384x1152xbf16, #tpu.memory_space<vmem>>, %arg3: memref<384x384xbf16, #tpu.memory_space<vmem>>, %arg4: memref<1x384xf32, #tpu.memory_space<vmem>>, %arg5: memref<1x128x384xf32, #tpu.memory_space<vmem>>, %arg6: memref<128x384xf32, #tpu.memory_space<vmem>>) attributes {dimension_semantics = [#tpu.dimension_semantics<parallel>], iteration_bounds = array<i64: 2>, scalar_prefetch = 0 : i64, scratch_operands = 1 : i64, tpu.core_type = #tpu.core_type<tc>, window_params = [{transform_indices = @transform_0, window_bounds = array<i64: 1, 128, 384>}, {pipeline_mode = #tpu.pipeline_mode<synchronous>, transform_indices = @transform_1, window_bounds = array<i64: 384, 1152>}, {pipeline_mode = #tpu.pipeline_mode<synchronous>, transform_indices = @transform_2, window_bounds = array<i64: 384, 384>}, {pipeline_mode = #tpu.pipeline_mode<synchronous>, transform_indices = @transform_3, window_bounds = array<i64: 1, 384>}, {transform_indices = @transform_4, window_bounds = array<i64: 1, 128, 384>}]} {
    %c0 = arith.constant 0 : index
    %c0_0 = arith.constant 0 : index
    %c0_1 = arith.constant 0 : index
    %0 = vector.load %arg1[%c0, %c0_0, %c0_1] : memref<1x128x384xf32, #tpu.memory_space<vmem>>, vector<1x128x384xf32>
    %1 = vector.shape_cast %0 : vector<1x128x384xf32> to vector<128x384xf32>
    %2 = arith.truncf %1 : vector<128x384xf32> to vector<128x384xbf16>
    %c0_2 = arith.constant 0 : index
    %c0_3 = arith.constant 0 : index
    %3 = vector.load %arg2[%c0_2, %c0_3] : memref<384x1152xbf16, #tpu.memory_space<vmem>>, vector<384x1152xbf16>
    %cst = arith.constant dense<0.000000e+00> : vector<128x1152xf32>
    %4 = tpu.matmul %2, %3, %cst {dimension_numbers = #tpu.dot_dimension_numbers<[1], [0], [0], [1], [0, 0, 1, 1], [], []>} : vector<128x384xbf16>, vector<384x1152xbf16>, vector<128x1152xf32> -> vector<128x1152xf32>
    %5 = vector.extract_strided_slice %4 {offsets = [0, 0], sizes = [128, 384], strides = [1, 1]} : vector<128x1152xf32> to vector<128x384xf32>
    %6 = vector.extract_strided_slice %4 {offsets = [0, 384], sizes = [128, 384], strides = [1, 1]} : vector<128x1152xf32> to vector<128x384xf32>
    %7 = vector.extract_strided_slice %4 {offsets = [0, 768], sizes = [128, 384], strides = [1, 1]} : vector<128x1152xf32> to vector<128x384xf32>
    %8 = tpu.iota {dimensions = array<i32: 0>} : vector<128x128xi32>
    %9 = tpu.iota {dimensions = array<i32: 1>} : vector<128x128xi32>
    %10 = arith.cmpi sle, %9, %8 : vector<128x128xi32>
    %cst_4 = arith.constant 0.000000e+00 : f32
    %cst_5 = arith.constant -1.000000e+30 : f32
    %11 = vector.broadcast %cst_4 : f32 to vector<128x128xf32>
    %12 = vector.broadcast %cst_5 : f32 to vector<128x128xf32>
    %13 = arith.select %10, %11, %12 : vector<128x128xi1>, vector<128x128xf32>
    %14 = vector.extract_strided_slice %5 {offsets = [0, 0], sizes = [128, 64], strides = [1, 1]} : vector<128x384xf32> to vector<128x64xf32>
    %cst_6 = arith.constant 1.250000e-01 : f32
    %15 = vector.broadcast %cst_6 : f32 to vector<128x64xf32>
    %16 = arith.mulf %14, %15 : vector<128x64xf32>
    %17 = arith.truncf %16 : vector<128x64xf32> to vector<128x64xbf16>
    %18 = vector.extract_strided_slice %6 {offsets = [0, 0], sizes = [128, 64], strides = [1, 1]} : vector<128x384xf32> to vector<128x64xf32>
    %19 = arith.truncf %18 : vector<128x64xf32> to vector<128x64xbf16>
    %20 = vector.extract_strided_slice %7 {offsets = [0, 0], sizes = [128, 64], strides = [1, 1]} : vector<128x384xf32> to vector<128x64xf32>
    %21 = arith.truncf %20 : vector<128x64xf32> to vector<128x64xbf16>
    %cst_7 = arith.constant dense<0.000000e+00> : vector<128x128xf32>
    %22 = tpu.matmul %17, %19, %cst_7 {dimension_numbers = #tpu.dot_dimension_numbers<[1], [1], [0], [0], [0, 0, 1, 0], [], []>} : vector<128x64xbf16>, vector<128x64xbf16>, vector<128x128xf32> -> vector<128x128xf32>
    %23 = arith.addf %22, %13 : vector<128x128xf32>
    %cst_8 = arith.constant dense<0xFF800000> : vector<128xf32>
    %24 = vector.multi_reduction <maximumf>, %23, %cst_8 [1] : vector<128x128xf32> to vector<128xf32>
    %25 = vector.shape_cast %24 : vector<128xf32> to vector<128x1xf32>
    %26 = vector.broadcast %25 : vector<128x1xf32> to vector<128x128xf32>
    %27 = arith.subf %23, %26 : vector<128x128xf32>
    %28 = math.exp %27 : vector<128x128xf32>
    %cst_9 = arith.constant dense<0.000000e+00> : vector<128xf32>
    %29 = vector.multi_reduction <add>, %28, %cst_9 [1] : vector<128x128xf32> to vector<128xf32>
    %30 = vector.shape_cast %29 : vector<128xf32> to vector<128x1xf32>
    %31 = arith.truncf %28 : vector<128x128xf32> to vector<128x128xbf16>
    %cst_10 = arith.constant dense<0.000000e+00> : vector<128x64xf32>
    %32 = tpu.matmul %31, %21, %cst_10 {dimension_numbers = #tpu.dot_dimension_numbers<[1], [0], [0], [1], [0, 0, 1, 1], [], []>} : vector<128x128xbf16>, vector<128x64xbf16>, vector<128x64xf32> -> vector<128x64xf32>
    %33 = tpu.reciprocal %30 {approx = true} : vector<128x1xf32> -> vector<128x1xf32>
    %34 = vector.broadcast %33 : vector<128x1xf32> to vector<128x64xf32>
    %35 = arith.mulf %32, %34 : vector<128x64xf32>
    %c0_11 = arith.constant 0 : index
    %c0_12 = arith.constant 0 : index
    %36 = vector.load %arg6[%c0_11, %c0_12] : memref<128x384xf32, #tpu.memory_space<vmem>>, vector<128x64xf32>
    tpu.vector_store %arg6[%c0_11, %c0_12], %35 {strides = array<i32>} : memref<128x384xf32, #tpu.memory_space<vmem>>, vector<128x64xf32>,
    %37 = vector.extract_strided_slice %5 {offsets = [0, 64], sizes = [128, 64], strides = [1, 1]} : vector<128x384xf32> to vector<128x64xf32>
    %cst_13 = arith.constant 1.250000e-01 : f32
    %38 = vector.broadcast %cst_13 : f32 to vector<128x64xf32>
    %39 = arith.mulf %37, %38 : vector<128x64xf32>
    %40 = arith.truncf %39 : vector<128x64xf32> to vector<128x64xbf16>
    %41 = vector.extract_strided_slice %6 {offsets = [0, 64], sizes = [128, 64], strides = [1, 1]} : vector<128x384xf32> to vector<128x64xf32>
    %42 = arith.truncf %41 : vector<128x64xf32> to vector<128x64xbf16>
    %43 = vector.extract_strided_slice %7 {offsets = [0, 64], sizes = [128, 64], strides = [1, 1]} : vector<128x384xf32> to vector<128x64xf32>
    %44 = arith.truncf %43 : vector<128x64xf32> to vector<128x64xbf16>
    %cst_14 = arith.constant dense<0.000000e+00> : vector<128x128xf32>
    %45 = tpu.matmul %40, %42, %cst_14 {dimension_numbers = #tpu.dot_dimension_numbers<[1], [1], [0], [0], [0, 0, 1, 0], [], []>} : vector<128x64xbf16>, vector<128x64xbf16>, vector<128x128xf32> -> vector<128x128xf32>
    %46 = arith.addf %45, %13 : vector<128x128xf32>
    %cst_15 = arith.constant dense<0xFF800000> : vector<128xf32>
    %47 = vector.multi_reduction <maximumf>, %46, %cst_15 [1] : vector<128x128xf32> to vector<128xf32>
    %48 = vector.shape_cast %47 : vector<128xf32> to vector<128x1xf32>
    %49 = vector.broadcast %48 : vector<128x1xf32> to vector<128x128xf32>
    %50 = arith.subf %46, %49 : vector<128x128xf32>
    %51 = math.exp %50 : vector<128x128xf32>
    %cst_16 = arith.constant dense<0.000000e+00> : vector<128xf32>
    %52 = vector.multi_reduction <add>, %51, %cst_16 [1] : vector<128x128xf32> to vector<128xf32>
    %53 = vector.shape_cast %52 : vector<128xf32> to vector<128x1xf32>
    %54 = arith.truncf %51 : vector<128x128xf32> to vector<128x128xbf16>
    %cst_17 = arith.constant dense<0.000000e+00> : vector<128x64xf32>
    %55 = tpu.matmul %54, %44, %cst_17 {dimension_numbers = #tpu.dot_dimension_numbers<[1], [0], [0], [1], [0, 0, 1, 1], [], []>} : vector<128x128xbf16>, vector<128x64xbf16>, vector<128x64xf32> -> vector<128x64xf32>
    %56 = tpu.reciprocal %53 {approx = true} : vector<128x1xf32> -> vector<128x1xf32>
    %57 = vector.broadcast %56 : vector<128x1xf32> to vector<128x64xf32>
    %58 = arith.mulf %55, %57 : vector<128x64xf32>
    %c0_18 = arith.constant 0 : index
    %c64 = arith.constant 64 : index
    %59 = vector.load %arg6[%c0_18, %c64] : memref<128x384xf32, #tpu.memory_space<vmem>>, vector<128x64xf32>
    tpu.vector_store %arg6[%c0_18, %c64], %58 {strides = array<i32>} : memref<128x384xf32, #tpu.memory_space<vmem>>, vector<128x64xf32>,
    %60 = vector.extract_strided_slice %5 {offsets = [0, 128], sizes = [128, 64], strides = [1, 1]} : vector<128x384xf32> to vector<128x64xf32>
    %cst_19 = arith.constant 1.250000e-01 : f32
    %61 = vector.broadcast %cst_19 : f32 to vector<128x64xf32>
    %62 = arith.mulf %60, %61 : vector<128x64xf32>
    %63 = arith.truncf %62 : vector<128x64xf32> to vector<128x64xbf16>
    %64 = vector.extract_strided_slice %6 {offsets = [0, 128], sizes = [128, 64], strides = [1, 1]} : vector<128x384xf32> to vector<128x64xf32>
    %65 = arith.truncf %64 : vector<128x64xf32> to vector<128x64xbf16>
    %66 = vector.extract_strided_slice %7 {offsets = [0, 128], sizes = [128, 64], strides = [1, 1]} : vector<128x384xf32> to vector<128x64xf32>
    %67 = arith.truncf %66 : vector<128x64xf32> to vector<128x64xbf16>
    %cst_20 = arith.constant dense<0.000000e+00> : vector<128x128xf32>
    %68 = tpu.matmul %63, %65, %cst_20 {dimension_numbers = #tpu.dot_dimension_numbers<[1], [1], [0], [0], [0, 0, 1, 0], [], []>} : vector<128x64xbf16>, vector<128x64xbf16>, vector<128x128xf32> -> vector<128x128xf32>
    %69 = arith.addf %68, %13 : vector<128x128xf32>
    %cst_21 = arith.constant dense<0xFF800000> : vector<128xf32>
    %70 = vector.multi_reduction <maximumf>, %69, %cst_21 [1] : vector<128x128xf32> to vector<128xf32>
    %71 = vector.shape_cast %70 : vector<128xf32> to vector<128x1xf32>
    %72 = vector.broadcast %71 : vector<128x1xf32> to vector<128x128xf32>
    %73 = arith.subf %69, %72 : vector<128x128xf32>
    %74 = math.exp %73 : vector<128x128xf32>
    %cst_22 = arith.constant dense<0.000000e+00> : vector<128xf32>
    %75 = vector.multi_reduction <add>, %74, %cst_22 [1] : vector<128x128xf32> to vector<128xf32>
    %76 = vector.shape_cast %75 : vector<128xf32> to vector<128x1xf32>
    %77 = arith.truncf %74 : vector<128x128xf32> to vector<128x128xbf16>
    %cst_23 = arith.constant dense<0.000000e+00> : vector<128x64xf32>
    %78 = tpu.matmul %77, %67, %cst_23 {dimension_numbers = #tpu.dot_dimension_numbers<[1], [0], [0], [1], [0, 0, 1, 1], [], []>} : vector<128x128xbf16>, vector<128x64xbf16>, vector<128x64xf32> -> vector<128x64xf32>
    %79 = tpu.reciprocal %76 {approx = true} : vector<128x1xf32> -> vector<128x1xf32>
    %80 = vector.broadcast %79 : vector<128x1xf32> to vector<128x64xf32>
    %81 = arith.mulf %78, %80 : vector<128x64xf32>
    %c0_24 = arith.constant 0 : index
    %c128 = arith.constant 128 : index
    %82 = vector.load %arg6[%c0_24, %c128] : memref<128x384xf32, #tpu.memory_space<vmem>>, vector<128x64xf32>
    tpu.vector_store %arg6[%c0_24, %c128], %81 {strides = array<i32>} : memref<128x384xf32, #tpu.memory_space<vmem>>, vector<128x64xf32>,
    %83 = vector.extract_strided_slice %5 {offsets = [0, 192], sizes = [128, 64], strides = [1, 1]} : vector<128x384xf32> to vector<128x64xf32>
    %cst_25 = arith.constant 1.250000e-01 : f32
    %84 = vector.broadcast %cst_25 : f32 to vector<128x64xf32>
    %85 = arith.mulf %83, %84 : vector<128x64xf32>
    %86 = arith.truncf %85 : vector<128x64xf32> to vector<128x64xbf16>
    %87 = vector.extract_strided_slice %6 {offsets = [0, 192], sizes = [128, 64], strides = [1, 1]} : vector<128x384xf32> to vector<128x64xf32>
    %88 = arith.truncf %87 : vector<128x64xf32> to vector<128x64xbf16>
    %89 = vector.extract_strided_slice %7 {offsets = [0, 192], sizes = [128, 64], strides = [1, 1]} : vector<128x384xf32> to vector<128x64xf32>
    %90 = arith.truncf %89 : vector<128x64xf32> to vector<128x64xbf16>
    %cst_26 = arith.constant dense<0.000000e+00> : vector<128x128xf32>
    %91 = tpu.matmul %86, %88, %cst_26 {dimension_numbers = #tpu.dot_dimension_numbers<[1], [1], [0], [0], [0, 0, 1, 0], [], []>} : vector<128x64xbf16>, vector<128x64xbf16>, vector<128x128xf32> -> vector<128x128xf32>
    %92 = arith.addf %91, %13 : vector<128x128xf32>
    %cst_27 = arith.constant dense<0xFF800000> : vector<128xf32>
    %93 = vector.multi_reduction <maximumf>, %92, %cst_27 [1] : vector<128x128xf32> to vector<128xf32>
    %94 = vector.shape_cast %93 : vector<128xf32> to vector<128x1xf32>
    %95 = vector.broadcast %94 : vector<128x1xf32> to vector<128x128xf32>
    %96 = arith.subf %92, %95 : vector<128x128xf32>
    %97 = math.exp %96 : vector<128x128xf32>
    %cst_28 = arith.constant dense<0.000000e+00> : vector<128xf32>
    %98 = vector.multi_reduction <add>, %97, %cst_28 [1] : vector<128x128xf32> to vector<128xf32>
    %99 = vector.shape_cast %98 : vector<128xf32> to vector<128x1xf32>
    %100 = arith.truncf %97 : vector<128x128xf32> to vector<128x128xbf16>
    %cst_29 = arith.constant dense<0.000000e+00> : vector<128x64xf32>
    %101 = tpu.matmul %100, %90, %cst_29 {dimension_numbers = #tpu.dot_dimension_numbers<[1], [0], [0], [1], [0, 0, 1, 1], [], []>} : vector<128x128xbf16>, vector<128x64xbf16>, vector<128x64xf32> -> vector<128x64xf32>
    %102 = tpu.reciprocal %99 {approx = true} : vector<128x1xf32> -> vector<128x1xf32>
    %103 = vector.broadcast %102 : vector<128x1xf32> to vector<128x64xf32>
    %104 = arith.mulf %101, %103 : vector<128x64xf32>
    %c0_30 = arith.constant 0 : index
    %c192 = arith.constant 192 : index
    %105 = vector.load %arg6[%c0_30, %c192] : memref<128x384xf32, #tpu.memory_space<vmem>>, vector<128x64xf32>
    tpu.vector_store %arg6[%c0_30, %c192], %104 {strides = array<i32>} : memref<128x384xf32, #tpu.memory_space<vmem>>, vector<128x64xf32>,
    %106 = vector.extract_strided_slice %5 {offsets = [0, 256], sizes = [128, 64], strides = [1, 1]} : vector<128x384xf32> to vector<128x64xf32>
    %cst_31 = arith.constant 1.250000e-01 : f32
    %107 = vector.broadcast %cst_31 : f32 to vector<128x64xf32>
    %108 = arith.mulf %106, %107 : vector<128x64xf32>
    %109 = arith.truncf %108 : vector<128x64xf32> to vector<128x64xbf16>
    %110 = vector.extract_strided_slice %6 {offsets = [0, 256], sizes = [128, 64], strides = [1, 1]} : vector<128x384xf32> to vector<128x64xf32>
    %111 = arith.truncf %110 : vector<128x64xf32> to vector<128x64xbf16>
    %112 = vector.extract_strided_slice %7 {offsets = [0, 256], sizes = [128, 64], strides = [1, 1]} : vector<128x384xf32> to vector<128x64xf32>
    %113 = arith.truncf %112 : vector<128x64xf32> to vector<128x64xbf16>
    %cst_32 = arith.constant dense<0.000000e+00> : vector<128x128xf32>
    %114 = tpu.matmul %109, %111, %cst_32 {dimension_numbers = #tpu.dot_dimension_numbers<[1], [1], [0], [0], [0, 0, 1, 0], [], []>} : vector<128x64xbf16>, vector<128x64xbf16>, vector<128x128xf32> -> vector<128x128xf32>
    %115 = arith.addf %114, %13 : vector<128x128xf32>
    %cst_33 = arith.constant dense<0xFF800000> : vector<128xf32>
    %116 = vector.multi_reduction <maximumf>, %115, %cst_33 [1] : vector<128x128xf32> to vector<128xf32>
    %117 = vector.shape_cast %116 : vector<128xf32> to vector<128x1xf32>
    %118 = vector.broadcast %117 : vector<128x1xf32> to vector<128x128xf32>
    %119 = arith.subf %115, %118 : vector<128x128xf32>
    %120 = math.exp %119 : vector<128x128xf32>
    %cst_34 = arith.constant dense<0.000000e+00> : vector<128xf32>
    %121 = vector.multi_reduction <add>, %120, %cst_34 [1] : vector<128x128xf32> to vector<128xf32>
    %122 = vector.shape_cast %121 : vector<128xf32> to vector<128x1xf32>
    %123 = arith.truncf %120 : vector<128x128xf32> to vector<128x128xbf16>
    %cst_35 = arith.constant dense<0.000000e+00> : vector<128x64xf32>
    %124 = tpu.matmul %123, %113, %cst_35 {dimension_numbers = #tpu.dot_dimension_numbers<[1], [0], [0], [1], [0, 0, 1, 1], [], []>} : vector<128x128xbf16>, vector<128x64xbf16>, vector<128x64xf32> -> vector<128x64xf32>
    %125 = tpu.reciprocal %122 {approx = true} : vector<128x1xf32> -> vector<128x1xf32>
    %126 = vector.broadcast %125 : vector<128x1xf32> to vector<128x64xf32>
    %127 = arith.mulf %124, %126 : vector<128x64xf32>
    %c0_36 = arith.constant 0 : index
    %c256 = arith.constant 256 : index
    %128 = vector.load %arg6[%c0_36, %c256] : memref<128x384xf32, #tpu.memory_space<vmem>>, vector<128x64xf32>
    tpu.vector_store %arg6[%c0_36, %c256], %127 {strides = array<i32>} : memref<128x384xf32, #tpu.memory_space<vmem>>, vector<128x64xf32>,
    %129 = vector.extract_strided_slice %5 {offsets = [0, 320], sizes = [128, 64], strides = [1, 1]} : vector<128x384xf32> to vector<128x64xf32>
    %cst_37 = arith.constant 1.250000e-01 : f32
    %130 = vector.broadcast %cst_37 : f32 to vector<128x64xf32>
    %131 = arith.mulf %129, %130 : vector<128x64xf32>
    %132 = arith.truncf %131 : vector<128x64xf32> to vector<128x64xbf16>
    %133 = vector.extract_strided_slice %6 {offsets = [0, 320], sizes = [128, 64], strides = [1, 1]} : vector<128x384xf32> to vector<128x64xf32>
    %134 = arith.truncf %133 : vector<128x64xf32> to vector<128x64xbf16>
    %135 = vector.extract_strided_slice %7 {offsets = [0, 320], sizes = [128, 64], strides = [1, 1]} : vector<128x384xf32> to vector<128x64xf32>
    %136 = arith.truncf %135 : vector<128x64xf32> to vector<128x64xbf16>
    %cst_38 = arith.constant dense<0.000000e+00> : vector<128x128xf32>
    %137 = tpu.matmul %132, %134, %cst_38 {dimension_numbers = #tpu.dot_dimension_numbers<[1], [1], [0], [0], [0, 0, 1, 0], [], []>} : vector<128x64xbf16>, vector<128x64xbf16>, vector<128x128xf32> -> vector<128x128xf32>
    %138 = arith.addf %137, %13 : vector<128x128xf32>
    %cst_39 = arith.constant dense<0xFF800000> : vector<128xf32>
    %139 = vector.multi_reduction <maximumf>, %138, %cst_39 [1] : vector<128x128xf32> to vector<128xf32>
    %140 = vector.shape_cast %139 : vector<128xf32> to vector<128x1xf32>
    %141 = vector.broadcast %140 : vector<128x1xf32> to vector<128x128xf32>
    %142 = arith.subf %138, %141 : vector<128x128xf32>
    %143 = math.exp %142 : vector<128x128xf32>
    %cst_40 = arith.constant dense<0.000000e+00> : vector<128xf32>
    %144 = vector.multi_reduction <add>, %143, %cst_40 [1] : vector<128x128xf32> to vector<128xf32>
    %145 = vector.shape_cast %144 : vector<128xf32> to vector<128x1xf32>
    %146 = arith.truncf %143 : vector<128x128xf32> to vector<128x128xbf16>
    %cst_41 = arith.constant dense<0.000000e+00> : vector<128x64xf32>
    %147 = tpu.matmul %146, %136, %cst_41 {dimension_numbers = #tpu.dot_dimension_numbers<[1], [0], [0], [1], [0, 0, 1, 1], [], []>} : vector<128x128xbf16>, vector<128x64xbf16>, vector<128x64xf32> -> vector<128x64xf32>
    %148 = tpu.reciprocal %145 {approx = true} : vector<128x1xf32> -> vector<128x1xf32>
    %149 = vector.broadcast %148 : vector<128x1xf32> to vector<128x64xf32>
    %150 = arith.mulf %147, %149 : vector<128x64xf32>
    %c0_42 = arith.constant 0 : index
    %c320 = arith.constant 320 : index
    %151 = vector.load %arg6[%c0_42, %c320] : memref<128x384xf32, #tpu.memory_space<vmem>>, vector<128x64xf32>
    tpu.vector_store %arg6[%c0_42, %c320], %150 {strides = array<i32>} : memref<128x384xf32, #tpu.memory_space<vmem>>, vector<128x64xf32>,
    %c0_43 = arith.constant 0 : index
    %c0_44 = arith.constant 0 : index
    %152 = vector.load %arg6[%c0_43, %c0_44] : memref<128x384xf32, #tpu.memory_space<vmem>>, vector<128x384xf32>
    %153 = arith.truncf %152 : vector<128x384xf32> to vector<128x384xbf16>
    %c0_45 = arith.constant 0 : index
    %c0_46 = arith.constant 0 : index
    %154 = vector.load %arg3[%c0_45, %c0_46] : memref<384x384xbf16, #tpu.memory_space<vmem>>, vector<384x384xbf16>
    %cst_47 = arith.constant dense<0.000000e+00> : vector<128x384xf32>
    %155 = tpu.matmul %153, %154, %cst_47 {dimension_numbers = #tpu.dot_dimension_numbers<[1], [0], [0], [1], [0, 0, 1, 1], [], []>} : vector<128x384xbf16>, vector<384x384xbf16>, vector<128x384xf32> -> vector<128x384xf32>
    %c0_48 = arith.constant 0 : index
    %c0_49 = arith.constant 0 : index
    %156 = vector.load %arg4[%c0_48, %c0_49] : memref<1x384xf32, #tpu.memory_space<vmem>>, vector<1x384xf32>
    %157 = vector.broadcast %156 : vector<1x384xf32> to vector<128x384xf32>
    %158 = arith.addf %155, %157 : vector<128x384xf32>
    %c0_50 = arith.constant 0 : index
    %c0_51 = arith.constant 0 : index
    %c0_52 = arith.constant 0 : index
    %159 = vector.load %arg5[%c0_50, %c0_51, %c0_52] : memref<1x128x384xf32, #tpu.memory_space<vmem>>, vector<1x128x384xf32>
    %160 = vector.shape_cast %159 : vector<1x128x384xf32> to vector<128x384xf32>
    %161 = vector.shape_cast %158 : vector<128x384xf32> to vector<1x128x384xf32>
    tpu.vector_store %arg5[%c0_50, %c0_51, %c0_52], %161 {strides = array<i32>} : memref<1x128x384xf32, #tpu.memory_space<vmem>>, vector<1x128x384xf32>,
    return
  }
  func.func @transform_0(%arg0: i32) -> (i32, i32, i32) {
    %c0_i32 = arith.constant 0 : i32
    %c0_i32_0 = arith.constant 0 : i32
    %c0_i32_1 = arith.constant 0 : i32
    return %arg0, %c0_i32, %c0_i32_0 : i32, i32, i32
  }
  func.func @transform_1(%arg0: i32) -> (i32, i32) {
    %c0_i32 = arith.constant 0 : i32
    %c0_i32_0 = arith.constant 0 : i32
    %c0_i32_1 = arith.constant 0 : i32
    return %c0_i32, %c0_i32_0 : i32, i32
  }
  func.func @transform_2(%arg0: i32) -> (i32, i32) {
    %c0_i32 = arith.constant 0 : i32
    %c0_i32_0 = arith.constant 0 : i32
    %c0_i32_1 = arith.constant 0 : i32
    return %c0_i32, %c0_i32_0 : i32, i32
  }
  func.func @transform_3(%arg0: i32) -> (i32, i32) {
    %c0_i32 = arith.constant 0 : i32
    %c0_i32_0 = arith.constant 0 : i32
    %c0_i32_1 = arith.constant 0 : i32
    return %c0_i32, %c0_i32_0 : i32, i32
  }
  func.func @transform_4(%arg0: i32) -> (i32, i32, i32) {
    %c0_i32 = arith.constant 0 : i32
    %c0_i32_0 = arith.constant 0 : i32
    %c0_i32_1 = arith.constant 0 : i32
    return %arg0, %c0_i32, %c0_i32_0 : i32, i32, i32
  }
}

</mosaic_0001>

<llo_original>
// kernel: tpu_custom_call.1
$region0: #{tpu_custom_call.1}
  #allocation0 [shape = 'u32[]', space=smem, size = 0x4, offset = 0x4, fixed_abs, tag = 'smem constant byte address 0x4 - core index']
  #allocation1 [shape = 'u32[144,128]{1,0:T(1,128)}', space=vmem, size = 0x12000, scoped, tag = 'internal scratch']
  #allocation2 [shape = 'f32[128,384]{1,0:T(8,128)}', space=vmem, size = 0x30000, scoped, tag = 'scratch operand']
  %s0 = inlined_call_operand.hbm [shape: f32[2,128,384], index: 0, kind: input, shape index: {}]
  %s1 = inlined_call_operand.hbm [shape: bf16[384,1152], index: 1, kind: input, shape index: {}]
  %s2 = inlined_call_operand.hbm [shape: bf16[384,384], index: 2, kind: input, shape index: {}]
  %s3 = inlined_call_operand.vmem [shape: f32[1,384], index: 3, kind: input, shape index: {}]
  %s4 = inlined_call_operand.hbm [shape: f32[2,128,384], index: 4, kind: output, shape index: {}]
  %s5 = sld [smem:[#allocation0]]
  $region61: #{tpu_custom_call.1} parent=0
    _
  %s7 = ssub.s32 1, %s5
  %s8 = scalar_select 0, %s7, %s5
  $region1: #{tpu_custom_call.1} parent=0
    #allocation3 [shape = 'u8[393216]{0}', space=vmem, size = 0x60000, scoped, tag = 'input window, operand 0']
    #allocation4 [shape = 's32[2]{0}', space=sflag, size = 0x8, scoped, tag = 'scoped memory for tpu_custom_call.1']
    #allocation5 [shape = 's32[2]{0}', space=sflag, size = 0x8, scoped, tag = 'scoped memory for tpu_custom_call.1']
    #allocation6 [shape = 'u8[884736]{0}', space=vmem, size = 0xd8000, scoped, tag = 'input window, operand 1, single buffered']
    #allocation7 [shape = 's32[1]{0}', space=sflag, size = 0x4, scoped, tag = 'scoped memory for tpu_custom_call.1']
    #allocation8 [shape = 'u8[294912]{0}', space=vmem, size = 0x48000, scoped, tag = 'input window, operand 2, single buffered']
    #allocation9 [shape = 'u8[393216]{0}', space=vmem, size = 0x60000, scoped, tag = 'output window, operand 0']
    %9 = vsyncpa [#allocation4], 0
    %s10 = scalar_lea.sflag [#allocation4], 1
    %11 = vsyncpa %s10, 0
    %12 = vsyncpa [#allocation7], 0
    %13 = vsyncpa [#allocation5], 0
    %s14 = scalar_lea.sflag [#allocation5], 1
    %15 = vsyncpa %s14, 0
    loop: start=0, step=1, limit=4
    $region2: #{tpu_custom_call.1} parent=1 // loop_pre_header
      _
    $region3: #{tpu_custom_call.1} parent=1 // loop_header
      %s17 = sphi 0, %s21
      %p18 = scmp.ge.s32.totalorder %s17, 4
      %s27 = sphi 0, %s29
      %s30 = sphi 0, %s27
      %s31 = sphi 0, %s30
      %s47 = sphi 0, %s31
      %s51 = sphi 0, %s51
      %s53 = sphi 0, %s51
      %s54 = sphi 0, %s53
      %s68 = sphi 0, %s54
      %s72 = sphi 0, %s72
      %s74 = sphi 0, %s72
      %s75 = sphi 0, %s74
      %s89 = sphi 0, %s75
      %s93 = sphi 0, %s93
      %s95 = sphi 0, %s93
      %s96 = sphi 0, %s95
      %s110 = sphi 0, %s96
      %s116 = sphi 0, %s118
      %s119 = sphi 0, %s116
      %s120 = sphi 0, %s119
      %s136 = sphi 0, %s120
    $region4: #{tpu_custom_call.1} parent=1 // loop_header_branch
      %20 = sbr.rel (%p18) target = $region8
    $region5: #{tpu_custom_call.1} parent=1 // loop_body
      %s22 = ssub.s32 %s17, 1
      %s23 = ssub.s32 %s17, 2
      %s24 = sadd.s32 %s17, 1
      %s25 = ssub.s32 %s17, %s24
      %p26 = scmp.eq.s32.totalorder %s25, 0
      %s28 = sadd.s32 %s27, 1
      %s29 = scalar_select %p26, %s27, %s28
      %p32 = pneg %p26
      %p33 = scmp.eq.s32.totalorder %s17, 1
      %p34 = por %p32, %p33
      %p35 = scmp.ne.s32.totalorder %s27, %s30
      %p36 = scmp.eq.s32.totalorder %s17, 0
      %p37 = por %p35, %p36
      %p38 = scmp.ne.s32.totalorder %s27, %s30
      %p39 = scmp.eq.s32.totalorder %s22, 1
      %p40 = por %p38, %p39
      %p41 = scmp.ne.s32.totalorder %s30, %s31
      %p42 = scmp.eq.s32.totalorder %s22, 0
      %p43 = por %p41, %p42
      %p44 = scmp.ne.s32.totalorder %s30, %s31
      %p45 = scmp.eq.s32.totalorder %s23, 1
      %p46 = por %p44, %p45
      %p48 = scmp.ne.s32.totalorder %s31, %s47
      %p49 = scmp.eq.s32.totalorder %s23, 0
      %p50 = por %p48, %p49
      %s52 = sadd.s32 %s51, 1
      %p55 = scmp.eq.s32.totalorder %s17, 1
      %p56 = scmp.ne.s32.totalorder %s51, %s53
      %p57 = scmp.eq.s32.totalorder %s17, 0
      %p58 = por %p56, %p57
      %p59 = scmp.ne.s32.totalorder %s51, %s53
      %p60 = scmp.eq.s32.totalorder %s22, 1
      %p61 = por %p59, %p60
      %p62 = scmp.ne.s32.totalorder %s53, %s54
      %p63 = scmp.eq.s32.totalorder %s22, 0
      %p64 = por %p62, %p63
      %p65 = scmp.ne.s32.totalorder %s53, %s54
      %p66 = scmp.eq.s32.totalorder %s23, 1
      %p67 = por %p65, %p66
      %p69 = scmp.ne.s32.totalorder %s54, %s68
      %p70 = scmp.eq.s32.totalorder %s23, 0
      %p71 = por %p69, %p70
      %s73 = sadd.s32 %s72, 1
      %p76 = scmp.eq.s32.totalorder %s17, 1
      %p77 = scmp.ne.s32.totalorder %s72, %s74
      %p78 = scmp.eq.s32.totalorder %s17, 0
      %p79 = por %p77, %p78
      %p80 = scmp.ne.s32.totalorder %s72, %s74
      %p81 = scmp.eq.s32.totalorder %s22, 1
      %p82 = por %p80, %p81
      %p83 = scmp.ne.s32.totalorder %s74, %s75
      %p84 = scmp.eq.s32.totalorder %s22, 0
      %p85 = por %p83, %p84
      %p86 = scmp.ne.s32.totalorder %s74, %s75
      %p87 = scmp.eq.s32.totalorder %s23, 1
      %p88 = por %p86, %p87
      %p90 = scmp.ne.s32.totalorder %s75, %s89
      %p91 = scmp.eq.s32.totalorder %s23, 0
      %p92 = por %p90, %p91
      %s94 = sadd.s32 %s93, 1
      %p97 = scmp.eq.s32.totalorder %s17, 1
      %p98 = scmp.ne.s32.totalorder %s93, %s95
      %p99 = scmp.eq.s32.totalorder %s17, 0
      %p100 = por %p98, %p99
      %p101 = scmp.ne.s32.totalorder %s93, %s95
      %p102 = scmp.eq.s32.totalorder %s22, 1
      %p103 = por %p101, %p102
      %p104 = scmp.ne.s32.totalorder %s95, %s96
      %p105 = scmp.eq.s32.totalorder %s22, 0
      %p106 = por %p104, %p105
      %p107 = scmp.ne.s32.totalorder %s95, %s96
      %p108 = scmp.eq.s32.totalorder %s23, 1
      %p109 = por %p107, %p108
      %p111 = scmp.ne.s32.totalorder %s96, %s110
      %p112 = scmp.eq.s32.totalorder %s23, 0
      %p113 = por %p111, %p112
      %s114 = ssub.s32 %s17, %s24
      %p115 = scmp.eq.s32.totalorder %s114, 0
      %s117 = sadd.s32 %s116, 1
      %s118 = scalar_select %p115, %s116, %s117
      %p121 = pneg %p115
      %p122 = scmp.eq.s32.totalorder %s17, 1
      %p123 = por %p121, %p122
      %p124 = scmp.ne.s32.totalorder %s116, %s119
      %p125 = scmp.eq.s32.totalorder %s17, 0
      %p126 = por %p124, %p125
      %p127 = scmp.ne.s32.totalorder %s116, %s119
      %p128 = scmp.eq.s32.totalorder %s22, 1
      %p129 = por %p127, %p128
      %p130 = scmp.ne.s32.totalorder %s119, %s120
      %p131 = scmp.eq.s32.totalorder %s22, 0
      %p132 = por %p130, %p131
      %p133 = scmp.ne.s32.totalorder %s119, %s120
      %p134 = scmp.eq.s32.totalorder %s23, 1
      %p135 = por %p133, %p134
      %p137 = scmp.ne.s32.totalorder %s120, %s136
      %p138 = scmp.eq.s32.totalorder %s23, 0
      %p139 = por %p137, %p138
      %p140 = scmp.le.s32.totalorder 1, %s17
      %p141 = scmp.lt.s32.totalorder %s17, 3
      %p142 = pnand %p140, %p141
      %p143 = pneg %p142
      // Predicated region
      $region9: #{tpu_custom_call.1} parent=5 // pred_check
        _
      $region10: #{tpu_custom_call.1} parent=5 // pred_check_branch
        %145 = sbr.rel (%p142) target = $region12
      $region11: #{tpu_custom_call.1} parent=5 // pred_region
        %s146 = ssub.s32 %s17, 1
        // Predicated region
        $region13: #{tpu_custom_call.1} parent=11 // pred_check
          %p147 = pneg %p64
        $region14: #{tpu_custom_call.1} parent=11 // pred_check_branch
          %149 = sbr.rel (%p147) target = $region16
        $region15: #{tpu_custom_call.1} parent=11 // pred_region
          %s151 = ssub.s32 27648, 27648
          %152 = vsyncadd [#allocation7], %s151
          %s153 = sshll.u32 [#allocation6], 4
          %s154 = int_to_ptr.vmem [resolvable:$true] %s153
          %159 = dma.hbm_to_vmem [thread:$0]  %s1, 27648, %s154, [#allocation7], 576, 576, 36
        $region16: #{tpu_custom_call.1} parent=11 // pred_fallthru
          _
        // Predicated region
        $region17: #{tpu_custom_call.1} parent=11 // pred_check
          %p160 = pneg %p85
        $region18: #{tpu_custom_call.1} parent=11 // pred_check_branch
          %162 = sbr.rel (%p160) target = $region20
        $region19: #{tpu_custom_call.1} parent=11 // pred_region
          %s164 = ssub.s32 9216, 9216
          %165 = vsyncadd [#allocation7], %s164
          %s166 = sshll.u32 [#allocation8], 4
          %s167 = int_to_ptr.vmem [resolvable:$true] %s166
          %172 = dma.hbm_to_vmem [thread:$0]  %s2, 9216, %s167, [#allocation7], 192, 192, 12
        $region20: #{tpu_custom_call.1} parent=11 // pred_fallthru
          _
        // Predicated region
        $region21: #{tpu_custom_call.1} parent=11 // pred_check
          %p173 = pneg %p106
        $region22: #{tpu_custom_call.1} parent=11 // pred_check_branch
          %175 = sbr.rel (%p173) target = $region24
        $region23: #{tpu_custom_call.1} parent=11 // pred_region
          _
        $region24: #{tpu_custom_call.1} parent=11 // pred_fallthru
          _
      $region12: #{tpu_custom_call.1} parent=5 // pred_fallthru
        _
      %p176 = scmp.lt.s32.totalorder %s17, 2
      // Predicated region
      $region25: #{tpu_custom_call.1} parent=5 // pred_check
        %p177 = pneg %p176
      $region26: #{tpu_custom_call.1} parent=5 // pred_check_branch
        %179 = sbr.rel (%p177) target = $region28
      $region27: #{tpu_custom_call.1} parent=5 // pred_region
        // Predicated region
        $region29: #{tpu_custom_call.1} parent=27 // pred_check
          %p180 = pneg %p37
        $region30: #{tpu_custom_call.1} parent=27 // pred_check_branch
          %182 = sbr.rel (%p180) target = $region32
        $region31: #{tpu_custom_call.1} parent=27 // pred_region
          %s183 = sand.u32 %s27, 1
          %s184 = scalar_lea.sflag [#allocation4], %s183
          %s185 = sand.u32 %s27, 1
          %s186 = smul.addr %s185, 384
          %s187 = scalar_lea.vmem [#allocation3], %s186
          %s189 = ssub.s32 6144, 6144
          %190 = vsyncadd %s184, %s189
          %s191 = smul.addr %s17, 48
          %s192 = smul.addr %s191, 128
          %s193 = scalar_lea.hbm %s0, %s192
          %s194 = sshll.u32 %s187, 4
          %s195 = int_to_ptr.vmem [resolvable:$true] %s194
          %200 = dma.hbm_to_vmem [thread:$0]  %s193, 6144, %s195, %s184, 384, 384, 24
        $region32: #{tpu_custom_call.1} parent=27 // pred_fallthru
          _
      $region28: #{tpu_custom_call.1} parent=5 // pred_fallthru
        _
      %p201 = scmp.le.s32.totalorder 1, %s17
      %p202 = scmp.lt.s32.totalorder %s17, 3
      %p203 = pnand %p201, %p202
      %p204 = pneg %p203
      // Predicated region
      $region33: #{tpu_custom_call.1} parent=5 // pred_check
        _
      $region34: #{tpu_custom_call.1} parent=5 // pred_check_branch
        %206 = sbr.rel (%p203) target = $region36
      $region35: #{tpu_custom_call.1} parent=5 // pred_region
        %s207 = ssub.s32 %s17, 1
        %s208 = sand.u32 %s30, 1
        %s209 = scalar_lea.sflag [#allocation4], %s208
        %s210 = sand.u32 %s30, 1
        %s211 = smul.addr %s210, 384
        %s212 = scalar_lea.vmem [#allocation3], %s211
        // Predicated region
        $region37: #{tpu_custom_call.1} parent=35 // pred_check
          %p213 = pneg %p43
        $region38: #{tpu_custom_call.1} parent=35 // pred_check_branch
          %215 = sbr.rel (%p213) target = $region40
        $region39: #{tpu_custom_call.1} parent=35 // pred_region
          %216 = dma.done %s209, 6144
        $region40: #{tpu_custom_call.1} parent=35 // pred_fallthru
          _
        // Predicated region
        $region41: #{tpu_custom_call.1} parent=35 // pred_check
          %p217 = pneg %p64
        $region42: #{tpu_custom_call.1} parent=35 // pred_check_branch
          %219 = sbr.rel (%p217) target = $region44
        $region43: #{tpu_custom_call.1} parent=35 // pred_region
          %220 = dma.done [#allocation7], 27648
        $region44: #{tpu_custom_call.1} parent=35 // pred_fallthru
          _
        // Predicated region
        $region45: #{tpu_custom_call.1} parent=35 // pred_check
          %p221 = pneg %p85
        $region46: #{tpu_custom_call.1} parent=35 // pred_check_branch
          %223 = sbr.rel (%p221) target = $region48
        $region47: #{tpu_custom_call.1} parent=35 // pred_region
          %224 = dma.done [#allocation7], 9216
        $region48: #{tpu_custom_call.1} parent=35 // pred_fallthru
          _
        %s225 = sand.u32 %s30, 1
        %s226 = scalar_lea.sflag [#allocation4], %s225
        %s227 = sand.u32 %s30, 1
        %s228 = smul.addr %s227, 384
        %s229 = scalar_lea.vmem [#allocation3], %s228
        %p230 = pneg %p43
        %p231 = pneg %p40
        %p232 = pneg %p64
        %p233 = pneg %p61
        %p234 = pneg %p85
        %p235 = pneg %p82
        %p236 = pneg %p106
        %p237 = pneg %p103
        %p238 = pneg %p132
        %p239 = pneg %p129
        %s240 = sand.u32 %s119, 1
        %s241 = scalar_lea.sflag [#allocation5], %s240
        %s242 = sand.u32 %s119, 1
        %s243 = smul.addr %s242, 384
        %s244 = scalar_lea.vmem [#allocation9], %s243
        %v246 = vld [vmem:[%s212] sm:$0xff]
        %v247 = vld [vmem:[%s212 + $0x8] sm:$0xff]
        %v248 = vld [vmem:[%s212 + $0x10] sm:$0xff]
        %v249 = vld [vmem:[%s212 + $0x18] sm:$0xff]
        %v250 = vld [vmem:[%s212 + $0x20] sm:$0xff]
        %v251 = vld [vmem:[%s212 + $0x28] sm:$0xff]
        %v252 = vld [vmem:[%s212 + $0x30] sm:$0xff]
        %v253 = vld [vmem:[%s212 + $0x38] sm:$0xff]
        %v254 = vld [vmem:[%s212 + $0x40] sm:$0xff]
        %v255 = vld [vmem:[%s212 + $0x48] sm:$0xff]
        %v256 = vld [vmem:[%s212 + $0x50] sm:$0xff]
        %v257 = vld [vmem:[%s212 + $0x58] sm:$0xff]
        %v258 = vld [vmem:[%s212 + $0x60] sm:$0xff]
        %v259 = vld [vmem:[%s212 + $0x68] sm:$0xff]
        %v260 = vld [vmem:[%s212 + $0x70] sm:$0xff]
        %v261 = vld [vmem:[%s212 + $0x78] sm:$0xff]
        %v262 = vld [vmem:[%s212 + $0x80] sm:$0xff]
        %v263 = vld [vmem:[%s212 + $0x88] sm:$0xff]
        %v264 = vld [vmem:[%s212 + $0x90] sm:$0xff]
        %v265 = vld [vmem:[%s212 + $0x98] sm:$0xff]
        %v266 = vld [vmem:[%s212 + $0xa0] sm:$0xff]
        %v267 = vld [vmem:[%s212 + $0xa8] sm:$0xff]
        %v268 = vld [vmem:[%s212 + $0xb0] sm:$0xff]
        %v269 = vld [vmem:[%s212 + $0xb8] sm:$0xff]
        %v270 = vld [vmem:[%s212 + $0xc0] sm:$0xff]
        %v271 = vld [vmem:[%s212 + $0xc8] sm:$0xff]
        %v272 = vld [vmem:[%s212 + $0xd0] sm:$0xff]
        %v273 = vld [vmem:[%s212 + $0xd8] sm:$0xff]
        %v274 = vld [vmem:[%s212 + $0xe0] sm:$0xff]
        %v275 = vld [vmem:[%s212 + $0xe8] sm:$0xff]
        %v276 = vld [vmem:[%s212 + $0xf0] sm:$0xff]
        %v277 = vld [vmem:[%s212 + $0xf8] sm:$0xff]
        %v278 = vld [vmem:[%s212 + $0x100] sm:$0xff]
        %v279 = vld [vmem:[%s212 + $0x108] sm:$0xff]
        %v280 = vld [vmem:[%s212 + $0x110] sm:$0xff]
        %v281 = vld [vmem:[%s212 + $0x118] sm:$0xff]
        %v282 = vld [vmem:[%s212 + $0x120] sm:$0xff]
        %v283 = vld [vmem:[%s212 + $0x128] sm:$0xff]
        %v284 = vld [vmem:[%s212 + $0x130] sm:$0xff]
        %v285 = vld [vmem:[%s212 + $0x138] sm:$0xff]
        %v286 = vld [vmem:[%s212 + $0x140] sm:$0xff]
        %v287 = vld [vmem:[%s212 + $0x148] sm:$0xff]
        %v288 = vld [vmem:[%s212 + $0x150] sm:$0xff]
        %v289 = vld [vmem:[%s212 + $0x158] sm:$0xff]
        %v290 = vld [vmem:[%s212 + $0x160] sm:$0xff]
        %v291 = vld [vmem:[%s212 + $0x168] sm:$0xff]
        %v292 = vld [vmem:[%s212 + $0x170] sm:$0xff]
        %v293 = vld [vmem:[%s212 + $0x178] sm:$0xff]
        %v294 = vpack.c.bf16 %v249, %v246
        %v295 = vpack.c.bf16 %v250, %v247
        %v296 = vpack.c.bf16 %v251, %v248
        %v297 = vpack.c.bf16 %v255, %v252
        %v298 = vpack.c.bf16 %v256, %v253
        %v299 = vpack.c.bf16 %v257, %v254
        %v300 = vpack.c.bf16 %v261, %v258
        %v301 = vpack.c.bf16 %v262, %v259
        %v302 = vpack.c.bf16 %v263, %v260
        %v303 = vpack.c.bf16 %v267, %v264
        %v304 = vpack.c.bf16 %v268, %v265
        %v305 = vpack.c.bf16 %v269, %v266
        %v306 = vpack.c.bf16 %v273, %v270
        %v307 = vpack.c.bf16 %v274, %v271
        %v308 = vpack.c.bf16 %v275, %v272
        %v309 = vpack.c.bf16 %v279, %v276
        %v310 = vpack.c.bf16 %v280, %v277
        %v311 = vpack.c.bf16 %v281, %v278
        %v312 = vpack.c.bf16 %v285, %v282
        %v313 = vpack.c.bf16 %v286, %v283
        %v314 = vpack.c.bf16 %v287, %v284
        %v315 = vpack.c.bf16 %v291, %v288
        %v316 = vpack.c.bf16 %v292, %v289
        %v317 = vpack.c.bf16 %v293, %v290
        %v318 = vld [vmem:[#allocation6] sm:$0xff]
        %v319 = vld [vmem:[#allocation6 + $0x8] sm:$0xff]
        %v320 = vld [vmem:[#allocation6 + $0x10] sm:$0xff]
        %v321 = vld [vmem:[#allocation6 + $0x18] sm:$0xff]
        %v322 = vld [vmem:[#allocation6 + $0x20] sm:$0xf]
        %v323 = vld [vmem:[#allocation6 + $0x24] sm:$0xff]
        %v324 = vld [vmem:[#allocation6 + $0x2c] sm:$0xff]
        %v325 = vld [vmem:[#allocation6 + $0x34] sm:$0xff]
        %v326 = vld [vmem:[#allocation6 + $0x3c] sm:$0xff]
        %v327 = vld [vmem:[#allocation6 + $0x44] sm:$0xf]
        %v328 = vld [vmem:[#allocation6 + $0x48] sm:$0xff]
        %v329 = vld [vmem:[#allocation6 + $0x50] sm:$0xff]
        %v330 = vld [vmem:[#allocation6 + $0x58] sm:$0xff]
        %v331 = vld [vmem:[#allocation6 + $0x60] sm:$0xff]
        %v332 = vld [vmem:[#allocation6 + $0x68] sm:$0xf]
        %v333 = vld [vmem:[#allocation6 + $0x6c] sm:$0xff]
        %v334 = vld [vmem:[#allocation6 + $0x74] sm:$0xff]
        %v335 = vld [vmem:[#allocation6 + $0x7c] sm:$0xff]
        %v336 = vld [vmem:[#allocation6 + $0x84] sm:$0xff]
        %v337 = vld [vmem:[#allocation6 + $0x8c] sm:$0xf]
        %v338 = vld [vmem:[#allocation6 + $0x90] sm:$0xff]
        %v339 = vld [vmem:[#allocation6 + $0x98] sm:$0xff]
        %v340 = vld [vmem:[#allocation6 + $0xa0] sm:$0xff]
        %v341 = vld [vmem:[#allocation6 + $0xa8] sm:$0xff]
        %v342 = vld [vmem:[#allocation6 + $0xb0] sm:$0xf]
        %v343 = vld [vmem:[#allocation6 + $0xb4] sm:$0xff]
        %v344 = vld [vmem:[#allocation6 + $0xbc] sm:$0xff]
        %v345 = vld [vmem:[#allocation6 + $0xc4] sm:$0xff]
        %v346 = vld [vmem:[#allocation6 + $0xcc] sm:$0xff]
        %v347 = vld [vmem:[#allocation6 + $0xd4] sm:$0xf]
        %v348 = vld [vmem:[#allocation6 + $0xd8] sm:$0xff]
        %v349 = vld [vmem:[#allocation6 + $0xe0] sm:$0xff]
        %v350 = vld [vmem:[#allocation6 + $0xe8] sm:$0xff]
        %v351 = vld [vmem:[#allocation6 + $0xf0] sm:$0xff]
        %v352 = vld [vmem:[#allocation6 + $0xf8] sm:$0xf]
        %v353 = vld [vmem:[#allocation6 + $0xfc] sm:$0xff]
        %v354 = vld [vmem:[#allocation6 + $0x104] sm:$0xff]
        %v355 = vld [vmem:[#allocation6 + $0x10c] sm:$0xff]
        %v356 = vld [vmem:[#allocation6 + $0x114] sm:$0xff]
        %v357 = vld [vmem:[#allocation6 + $0x11c] sm:$0xf]
        %v358 = vld [vmem:[#allocation6 + $0x120] sm:$0xff]
        %v359 = vld [vmem:[#allocation6 + $0x128] sm:$0xff]
        %v360 = vld [vmem:[#allocation6 + $0x130] sm:$0xff]
        %v361 = vld [vmem:[#allocation6 + $0x138] sm:$0xff]
        %v362 = vld [vmem:[#allocation6 + $0x140] sm:$0xf]
        %v363 = vld [vmem:[#allocation6 + $0x144] sm:$0xff]
        %v364 = vld [vmem:[#allocation6 + $0x14c] sm:$0xff]
        %v365 = vld [vmem:[#allocation6 + $0x154] sm:$0xff]
        %v366 = vld [vmem:[#allocation6 + $0x15c] sm:$0xff]
        %v367 = vld [vmem:[#allocation6 + $0x164] sm:$0xf]
        %v368 = vld [vmem:[#allocation6 + $0x168] sm:$0xff]
        %v369 = vld [vmem:[#allocation6 + $0x170] sm:$0xff]
        %v370 = vld [vmem:[#allocation6 + $0x178] sm:$0xff]
        %v371 = vld [vmem:[#allocation6 + $0x180] sm:$0xff]
        %v372 = vld [vmem:[#allocation6 + $0x188] sm:$0xf]
        %v373 = vld [vmem:[#allocation6 + $0x18c] sm:$0xff]
        %v374 = vld [vmem:[#allocation6 + $0x194] sm:$0xff]
        %v375 = vld [vmem:[#allocation6 + $0x19c] sm:$0xff]
        %v376 = vld [vmem:[#allocation6 + $0x1a4] sm:$0xff]
        %v377 = vld [vmem:[#allocation6 + $0x1ac] sm:$0xf]
        %v378 = vld [vmem:[#allocation6 + $0x1b0] sm:$0xff]
        %v379 = vld [vmem:[#allocation6 + $0x1b8] sm:$0xff]
        %v380 = vld [vmem:[#allocation6 + $0x1c0] sm:$0xff]
        %v381 = vld [vmem:[#allocation6 + $0x1c8] sm:$0xff]
        %v382 = vld [vmem:[#allocation6 + $0x1d0] sm:$0xf]
        %v383 = vld [vmem:[#allocation6 + $0x1d4] sm:$0xff]
        %v384 = vld [vmem:[#allocation6 + $0x1dc] sm:$0xff]
        %v385 = vld [vmem:[#allocation6 + $0x1e4] sm:$0xff]
        %v386 = vld [vmem:[#allocation6 + $0x1ec] sm:$0xff]
        %v387 = vld [vmem:[#allocation6 + $0x1f4] sm:$0xf]
        %v388 = vld [vmem:[#allocation6 + $0x1f8] sm:$0xff]
        %v389 = vld [vmem:[#allocation6 + $0x200] sm:$0xff]
        %v390 = vld [vmem:[#allocation6 + $0x208] sm:$0xff]
        %v391 = vld [vmem:[#allocation6 + $0x210] sm:$0xff]
        %v392 = vld [vmem:[#allocation6 + $0x218] sm:$0xf]
        %v393 = vld [vmem:[#allocation6 + $0x21c] sm:$0xff]
        %v394 = vld [vmem:[#allocation6 + $0x224] sm:$0xff]
        %v395 = vld [vmem:[#allocation6 + $0x22c] sm:$0xff]
        %v396 = vld [vmem:[#allocation6 + $0x234] sm:$0xff]
        %v397 = vld [vmem:[#allocation6 + $0x23c] sm:$0xf]
        %v398 = vld [vmem:[#allocation6 + $0x240] sm:$0xff]
        %v399 = vld [vmem:[#allocation6 + $0x248] sm:$0xff]
        %v400 = vld [vmem:[#allocation6 + $0x250] sm:$0xff]
        %v401 = vld [vmem:[#allocation6 + $0x258] sm:$0xff]
        %v402 = vld [vmem:[#allocation6 + $0x260] sm:$0xf]
        %v403 = vld [vmem:[#allocation6 + $0x264] sm:$0xff]
        %v404 = vld [vmem:[#allocation6 + $0x26c] sm:$0xff]
        %v405 = vld [vmem:[#allocation6 + $0x274] sm:$0xff]
        %v406 = vld [vmem:[#allocation6 + $0x27c] sm:$0xff]
        %v407 = vld [vmem:[#allocation6 + $0x284] sm:$0xf]
        %v408 = vld [vmem:[#allocation6 + $0x288] sm:$0xff]
        %v409 = vld [vmem:[#allocation6 + $0x290] sm:$0xff]
        %v410 = vld [vmem:[#allocation6 + $0x298] sm:$0xff]
        %v411 = vld [vmem:[#allocation6 + $0x2a0] sm:$0xff]
        %v412 = vld [vmem:[#allocation6 + $0x2a8] sm:$0xf]
        %v413 = vld [vmem:[#allocation6 + $0x2ac] sm:$0xff]
        %v414 = vld [vmem:[#allocation6 + $0x2b4] sm:$0xff]
        %v415 = vld [vmem:[#allocation6 + $0x2bc] sm:$0xff]
        %v416 = vld [vmem:[#allocation6 + $0x2c4] sm:$0xff]
        %v417 = vld [vmem:[#allocation6 + $0x2cc] sm:$0xf]
        %v418 = vld [vmem:[#allocation6 + $0x2d0] sm:$0xff]
        %v419 = vld [vmem:[#allocation6 + $0x2d8] sm:$0xff]
        %v420 = vld [vmem:[#allocation6 + $0x2e0] sm:$0xff]
        %v421 = vld [vmem:[#allocation6 + $0x2e8] sm:$0xff]
        %v422 = vld [vmem:[#allocation6 + $0x2f0] sm:$0xf]
        %v423 = vld [vmem:[#allocation6 + $0x2f4] sm:$0xff]
        %v424 = vld [vmem:[#allocation6 + $0x2fc] sm:$0xff]
        %v425 = vld [vmem:[#allocation6 + $0x304] sm:$0xff]
        %v426 = vld [vmem:[#allocation6 + $0x30c] sm:$0xff]
        %v427 = vld [vmem:[#allocation6 + $0x314] sm:$0xf]
        %v428 = vld [vmem:[#allocation6 + $0x318] sm:$0xff]
        %v429 = vld [vmem:[#allocation6 + $0x320] sm:$0xff]
        %v430 = vld [vmem:[#allocation6 + $0x328] sm:$0xff]
        %v431 = vld [vmem:[#allocation6 + $0x330] sm:$0xff]
        %v432 = vld [vmem:[#allocation6 + $0x338] sm:$0xf]
        %v433 = vld [vmem:[#allocation6 + $0x33c] sm:$0xff]
        %v434 = vld [vmem:[#allocation6 + $0x344] sm:$0xff]
        %v435 = vld [vmem:[#allocation6 + $0x34c] sm:$0xff]
        %v436 = vld [vmem:[#allocation6 + $0x354] sm:$0xff]
        %v437 = vld [vmem:[#allocation6 + $0x35c] sm:$0xf]
        %v438 = vld [vmem:[#allocation6 + $0x360] sm:$0xff]
        %v439 = vld [vmem:[#allocation6 + $0x368] sm:$0xff]
        %v440 = vld [vmem:[#allocation6 + $0x370] sm:$0xff]
        %v441 = vld [vmem:[#allocation6 + $0x378] sm:$0xff]
        %v442 = vld [vmem:[#allocation6 + $0x380] sm:$0xf]
        %v443 = vld [vmem:[#allocation6 + $0x384] sm:$0xff]
        %v444 = vld [vmem:[#allocation6 + $0x38c] sm:$0xff]
        %v445 = vld [vmem:[#allocation6 + $0x394] sm:$0xff]
        %v446 = vld [vmem:[#allocation6 + $0x39c] sm:$0xff]
        %v447 = vld [vmem:[#allocation6 + $0x3a4] sm:$0xf]
        %v448 = vld [vmem:[#allocation6 + $0x3a8] sm:$0xff]
        %v449 = vld [vmem:[#allocation6 + $0x3b0] sm:$0xff]
        %v450 = vld [vmem:[#allocation6 + $0x3b8] sm:$0xff]
        %v451 = vld [vmem:[#allocation6 + $0x3c0] sm:$0xff]
        %v452 = vld [vmem:[#allocation6 + $0x3c8] sm:$0xf]
        %v453 = vld [vmem:[#allocation6 + $0x3cc] sm:$0xff]
        %v454 = vld [vmem:[#allocation6 + $0x3d4] sm:$0xff]
        %v455 = vld [vmem:[#allocation6 + $0x3dc] sm:$0xff]
        %v456 = vld [vmem:[#allocation6 + $0x3e4] sm:$0xff]
        %v457 = vld [vmem:[#allocation6 + $0x3ec] sm:$0xf]
        %v458 = vld [vmem:[#allocation6 + $0x3f0] sm:$0xff]
        %v459 = vld [vmem:[#allocation6 + $0x3f8] sm:$0xff]
        %v460 = vld [vmem:[#allocation6 + $0x400] sm:$0xff]
        %v461 = vld [vmem:[#allocation6 + $0x408] sm:$0xff]
        %v462 = vld [vmem:[#allocation6 + $0x410] sm:$0xf]
        %v463 = vld [vmem:[#allocation6 + $0x414] sm:$0xff]
        %v464 = vld [vmem:[#allocation6 + $0x41c] sm:$0xff]
        %v465 = vld [vmem:[#allocation6 + $0x424] sm:$0xff]
        %v466 = vld [vmem:[#allocation6 + $0x42c] sm:$0xff]
        %v467 = vld [vmem:[#allocation6 + $0x434] sm:$0xf]
        %v468 = vld [vmem:[#allocation6 + $0x438] sm:$0xff]
        %v469 = vld [vmem:[#allocation6 + $0x440] sm:$0xff]
        %v470 = vld [vmem:[#allocation6 + $0x448] sm:$0xff]
        %v471 = vld [vmem:[#allocation6 + $0x450] sm:$0xff]
        %v472 = vld [vmem:[#allocation6 + $0x458] sm:$0xf]
        %v473 = vld [vmem:[#allocation6 + $0x45c] sm:$0xff]
        %v474 = vld [vmem:[#allocation6 + $0x464] sm:$0xff]
        %v475 = vld [vmem:[#allocation6 + $0x46c] sm:$0xff]
        %v476 = vld [vmem:[#allocation6 + $0x474] sm:$0xff]
        %v477 = vld [vmem:[#allocation6 + $0x47c] sm:$0xf]
        %v478 = vld [vmem:[#allocation6 + $0x480] sm:$0xff]
        %v479 = vld [vmem:[#allocation6 + $0x488] sm:$0xff]
        %v480 = vld [vmem:[#allocation6 + $0x490] sm:$0xff]
        %v481 = vld [vmem:[#allocation6 + $0x498] sm:$0xff]
        %v482 = vld [vmem:[#allocation6 + $0x4a0] sm:$0xf]
        %v483 = vld [vmem:[#allocation6 + $0x4a4] sm:$0xff]
        %v484 = vld [vmem:[#allocation6 + $0x4ac] sm:$0xff]
        %v485 = vld [vmem:[#allocation6 + $0x4b4] sm:$0xff]
        %v486 = vld [vmem:[#allocation6 + $0x4bc] sm:$0xff]
        %v487 = vld [vmem:[#allocation6 + $0x4c4] sm:$0xf]
        %v488 = vld [vmem:[#allocation6 + $0x4c8] sm:$0xff]
        %v489 = vld [vmem:[#allocation6 + $0x4d0] sm:$0xff]
        %v490 = vld [vmem:[#allocation6 + $0x4d8] sm:$0xff]
        %v491 = vld [vmem:[#allocation6 + $0x4e0] sm:$0xff]
        %v492 = vld [vmem:[#allocation6 + $0x4e8] sm:$0xf]
        %v493 = vld [vmem:[#allocation6 + $0x4ec] sm:$0xff]
        %v494 = vld [vmem:[#allocation6 + $0x4f4] sm:$0xff]
        %v495 = vld [vmem:[#allocation6 + $0x4fc] sm:$0xff]
        %v496 = vld [vmem:[#allocation6 + $0x504] sm:$0xff]
        %v497 = vld [vmem:[#allocation6 + $0x50c] sm:$0xf]
        %v498 = vld [vmem:[#allocation6 + $0x510] sm:$0xff]
        %v499 = vld [vmem:[#allocation6 + $0x518] sm:$0xff]
        %v500 = vld [vmem:[#allocation6 + $0x520] sm:$0xff]
        %v501 = vld [vmem:[#allocation6 + $0x528] sm:$0xff]
        %v502 = vld [vmem:[#allocation6 + $0x530] sm:$0xf]
        %v503 = vld [vmem:[#allocation6 + $0x534] sm:$0xff]
        %v504 = vld [vmem:[#allocation6 + $0x53c] sm:$0xff]
        %v505 = vld [vmem:[#allocation6 + $0x544] sm:$0xff]
        %v506 = vld [vmem:[#allocation6 + $0x54c] sm:$0xff]
        %v507 = vld [vmem:[#allocation6 + $0x554] sm:$0xf]
        %v508 = vld [vmem:[#allocation6 + $0x558] sm:$0xff]
        %v509 = vld [vmem:[#allocation6 + $0x560] sm:$0xff]
        %v510 = vld [vmem:[#allocation6 + $0x568] sm:$0xff]
        %v511 = vld [vmem:[#allocation6 + $0x570] sm:$0xff]
        %v512 = vld [vmem:[#allocation6 + $0x578] sm:$0xf]
        %v513 = vld [vmem:[#allocation6 + $0x57c] sm:$0xff]
        %v514 = vld [vmem:[#allocation6 + $0x584] sm:$0xff]
        %v515 = vld [vmem:[#allocation6 + $0x58c] sm:$0xff]
        %v516 = vld [vmem:[#allocation6 + $0x594] sm:$0xff]
        %v517 = vld [vmem:[#allocation6 + $0x59c] sm:$0xf]
        %v518 = vld [vmem:[#allocation6 + $0x5a0] sm:$0xff]
        %v519 = vld [vmem:[#allocation6 + $0x5a8] sm:$0xff]
        %v520 = vld [vmem:[#allocation6 + $0x5b0] sm:$0xff]
        %v521 = vld [vmem:[#allocation6 + $0x5b8] sm:$0xff]
        %v522 = vld [vmem:[#allocation6 + $0x5c0] sm:$0xf]
        %v523 = vld [vmem:[#allocation6 + $0x5c4] sm:$0xff]
        %v524 = vld [vmem:[#allocation6 + $0x5cc] sm:$0xff]
        %v525 = vld [vmem:[#allocation6 + $0x5d4] sm:$0xff]
        %v526 = vld [vmem:[#allocation6 + $0x5dc] sm:$0xff]
        %v527 = vld [vmem:[#allocation6 + $0x5e4] sm:$0xf]
        %v528 = vld [vmem:[#allocation6 + $0x5e8] sm:$0xff]
        %v529 = vld [vmem:[#allocation6 + $0x5f0] sm:$0xff]
        %v530 = vld [vmem:[#allocation6 + $0x5f8] sm:$0xff]
        %v531 = vld [vmem:[#allocation6 + $0x600] sm:$0xff]
        %v532 = vld [vmem:[#allocation6 + $0x608] sm:$0xf]
        %v533 = vld [vmem:[#allocation6 + $0x60c] sm:$0xff]
        %v534 = vld [vmem:[#allocation6 + $0x614] sm:$0xff]
        %v535 = vld [vmem:[#allocation6 + $0x61c] sm:$0xff]
        %v536 = vld [vmem:[#allocation6 + $0x624] sm:$0xff]
        %v537 = vld [vmem:[#allocation6 + $0x62c] sm:$0xf]
        %v538 = vld [vmem:[#allocation6 + $0x630] sm:$0xff]
        %v539 = vld [vmem:[#allocation6 + $0x638] sm:$0xff]
        %v540 = vld [vmem:[#allocation6 + $0x640] sm:$0xff]
        %v541 = vld [vmem:[#allocation6 + $0x648] sm:$0xff]
        %v542 = vld [vmem:[#allocation6 + $0x650] sm:$0xf]
        %v543 = vld [vmem:[#allocation6 + $0x654] sm:$0xff]
        %v544 = vld [vmem:[#allocation6 + $0x65c] sm:$0xff]
        %v545 = vld [vmem:[#allocation6 + $0x664] sm:$0xff]
        %v546 = vld [vmem:[#allocation6 + $0x66c] sm:$0xff]
        %v547 = vld [vmem:[#allocation6 + $0x674] sm:$0xf]
        %v548 = vld [vmem:[#allocation6 + $0x678] sm:$0xff]
        %v549 = vld [vmem:[#allocation6 + $0x680] sm:$0xff]
        %v550 = vld [vmem:[#allocation6 + $0x688] sm:$0xff]
        %v551 = vld [vmem:[#allocation6 + $0x690] sm:$0xff]
        %v552 = vld [vmem:[#allocation6 + $0x698] sm:$0xf]
        %v553 = vld [vmem:[#allocation6 + $0x69c] sm:$0xff]
        %v554 = vld [vmem:[#allocation6 + $0x6a4] sm:$0xff]
        %v555 = vld [vmem:[#allocation6 + $0x6ac] sm:$0xff]
        %v556 = vld [vmem:[#allocation6 + $0x6b4] sm:$0xff]
        %v557 = vld [vmem:[#allocation6 + $0x6bc] sm:$0xf]
        %v798 = vunpack.c.l.b16 %v318
        %v799 = vunpack.c.h.b16 %v318
        %v800 = vunpack.c.l.b16 %v319
        %v801 = vunpack.c.h.b16 %v319
        %v802 = vunpack.c.l.b16 %v320
        %v803 = vunpack.c.h.b16 %v320
        %v804 = vunpack.c.l.b16 %v321
        %v805 = vunpack.c.h.b16 %v321
        %v806 = vunpack.c.l.b16 %v322
        %v807 = vunpack.c.l.b16 %v323
        %v808 = vunpack.c.h.b16 %v323
        %v809 = vunpack.c.l.b16 %v324
        %v810 = vunpack.c.h.b16 %v324
        %v811 = vunpack.c.l.b16 %v325
        %v812 = vunpack.c.h.b16 %v325
        %v813 = vunpack.c.l.b16 %v326
        %v814 = vunpack.c.h.b16 %v326
        %v815 = vunpack.c.l.b16 %v327
        %v816 = vunpack.c.l.b16 %v328
        %v817 = vunpack.c.h.b16 %v328
        %v818 = vunpack.c.l.b16 %v329
        %v819 = vunpack.c.h.b16 %v329
        %v820 = vunpack.c.l.b16 %v330
        %v821 = vunpack.c.h.b16 %v330
        %v822 = vunpack.c.l.b16 %v331
        %v823 = vunpack.c.h.b16 %v331
        %v824 = vunpack.c.l.b16 %v332
        %v825 = vunpack.c.l.b16 %v333
        %v826 = vunpack.c.h.b16 %v333
        %v827 = vunpack.c.l.b16 %v334
        %v828 = vunpack.c.h.b16 %v334
        %v829 = vunpack.c.l.b16 %v335
        %v830 = vunpack.c.h.b16 %v335
        %v831 = vunpack.c.l.b16 %v336
        %v832 = vunpack.c.h.b16 %v336
        %v833 = vunpack.c.l.b16 %v337
        %v834 = vunpack.c.l.b16 %v338
        %v835 = vunpack.c.h.b16 %v338
        %v836 = vunpack.c.l.b16 %v339
        %v837 = vunpack.c.h.b16 %v339
        %v838 = vunpack.c.l.b16 %v340
        %v839 = vunpack.c.h.b16 %v340
        %v840 = vunpack.c.l.b16 %v341
        %v841 = vunpack.c.h.b16 %v341
        %v842 = vunpack.c.l.b16 %v342
        %v843 = vunpack.c.l.b16 %v343
        %v844 = vunpack.c.h.b16 %v343
        %v845 = vunpack.c.l.b16 %v344
        %v846 = vunpack.c.h.b16 %v344
        %v847 = vunpack.c.l.b16 %v345
        %v848 = vunpack.c.h.b16 %v345
        %v849 = vunpack.c.l.b16 %v346
        %v850 = vunpack.c.h.b16 %v346
        %v851 = vunpack.c.l.b16 %v347
        %v852 = vunpack.c.l.b16 %v348
        %v853 = vunpack.c.h.b16 %v348
        %v854 = vunpack.c.l.b16 %v349
        %v855 = vunpack.c.h.b16 %v349
        %v856 = vunpack.c.l.b16 %v350
        %v857 = vunpack.c.h.b16 %v350
        %v858 = vunpack.c.l.b16 %v351
        %v859 = vunpack.c.h.b16 %v351
        %v860 = vunpack.c.l.b16 %v352
        %v861 = vunpack.c.l.b16 %v353
        %v862 = vunpack.c.h.b16 %v353
        %v863 = vunpack.c.l.b16 %v354
        %v864 = vunpack.c.h.b16 %v354
        %v865 = vunpack.c.l.b16 %v355
        %v866 = vunpack.c.h.b16 %v355
        %v867 = vunpack.c.l.b16 %v356
        %v868 = vunpack.c.h.b16 %v356
        %v869 = vunpack.c.l.b16 %v357
        %v870 = vunpack.c.l.b16 %v358
        %v871 = vunpack.c.h.b16 %v358
        %v872 = vunpack.c.l.b16 %v359
        %v873 = vunpack.c.h.b16 %v359
        %v874 = vunpack.c.l.b16 %v360
        %v875 = vunpack.c.h.b16 %v360
        %v876 = vunpack.c.l.b16 %v361
        %v877 = vunpack.c.h.b16 %v361
        %v878 = vunpack.c.l.b16 %v362
        %v879 = vunpack.c.l.b16 %v363
        %v880 = vunpack.c.h.b16 %v363
        %v881 = vunpack.c.l.b16 %v364
        %v882 = vunpack.c.h.b16 %v364
        %v883 = vunpack.c.l.b16 %v365
        %v884 = vunpack.c.h.b16 %v365
        %v885 = vunpack.c.l.b16 %v366
        %v886 = vunpack.c.h.b16 %v366
        %v887 = vunpack.c.l.b16 %v367
        %v888 = vunpack.c.l.b16 %v368
        %v889 = vunpack.c.h.b16 %v368
        %v890 = vunpack.c.l.b16 %v369
        %v891 = vunpack.c.h.b16 %v369
        %v892 = vunpack.c.l.b16 %v370
        %v893 = vunpack.c.h.b16 %v370
        %v894 = vunpack.c.l.b16 %v371
        %v895 = vunpack.c.h.b16 %v371
        %v896 = vunpack.c.l.b16 %v372
        %v897 = vunpack.c.l.b16 %v373
        %v898 = vunpack.c.h.b16 %v373
        %v899 = vunpack.c.l.b16 %v374
        %v900 = vunpack.c.h.b16 %v374
        %v901 = vunpack.c.l.b16 %v375
        %v902 = vunpack.c.h.b16 %v375
        %v903 = vunpack.c.l.b16 %v376
        %v904 = vunpack.c.h.b16 %v376
        %v905 = vunpack.c.l.b16 %v377
        %v906 = vunpack.c.l.b16 %v378
        %v907 = vunpack.c.h.b16 %v378
        %v908 = vunpack.c.l.b16 %v379
        %v909 = vunpack.c.h.b16 %v379
        %v910 = vunpack.c.l.b16 %v380
        %v911 = vunpack.c.h.b16 %v380
        %v912 = vunpack.c.l.b16 %v381
        %v913 = vunpack.c.h.b16 %v381
        %v914 = vunpack.c.l.b16 %v382
        %v915 = vunpack.c.l.b16 %v383
        %v916 = vunpack.c.h.b16 %v383
        %v917 = vunpack.c.l.b16 %v384
        %v918 = vunpack.c.h.b16 %v384
        %v919 = vunpack.c.l.b16 %v385
        %v920 = vunpack.c.h.b16 %v385
        %v921 = vunpack.c.l.b16 %v386
        %v922 = vunpack.c.h.b16 %v386
        %v923 = vunpack.c.l.b16 %v387
        %v924 = vunpack.c.l.b16 %v388
        %v925 = vunpack.c.h.b16 %v388
        %v926 = vunpack.c.l.b16 %v389
        %v927 = vunpack.c.h.b16 %v389
        %v928 = vunpack.c.l.b16 %v390
        %v929 = vunpack.c.h.b16 %v390
        %v930 = vunpack.c.l.b16 %v391
        %v931 = vunpack.c.h.b16 %v391
        %v932 = vunpack.c.l.b16 %v392
        %v933 = vunpack.c.l.b16 %v393
        %v934 = vunpack.c.h.b16 %v393
        %v935 = vunpack.c.l.b16 %v394
        %v936 = vunpack.c.h.b16 %v394
        %v937 = vunpack.c.l.b16 %v395
        %v938 = vunpack.c.h.b16 %v395
        %v939 = vunpack.c.l.b16 %v396
        %v940 = vunpack.c.h.b16 %v396
        %v941 = vunpack.c.l.b16 %v397
        %v942 = vunpack.c.l.b16 %v398
        %v943 = vunpack.c.h.b16 %v398
        %v944 = vunpack.c.l.b16 %v399
        %v945 = vunpack.c.h.b16 %v399
        %v946 = vunpack.c.l.b16 %v400
        %v947 = vunpack.c.h.b16 %v400
        %v948 = vunpack.c.l.b16 %v401
        %v949 = vunpack.c.h.b16 %v401
        %v950 = vunpack.c.l.b16 %v402
        %v951 = vunpack.c.l.b16 %v403
        %v952 = vunpack.c.h.b16 %v403
        %v953 = vunpack.c.l.b16 %v404
        %v954 = vunpack.c.h.b16 %v404
        %v955 = vunpack.c.l.b16 %v405
        %v956 = vunpack.c.h.b16 %v405
        %v957 = vunpack.c.l.b16 %v406
        %v958 = vunpack.c.h.b16 %v406
        %v959 = vunpack.c.l.b16 %v407
        %v960 = vunpack.c.l.b16 %v408
        %v961 = vunpack.c.h.b16 %v408
        %v962 = vunpack.c.l.b16 %v409
        %v963 = vunpack.c.h.b16 %v409
        %v964 = vunpack.c.l.b16 %v410
        %v965 = vunpack.c.h.b16 %v410
        %v966 = vunpack.c.l.b16 %v411
        %v967 = vunpack.c.h.b16 %v411
        %v968 = vunpack.c.l.b16 %v412
        %v969 = vunpack.c.l.b16 %v413
        %v970 = vunpack.c.h.b16 %v413
        %v971 = vunpack.c.l.b16 %v414
        %v972 = vunpack.c.h.b16 %v414
        %v973 = vunpack.c.l.b16 %v415
        %v974 = vunpack.c.h.b16 %v415
        %v975 = vunpack.c.l.b16 %v416
        %v976 = vunpack.c.h.b16 %v416
        %v977 = vunpack.c.l.b16 %v417
        %v978 = vunpack.c.l.b16 %v418
        %v979 = vunpack.c.h.b16 %v418
        %v980 = vunpack.c.l.b16 %v419
        %v981 = vunpack.c.h.b16 %v419
        %v982 = vunpack.c.l.b16 %v420
        %v983 = vunpack.c.h.b16 %v420
        %v984 = vunpack.c.l.b16 %v421
        %v985 = vunpack.c.h.b16 %v421
        %v986 = vunpack.c.l.b16 %v422
        %v987 = vunpack.c.l.b16 %v423
        %v988 = vunpack.c.h.b16 %v423
        %v989 = vunpack.c.l.b16 %v424
        %v990 = vunpack.c.h.b16 %v424
        %v991 = vunpack.c.l.b16 %v425
        %v992 = vunpack.c.h.b16 %v425
        %v993 = vunpack.c.l.b16 %v426
        %v994 = vunpack.c.h.b16 %v426
        %v995 = vunpack.c.l.b16 %v427
        %v996 = vunpack.c.l.b16 %v428
        %v997 = vunpack.c.h.b16 %v428
        %v998 = vunpack.c.l.b16 %v429
        %v999 = vunpack.c.h.b16 %v429
        %v1000 = vunpack.c.l.b16 %v430
        %v1001 = vunpack.c.h.b16 %v430
        %v1002 = vunpack.c.l.b16 %v431
        %v1003 = vunpack.c.h.b16 %v431
        %v1004 = vunpack.c.l.b16 %v432
        %v1005 = vunpack.c.l.b16 %v433
        %v1006 = vunpack.c.h.b16 %v433
        %v1007 = vunpack.c.l.b16 %v434
        %v1008 = vunpack.c.h.b16 %v434
        %v1009 = vunpack.c.l.b16 %v435
        %v1010 = vunpack.c.h.b16 %v435
        %v1011 = vunpack.c.l.b16 %v436
        %v1012 = vunpack.c.h.b16 %v436
        %v1013 = vunpack.c.l.b16 %v437
        %v1014 = vunpack.c.l.b16 %v438
        %v1015 = vunpack.c.h.b16 %v438
        %v1016 = vunpack.c.l.b16 %v439
        %v1017 = vunpack.c.h.b16 %v439
        %v1018 = vunpack.c.l.b16 %v440
        %v1019 = vunpack.c.h.b16 %v440
        %v1020 = vunpack.c.l.b16 %v441
        %v1021 = vunpack.c.h.b16 %v441
        %v1022 = vunpack.c.l.b16 %v442
        %v1023 = vunpack.c.l.b16 %v443
        %v1024 = vunpack.c.h.b16 %v443
        %v1025 = vunpack.c.l.b16 %v444
        %v1026 = vunpack.c.h.b16 %v444
        %v1027 = vunpack.c.l.b16 %v445
        %v1028 = vunpack.c.h.b16 %v445
        %v1029 = vunpack.c.l.b16 %v446
        %v1030 = vunpack.c.h.b16 %v446
        %v1031 = vunpack.c.l.b16 %v447
        %v1032 = vunpack.c.l.b16 %v448
        %v1033 = vunpack.c.h.b16 %v448
        %v1034 = vunpack.c.l.b16 %v449
        %v1035 = vunpack.c.h.b16 %v449
        %v1036 = vunpack.c.l.b16 %v450
        %v1037 = vunpack.c.h.b16 %v450
        %v1038 = vunpack.c.l.b16 %v451
        %v1039 = vunpack.c.h.b16 %v451
        %v1040 = vunpack.c.l.b16 %v452
        %v1041 = vunpack.c.l.b16 %v453
        %v1042 = vunpack.c.h.b16 %v453
        %v1043 = vunpack.c.l.b16 %v454
        %v1044 = vunpack.c.h.b16 %v454
        %v1045 = vunpack.c.l.b16 %v455
        %v1046 = vunpack.c.h.b16 %v455
        %v1047 = vunpack.c.l.b16 %v456
        %v1048 = vunpack.c.h.b16 %v456
        %v1049 = vunpack.c.l.b16 %v457
        %v1050 = vunpack.c.l.b16 %v458
        %v1051 = vunpack.c.h.b16 %v458
        %v1052 = vunpack.c.l.b16 %v459
        %v1053 = vunpack.c.h.b16 %v459
        %v1054 = vunpack.c.l.b16 %v460
        %v1055 = vunpack.c.h.b16 %v460
        %v1056 = vunpack.c.l.b16 %v461
        %v1057 = vunpack.c.h.b16 %v461
        %v1058 = vunpack.c.l.b16 %v462
        %v1059 = vunpack.c.l.b16 %v463
        %v1060 = vunpack.c.h.b16 %v463
        %v1061 = vunpack.c.l.b16 %v464
        %v1062 = vunpack.c.h.b16 %v464
        %v1063 = vunpack.c.l.b16 %v465
        %v1064 = vunpack.c.h.b16 %v465
        %v1065 = vunpack.c.l.b16 %v466
        %v1066 = vunpack.c.h.b16 %v466
        %v1067 = vunpack.c.l.b16 %v467
        %v1068 = vunpack.c.l.b16 %v468
        %v1069 = vunpack.c.h.b16 %v468
        %v1070 = vunpack.c.l.b16 %v469
        %v1071 = vunpack.c.h.b16 %v469
        %v1072 = vunpack.c.l.b16 %v470
        %v1073 = vunpack.c.h.b16 %v470
        %v1074 = vunpack.c.l.b16 %v471
        %v1075 = vunpack.c.h.b16 %v471
        %v1076 = vunpack.c.l.b16 %v472
        %v1077 = vunpack.c.l.b16 %v473
        %v1078 = vunpack.c.h.b16 %v473
        %v1079 = vunpack.c.l.b16 %v474
        %v1080 = vunpack.c.h.b16 %v474
        %v1081 = vunpack.c.l.b16 %v475
        %v1082 = vunpack.c.h.b16 %v475
        %v1083 = vunpack.c.l.b16 %v476
        %v1084 = vunpack.c.h.b16 %v476
        %v1085 = vunpack.c.l.b16 %v477
        %v1086 = vunpack.c.l.b16 %v478
        %v1087 = vunpack.c.h.b16 %v478
        %v1088 = vunpack.c.l.b16 %v479
        %v1089 = vunpack.c.h.b16 %v479
        %v1090 = vunpack.c.l.b16 %v480
        %v1091 = vunpack.c.h.b16 %v480
        %v1092 = vunpack.c.l.b16 %v481
        %v1093 = vunpack.c.h.b16 %v481
        %v1094 = vunpack.c.l.b16 %v482
        %v1095 = vunpack.c.l.b16 %v483
        %v1096 = vunpack.c.h.b16 %v483
        %v1097 = vunpack.c.l.b16 %v484
        %v1098 = vunpack.c.h.b16 %v484
        %v1099 = vunpack.c.l.b16 %v485
        %v1100 = vunpack.c.h.b16 %v485
        %v1101 = vunpack.c.l.b16 %v486
        %v1102 = vunpack.c.h.b16 %v486
        %v1103 = vunpack.c.l.b16 %v487
        %v1104 = vunpack.c.l.b16 %v488
        %v1105 = vunpack.c.h.b16 %v488
        %v1106 = vunpack.c.l.b16 %v489
        %v1107 = vunpack.c.h.b16 %v489
        %v1108 = vunpack.c.l.b16 %v490
        %v1109 = vunpack.c.h.b16 %v490
        %v1110 = vunpack.c.l.b16 %v491
        %v1111 = vunpack.c.h.b16 %v491
        %v1112 = vunpack.c.l.b16 %v492
        %v1113 = vunpack.c.l.b16 %v493
        %v1114 = vunpack.c.h.b16 %v493
        %v1115 = vunpack.c.l.b16 %v494
        %v1116 = vunpack.c.h.b16 %v494
        %v1117 = vunpack.c.l.b16 %v495
        %v1118 = vunpack.c.h.b16 %v495
        %v1119 = vunpack.c.l.b16 %v496
        %v1120 = vunpack.c.h.b16 %v496
        %v1121 = vunpack.c.l.b16 %v497
        %v1122 = vunpack.c.l.b16 %v498
        %v1123 = vunpack.c.h.b16 %v498
        %v1124 = vunpack.c.l.b16 %v499
        %v1125 = vunpack.c.h.b16 %v499
        %v1126 = vunpack.c.l.b16 %v500
        %v1127 = vunpack.c.h.b16 %v500
        %v1128 = vunpack.c.l.b16 %v501
        %v1129 = vunpack.c.h.b16 %v501
        %v1130 = vunpack.c.l.b16 %v502
        %v1131 = vunpack.c.l.b16 %v503
        %v1132 = vunpack.c.h.b16 %v503
        %v1133 = vunpack.c.l.b16 %v504
        %v1134 = vunpack.c.h.b16 %v504
        %v1135 = vunpack.c.l.b16 %v505
        %v1136 = vunpack.c.h.b16 %v505
        %v1137 = vunpack.c.l.b16 %v506
        %v1138 = vunpack.c.h.b16 %v506
        %v1139 = vunpack.c.l.b16 %v507
        %v1140 = vunpack.c.l.b16 %v508
        %v1141 = vunpack.c.h.b16 %v508
        %v1142 = vunpack.c.l.b16 %v509
        %v1143 = vunpack.c.h.b16 %v509
        %v1144 = vunpack.c.l.b16 %v510
        %v1145 = vunpack.c.h.b16 %v510
        %v1146 = vunpack.c.l.b16 %v511
        %v1147 = vunpack.c.h.b16 %v511
        %v1148 = vunpack.c.l.b16 %v512
        %v1149 = vunpack.c.l.b16 %v513
        %v1150 = vunpack.c.h.b16 %v513
        %v1151 = vunpack.c.l.b16 %v514
        %v1152 = vunpack.c.h.b16 %v514
        %v1153 = vunpack.c.l.b16 %v515
        %v1154 = vunpack.c.h.b16 %v515
        %v1155 = vunpack.c.l.b16 %v516
        %v1156 = vunpack.c.h.b16 %v516
        %v1157 = vunpack.c.l.b16 %v517
        %v1158 = vunpack.c.l.b16 %v518
        %v1159 = vunpack.c.h.b16 %v518
        %v1160 = vunpack.c.l.b16 %v519
        %v1161 = vunpack.c.h.b16 %v519
        %v1162 = vunpack.c.l.b16 %v520
        %v1163 = vunpack.c.h.b16 %v520
        %v1164 = vunpack.c.l.b16 %v521
        %v1165 = vunpack.c.h.b16 %v521
        %v1166 = vunpack.c.l.b16 %v522
        %v1167 = vunpack.c.l.b16 %v523
        %v1168 = vunpack.c.h.b16 %v523
        %v1169 = vunpack.c.l.b16 %v524
        %v1170 = vunpack.c.h.b16 %v524
        %v1171 = vunpack.c.l.b16 %v525
        %v1172 = vunpack.c.h.b16 %v525
        %v1173 = vunpack.c.l.b16 %v526
        %v1174 = vunpack.c.h.b16 %v526
        %v1175 = vunpack.c.l.b16 %v527
        %v1176 = vunpack.c.l.b16 %v528
        %v1177 = vunpack.c.h.b16 %v528
        %v1178 = vunpack.c.l.b16 %v529
        %v1179 = vunpack.c.h.b16 %v529
        %v1180 = vunpack.c.l.b16 %v530
        %v1181 = vunpack.c.h.b16 %v530
        %v1182 = vunpack.c.l.b16 %v531
        %v1183 = vunpack.c.h.b16 %v531
        %v1184 = vunpack.c.l.b16 %v532
        %v1185 = vunpack.c.l.b16 %v533
        %v1186 = vunpack.c.h.b16 %v533
        %v1187 = vunpack.c.l.b16 %v534
        %v1188 = vunpack.c.h.b16 %v534
        %v1189 = vunpack.c.l.b16 %v535
        %v1190 = vunpack.c.h.b16 %v535
        %v1191 = vunpack.c.l.b16 %v536
        %v1192 = vunpack.c.h.b16 %v536
        %v1193 = vunpack.c.l.b16 %v537
        %v1194 = vunpack.c.l.b16 %v538
        %v1195 = vunpack.c.h.b16 %v538
        %v1196 = vunpack.c.l.b16 %v539
        %v1197 = vunpack.c.h.b16 %v539
        %v1198 = vunpack.c.l.b16 %v540
        %v1199 = vunpack.c.h.b16 %v540
        %v1200 = vunpack.c.l.b16 %v541
        %v1201 = vunpack.c.h.b16 %v541
        %v1202 = vunpack.c.l.b16 %v542
        %v1203 = vunpack.c.l.b16 %v543
        %v1204 = vunpack.c.h.b16 %v543
        %v1205 = vunpack.c.l.b16 %v544
        %v1206 = vunpack.c.h.b16 %v544
        %v1207 = vunpack.c.l.b16 %v545
        %v1208 = vunpack.c.h.b16 %v545
        %v1209 = vunpack.c.l.b16 %v546
        %v1210 = vunpack.c.h.b16 %v546
        %v1211 = vunpack.c.l.b16 %v547
        %v1212 = vunpack.c.l.b16 %v548
        %v1213 = vunpack.c.h.b16 %v548
        %v1214 = vunpack.c.l.b16 %v549
        %v1215 = vunpack.c.h.b16 %v549
        %v1216 = vunpack.c.l.b16 %v550
        %v1217 = vunpack.c.h.b16 %v550
        %v1218 = vunpack.c.l.b16 %v551
        %v1219 = vunpack.c.h.b16 %v551
        %v1220 = vunpack.c.l.b16 %v552
        %v1221 = vunpack.c.l.b16 %v553
        %v1222 = vunpack.c.h.b16 %v553
        %v1223 = vunpack.c.l.b16 %v554
        %v1224 = vunpack.c.h.b16 %v554
        %v1225 = vunpack.c.l.b16 %v555
        %v1226 = vunpack.c.h.b16 %v555
        %v1227 = vunpack.c.l.b16 %v556
        %v1228 = vunpack.c.h.b16 %v556
        %v1229 = vunpack.c.l.b16 %v557
        %v1230 = vpack.c.b16 %v807, %v798
        %v1231 = vpack.c.b16 %v808, %v799
        %v1232 = vpack.c.b16 %v809, %v800
        %v1233 = vpack.c.b16 %v810, %v801
        %v1234 = vpack.c.b16 %v811, %v802
        %v1235 = vpack.c.b16 %v812, %v803
        %v1236 = vpack.c.b16 %v813, %v804
        %v1237 = vpack.c.b16 %v814, %v805
        %v1238 = vpack.c.b16 %v815, %v806
        %v1239 = vpack.c.b16 %v825, %v816
        %v1240 = vpack.c.b16 %v826, %v817
        %v1241 = vpack.c.b16 %v827, %v818
        %v1242 = vpack.c.b16 %v828, %v819
        %v1243 = vpack.c.b16 %v829, %v820
        %v1244 = vpack.c.b16 %v830, %v821
        %v1245 = vpack.c.b16 %v831, %v822
        %v1246 = vpack.c.b16 %v832, %v823
        %v1247 = vpack.c.b16 %v833, %v824
        %v1248 = vpack.c.b16 %v843, %v834
        %v1249 = vpack.c.b16 %v844, %v835
        %v1250 = vpack.c.b16 %v845, %v836
        %v1251 = vpack.c.b16 %v846, %v837
        %v1252 = vpack.c.b16 %v847, %v838
        %v1253 = vpack.c.b16 %v848, %v839
        %v1254 = vpack.c.b16 %v849, %v840
        %v1255 = vpack.c.b16 %v850, %v841
        %v1256 = vpack.c.b16 %v851, %v842
        %v1257 = vpack.c.b16 %v861, %v852
        %v1258 = vpack.c.b16 %v862, %v853
        %v1259 = vpack.c.b16 %v863, %v854
        %v1260 = vpack.c.b16 %v864, %v855
        %v1261 = vpack.c.b16 %v865, %v856
        %v1262 = vpack.c.b16 %v866, %v857
        %v1263 = vpack.c.b16 %v867, %v858
        %v1264 = vpack.c.b16 %v868, %v859
        %v1265 = vpack.c.b16 %v869, %v860
        %v1266 = vpack.c.b16 %v879, %v870
        %v1267 = vpack.c.b16 %v880, %v871
        %v1268 = vpack.c.b16 %v881, %v872
        %v1269 = vpack.c.b16 %v882, %v873
        %v1270 = vpack.c.b16 %v883, %v874
        %v1271 = vpack.c.b16 %v884, %v875
        %v1272 = vpack.c.b16 %v885, %v876
        %v1273 = vpack.c.b16 %v886, %v877
        %v1274 = vpack.c.b16 %v887, %v878
        %v1275 = vpack.c.b16 %v897, %v888
        %v1276 = vpack.c.b16 %v898, %v889
        %v1277 = vpack.c.b16 %v899, %v890
        %v1278 = vpack.c.b16 %v900, %v891
        %v1279 = vpack.c.b16 %v901, %v892
        %v1280 = vpack.c.b16 %v902, %v893
        %v1281 = vpack.c.b16 %v903, %v894
        %v1282 = vpack.c.b16 %v904, %v895
        %v1283 = vpack.c.b16 %v905, %v896
        %v1284 = vpack.c.b16 %v915, %v906
        %v1285 = vpack.c.b16 %v916, %v907
        %v1286 = vpack.c.b16 %v917, %v908
        %v1287 = vpack.c.b16 %v918, %v909
        %v1288 = vpack.c.b16 %v919, %v910
        %v1289 = vpack.c.b16 %v920, %v911
        %v1290 = vpack.c.b16 %v921, %v912
        %v1291 = vpack.c.b16 %v922, %v913
        %v1292 = vpack.c.b16 %v923, %v914
        %v1293 = vpack.c.b16 %v933, %v924
        %v1294 = vpack.c.b16 %v934, %v925
        %v1295 = vpack.c.b16 %v935, %v926
        %v1296 = vpack.c.b16 %v936, %v927
        %v1297 = vpack.c.b16 %v937, %v928
        %v1298 = vpack.c.b16 %v938, %v929
        %v1299 = vpack.c.b16 %v939, %v930
        %v1300 = vpack.c.b16 %v940, %v931
        %v1301 = vpack.c.b16 %v941, %v932
        %v1302 = vpack.c.b16 %v951, %v942
        %v1303 = vpack.c.b16 %v952, %v943
        %v1304 = vpack.c.b16 %v953, %v944
        %v1305 = vpack.c.b16 %v954, %v945
        %v1306 = vpack.c.b16 %v955, %v946
        %v1307 = vpack.c.b16 %v956, %v947
        %v1308 = vpack.c.b16 %v957, %v948
        %v1309 = vpack.c.b16 %v958, %v949
        %v1310 = vpack.c.b16 %v959, %v950
        %v1311 = vpack.c.b16 %v969, %v960
        %v1312 = vpack.c.b16 %v970, %v961
        %v1313 = vpack.c.b16 %v971, %v962
        %v1314 = vpack.c.b16 %v972, %v963
        %v1315 = vpack.c.b16 %v973, %v964
        %v1316 = vpack.c.b16 %v974, %v965
        %v1317 = vpack.c.b16 %v975, %v966
        %v1318 = vpack.c.b16 %v976, %v967
        %v1319 = vpack.c.b16 %v977, %v968
        %v1320 = vpack.c.b16 %v987, %v978
        %v1321 = vpack.c.b16 %v988, %v979
        %v1322 = vpack.c.b16 %v989, %v980
        %v1323 = vpack.c.b16 %v990, %v981
        %v1324 = vpack.c.b16 %v991, %v982
        %v1325 = vpack.c.b16 %v992, %v983
        %v1326 = vpack.c.b16 %v993, %v984
        %v1327 = vpack.c.b16 %v994, %v985
        %v1328 = vpack.c.b16 %v995, %v986
        %v1329 = vpack.c.b16 %v1005, %v996
        %v1330 = vpack.c.b16 %v1006, %v997
        %v1331 = vpack.c.b16 %v1007, %v998
        %v1332 = vpack.c.b16 %v1008, %v999
        %v1333 = vpack.c.b16 %v1009, %v1000
        %v1334 = vpack.c.b16 %v1010, %v1001
        %v1335 = vpack.c.b16 %v1011, %v1002
        %v1336 = vpack.c.b16 %v1012, %v1003
        %v1337 = vpack.c.b16 %v1013, %v1004
        %v1338 = vpack.c.b16 %v1023, %v1014
        %v1339 = vpack.c.b16 %v1024, %v1015
        %v1340 = vpack.c.b16 %v1025, %v1016
        %v1341 = vpack.c.b16 %v1026, %v1017
        %v1342 = vpack.c.b16 %v1027, %v1018
        %v1343 = vpack.c.b16 %v1028, %v1019
        %v1344 = vpack.c.b16 %v1029, %v1020
        %v1345 = vpack.c.b16 %v1030, %v1021
        %v1346 = vpack.c.b16 %v1031, %v1022
        %v1347 = vpack.c.b16 %v1041, %v1032
        %v1348 = vpack.c.b16 %v1042, %v1033
        %v1349 = vpack.c.b16 %v1043, %v1034
        %v1350 = vpack.c.b16 %v1044, %v1035
        %v1351 = vpack.c.b16 %v1045, %v1036
        %v1352 = vpack.c.b16 %v1046, %v1037
        %v1353 = vpack.c.b16 %v1047, %v1038
        %v1354 = vpack.c.b16 %v1048, %v1039
        %v1355 = vpack.c.b16 %v1049, %v1040
        %v1356 = vpack.c.b16 %v1059, %v1050
        %v1357 = vpack.c.b16 %v1060, %v1051
        %v1358 = vpack.c.b16 %v1061, %v1052
        %v1359 = vpack.c.b16 %v1062, %v1053
        %v1360 = vpack.c.b16 %v1063, %v1054
        %v1361 = vpack.c.b16 %v1064, %v1055
        %v1362 = vpack.c.b16 %v1065, %v1056
        %v1363 = vpack.c.b16 %v1066, %v1057
        %v1364 = vpack.c.b16 %v1067, %v1058
        %v1365 = vpack.c.b16 %v1077, %v1068
        %v1366 = vpack.c.b16 %v1078, %v1069
        %v1367 = vpack.c.b16 %v1079, %v1070
        %v1368 = vpack.c.b16 %v1080, %v1071
        %v1369 = vpack.c.b16 %v1081, %v1072
        %v1370 = vpack.c.b16 %v1082, %v1073
        %v1371 = vpack.c.b16 %v1083, %v1074
        %v1372 = vpack.c.b16 %v1084, %v1075
        %v1373 = vpack.c.b16 %v1085, %v1076
        %v1374 = vpack.c.b16 %v1095, %v1086
        %v1375 = vpack.c.b16 %v1096, %v1087
        %v1376 = vpack.c.b16 %v1097, %v1088
        %v1377 = vpack.c.b16 %v1098, %v1089
        %v1378 = vpack.c.b16 %v1099, %v1090
        %v1379 = vpack.c.b16 %v1100, %v1091
        %v1380 = vpack.c.b16 %v1101, %v1092
        %v1381 = vpack.c.b16 %v1102, %v1093
        %v1382 = vpack.c.b16 %v1103, %v1094
        %v1383 = vpack.c.b16 %v1113, %v1104
        %v1384 = vpack.c.b16 %v1114, %v1105
        %v1385 = vpack.c.b16 %v1115, %v1106
        %v1386 = vpack.c.b16 %v1116, %v1107
        %v1387 = vpack.c.b16 %v1117, %v1108
        %v1388 = vpack.c.b16 %v1118, %v1109
        %v1389 = vpack.c.b16 %v1119, %v1110
        %v1390 = vpack.c.b16 %v1120, %v1111
        %v1391 = vpack.c.b16 %v1121, %v1112
        %v1392 = vpack.c.b16 %v1131, %v1122
        %v1393 = vpack.c.b16 %v1132, %v1123
        %v1394 = vpack.c.b16 %v1133, %v1124
        %v1395 = vpack.c.b16 %v1134, %v1125
        %v1396 = vpack.c.b16 %v1135, %v1126
        %v1397 = vpack.c.b16 %v1136, %v1127
        %v1398 = vpack.c.b16 %v1137, %v1128
        %v1399 = vpack.c.b16 %v1138, %v1129
        %v1400 = vpack.c.b16 %v1139, %v1130
        %v1401 = vpack.c.b16 %v1149, %v1140
        %v1402 = vpack.c.b16 %v1150, %v1141
        %v1403 = vpack.c.b16 %v1151, %v1142
        %v1404 = vpack.c.b16 %v1152, %v1143
        %v1405 = vpack.c.b16 %v1153, %v1144
        %v1406 = vpack.c.b16 %v1154, %v1145
        %v1407 = vpack.c.b16 %v1155, %v1146
        %v1408 = vpack.c.b16 %v1156, %v1147
        %v1409 = vpack.c.b16 %v1157, %v1148
        %v1410 = vpack.c.b16 %v1167, %v1158
        %v1411 = vpack.c.b16 %v1168, %v1159
        %v1412 = vpack.c.b16 %v1169, %v1160
        %v1413 = vpack.c.b16 %v1170, %v1161
        %v1414 = vpack.c.b16 %v1171, %v1162
        %v1415 = vpack.c.b16 %v1172, %v1163
        %v1416 = vpack.c.b16 %v1173, %v1164
        %v1417 = vpack.c.b16 %v1174, %v1165
        %v1418 = vpack.c.b16 %v1175, %v1166
        %v1419 = vpack.c.b16 %v1185, %v1176
        %v1420 = vpack.c.b16 %v1186, %v1177
        %v1421 = vpack.c.b16 %v1187, %v1178
        %v1422 = vpack.c.b16 %v1188, %v1179
        %v1423 = vpack.c.b16 %v1189, %v1180
        %v1424 = vpack.c.b16 %v1190, %v1181
        %v1425 = vpack.c.b16 %v1191, %v1182
        %v1426 = vpack.c.b16 %v1192, %v1183
        %v1427 = vpack.c.b16 %v1193, %v1184
        %v1428 = vpack.c.b16 %v1203, %v1194
        %v1429 = vpack.c.b16 %v1204, %v1195
        %v1430 = vpack.c.b16 %v1205, %v1196
        %v1431 = vpack.c.b16 %v1206, %v1197
        %v1432 = vpack.c.b16 %v1207, %v1198
        %v1433 = vpack.c.b16 %v1208, %v1199
        %v1434 = vpack.c.b16 %v1209, %v1200
        %v1435 = vpack.c.b16 %v1210, %v1201
        %v1436 = vpack.c.b16 %v1211, %v1202
        %v1437 = vpack.c.b16 %v1221, %v1212
        %v1438 = vpack.c.b16 %v1222, %v1213
        %v1439 = vpack.c.b16 %v1223, %v1214
        %v1440 = vpack.c.b16 %v1224, %v1215
        %v1441 = vpack.c.b16 %v1225, %v1216
        %v1442 = vpack.c.b16 %v1226, %v1217
        %v1443 = vpack.c.b16 %v1227, %v1218
        %v1444 = vpack.c.b16 %v1228, %v1219
        %v1445 = vpack.c.b16 %v1229, %v1220
        %1662 = vmatprep.subr.bf16.mxu0 %v1231
        %1663 = vmatpush1.bf16.msra.mxu0 %v1230
        %1664 = vmatprep.subr.bf16.mxu0 %v1240
        %1665 = vmatpush1.bf16.msra.mxu0 %v1239
        %1666 = vmatprep.subr.bf16.mxu0 %v1249
        %1667 = vmatpush1.bf16.msra.mxu0 %v1248
        %1668 = vmatprep.subr.bf16.mxu0 %v1258
        %1669 = vmatpush1.bf16.msra.mxu0 %v1257
        %1670 = vmatprep.subr.bf16.mxu0 %v1267
        %1671 = vmatpush1.bf16.msra.mxu0 %v1266
        %1672 = vmatprep.subr.bf16.mxu0 %v1276
        %1673 = vmatpush1.bf16.msra.mxu0 %v1275
        %1674 = vmatprep.subr.bf16.mxu0 %v1285
        %1675 = vmatpush1.bf16.msra.mxu0 %v1284
        %1676 = vmatprep.subr.bf16.mxu0 %v1294
        %1677 = vmatpush1.bf16.msra.mxu0 %v1293
        %1678 = vmatprep.subr.bf16.mxu0 %v1303
        %1679 = vmatpush1.bf16.msra.mxu0 %v1302
        %1680 = vmatprep.subr.bf16.mxu0 %v1312
        %1681 = vmatpush1.bf16.msra.mxu0 %v1311
        %1682 = vmatprep.subr.bf16.mxu0 %v1321
        %1683 = vmatpush1.bf16.msra.mxu0 %v1320
        %1684 = vmatprep.subr.bf16.mxu0 %v1330
        %1685 = vmatpush1.bf16.msra.mxu0 %v1329
        %1686 = vmatprep.subr.bf16.mxu0 %v1339
        %1687 = vmatpush1.bf16.msra.mxu0 %v1338
        %1688 = vmatprep.subr.bf16.mxu0 %v1348
        %1689 = vmatpush1.bf16.msra.mxu0 %v1347
        %1690 = vmatprep.subr.bf16.mxu0 %v1357
        %1691 = vmatpush1.bf16.msra.mxu0 %v1356
        %1692 = vmatprep.subr.bf16.mxu0 %v1366
        %1693 = vmatpush1.bf16.msra.mxu0 %v1365
        %1694 = vmatprep.mubr.bf16.mxu0 %v295
        %1695 = vmatmul.mubr.bf16.gmra.mrb[0].mxu0 %v294
        %v1696 = vpop.f32.mrb[0].mxu0
        %v1697 = vadd.f32 0.0, %v1696
        %v1698 = vpop.f32.mrb[0].mxu0
        %v1699 = vadd.f32 0.0, %v1698
        %v1700 = vpop.f32.mrb[0].mxu0
        %v1701 = vadd.f32 0.0, %v1700
        %v1702 = vpop.f32.mrb[0].mxu0
        %v1703 = vadd.f32 0.0, %v1702
        %1704 = vmatprep.mubr.bf16.mxu0 %v298
        %1705 = vmatmul.mubr.bf16.gmra.mrb[0].mxu0 %v297
        %v1706 = vpop.f32.mrb[0].mxu0
        %v1707 = vadd.f32 0.0, %v1706
        %v1708 = vpop.f32.mrb[0].mxu0
        %v1709 = vadd.f32 0.0, %v1708
        %v1710 = vpop.f32.mrb[0].mxu0
        %v1711 = vadd.f32 0.0, %v1710
        %v1712 = vpop.f32.mrb[0].mxu0
        %v1713 = vadd.f32 0.0, %v1712
        %1714 = vmatprep.mubr.bf16.mxu0 %v301
        %1715 = vmatmul.mubr.bf16.gmra.mrb[0].mxu0 %v300
        %v1716 = vpop.f32.mrb[0].mxu0
        %v1717 = vadd.f32 0.0, %v1716
        %v1718 = vpop.f32.mrb[0].mxu0
        %v1719 = vadd.f32 0.0, %v1718
        %v1720 = vpop.f32.mrb[0].mxu0
        %v1721 = vadd.f32 0.0, %v1720
        %v1722 = vpop.f32.mrb[0].mxu0
        %v1723 = vadd.f32 0.0, %v1722
        %1724 = vmatprep.mubr.bf16.mxu0 %v304
        %1725 = vmatmul.mubr.bf16.gmra.mrb[0].mxu0 %v303
        %v1726 = vpop.f32.mrb[0].mxu0
        %v1727 = vadd.f32 0.0, %v1726
        %v1728 = vpop.f32.mrb[0].mxu0
        %v1729 = vadd.f32 0.0, %v1728
        %v1730 = vpop.f32.mrb[0].mxu0
        %v1731 = vadd.f32 0.0, %v1730
        %v1732 = vpop.f32.mrb[0].mxu0
        %v1733 = vadd.f32 0.0, %v1732
        %1734 = vmatprep.mubr.bf16.mxu0 %v307
        %1735 = vmatmul.mubr.bf16.gmra.mrb[0].mxu0 %v306
        %v1736 = vpop.f32.mrb[0].mxu0
        %v1737 = vadd.f32 0.0, %v1736
        %v1738 = vpop.f32.mrb[0].mxu0
        %v1739 = vadd.f32 0.0, %v1738
        %v1740 = vpop.f32.mrb[0].mxu0
        %v1741 = vadd.f32 0.0, %v1740
        %v1742 = vpop.f32.mrb[0].mxu0
        %v1743 = vadd.f32 0.0, %v1742
        %1744 = vmatprep.mubr.bf16.mxu0 %v310
        %1745 = vmatmul.mubr.bf16.gmra.mrb[0].mxu0 %v309
        %v1746 = vpop.f32.mrb[0].mxu0
        %v1747 = vadd.f32 0.0, %v1746
        %v1748 = vpop.f32.mrb[0].mxu0
        %v1749 = vadd.f32 0.0, %v1748
        %v1750 = vpop.f32.mrb[0].mxu0
        %v1751 = vadd.f32 0.0, %v1750
        %v1752 = vpop.f32.mrb[0].mxu0
        %v1753 = vadd.f32 0.0, %v1752
        %1754 = vmatprep.mubr.bf16.mxu0 %v313
        %1755 = vmatmul.mubr.bf16.gmra.mrb[0].mxu0 %v312
        %v1756 = vpop.f32.mrb[0].mxu0
        %v1757 = vadd.f32 0.0, %v1756
        %v1758 = vpop.f32.mrb[0].mxu0
        %v1759 = vadd.f32 0.0, %v1758
        %v1760 = vpop.f32.mrb[0].mxu0
        %v1761 = vadd.f32 0.0, %v1760
        %v1762 = vpop.f32.mrb[0].mxu0
        %v1763 = vadd.f32 0.0, %v1762
        %1764 = vmatprep.mubr.bf16.mxu0 %v316
        %1765 = vmatmul.mubr.bf16.gmra.mrb[0].mxu0 %v315
        %v1766 = vpop.f32.mrb[0].mxu0
        %v1767 = vadd.f32 0.0, %v1766
        %v1768 = vpop.f32.mrb[0].mxu0
        %v1769 = vadd.f32 0.0, %v1768
        %v1770 = vpop.f32.mrb[0].mxu0
        %v1771 = vadd.f32 0.0, %v1770
        %v1772 = vpop.f32.mrb[0].mxu0
        %v1773 = vadd.f32 0.0, %v1772
        %1774 = vdwg.mxu0
        %1775 = vmatprep.subr.bf16.mxu0 %v1375
        %1776 = vmatpush1.bf16.msra.mxu0 %v1374
        %1777 = vmatprep.subr.bf16.mxu0 %v1384
        %1778 = vmatpush1.bf16.msra.mxu0 %v1383
        %1779 = vmatprep.subr.bf16.mxu0 %v1393
        %1780 = vmatpush1.bf16.msra.mxu0 %v1392
        %1781 = vmatprep.subr.bf16.mxu0 %v1402
        %1782 = vmatpush1.bf16.msra.mxu0 %v1401
        %1783 = vmatprep.subr.bf16.mxu0 %v1411
        %1784 = vmatpush1.bf16.msra.mxu0 %v1410
        %1785 = vmatprep.subr.bf16.mxu0 %v1420
        %1786 = vmatpush1.bf16.msra.mxu0 %v1419
        %1787 = vmatprep.subr.bf16.mxu0 %v1429
        %1788 = vmatpush1.bf16.msra.mxu0 %v1428
        %1789 = vmatprep.subr.bf16.mxu0 %v1438
        %1790 = vmatpush1.bf16.msra.mxu0 %v1437
        %1791 = vmatprep.subr.bf16.mxu0 0
        %1792 = vmatpush1.bf16.msra.mxu0 0
        %1793 = vmatprep.subr.bf16.mxu0 0
        %1794 = vmatpush1.bf16.msra.mxu0 0
        %1795 = vmatprep.subr.bf16.mxu0 0
        %1796 = vmatpush1.bf16.msra.mxu0 0
        %1797 = vmatprep.subr.bf16.mxu0 0
        %1798 = vmatpush1.bf16.msra.mxu0 0
        %1799 = vmatprep.subr.bf16.mxu0 0
        %1800 = vmatpush1.bf16.msra.mxu0 0
        %1801 = vmatprep.subr.bf16.mxu0 0
        %1802 = vmatpush1.bf16.msra.mxu0 0
        %1803 = vmatprep.subr.bf16.mxu0 0
        %1804 = vmatpush1.bf16.msra.mxu0 0
        %1805 = vmatprep.subr.bf16.mxu0 0
        %1806 = vmatpush1.bf16.msra.mxu0 0
        %1807 = vmatprep.mubr.bf16.mxu0 0
        %1808 = vmatmul.mubr.bf16.gmra.mrb[0].mxu0 %v296
        %v1809 = vpop.f32.mrb[0].mxu0
        %v1810 = vadd.f32 %v1697, %v1809
        %v1811 = vpop.f32.mrb[0].mxu0
        %v1812 = vadd.f32 %v1699, %v1811
        %v1813 = vpop.f32.mrb[0].mxu0
        %v1814 = vadd.f32 %v1701, %v1813
        %v1815 = vpop.f32.mrb[0].mxu0
        %v1816 = vadd.f32 %v1703, %v1815
        %1817 = vmatprep.mubr.bf16.mxu0 0
        %1818 = vmatmul.mubr.bf16.gmra.mrb[0].mxu0 %v299
        %v1819 = vpop.f32.mrb[0].mxu0
        %v1820 = vadd.f32 %v1707, %v1819
        %v1821 = vpop.f32.mrb[0].mxu0
        %v1822 = vadd.f32 %v1709, %v1821
        %v1823 = vpop.f32.mrb[0].mxu0
        %v1824 = vadd.f32 %v1711, %v1823
        %v1825 = vpop.f32.mrb[0].mxu0
        %v1826 = vadd.f32 %v1713, %v1825
        %1827 = vmatprep.mubr.bf16.mxu0 0
        %1828 = vmatmul.mubr.bf16.gmra.mrb[0].mxu0 %v302
        %v1829 = vpop.f32.mrb[0].mxu0
        %v1830 = vadd.f32 %v1717, %v1829
        %v1831 = vpop.f32.mrb[0].mxu0
        %v1832 = vadd.f32 %v1719, %v1831
        %v1833 = vpop.f32.mrb[0].mxu0
        %v1834 = vadd.f32 %v1721, %v1833
        %v1835 = vpop.f32.mrb[0].mxu0
        %v1836 = vadd.f32 %v1723, %v1835
        %1837 = vmatprep.mubr.bf16.mxu0 0
        %1838 = vmatmul.mubr.bf16.gmra.mrb[0].mxu0 %v305
        %v1839 = vpop.f32.mrb[0].mxu0
        %v1840 = vadd.f32 %v1727, %v1839
        %v1841 = vpop.f32.mrb[0].mxu0
        %v1842 = vadd.f32 %v1729, %v1841
        %v1843 = vpop.f32.mrb[0].mxu0
        %v1844 = vadd.f32 %v1731, %v1843
        %v1845 = vpop.f32.mrb[0].mxu0
        %v1846 = vadd.f32 %v1733, %v1845
        %1847 = vmatprep.mubr.bf16.mxu0 0
        %1848 = vmatmul.mubr.bf16.gmra.mrb[0].mxu0 %v308
        %v1849 = vpop.f32.mrb[0].mxu0
        %v1850 = vadd.f32 %v1737, %v1849
        %v1851 = vpop.f32.mrb[0].mxu0
        %v1852 = vadd.f32 %v1739, %v1851
        %v1853 = vpop.f32.mrb[0].mxu0
        %v1854 = vadd.f32 %v1741, %v1853
        %v1855 = vpop.f32.mrb[0].mxu0
        %v1856 = vadd.f32 %v1743, %v1855
        %1857 = vmatprep.mubr.bf16.mxu0 0
        %1858 = vmatmul.mubr.bf16.gmra.mrb[0].mxu0 %v311
        %v1859 = vpop.f32.mrb[0].mxu0
        %v1860 = vadd.f32 %v1747, %v1859
        %v1861 = vpop.f32.mrb[0].mxu0
        %v1862 = vadd.f32 %v1749, %v1861
        %v1863 = vpop.f32.mrb[0].mxu0
        %v1864 = vadd.f32 %v1751, %v1863
        %v1865 = vpop.f32.mrb[0].mxu0
        %v1866 = vadd.f32 %v1753, %v1865
        %1867 = vmatprep.mubr.bf16.mxu0 0
        %1868 = vmatmul.mubr.bf16.gmra.mrb[0].mxu0 %v314
        %v1869 = vpop.f32.mrb[0].mxu0
        %v1870 = vadd.f32 %v1757, %v1869
        %v1871 = vpop.f32.mrb[0].mxu0
        %v1872 = vadd.f32 %v1759, %v1871
        %v1873 = vpop.f32.mrb[0].mxu0
        %v1874 = vadd.f32 %v1761, %v1873
        %v1875 = vpop.f32.mrb[0].mxu0
        %v1876 = vadd.f32 %v1763, %v1875
        %1877 = vmatprep.mubr.bf16.mxu0 0
        %1878 = vmatmul.mubr.bf16.gmra.mrb[0].mxu0 %v317
        %v1879 = vpop.f32.mrb[0].mxu0
        %v1880 = vadd.f32 %v1767, %v1879
        %v1881 = vpop.f32.mrb[0].mxu0
        %v1882 = vadd.f32 %v1769, %v1881
        %v1883 = vpop.f32.mrb[0].mxu0
        %v1884 = vadd.f32 %v1771, %v1883
        %v1885 = vpop.f32.mrb[0].mxu0
        %v1886 = vadd.f32 %v1773, %v1885
        %1887 = vdwg.mxu0
        %1888 = vmatprep.subr.bf16.mxu0 %v1233
        %1889 = vmatpush1.bf16.msra.mxu0 %v1232
        %1890 = vmatprep.subr.bf16.mxu0 %v1242
        %1891 = vmatpush1.bf16.msra.mxu0 %v1241
        %1892 = vmatprep.subr.bf16.mxu0 %v1251
        %1893 = vmatpush1.bf16.msra.mxu0 %v1250
        %1894 = vmatprep.subr.bf16.mxu0 %v1260
        %1895 = vmatpush1.bf16.msra.mxu0 %v1259
        %1896 = vmatprep.subr.bf16.mxu0 %v1269
        %1897 = vmatpush1.bf16.msra.mxu0 %v1268
        %1898 = vmatprep.subr.bf16.mxu0 %v1278
        %1899 = vmatpush1.bf16.msra.mxu0 %v1277
        %1900 = vmatprep.subr.bf16.mxu0 %v1287
        %1901 = vmatpush1.bf16.msra.mxu0 %v1286
        %1902 = vmatprep.subr.bf16.mxu0 %v1296
        %1903 = vmatpush1.bf16.msra.mxu0 %v1295
        %1904 = vmatprep.subr.bf16.mxu0 %v1305
        %1905 = vmatpush1.bf16.msra.mxu0 %v1304
        %1906 = vmatprep.subr.bf16.mxu0 %v1314
        %1907 = vmatpush1.bf16.msra.mxu0 %v1313
        %1908 = vmatprep.subr.bf16.mxu0 %v1323
        %1909 = vmatpush1.bf16.msra.mxu0 %v1322
        %1910 = vmatprep.subr.bf16.mxu0 %v1332
        %1911 = vmatpush1.bf16.msra.mxu0 %v1331
        %1912 = vmatprep.subr.bf16.mxu0 %v1341
        %1913 = vmatpush1.bf16.msra.mxu0 %v1340
        %1914 = vmatprep.subr.bf16.mxu0 %v1350
        %1915 = vmatpush1.bf16.msra.mxu0 %v1349
        %1916 = vmatprep.subr.bf16.mxu0 %v1359
        %1917 = vmatpush1.bf16.msra.mxu0 %v1358
        %1918 = vmatprep.subr.bf16.mxu0 %v1368
        %1919 = vmatpush1.bf16.msra.mxu0 %v1367
        %1920 = vmatprep.mubr.bf16.mxu0 %v295
        %1921 = vmatmul.mubr.bf16.gmra.mrb[0].mxu0 %v294
        %v1922 = vpop.f32.mrb[0].mxu0
        %v1923 = vadd.f32 0.0, %v1922
        %v1924 = vpop.f32.mrb[0].mxu0
        %v1925 = vadd.f32 0.0, %v1924
        %v1926 = vpop.f32.mrb[0].mxu0
        %v1927 = vadd.f32 0.0, %v1926
        %v1928 = vpop.f32.mrb[0].mxu0
        %v1929 = vadd.f32 0.0, %v1928
        %1930 = vmatprep.mubr.bf16.mxu0 %v298
        %1931 = vmatmul.mubr.bf16.gmra.mrb[0].mxu0 %v297
        %v1932 = vpop.f32.mrb[0].mxu0
        %v1933 = vadd.f32 0.0, %v1932
        %v1934 = vpop.f32.mrb[0].mxu0
        %v1935 = vadd.f32 0.0, %v1934
        %v1936 = vpop.f32.mrb[0].mxu0
        %v1937 = vadd.f32 0.0, %v1936
        %v1938 = vpop.f32.mrb[0].mxu0
        %v1939 = vadd.f32 0.0, %v1938
        %1940 = vmatprep.mubr.bf16.mxu0 %v301
        %1941 = vmatmul.mubr.bf16.gmra.mrb[0].mxu0 %v300
        %v1942 = vpop.f32.mrb[0].mxu0
        %v1943 = vadd.f32 0.0, %v1942
        %v1944 = vpop.f32.mrb[0].mxu0
        %v1945 = vadd.f32 0.0, %v1944
        %v1946 = vpop.f32.mrb[0].mxu0
        %v1947 = vadd.f32 0.0, %v1946
        %v1948 = vpop.f32.mrb[0].mxu0
        %v1949 = vadd.f32 0.0, %v1948
        %1950 = vmatprep.mubr.bf16.mxu0 %v304
        %1951 = vmatmul.mubr.bf16.gmra.mrb[0].mxu0 %v303
        %v1952 = vpop.f32.mrb[0].mxu0
        %v1953 = vadd.f32 0.0, %v1952
        %v1954 = vpop.f32.mrb[0].mxu0
        %v1955 = vadd.f32 0.0, %v1954
        %v1956 = vpop.f32.mrb[0].mxu0
        %v1957 = vadd.f32 0.0, %v1956
        %v1958 = vpop.f32.mrb[0].mxu0
        %v1959 = vadd.f32 0.0, %v1958
        %1960 = vmatprep.mubr.bf16.mxu0 %v307
        %1961 = vmatmul.mubr.bf16.gmra.mrb[0].mxu0 %v306
        %v1962 = vpop.f32.mrb[0].mxu0
        %v1963 = vadd.f32 0.0, %v1962
        %v1964 = vpop.f32.mrb[0].mxu0
        %v1965 = vadd.f32 0.0, %v1964
        %v1966 = vpop.f32.mrb[0].mxu0
        %v1967 = vadd.f32 0.0, %v1966
        %v1968 = vpop.f32.mrb[0].mxu0
        %v1969 = vadd.f32 0.0, %v1968
        %1970 = vmatprep.mubr.bf16.mxu0 %v310
        %1971 = vmatmul.mubr.bf16.gmra.mrb[0].mxu0 %v309
        %v1972 = vpop.f32.mrb[0].mxu0
        %v1973 = vadd.f32 0.0, %v1972
        %v1974 = vpop.f32.mrb[0].mxu0
        %v1975 = vadd.f32 0.0, %v1974
        %v1976 = vpop.f32.mrb[0].mxu0
        %v1977 = vadd.f32 0.0, %v1976
        %v1978 = vpop.f32.mrb[0].mxu0
        %v1979 = vadd.f32 0.0, %v1978
        %1980 = vmatprep.mubr.bf16.mxu0 %v313
        %1981 = vmatmul.mubr.bf16.gmra.mrb[0].mxu0 %v312
        %v1982 = vpop.f32.mrb[0].mxu0
        %v1983 = vadd.f32 0.0, %v1982
        %v1984 = vpop.f32.mrb[0].mxu0
        %v1985 = vadd.f32 0.0, %v1984
        %v1986 = vpop.f32.mrb[0].mxu0
        %v1987 = vadd.f32 0.0, %v1986
        %v1988 = vpop.f32.mrb[0].mxu0
        %v1989 = vadd.f32 0.0, %v1988
        %1990 = vmatprep.mubr.bf16.mxu0 %v316
        %1991 = vmatmul.mubr.bf16.gmra.mrb[0].mxu0 %v315
        %v1992 = vpop.f32.mrb[0].mxu0
        %v1993 = vadd.f32 0.0, %v1992
        %v1994 = vpop.f32.mrb[0].mxu0
        %v1995 = vadd.f32 0.0, %v1994
        %v1996 = vpop.f32.mrb[0].mxu0
        %v1997 = vadd.f32 0.0, %v1996
        %v1998 = vpop.f32.mrb[0].mxu0
        %v1999 = vadd.f32 0.0, %v1998
        %2000 = vdwg.mxu0
        %2001 = vmatprep.subr.bf16.mxu0 %v1377
        %2002 = vmatpush1.bf16.msra.mxu0 %v1376
        %2003 = vmatprep.subr.bf16.mxu0 %v1386
        %2004 = vmatpush1.bf16.msra.mxu0 %v1385
        %2005 = vmatprep.subr.bf16.mxu0 %v1395
        %2006 = vmatpush1.bf16.msra.mxu0 %v1394
        %2007 = vmatprep.subr.bf16.mxu0 %v1404
        %2008 = vmatpush1.bf16.msra.mxu0 %v1403
        %2009 = vmatprep.subr.bf16.mxu0 %v1413
        %2010 = vmatpush1.bf16.msra.mxu0 %v1412
        %2011 = vmatprep.subr.bf16.mxu0 %v1422
        %2012 = vmatpush1.bf16.msra.mxu0 %v1421
        %2013 = vmatprep.subr.bf16.mxu0 %v1431
        %2014 = vmatpush1.bf16.msra.mxu0 %v1430
        %2015 = vmatprep.subr.bf16.mxu0 %v1440
        %2016 = vmatpush1.bf16.msra.mxu0 %v1439
        %2017 = vmatprep.subr.bf16.mxu0 0
        %2018 = vmatpush1.bf16.msra.mxu0 0
        %2019 = vmatprep.subr.bf16.mxu0 0
        %2020 = vmatpush1.bf16.msra.mxu0 0
        %2021 = vmatprep.subr.bf16.mxu0 0
        %2022 = vmatpush1.bf16.msra.mxu0 0
        %2023 = vmatprep.subr.bf16.mxu0 0
        %2024 = vmatpush1.bf16.msra.mxu0 0
        %2025 = vmatprep.subr.bf16.mxu0 0
        %2026 = vmatpush1.bf16.msra.mxu0 0
        %2027 = vmatprep.subr.bf16.mxu0 0
        %2028 = vmatpush1.bf16.msra.mxu0 0
        %2029 = vmatprep.subr.bf16.mxu0 0
        %2030 = vmatpush1.bf16.msra.mxu0 0
        %2031 = vmatprep.subr.bf16.mxu0 0
        %2032 = vmatpush1.bf16.msra.mxu0 0
        %2033 = vmatprep.mubr.bf16.mxu0 0
        %2034 = vmatmul.mubr.bf16.gmra.mrb[0].mxu0 %v296
        %v2035 = vpop.f32.mrb[0].mxu0
        %v2036 = vadd.f32 %v1923, %v2035
        %v2037 = vpop.f32.mrb[0].mxu0
        %v2038 = vadd.f32 %v1925, %v2037
        %v2039 = vpop.f32.mrb[0].mxu0
        %v2040 = vadd.f32 %v1927, %v2039
        %v2041 = vpop.f32.mrb[0].mxu0
        %v2042 = vadd.f32 %v1929, %v2041
        %2043 = vmatprep.mubr.bf16.mxu0 0
        %2044 = vmatmul.mubr.bf16.gmra.mrb[0].mxu0 %v299
        %v2045 = vpop.f32.mrb[0].mxu0
        %v2046 = vadd.f32 %v1933, %v2045
        %v2047 = vpop.f32.mrb[0].mxu0
        %v2048 = vadd.f32 %v1935, %v2047
        %v2049 = vpop.f32.mrb[0].mxu0
        %v2050 = vadd.f32 %v1937, %v2049
        %v2051 = vpop.f32.mrb[0].mxu0
        %v2052 = vadd.f32 %v1939, %v2051
        %2053 = vmatprep.mubr.bf16.mxu0 0
        %2054 = vmatmul.mubr.bf16.gmra.mrb[0].mxu0 %v302
        %v2055 = vpop.f32.mrb[0].mxu0
        %v2056 = vadd.f32 %v1943, %v2055
        %v2057 = vpop.f32.mrb[0].mxu0
        %v2058 = vadd.f32 %v1945, %v2057
        %v2059 = vpop.f32.mrb[0].mxu0
        %v2060 = vadd.f32 %v1947, %v2059
        %v2061 = vpop.f32.mrb[0].mxu0
        %v2062 = vadd.f32 %v1949, %v2061
        %2063 = vmatprep.mubr.bf16.mxu0 0
        %2064 = vmatmul.mubr.bf16.gmra.mrb[0].mxu0 %v305
        %v2065 = vpop.f32.mrb[0].mxu0
        %v2066 = vadd.f32 %v1953, %v2065
        %v2067 = vpop.f32.mrb[0].mxu0
        %v2068 = vadd.f32 %v1955, %v2067
        %v2069 = vpop.f32.mrb[0].mxu0
        %v2070 = vadd.f32 %v1957, %v2069
        %v2071 = vpop.f32.mrb[0].mxu0
        %v2072 = vadd.f32 %v1959, %v2071
        %2073 = vmatprep.mubr.bf16.mxu0 0
        %2074 = vmatmul.mubr.bf16.gmra.mrb[0].mxu0 %v308
        %v2075 = vpop.f32.mrb[0].mxu0
        %v2076 = vadd.f32 %v1963, %v2075
        %v2077 = vpop.f32.mrb[0].mxu0
        %v2078 = vadd.f32 %v1965, %v2077
        %v2079 = vpop.f32.mrb[0].mxu0
        %v2080 = vadd.f32 %v1967, %v2079
        %v2081 = vpop.f32.mrb[0].mxu0
        %v2082 = vadd.f32 %v1969, %v2081
        %2083 = vmatprep.mubr.bf16.mxu0 0
        %2084 = vmatmul.mubr.bf16.gmra.mrb[0].mxu0 %v311
        %v2085 = vpop.f32.mrb[0].mxu0
        %v2086 = vadd.f32 %v1973, %v2085
        %v2087 = vpop.f32.mrb[0].mxu0
        %v2088 = vadd.f32 %v1975, %v2087
        %v2089 = vpop.f32.mrb[0].mxu0
        %v2090 = vadd.f32 %v1977, %v2089
        %v2091 = vpop.f32.mrb[0].mxu0
        %v2092 = vadd.f32 %v1979, %v2091
        %2093 = vmatprep.mubr.bf16.mxu0 0
        %2094 = vmatmul.mubr.bf16.gmra.mrb[0].mxu0 %v314
        %v2095 = vpop.f32.mrb[0].mxu0
        %v2096 = vadd.f32 %v1983, %v2095
        %v2097 = vpop.f32.mrb[0].mxu0
        %v2098 = vadd.f32 %v1985, %v2097
        %v2099 = vpop.f32.mrb[0].mxu0
        %v2100 = vadd.f32 %v1987, %v2099
        %v2101 = vpop.f32.mrb[0].mxu0
        %v2102 = vadd.f32 %v1989, %v2101
        %2103 = vmatprep.mubr.bf16.mxu0 0
        %2104 = vmatmul.mubr.bf16.gmra.mrb[0].mxu0 %v317
        %v2105 = vpop.f32.mrb[0].mxu0
        %v2106 = vadd.f32 %v1993, %v2105
        %v2107 = vpop.f32.mrb[0].mxu0
        %v2108 = vadd.f32 %v1995, %v2107
        %v2109 = vpop.f32.mrb[0].mxu0
        %v2110 = vadd.f32 %v1997, %v2109
        %v2111 = vpop.f32.mrb[0].mxu0
        %v2112 = vadd.f32 %v1999, %v2111
        %2113 = vdwg.mxu0
        %2114 = vmatprep.subr.bf16.mxu0 %v1235
        %2115 = vmatpush1.bf16.msra.mxu0 %v1234
        %2116 = vmatprep.subr.bf16.mxu0 %v1244
        %2117 = vmatpush1.bf16.msra.mxu0 %v1243
        %2118 = vmatprep.subr.bf16.mxu0 %v1253
        %2119 = vmatpush1.bf16.msra.mxu0 %v1252
        %2120 = vmatprep.subr.bf16.mxu0 %v1262
        %2121 = vmatpush1.bf16.msra.mxu0 %v1261
        %2122 = vmatprep.subr.bf16.mxu0 %v1271
        %2123 = vmatpush1.bf16.msra.mxu0 %v1270
        %2124 = vmatprep.subr.bf16.mxu0 %v1280
        %2125 = vmatpush1.bf16.msra.mxu0 %v1279
        %2126 = vmatprep.subr.bf16.mxu0 %v1289
        %2127 = vmatpush1.bf16.msra.mxu0 %v1288
        %2128 = vmatprep.subr.bf16.mxu0 %v1298
        %2129 = vmatpush1.bf16.msra.mxu0 %v1297
        %2130 = vmatprep.subr.bf16.mxu0 %v1307
        %2131 = vmatpush1.bf16.msra.mxu0 %v1306
        %2132 = vmatprep.subr.bf16.mxu0 %v1316
        %2133 = vmatpush1.bf16.msra.mxu0 %v1315
        %2134 = vmatprep.subr.bf16.mxu0 %v1325
        %2135 = vmatpush1.bf16.msra.mxu0 %v1324
        %2136 = vmatprep.subr.bf16.mxu0 %v1334
        %2137 = vmatpush1.bf16.msra.mxu0 %v1333
        %2138 = vmatprep.subr.bf16.mxu0 %v1343
        %2139 = vmatpush1.bf16.msra.mxu0 %v1342
        %2140 = vmatprep.subr.bf16.mxu0 %v1352
        %2141 = vmatpush1.bf16.msra.mxu0 %v1351
        %2142 = vmatprep.subr.bf16.mxu0 %v1361
        %2143 = vmatpush1.bf16.msra.mxu0 %v1360
        %2144 = vmatprep.subr.bf16.mxu0 %v1370
        %2145 = vmatpush1.bf16.msra.mxu0 %v1369
        %2146 = vmatprep.mubr.bf16.mxu0 %v295
        %2147 = vmatmul.mubr.bf16.gmra.mrb[0].mxu0 %v294
        %v2148 = vpop.f32.mrb[0].mxu0
        %v2149 = vadd.f32 0.0, %v2148
        %v2150 = vpop.f32.mrb[0].mxu0
        %v2151 = vadd.f32 0.0, %v2150
        %v2152 = vpop.f32.mrb[0].mxu0
        %v2153 = vadd.f32 0.0, %v2152
        %v2154 = vpop.f32.mrb[0].mxu0
        %v2155 = vadd.f32 0.0, %v2154
        %2156 = vmatprep.mubr.bf16.mxu0 %v298
        %2157 = vmatmul.mubr.bf16.gmra.mrb[0].mxu0 %v297
        %v2158 = vpop.f32.mrb[0].mxu0
        %v2159 = vadd.f32 0.0, %v2158
        %v2160 = vpop.f32.mrb[0].mxu0
        %v2161 = vadd.f32 0.0, %v2160
        %v2162 = vpop.f32.mrb[0].mxu0
        %v2163 = vadd.f32 0.0, %v2162
        %v2164 = vpop.f32.mrb[0].mxu0
        %v2165 = vadd.f32 0.0, %v2164
        %2166 = vmatprep.mubr.bf16.mxu0 %v301
        %2167 = vmatmul.mubr.bf16.gmra.mrb[0].mxu0 %v300
        %v2168 = vpop.f32.mrb[0].mxu0
        %v2169 = vadd.f32 0.0, %v2168
        %v2170 = vpop.f32.mrb[0].mxu0
        %v2171 = vadd.f32 0.0, %v2170
        %v2172 = vpop.f32.mrb[0].mxu0
        %v2173 = vadd.f32 0.0, %v2172
        %v2174 = vpop.f32.mrb[0].mxu0
        %v2175 = vadd.f32 0.0, %v2174
        %2176 = vmatprep.mubr.bf16.mxu0 %v304
        %2177 = vmatmul.mubr.bf16.gmra.mrb[0].mxu0 %v303
        %v2178 = vpop.f32.mrb[0].mxu0
        %v2179 = vadd.f32 0.0, %v2178
        %v2180 = vpop.f32.mrb[0].mxu0
        %v2181 = vadd.f32 0.0, %v2180
        %v2182 = vpop.f32.mrb[0].mxu0
        %v2183 = vadd.f32 0.0, %v2182
        %v2184 = vpop.f32.mrb[0].mxu0
        %v2185 = vadd.f32 0.0, %v2184
        %2186 = vmatprep.mubr.bf16.mxu0 %v307
        %2187 = vmatmul.mubr.bf16.gmra.mrb[0].mxu0 %v306
        %v2188 = vpop.f32.mrb[0].mxu0
        %v2189 = vadd.f32 0.0, %v2188
        %v2190 = vpop.f32.mrb[0].mxu0
        %v2191 = vadd.f32 0.0, %v2190
        %v2192 = vpop.f32.mrb[0].mxu0
        %v2193 = vadd.f32 0.0, %v2192
        %v2194 = vpop.f32.mrb[0].mxu0
        %v2195 = vadd.f32 0.0, %v2194
        %2196 = vmatprep.mubr.bf16.mxu0 %v310
        %2197 = vmatmul.mubr.bf16.gmra.mrb[0].mxu0 %v309
        %v2198 = vpop.f32.mrb[0].mxu0
        %v2199 = vadd.f32 0.0, %v2198
        %v2200 = vpop.f32.mrb[0].mxu0
        %v2201 = vadd.f32 0.0, %v2200
        %v2202 = vpop.f32.mrb[0].mxu0
        %v2203 = vadd.f32 0.0, %v2202
        %v2204 = vpop.f32.mrb[0].mxu0
        %v2205 = vadd.f32 0.0, %v2204
        %2206 = vmatprep.mubr.bf16.mxu0 %v313
        %2207 = vmatmul.mubr.bf16.gmra.mrb[0].mxu0 %v312
        %v2208 = vpop.f32.mrb[0].mxu0
        %v2209 = vadd.f32 0.0, %v2208
        %v2210 = vpop.f32.mrb[0].mxu0
        %v2211 = vadd.f32 0.0, %v2210
        %v2212 = vpop.f32.mrb[0].mxu0
        %v2213 = vadd.f32 0.0, %v2212
        %v2214 = vpop.f32.mrb[0].mxu0
        %v2215 = vadd.f32 0.0, %v2214
        %2216 = vmatprep.mubr.bf16.mxu0 %v316
        %2217 = vmatmul.mubr.bf16.gmra.mrb[0].mxu0 %v315
        %v2218 = vpop.f32.mrb[0].mxu0
        %v2219 = vadd.f32 0.0, %v2218
        %v2220 = vpop.f32.mrb[0].mxu0
        %v2221 = vadd.f32 0.0, %v2220
        %v2222 = vpop.f32.mrb[0].mxu0
        %v2223 = vadd.f32 0.0, %v2222
        %v2224 = vpop.f32.mrb[0].mxu0
        %v2225 = vadd.f32 0.0, %v2224
        %2226 = vdwg.mxu0
        %2227 = vmatprep.subr.bf16.mxu0 %v1379
        %2228 = vmatpush1.bf16.msra.mxu0 %v1378
        %2229 = vmatprep.subr.bf16.mxu0 %v1388
        %2230 = vmatpush1.bf16.msra.mxu0 %v1387
        %2231 = vmatprep.subr.bf16.mxu0 %v1397
        %2232 = vmatpush1.bf16.msra.mxu0 %v1396
        %2233 = vmatprep.subr.bf16.mxu0 %v1406
        %2234 = vmatpush1.bf16.msra.mxu0 %v1405
        %2235 = vmatprep.subr.bf16.mxu0 %v1415
        %2236 = vmatpush1.bf16.msra.mxu0 %v1414
        %2237 = vmatprep.subr.bf16.mxu0 %v1424
        %2238 = vmatpush1.bf16.msra.mxu0 %v1423
        %2239 = vmatprep.subr.bf16.mxu0 %v1433
        %2240 = vmatpush1.bf16.msra.mxu0 %v1432
        %2241 = vmatprep.subr.bf16.mxu0 %v1442
        %2242 = vmatpush1.bf16.msra.mxu0 %v1441
        %2243 = vmatprep.subr.bf16.mxu0 0
        %2244 = vmatpush1.bf16.msra.mxu0 0
        %2245 = vmatprep.subr.bf16.mxu0 0
        %2246 = vmatpush1.bf16.msra.mxu0 0
        %2247 = vmatprep.subr.bf16.mxu0 0
        %2248 = vmatpush1.bf16.msra.mxu0 0
        %2249 = vmatprep.subr.bf16.mxu0 0
        %2250 = vmatpush1.bf16.msra.mxu0 0
        %2251 = vmatprep.subr.bf16.mxu0 0
        %2252 = vmatpush1.bf16.msra.mxu0 0
        %2253 = vmatprep.subr.bf16.mxu0 0
        %2254 = vmatpush1.bf16.msra.mxu0 0
        %2255 = vmatprep.subr.bf16.mxu0 0
        %2256 = vmatpush1.bf16.msra.mxu0 0
        %2257 = vmatprep.subr.bf16.mxu0 0
        %2258 = vmatpush1.bf16.msra.mxu0 0
        %2259 = vmatprep.mubr.bf16.mxu0 0
        %2260 = vmatmul.mubr.bf16.gmra.mrb[0].mxu0 %v296
        %v2261 = vpop.f32.mrb[0].mxu0
        %v2262 = vadd.f32 %v2149, %v2261
        %v2263 = vpop.f32.mrb[0].mxu0
        %v2264 = vadd.f32 %v2151, %v2263
        %v2265 = vpop.f32.mrb[0].mxu0
        %v2266 = vadd.f32 %v2153, %v2265
        %v2267 = vpop.f32.mrb[0].mxu0
        %v2268 = vadd.f32 %v2155, %v2267
        %2269 = vmatprep.mubr.bf16.mxu0 0
        %2270 = vmatmul.mubr.bf16.gmra.mrb[0].mxu0 %v299
        %v2271 = vpop.f32.mrb[0].mxu0
        %v2272 = vadd.f32 %v2159, %v2271
        %v2273 = vpop.f32.mrb[0].mxu0
        %v2274 = vadd.f32 %v2161, %v2273
        %v2275 = vpop.f32.mrb[0].mxu0
        %v2276 = vadd.f32 %v2163, %v2275
        %v2277 = vpop.f32.mrb[0].mxu0
        %v2278 = vadd.f32 %v2165, %v2277
        %2279 = vmatprep.mubr.bf16.mxu0 0
        %2280 = vmatmul.mubr.bf16.gmra.mrb[0].mxu0 %v302
        %v2281 = vpop.f32.mrb[0].mxu0
        %v2282 = vadd.f32 %v2169, %v2281
        %v2283 = vpop.f32.mrb[0].mxu0
        %v2284 = vadd.f32 %v2171, %v2283
        %v2285 = vpop.f32.mrb[0].mxu0
        %v2286 = vadd.f32 %v2173, %v2285
        %v2287 = vpop.f32.mrb[0].mxu0
        %v2288 = vadd.f32 %v2175, %v2287
        %2289 = vmatprep.mubr.bf16.mxu0 0
        %2290 = vmatmul.mubr.bf16.gmra.mrb[0].mxu0 %v305
        %v2291 = vpop.f32.mrb[0].mxu0
        %v2292 = vadd.f32 %v2179, %v2291
        %v2293 = vpop.f32.mrb[0].mxu0
        %v2294 = vadd.f32 %v2181, %v2293
        %v2295 = vpop.f32.mrb[0].mxu0
        %v2296 = vadd.f32 %v2183, %v2295
        %v2297 = vpop.f32.mrb[0].mxu0
        %v2298 = vadd.f32 %v2185, %v2297
        %2299 = vmatprep.mubr.bf16.mxu0 0
        %2300 = vmatmul.mubr.bf16.gmra.mrb[0].mxu0 %v308
        %v2301 = vpop.f32.mrb[0].mxu0
        %v2302 = vadd.f32 %v2189, %v2301
        %v2303 = vpop.f32.mrb[0].mxu0
        %v2304 = vadd.f32 %v2191, %v2303
        %v2305 = vpop.f32.mrb[0].mxu0
        %v2306 = vadd.f32 %v2193, %v2305
        %v2307 = vpop.f32.mrb[0].mxu0
        %v2308 = vadd.f32 %v2195, %v2307
        %2309 = vmatprep.mubr.bf16.mxu0 0
        %2310 = vmatmul.mubr.bf16.gmra.mrb[0].mxu0 %v311
        %v2311 = vpop.f32.mrb[0].mxu0
        %v2312 = vadd.f32 %v2199, %v2311
        %v2313 = vpop.f32.mrb[0].mxu0
        %v2314 = vadd.f32 %v2201, %v2313
        %v2315 = vpop.f32.mrb[0].mxu0
        %v2316 = vadd.f32 %v2203, %v2315
        %v2317 = vpop.f32.mrb[0].mxu0
        %v2318 = vadd.f32 %v2205, %v2317
        %2319 = vmatprep.mubr.bf16.mxu0 0
        %2320 = vmatmul.mubr.bf16.gmra.mrb[0].mxu0 %v314
        %v2321 = vpop.f32.mrb[0].mxu0
        %v2322 = vadd.f32 %v2209, %v2321
        %v2323 = vpop.f32.mrb[0].mxu0
        %v2324 = vadd.f32 %v2211, %v2323
        %v2325 = vpop.f32.mrb[0].mxu0
        %v2326 = vadd.f32 %v2213, %v2325
        %v2327 = vpop.f32.mrb[0].mxu0
        %v2328 = vadd.f32 %v2215, %v2327
        %2329 = vmatprep.mubr.bf16.mxu0 0
        %2330 = vmatmul.mubr.bf16.gmra.mrb[0].mxu0 %v317
        %v2331 = vpop.f32.mrb[0].mxu0
        %v2332 = vadd.f32 %v2219, %v2331
        %v2333 = vpop.f32.mrb[0].mxu0
        %v2334 = vadd.f32 %v2221, %v2333
        %v2335 = vpop.f32.mrb[0].mxu0
        %v2336 = vadd.f32 %v2223, %v2335
        %v2337 = vpop.f32.mrb[0].mxu0
        %v2338 = vadd.f32 %v2225, %v2337
        %2339 = vdwg.mxu0
        %2340 = vmatprep.subr.bf16.mxu0 %v1237
        %2341 = vmatpush1.bf16.msra.mxu0 %v1236
        %2342 = vmatprep.subr.bf16.mxu0 %v1246
        %2343 = vmatpush1.bf16.msra.mxu0 %v1245
        %2344 = vmatprep.subr.bf16.mxu0 %v1255
        %2345 = vmatpush1.bf16.msra.mxu0 %v1254
        %2346 = vmatprep.subr.bf16.mxu0 %v1264
        %2347 = vmatpush1.bf16.msra.mxu0 %v1263
        %2348 = vmatprep.subr.bf16.mxu0 %v1273
        %2349 = vmatpush1.bf16.msra.mxu0 %v1272
        %2350 = vmatprep.subr.bf16.mxu0 %v1282
        %2351 = vmatpush1.bf16.msra.mxu0 %v1281
        %2352 = vmatprep.subr.bf16.mxu0 %v1291
        %2353 = vmatpush1.bf16.msra.mxu0 %v1290
        %2354 = vmatprep.subr.bf16.mxu0 %v1300
        %2355 = vmatpush1.bf16.msra.mxu0 %v1299
        %2356 = vmatprep.subr.bf16.mxu0 %v1309
        %2357 = vmatpush1.bf16.msra.mxu0 %v1308
        %2358 = vmatprep.subr.bf16.mxu0 %v1318
        %2359 = vmatpush1.bf16.msra.mxu0 %v1317
        %2360 = vmatprep.subr.bf16.mxu0 %v1327
        %2361 = vmatpush1.bf16.msra.mxu0 %v1326
        %2362 = vmatprep.subr.bf16.mxu0 %v1336
        %2363 = vmatpush1.bf16.msra.mxu0 %v1335
        %2364 = vmatprep.subr.bf16.mxu0 %v1345
        %2365 = vmatpush1.bf16.msra.mxu0 %v1344
        %2366 = vmatprep.subr.bf16.mxu0 %v1354
        %2367 = vmatpush1.bf16.msra.mxu0 %v1353
        %2368 = vmatprep.subr.bf16.mxu0 %v1363
        %2369 = vmatpush1.bf16.msra.mxu0 %v1362
        %2370 = vmatprep.subr.bf16.mxu0 %v1372
        %2371 = vmatpush1.bf16.msra.mxu0 %v1371
        %2372 = vmatprep.mubr.bf16.mxu0 %v295
        %2373 = vmatmul.mubr.bf16.gmra.mrb[0].mxu0 %v294
        %v2374 = vpop.f32.mrb[0].mxu0
        %v2375 = vadd.f32 0.0, %v2374
        %v2376 = vpop.f32.mrb[0].mxu0
        %v2377 = vadd.f32 0.0, %v2376
        %v2378 = vpop.f32.mrb[0].mxu0
        %v2379 = vadd.f32 0.0, %v2378
        %v2380 = vpop.f32.mrb[0].mxu0
        %v2381 = vadd.f32 0.0, %v2380
        %2382 = vmatprep.mubr.bf16.mxu0 %v298
        %2383 = vmatmul.mubr.bf16.gmra.mrb[0].mxu0 %v297
        %v2384 = vpop.f32.mrb[0].mxu0
        %v2385 = vadd.f32 0.0, %v2384
        %v2386 = vpop.f32.mrb[0].mxu0
        %v2387 = vadd.f32 0.0, %v2386
        %v2388 = vpop.f32.mrb[0].mxu0
        %v2389 = vadd.f32 0.0, %v2388
        %v2390 = vpop.f32.mrb[0].mxu0
        %v2391 = vadd.f32 0.0, %v2390
        %2392 = vmatprep.mubr.bf16.mxu0 %v301
        %2393 = vmatmul.mubr.bf16.gmra.mrb[0].mxu0 %v300
        %v2394 = vpop.f32.mrb[0].mxu0
        %v2395 = vadd.f32 0.0, %v2394
        %v2396 = vpop.f32.mrb[0].mxu0
        %v2397 = vadd.f32 0.0, %v2396
        %v2398 = vpop.f32.mrb[0].mxu0
        %v2399 = vadd.f32 0.0, %v2398
        %v2400 = vpop.f32.mrb[0].mxu0
        %v2401 = vadd.f32 0.0, %v2400
        %2402 = vmatprep.mubr.bf16.mxu0 %v304
        %2403 = vmatmul.mubr.bf16.gmra.mrb[0].mxu0 %v303
        %v2404 = vpop.f32.mrb[0].mxu0
        %v2405 = vadd.f32 0.0, %v2404
        %v2406 = vpop.f32.mrb[0].mxu0
        %v2407 = vadd.f32 0.0, %v2406
        %v2408 = vpop.f32.mrb[0].mxu0
        %v2409 = vadd.f32 0.0, %v2408
        %v2410 = vpop.f32.mrb[0].mxu0
        %v2411 = vadd.f32 0.0, %v2410
        %2412 = vmatprep.mubr.bf16.mxu0 %v307
        %2413 = vmatmul.mubr.bf16.gmra.mrb[0].mxu0 %v306
        %v2414 = vpop.f32.mrb[0].mxu0
        %v2415 = vadd.f32 0.0, %v2414
        %v2416 = vpop.f32.mrb[0].mxu0
        %v2417 = vadd.f32 0.0, %v2416
        %v2418 = vpop.f32.mrb[0].mxu0
        %v2419 = vadd.f32 0.0, %v2418
        %v2420 = vpop.f32.mrb[0].mxu0
        %v2421 = vadd.f32 0.0, %v2420
        %2422 = vmatprep.mubr.bf16.mxu0 %v310
        %2423 = vmatmul.mubr.bf16.gmra.mrb[0].mxu0 %v309
        %v2424 = vpop.f32.mrb[0].mxu0
        %v2425 = vadd.f32 0.0, %v2424
        %v2426 = vpop.f32.mrb[0].mxu0
        %v2427 = vadd.f32 0.0, %v2426
        %v2428 = vpop.f32.mrb[0].mxu0
        %v2429 = vadd.f32 0.0, %v2428
        %v2430 = vpop.f32.mrb[0].mxu0
        %v2431 = vadd.f32 0.0, %v2430
        %2432 = vmatprep.mubr.bf16.mxu0 %v313
        %2433 = vmatmul.mubr.bf16.gmra.mrb[0].mxu0 %v312
        %v2434 = vpop.f32.mrb[0].mxu0
        %v2435 = vadd.f32 0.0, %v2434
        %v2436 = vpop.f32.mrb[0].mxu0
        %v2437 = vadd.f32 0.0, %v2436
        %v2438 = vpop.f32.mrb[0].mxu0
        %v2439 = vadd.f32 0.0, %v2438
        %v2440 = vpop.f32.mrb[0].mxu0
        %v2441 = vadd.f32 0.0, %v2440
        %2442 = vmatprep.mubr.bf16.mxu0 %v316
        %2443 = vmatmul.mubr.bf16.gmra.mrb[0].mxu0 %v315
        %v2444 = vpop.f32.mrb[0].mxu0
        %v2445 = vadd.f32 0.0, %v2444
        %v2446 = vpop.f32.mrb[0].mxu0
        %v2447 = vadd.f32 0.0, %v2446
        %v2448 = vpop.f32.mrb[0].mxu0
        %v2449 = vadd.f32 0.0, %v2448
        %v2450 = vpop.f32.mrb[0].mxu0
        %v2451 = vadd.f32 0.0, %v2450
        %2452 = vdwg.mxu0
        %2453 = vmatprep.subr.bf16.mxu0 %v1381
        %2454 = vmatpush1.bf16.msra.mxu0 %v1380
        %2455 = vmatprep.subr.bf16.mxu0 %v1390
        %2456 = vmatpush1.bf16.msra.mxu0 %v1389
        %2457 = vmatprep.subr.bf16.mxu0 %v1399
        %2458 = vmatpush1.bf16.msra.mxu0 %v1398
        %2459 = vmatprep.subr.bf16.mxu0 %v1408
        %2460 = vmatpush1.bf16.msra.mxu0 %v1407
        %2461 = vmatprep.subr.bf16.mxu0 %v1417
        %2462 = vmatpush1.bf16.msra.mxu0 %v1416
        %2463 = vmatprep.subr.bf16.mxu0 %v1426
        %2464 = vmatpush1.bf16.msra.mxu0 %v1425
        %2465 = vmatprep.subr.bf16.mxu0 %v1435
        %2466 = vmatpush1.bf16.msra.mxu0 %v1434
        %2467 = vmatprep.subr.bf16.mxu0 %v1444
        %2468 = vmatpush1.bf16.msra.mxu0 %v1443
        %2469 = vmatprep.subr.bf16.mxu0 0
        %2470 = vmatpush1.bf16.msra.mxu0 0
        %2471 = vmatprep.subr.bf16.mxu0 0
        %2472 = vmatpush1.bf16.msra.mxu0 0
        %2473 = vmatprep.subr.bf16.mxu0 0
        %2474 = vmatpush1.bf16.msra.mxu0 0
        %2475 = vmatprep.subr.bf16.mxu0 0
        %2476 = vmatpush1.bf16.msra.mxu0 0
        %2477 = vmatprep.subr.bf16.mxu0 0
        %2478 = vmatpush1.bf16.msra.mxu0 0
        %2479 = vmatprep.subr.bf16.mxu0 0
        %2480 = vmatpush1.bf16.msra.mxu0 0
        %2481 = vmatprep.subr.bf16.mxu0 0
        %2482 = vmatpush1.bf16.msra.mxu0 0
        %2483 = vmatprep.subr.bf16.mxu0 0
        %2484 = vmatpush1.bf16.msra.mxu0 0
        %2485 = vmatprep.mubr.bf16.mxu0 0
        %2486 = vmatmul.mubr.bf16.gmra.mrb[0].mxu0 %v296
        %v2487 = vpop.f32.mrb[0].mxu0
        %v2488 = vadd.f32 %v2375, %v2487
        %v2489 = vpop.f32.mrb[0].mxu0
        %v2490 = vadd.f32 %v2377, %v2489
        %v2491 = vpop.f32.mrb[0].mxu0
        %v2492 = vadd.f32 %v2379, %v2491
        %v2493 = vpop.f32.mrb[0].mxu0
        %v2494 = vadd.f32 %v2381, %v2493
        %2495 = vmatprep.mubr.bf16.mxu0 0
        %2496 = vmatmul.mubr.bf16.gmra.mrb[0].mxu0 %v299
        %v2497 = vpop.f32.mrb[0].mxu0
        %v2498 = vadd.f32 %v2385, %v2497
        %v2499 = vpop.f32.mrb[0].mxu0
        %v2500 = vadd.f32 %v2387, %v2499
        %v2501 = vpop.f32.mrb[0].mxu0
        %v2502 = vadd.f32 %v2389, %v2501
        %v2503 = vpop.f32.mrb[0].mxu0
        %v2504 = vadd.f32 %v2391, %v2503
        %2505 = vmatprep.mubr.bf16.mxu0 0
        %2506 = vmatmul.mubr.bf16.gmra.mrb[0].mxu0 %v302
        %v2507 = vpop.f32.mrb[0].mxu0
        %v2508 = vadd.f32 %v2395, %v2507
        %v2509 = vpop.f32.mrb[0].mxu0
        %v2510 = vadd.f32 %v2397, %v2509
        %v2511 = vpop.f32.mrb[0].mxu0
        %v2512 = vadd.f32 %v2399, %v2511
        %v2513 = vpop.f32.mrb[0].mxu0
        %v2514 = vadd.f32 %v2401, %v2513
        %2515 = vmatprep.mubr.bf16.mxu0 0
        %2516 = vmatmul.mubr.bf16.gmra.mrb[0].mxu0 %v305
        %v2517 = vpop.f32.mrb[0].mxu0
        %v2518 = vadd.f32 %v2405, %v2517
        %v2519 = vpop.f32.mrb[0].mxu0
        %v2520 = vadd.f32 %v2407, %v2519
        %v2521 = vpop.f32.mrb[0].mxu0
        %v2522 = vadd.f32 %v2409, %v2521
        %v2523 = vpop.f32.mrb[0].mxu0
        %v2524 = vadd.f32 %v2411, %v2523
        %2525 = vmatprep.mubr.bf16.mxu0 0
        %2526 = vmatmul.mubr.bf16.gmra.mrb[0].mxu0 %v308
        %v2527 = vpop.f32.mrb[0].mxu0
        %v2528 = vadd.f32 %v2415, %v2527
        %v2529 = vpop.f32.mrb[0].mxu0
        %v2530 = vadd.f32 %v2417, %v2529
        %v2531 = vpop.f32.mrb[0].mxu0
        %v2532 = vadd.f32 %v2419, %v2531
        %v2533 = vpop.f32.mrb[0].mxu0
        %v2534 = vadd.f32 %v2421, %v2533
        %2535 = vmatprep.mubr.bf16.mxu0 0
        %2536 = vmatmul.mubr.bf16.gmra.mrb[0].mxu0 %v311
        %v2537 = vpop.f32.mrb[0].mxu0
        %v2538 = vadd.f32 %v2425, %v2537
        %v2539 = vpop.f32.mrb[0].mxu0
        %v2540 = vadd.f32 %v2427, %v2539
        %v2541 = vpop.f32.mrb[0].mxu0
        %v2542 = vadd.f32 %v2429, %v2541
        %v2543 = vpop.f32.mrb[0].mxu0
        %v2544 = vadd.f32 %v2431, %v2543
        %2545 = vmatprep.mubr.bf16.mxu0 0
        %2546 = vmatmul.mubr.bf16.gmra.mrb[0].mxu0 %v314
        %v2547 = vpop.f32.mrb[0].mxu0
        %v2548 = vadd.f32 %v2435, %v2547
        %v2549 = vpop.f32.mrb[0].mxu0
        %v2550 = vadd.f32 %v2437, %v2549
        %v2551 = vpop.f32.mrb[0].mxu0
        %v2552 = vadd.f32 %v2439, %v2551
        %v2553 = vpop.f32.mrb[0].mxu0
        %v2554 = vadd.f32 %v2441, %v2553
        %2555 = vmatprep.mubr.bf16.mxu0 0
        %2556 = vmatmul.mubr.bf16.gmra.mrb[0].mxu0 %v317
        %v2557 = vpop.f32.mrb[0].mxu0
        %v2558 = vadd.f32 %v2445, %v2557
        %v2559 = vpop.f32.mrb[0].mxu0
        %v2560 = vadd.f32 %v2447, %v2559
        %v2561 = vpop.f32.mrb[0].mxu0
        %v2562 = vadd.f32 %v2449, %v2561
        %v2563 = vpop.f32.mrb[0].mxu0
        %v2564 = vadd.f32 %v2451, %v2563
        %2565 = vdwg.mxu0
        %2566 = vmatprep.subr.bf16.mxu0 0
        %2567 = vmatpush1.bf16.msra.mxu0 %v1238
        %2568 = vmatprep.subr.bf16.mxu0 0
        %2569 = vmatpush1.bf16.msra.mxu0 %v1247
        %2570 = vmatprep.subr.bf16.mxu0 0
        %2571 = vmatpush1.bf16.msra.mxu0 %v1256
        %2572 = vmatprep.subr.bf16.mxu0 0
        %2573 = vmatpush1.bf16.msra.mxu0 %v1265
        %2574 = vmatprep.subr.bf16.mxu0 0
        %2575 = vmatpush1.bf16.msra.mxu0 %v1274
        %2576 = vmatprep.subr.bf16.mxu0 0
        %2577 = vmatpush1.bf16.msra.mxu0 %v1283
        %2578 = vmatprep.subr.bf16.mxu0 0
        %2579 = vmatpush1.bf16.msra.mxu0 %v1292
        %2580 = vmatprep.subr.bf16.mxu0 0
        %2581 = vmatpush1.bf16.msra.mxu0 %v1301
        %2582 = vmatprep.subr.bf16.mxu0 0
        %2583 = vmatpush1.bf16.msra.mxu0 %v1310
        %2584 = vmatprep.subr.bf16.mxu0 0
        %2585 = vmatpush1.bf16.msra.mxu0 %v1319
        %2586 = vmatprep.subr.bf16.mxu0 0
        %2587 = vmatpush1.bf16.msra.mxu0 %v1328
        %2588 = vmatprep.subr.bf16.mxu0 0
        %2589 = vmatpush1.bf16.msra.mxu0 %v1337
        %2590 = vmatprep.subr.bf16.mxu0 0
        %2591 = vmatpush1.bf16.msra.mxu0 %v1346
        %2592 = vmatprep.subr.bf16.mxu0 0
        %2593 = vmatpush1.bf16.msra.mxu0 %v1355
        %2594 = vmatprep.subr.bf16.mxu0 0
        %2595 = vmatpush1.bf16.msra.mxu0 %v1364
        %2596 = vmatprep.subr.bf16.mxu0 0
        %2597 = vmatpush1.bf16.msra.mxu0 %v1373
        %2598 = vmatprep.mubr.bf16.mxu0 %v295
        %2599 = vmatmul.mubr.bf16.gmra.mrb[0].mxu0 %v294
        %v2600 = vpop.f32.mrb[0].mxu0
        %v2601 = vadd.f32 0.0, %v2600
        %v2602 = vpop.f32.mrb[0].mxu0
        %v2603 = vpop.f32.mrb[0].mxu0
        %v2604 = vadd.f32 0.0, %v2603
        %v2605 = vpop.f32.mrb[0].mxu0
        %2606 = vmatprep.mubr.bf16.mxu0 %v298
        %2607 = vmatmul.mubr.bf16.gmra.mrb[0].mxu0 %v297
        %v2608 = vpop.f32.mrb[0].mxu0
        %v2609 = vadd.f32 0.0, %v2608
        %v2610 = vpop.f32.mrb[0].mxu0
        %v2611 = vpop.f32.mrb[0].mxu0
        %v2612 = vadd.f32 0.0, %v2611
        %v2613 = vpop.f32.mrb[0].mxu0
        %2614 = vmatprep.mubr.bf16.mxu0 %v301
        %2615 = vmatmul.mubr.bf16.gmra.mrb[0].mxu0 %v300
        %v2616 = vpop.f32.mrb[0].mxu0
        %v2617 = vadd.f32 0.0, %v2616
        %v2618 = vpop.f32.mrb[0].mxu0
        %v2619 = vpop.f32.mrb[0].mxu0
        %v2620 = vadd.f32 0.0, %v2619
        %v2621 = vpop.f32.mrb[0].mxu0
        %2622 = vmatprep.mubr.bf16.mxu0 %v304
        %2623 = vmatmul.mubr.bf16.gmra.mrb[0].mxu0 %v303
        %v2624 = vpop.f32.mrb[0].mxu0
        %v2625 = vadd.f32 0.0, %v2624
        %v2626 = vpop.f32.mrb[0].mxu0
        %v2627 = vpop.f32.mrb[0].mxu0
        %v2628 = vadd.f32 0.0, %v2627
        %v2629 = vpop.f32.mrb[0].mxu0
        %2630 = vmatprep.mubr.bf16.mxu0 %v307
        %2631 = vmatmul.mubr.bf16.gmra.mrb[0].mxu0 %v306
        %v2632 = vpop.f32.mrb[0].mxu0
        %v2633 = vadd.f32 0.0, %v2632
        %v2634 = vpop.f32.mrb[0].mxu0
        %v2635 = vpop.f32.mrb[0].mxu0
        %v2636 = vadd.f32 0.0, %v2635
        %v2637 = vpop.f32.mrb[0].mxu0
        %2638 = vmatprep.mubr.bf16.mxu0 %v310
        %2639 = vmatmul.mubr.bf16.gmra.mrb[0].mxu0 %v309
        %v2640 = vpop.f32.mrb[0].mxu0
        %v2641 = vadd.f32 0.0, %v2640
        %v2642 = vpop.f32.mrb[0].mxu0
        %v2643 = vpop.f32.mrb[0].mxu0
        %v2644 = vadd.f32 0.0, %v2643
        %v2645 = vpop.f32.mrb[0].mxu0
        %2646 = vmatprep.mubr.bf16.mxu0 %v313
        %2647 = vmatmul.mubr.bf16.gmra.mrb[0].mxu0 %v312
        %v2648 = vpop.f32.mrb[0].mxu0
        %v2649 = vadd.f32 0.0, %v2648
        %v2650 = vpop.f32.mrb[0].mxu0
        %v2651 = vpop.f32.mrb[0].mxu0
        %v2652 = vadd.f32 0.0, %v2651
        %v2653 = vpop.f32.mrb[0].mxu0
        %2654 = vmatprep.mubr.bf16.mxu0 %v316
        %2655 = vmatmul.mubr.bf16.gmra.mrb[0].mxu0 %v315
        %v2656 = vpop.f32.mrb[0].mxu0
        %v2657 = vadd.f32 0.0, %v2656
        %v2658 = vpop.f32.mrb[0].mxu0
        %v2659 = vpop.f32.mrb[0].mxu0
        %v2660 = vadd.f32 0.0, %v2659
        %v2661 = vpop.f32.mrb[0].mxu0
        %2662 = vdwg.mxu0
        %2663 = vmatprep.subr.bf16.mxu0 0
        %2664 = vmatpush1.bf16.msra.mxu0 %v1382
        %2665 = vmatprep.subr.bf16.mxu0 0
        %2666 = vmatpush1.bf16.msra.mxu0 %v1391
        %2667 = vmatprep.subr.bf16.mxu0 0
        %2668 = vmatpush1.bf16.msra.mxu0 %v1400
        %2669 = vmatprep.subr.bf16.mxu0 0
        %2670 = vmatpush1.bf16.msra.mxu0 %v1409
        %2671 = vmatprep.subr.bf16.mxu0 0
        %2672 = vmatpush1.bf16.msra.mxu0 %v1418
        %2673 = vmatprep.subr.bf16.mxu0 0
        %2674 = vmatpush1.bf16.msra.mxu0 %v1427
        %2675 = vmatprep.subr.bf16.mxu0 0
        %2676 = vmatpush1.bf16.msra.mxu0 %v1436
        %2677 = vmatprep.subr.bf16.mxu0 0
        %2678 = vmatpush1.bf16.msra.mxu0 %v1445
        %2679 = vmatprep.subr.bf16.mxu0 0
        %2680 = vmatpush1.bf16.msra.mxu0 0
        %2681 = vmatprep.subr.bf16.mxu0 0
        %2682 = vmatpush1.bf16.msra.mxu0 0
        %2683 = vmatprep.subr.bf16.mxu0 0
        %2684 = vmatpush1.bf16.msra.mxu0 0
        %2685 = vmatprep.subr.bf16.mxu0 0
        %2686 = vmatpush1.bf16.msra.mxu0 0
        %2687 = vmatprep.subr.bf16.mxu0 0
        %2688 = vmatpush1.bf16.msra.mxu0 0
        %2689 = vmatprep.subr.bf16.mxu0 0
        %2690 = vmatpush1.bf16.msra.mxu0 0
        %2691 = vmatprep.subr.bf16.mxu0 0
        %2692 = vmatpush1.bf16.msra.mxu0 0
        %2693 = vmatprep.subr.bf16.mxu0 0
        %2694 = vmatpush1.bf16.msra.mxu0 0
        %2695 = vmatprep.mubr.bf16.mxu0 0
        %2696 = vmatmul.mubr.bf16.gmra.mrb[0].mxu0 %v296
        %v2697 = vpop.f32.mrb[0].mxu0
        %v2698 = vadd.f32 %v2601, %v2697
        %v2699 = vpop.f32.mrb[0].mxu0
        %v2700 = vpop.f32.mrb[0].mxu0
        %v2701 = vadd.f32 %v2604, %v2700
        %v2702 = vpop.f32.mrb[0].mxu0
        %2703 = vmatprep.mubr.bf16.mxu0 0
        %2704 = vmatmul.mubr.bf16.gmra.mrb[0].mxu0 %v299
        %v2705 = vpop.f32.mrb[0].mxu0
        %v2706 = vadd.f32 %v2609, %v2705
        %v2707 = vpop.f32.mrb[0].mxu0
        %v2708 = vpop.f32.mrb[0].mxu0
        %v2709 = vadd.f32 %v2612, %v2708
        %v2710 = vpop.f32.mrb[0].mxu0
        %2711 = vmatprep.mubr.bf16.mxu0 0
        %2712 = vmatmul.mubr.bf16.gmra.mrb[0].mxu0 %v302
        %v2713 = vpop.f32.mrb[0].mxu0
        %v2714 = vadd.f32 %v2617, %v2713
        %v2715 = vpop.f32.mrb[0].mxu0
        %v2716 = vpop.f32.mrb[0].mxu0
        %v2717 = vadd.f32 %v2620, %v2716
        %v2718 = vpop.f32.mrb[0].mxu0
        %2719 = vmatprep.mubr.bf16.mxu0 0
        %2720 = vmatmul.mubr.bf16.gmra.mrb[0].mxu0 %v305
        %v2721 = vpop.f32.mrb[0].mxu0
        %v2722 = vadd.f32 %v2625, %v2721
        %v2723 = vpop.f32.mrb[0].mxu0
        %v2724 = vpop.f32.mrb[0].mxu0
        %v2725 = vadd.f32 %v2628, %v2724
        %v2726 = vpop.f32.mrb[0].mxu0
        %2727 = vmatprep.mubr.bf16.mxu0 0
        %2728 = vmatmul.mubr.bf16.gmra.mrb[0].mxu0 %v308
        %v2729 = vpop.f32.mrb[0].mxu0
        %v2730 = vadd.f32 %v2633, %v2729
        %v2731 = vpop.f32.mrb[0].mxu0
        %v2732 = vpop.f32.mrb[0].mxu0
        %v2733 = vadd.f32 %v2636, %v2732
        %v2734 = vpop.f32.mrb[0].mxu0
        %2735 = vmatprep.mubr.bf16.mxu0 0
        %2736 = vmatmul.mubr.bf16.gmra.mrb[0].mxu0 %v311
        %v2737 = vpop.f32.mrb[0].mxu0
        %v2738 = vadd.f32 %v2641, %v2737
        %v2739 = vpop.f32.mrb[0].mxu0
        %v2740 = vpop.f32.mrb[0].mxu0
        %v2741 = vadd.f32 %v2644, %v2740
        %v2742 = vpop.f32.mrb[0].mxu0
        %2743 = vmatprep.mubr.bf16.mxu0 0
        %2744 = vmatmul.mubr.bf16.gmra.mrb[0].mxu0 %v314
        %v2745 = vpop.f32.mrb[0].mxu0
        %v2746 = vadd.f32 %v2649, %v2745
        %v2747 = vpop.f32.mrb[0].mxu0
        %v2748 = vpop.f32.mrb[0].mxu0
        %v2749 = vadd.f32 %v2652, %v2748
        %v2750 = vpop.f32.mrb[0].mxu0
        %2751 = vmatprep.mubr.bf16.mxu0 0
        %2752 = vmatmul.mubr.bf16.gmra.mrb[0].mxu0 %v317
        %v2753 = vpop.f32.mrb[0].mxu0
        %v2754 = vadd.f32 %v2657, %v2753
        %v2755 = vpop.f32.mrb[0].mxu0
        %v2756 = vpop.f32.mrb[0].mxu0
        %v2757 = vadd.f32 %v2660, %v2756
        %v2758 = vpop.f32.mrb[0].mxu0
        %2759 = vdwg.mxu0
        %v2760 = vlaneseq
        %v2761 = vshrl.u32 %v2760, 7
        %v2762 = vadd.s32 %v2761, 8
        %v2763 = vadd.s32 %v2761, 16
        %v2764 = vadd.s32 %v2761, 24
        %v2765 = vadd.s32 %v2761, 32
        %v2766 = vadd.s32 %v2761, 40
        %v2767 = vadd.s32 %v2761, 48
        %v2768 = vadd.s32 %v2761, 56
        %v2769 = vadd.s32 %v2761, 64
        %v2770 = vadd.s32 %v2761, 72
        %v2771 = vadd.s32 %v2761, 80
        %v2772 = vadd.s32 %v2761, 88
        %v2773 = vadd.s32 %v2761, 96
        %v2774 = vadd.s32 %v2761, 104
        %v2775 = vadd.s32 %v2761, 112
        %v2776 = vadd.s32 %v2761, 120
        %v2777 = vlaneseq
        %v2778 = vand.u32 %v2777, 127
        %vm2779 = vcmp.le.s32.totalorder %v2778, %v2761
        %vm2780 = vcmp.le.s32.totalorder %v2778, %v2762
        %vm2781 = vcmp.le.s32.totalorder %v2778, %v2763
        %vm2782 = vcmp.le.s32.totalorder %v2778, %v2764
        %vm2783 = vcmp.le.s32.totalorder %v2778, %v2765
        %vm2784 = vcmp.le.s32.totalorder %v2778, %v2766
        %vm2785 = vcmp.le.s32.totalorder %v2778, %v2767
        %vm2786 = vcmp.le.s32.totalorder %v2778, %v2768
        %vm2787 = vcmp.le.s32.totalorder %v2778, %v2769
        %vm2788 = vcmp.le.s32.totalorder %v2778, %v2770
        %vm2789 = vcmp.le.s32.totalorder %v2778, %v2771
        %vm2790 = vcmp.le.s32.totalorder %v2778, %v2772
        %vm2791 = vcmp.le.s32.totalorder %v2778, %v2773
        %vm2792 = vcmp.le.s32.totalorder %v2778, %v2774
        %vm2793 = vcmp.le.s32.totalorder %v2778, %v2775
        %vm2794 = vcmp.le.s32.totalorder %v2778, %v2776
        %v2795 = vsel %vm2779, 0.0, -1e+30
        %v2796 = vsel %vm2780, 0.0, -1e+30
        %v2797 = vsel %vm2781, 0.0, -1e+30
        %v2798 = vsel %vm2782, 0.0, -1e+30
        %v2799 = vsel %vm2783, 0.0, -1e+30
        %v2800 = vsel %vm2784, 0.0, -1e+30
        %v2801 = vsel %vm2785, 0.0, -1e+30
        %v2802 = vsel %vm2786, 0.0, -1e+30
        %v2803 = vsel %vm2787, 0.0, -1e+30
        %v2804 = vsel %vm2788, 0.0, -1e+30
        %v2805 = vsel %vm2789, 0.0, -1e+30
        %v2806 = vsel %vm2790, 0.0, -1e+30
        %v2807 = vsel %vm2791, 0.0, -1e+30
        %v2808 = vsel %vm2792, 0.0, -1e+30
        %v2809 = vsel %vm2793, 0.0, -1e+30
        %v2810 = vsel %vm2794, 0.0, -1e+30
        %v2811 = vmul.f32 %v1810, 0.125
        %v2812 = vmul.f32 %v1814, 0.125
        %v2813 = vmul.f32 %v1820, 0.125
        %v2814 = vmul.f32 %v1824, 0.125
        %v2815 = vmul.f32 %v1830, 0.125
        %v2816 = vmul.f32 %v1834, 0.125
        %v2817 = vmul.f32 %v1840, 0.125
        %v2818 = vmul.f32 %v1844, 0.125
        %v2819 = vmul.f32 %v1850, 0.125
        %v2820 = vmul.f32 %v1854, 0.125
        %v2821 = vmul.f32 %v1860, 0.125
        %v2822 = vmul.f32 %v1864, 0.125
        %v2823 = vmul.f32 %v1870, 0.125
        %v2824 = vmul.f32 %v1874, 0.125
        %v2825 = vmul.f32 %v1880, 0.125
        %v2826 = vmul.f32 %v1884, 0.125
        %v2827 = vpack.c.bf16 %v2812, %v2811
        %v2828 = vpack.c.bf16 %v2814, %v2813
        %v2829 = vpack.c.bf16 %v2816, %v2815
        %v2830 = vpack.c.bf16 %v2818, %v2817
        %v2831 = vpack.c.bf16 %v2820, %v2819
        %v2832 = vpack.c.bf16 %v2822, %v2821
        %v2833 = vpack.c.bf16 %v2824, %v2823
        %v2834 = vpack.c.bf16 %v2826, %v2825
        %v2835 = vpack.c.bf16 %v2042, %v2038
        %v2836 = vpack.c.bf16 %v2052, %v2048
        %v2837 = vpack.c.bf16 %v2062, %v2058
        %v2838 = vpack.c.bf16 %v2072, %v2068
        %v2839 = vpack.c.bf16 %v2082, %v2078
        %v2840 = vpack.c.bf16 %v2092, %v2088
        %v2841 = vpack.c.bf16 %v2102, %v2098
        %v2842 = vpack.c.bf16 %v2112, %v2108
        %v2843 = vpack.c.bf16 %v2492, %v2488
        %v2844 = vpack.c.bf16 %v2502, %v2498
        %v2845 = vpack.c.bf16 %v2512, %v2508
        %v2846 = vpack.c.bf16 %v2522, %v2518
        %v2847 = vpack.c.bf16 %v2532, %v2528
        %v2848 = vpack.c.bf16 %v2542, %v2538
        %v2849 = vpack.c.bf16 %v2552, %v2548
        %v2850 = vpack.c.bf16 %v2562, %v2558
        %vm2851 = vcmask 523264
        %v2853 = vsel %vm2851, %v2827, 0
        %v2856 = vsel %vm2851, %v2828, 0
        %v2859 = vsel %vm2851, %v2829, 0
        %v2862 = vsel %vm2851, %v2830, 0
        %v2865 = vsel %vm2851, %v2831, 0
        %v2868 = vsel %vm2851, %v2832, 0
        %v2871 = vsel %vm2851, %v2833, 0
        %v2874 = vsel %vm2851, %v2834, 0
        %v2877 = vsel %vm2851, %v2835, 0
        %v2880 = vsel %vm2851, %v2836, 0
        %v2883 = vsel %vm2851, %v2837, 0
        %v2886 = vsel %vm2851, %v2838, 0
        %v2889 = vsel %vm2851, %v2839, 0
        %v2892 = vsel %vm2851, %v2840, 0
        %v2895 = vsel %vm2851, %v2841, 0
        %v2898 = vsel %vm2851, %v2842, 0
        %2900 = vmatprep.subr.bf16.mxu0 0
        %2901 = vmatpush1.bf16.xpose.msra.mxu0 %v2877
        %2902 = vmatprep.subr.bf16.mxu0 0
        %2903 = vmatpush1.bf16.xpose.msra.mxu0 %v2880
        %2904 = vmatprep.subr.bf16.mxu0 0
        %2905 = vmatpush1.bf16.xpose.msra.mxu0 %v2883
        %2906 = vmatprep.subr.bf16.mxu0 0
        %2907 = vmatpush1.bf16.xpose.msra.mxu0 %v2886
        %2908 = vmatprep.subr.bf16.mxu0 0
        %2909 = vmatpush1.bf16.xpose.msra.mxu0 %v2889
        %2910 = vmatprep.subr.bf16.mxu0 0
        %2911 = vmatpush1.bf16.xpose.msra.mxu0 %v2892
        %2912 = vmatprep.subr.bf16.mxu0 0
        %2913 = vmatpush1.bf16.xpose.msra.mxu0 %v2895
        %2914 = vmatprep.subr.bf16.mxu0 0
        %2915 = vmatpush1.bf16.xpose.msra.mxu0 %v2898
        %2916 = vmatprep.subr.bf16.mxu0 0
        %2917 = vmatpush1.bf16.xpose.msra.mxu0 0
        %2918 = vmatprep.subr.bf16.mxu0 0
        %2919 = vmatpush1.bf16.xpose.msra.mxu0 0
        %2920 = vmatprep.subr.bf16.mxu0 0
        %2921 = vmatpush1.bf16.xpose.msra.mxu0 0
        %2922 = vmatprep.subr.bf16.mxu0 0
        %2923 = vmatpush1.bf16.xpose.msra.mxu0 0
        %2924 = vmatprep.subr.bf16.mxu0 0
        %2925 = vmatpush1.bf16.xpose.msra.mxu0 0
        %2926 = vmatprep.subr.bf16.mxu0 0
        %2927 = vmatpush1.bf16.xpose.msra.mxu0 0
        %2928 = vmatprep.subr.bf16.mxu0 0
        %2929 = vmatpush1.bf16.xpose.msra.mxu0 0
        %2930 = vmatprep.subr.bf16.mxu0 0
        %2931 = vmatpush1.bf16.xpose.msra.mxu0 0
        %2932 = vmatprep.mubr.bf16.mxu0 0
        %2933 = vmatmul.mubr.bf16.gmra.mrb[0].mxu0 %v2853
        %v2934 = vpop.f32.mrb[0].mxu0
        %v2935 = vadd.f32 %v2795, %v2934
        %v2936 = vpop.f32.mrb[0].mxu0
        %v2937 = vpop.f32.mrb[0].mxu0
        %v2938 = vadd.f32 %v2796, %v2937
        %v2939 = vpop.f32.mrb[0].mxu0
        %2940 = vmatprep.mubr.bf16.mxu0 0
        %2941 = vmatmul.mubr.bf16.gmra.mrb[0].mxu0 %v2856
        %v2942 = vpop.f32.mrb[0].mxu0
        %v2943 = vadd.f32 %v2797, %v2942
        %v2944 = vpop.f32.mrb[0].mxu0
        %v2945 = vpop.f32.mrb[0].mxu0
        %v2946 = vadd.f32 %v2798, %v2945
        %v2947 = vpop.f32.mrb[0].mxu0
        %2948 = vmatprep.mubr.bf16.mxu0 0
        %2949 = vmatmul.mubr.bf16.gmra.mrb[0].mxu0 %v2859
        %v2950 = vpop.f32.mrb[0].mxu0
        %v2951 = vadd.f32 %v2799, %v2950
        %v2952 = vpop.f32.mrb[0].mxu0
        %v2953 = vpop.f32.mrb[0].mxu0
        %v2954 = vadd.f32 %v2800, %v2953
        %v2955 = vpop.f32.mrb[0].mxu0
        %2956 = vmatprep.mubr.bf16.mxu0 0
        %2957 = vmatmul.mubr.bf16.gmra.mrb[0].mxu0 %v2862
        %v2958 = vpop.f32.mrb[0].mxu0
        %v2959 = vadd.f32 %v2801, %v2958
        %v2960 = vpop.f32.mrb[0].mxu0
        %v2961 = vpop.f32.mrb[0].mxu0
        %v2962 = vadd.f32 %v2802, %v2961
        %v2963 = vpop.f32.mrb[0].mxu0
        %2964 = vmatprep.mubr.bf16.mxu0 0
        %2965 = vmatmul.mubr.bf16.gmra.mrb[0].mxu0 %v2865
        %v2966 = vpop.f32.mrb[0].mxu0
        %v2967 = vadd.f32 %v2803, %v2966
        %v2968 = vpop.f32.mrb[0].mxu0
        %v2969 = vpop.f32.mrb[0].mxu0
        %v2970 = vadd.f32 %v2804, %v2969
        %v2971 = vpop.f32.mrb[0].mxu0
        %2972 = vmatprep.mubr.bf16.mxu0 0
        %2973 = vmatmul.mubr.bf16.gmra.mrb[0].mxu0 %v2868
        %v2974 = vpop.f32.mrb[0].mxu0
        %v2975 = vadd.f32 %v2805, %v2974
        %v2976 = vpop.f32.mrb[0].mxu0
        %v2977 = vpop.f32.mrb[0].mxu0
        %v2978 = vadd.f32 %v2806, %v2977
        %v2979 = vpop.f32.mrb[0].mxu0
        %2980 = vmatprep.mubr.bf16.mxu0 0
        %2981 = vmatmul.mubr.bf16.gmra.mrb[0].mxu0 %v2871
        %v2982 = vpop.f32.mrb[0].mxu0
        %v2983 = vadd.f32 %v2807, %v2982
        %v2984 = vpop.f32.mrb[0].mxu0
        %v2985 = vpop.f32.mrb[0].mxu0
        %v2986 = vadd.f32 %v2808, %v2985
        %v2987 = vpop.f32.mrb[0].mxu0
        %2988 = vmatprep.mubr.bf16.mxu0 0
        %2989 = vmatmul.mubr.bf16.gmra.mrb[0].mxu0 %v2874
        %v2990 = vpop.f32.mrb[0].mxu0
        %v2991 = vadd.f32 %v2809, %v2990
        %v2992 = vpop.f32.mrb[0].mxu0
        %v2993 = vpop.f32.mrb[0].mxu0
        %v2994 = vadd.f32 %v2810, %v2993
        %v2995 = vpop.f32.mrb[0].mxu0
        %2996 = vdwg.mxu0
        %2997 = vmax.xlane.f32.xlu0 %v2935
        %v2998 = vpop.xlane.xlu0 %2997
        %2999 = vmax.xlane.f32.xlu0 %v2938
        %v3000 = vpop.xlane.xlu0 %2999
        %3001 = vmax.xlane.f32.xlu0 %v2943
        %v3002 = vpop.xlane.xlu0 %3001
        %3003 = vmax.xlane.f32.xlu0 %v2946
        %v3004 = vpop.xlane.xlu0 %3003
        %3005 = vmax.xlane.f32.xlu0 %v2951
        %v3006 = vpop.xlane.xlu0 %3005
        %3007 = vmax.xlane.f32.xlu0 %v2954
        %v3008 = vpop.xlane.xlu0 %3007
        %3009 = vmax.xlane.f32.xlu0 %v2959
        %v3010 = vpop.xlane.xlu0 %3009
        %3011 = vmax.xlane.f32.xlu0 %v2962
        %v3012 = vpop.xlane.xlu0 %3011
        %3013 = vmax.xlane.f32.xlu0 %v2967
        %v3014 = vpop.xlane.xlu0 %3013
        %3015 = vmax.xlane.f32.xlu0 %v2970
        %v3016 = vpop.xlane.xlu0 %3015
        %3017 = vmax.xlane.f32.xlu0 %v2975
        %v3018 = vpop.xlane.xlu0 %3017
        %3019 = vmax.xlane.f32.xlu0 %v2978
        %v3020 = vpop.xlane.xlu0 %3019
        %3021 = vmax.xlane.f32.xlu0 %v2983
        %v3022 = vpop.xlane.xlu0 %3021
        %3023 = vmax.xlane.f32.xlu0 %v2986
        %v3024 = vpop.xlane.xlu0 %3023
        %3025 = vmax.xlane.f32.xlu0 %v2991
        %v3026 = vpop.xlane.xlu0 %3025
        %3027 = vmax.xlane.f32.xlu0 %v2994
        %v3028 = vpop.xlane.xlu0 %3027
        %v3029 = vsub.f32 %v2935, %v2998
        %v3030 = vsub.f32 %v2938, %v3000
        %v3031 = vsub.f32 %v2943, %v3002
        %v3032 = vsub.f32 %v2946, %v3004
        %v3033 = vsub.f32 %v2951, %v3006
        %v3034 = vsub.f32 %v2954, %v3008
        %v3035 = vsub.f32 %v2959, %v3010
        %v3036 = vsub.f32 %v2962, %v3012
        %v3037 = vsub.f32 %v2967, %v3014
        %v3038 = vsub.f32 %v2970, %v3016
        %v3039 = vsub.f32 %v2975, %v3018
        %v3040 = vsub.f32 %v2978, %v3020
        %v3041 = vsub.f32 %v2983, %v3022
        %v3042 = vsub.f32 %v2986, %v3024
        %v3043 = vsub.f32 %v2991, %v3026
        %v3044 = vsub.f32 %v2994, %v3028
        %v3045 = vmul.f32 %v3029, 1.442695
        %v3046 = vpow.pop %v3045
        %v3047 = vmul.f32 %v3030, 1.442695
        %v3048 = vpow.pop %v3047
        %v3049 = vmul.f32 %v3031, 1.442695
        %v3050 = vpow.pop %v3049
        %v3051 = vmul.f32 %v3032, 1.442695
        %v3052 = vpow.pop %v3051
        %v3053 = vmul.f32 %v3033, 1.442695
        %v3054 = vpow.pop %v3053
        %v3055 = vmul.f32 %v3034, 1.442695
        %v3056 = vpow.pop %v3055
        %v3057 = vmul.f32 %v3035, 1.442695
        %v3058 = vpow.pop %v3057
        %v3059 = vmul.f32 %v3036, 1.442695
        %v3060 = vpow.pop %v3059
        %v3061 = vmul.f32 %v3037, 1.442695
        %v3062 = vpow.pop %v3061
        %v3063 = vmul.f32 %v3038, 1.442695
        %v3064 = vpow.pop %v3063
        %v3065 = vmul.f32 %v3039, 1.442695
        %v3066 = vpow.pop %v3065
        %v3067 = vmul.f32 %v3040, 1.442695
        %v3068 = vpow.pop %v3067
        %v3069 = vmul.f32 %v3041, 1.442695
        %v3070 = vpow.pop %v3069
        %v3071 = vmul.f32 %v3042, 1.442695
        %v3072 = vpow.pop %v3071
        %v3073 = vmul.f32 %v3043, 1.442695
        %v3074 = vpow.pop %v3073
        %v3075 = vmul.f32 %v3044, 1.442695
        %v3076 = vpow.pop %v3075
        %3077 = vadd.xlane.f32.xlu0 %v3046
        %v3078 = vpop.xlane.xlu0 %3077
        %3079 = vadd.xlane.f32.xlu0 %v3048
        %v3080 = vpop.xlane.xlu0 %3079
        %3081 = vadd.xlane.f32.xlu0 %v3050
        %v3082 = vpop.xlane.xlu0 %3081
        %3083 = vadd.xlane.f32.xlu0 %v3052
        %v3084 = vpop.xlane.xlu0 %3083
        %3085 = vadd.xlane.f32.xlu0 %v3054
        %v3086 = vpop.xlane.xlu0 %3085
        %3087 = vadd.xlane.f32.xlu0 %v3056
        %v3088 = vpop.xlane.xlu0 %3087
        %3089 = vadd.xlane.f32.xlu0 %v3058
        %v3090 = vpop.xlane.xlu0 %3089
        %3091 = vadd.xlane.f32.xlu0 %v3060
        %v3092 = vpop.xlane.xlu0 %3091
        %3093 = vadd.xlane.f32.xlu0 %v3062
        %v3094 = vpop.xlane.xlu0 %3093
        %3095 = vadd.xlane.f32.xlu0 %v3064
        %v3096 = vpop.xlane.xlu0 %3095
        %3097 = vadd.xlane.f32.xlu0 %v3066
        %v3098 = vpop.xlane.xlu0 %3097
        %3099 = vadd.xlane.f32.xlu0 %v3068
        %v3100 = vpop.xlane.xlu0 %3099
        %3101 = vadd.xlane.f32.xlu0 %v3070
        %v3102 = vpop.xlane.xlu0 %3101
        %3103 = vadd.xlane.f32.xlu0 %v3072
        %v3104 = vpop.xlane.xlu0 %3103
        %3105 = vadd.xlane.f32.xlu0 %v3074
        %v3106 = vpop.xlane.xlu0 %3105
        %3107 = vadd.xlane.f32.xlu0 %v3076
        %v3108 = vpop.xlane.xlu0 %3107
        %v3109 = vpack.c.bf16 %v3048, %v3046
        %v3110 = vpack.c.bf16 %v3052, %v3050
        %v3111 = vpack.c.bf16 %v3056, %v3054
        %v3112 = vpack.c.bf16 %v3060, %v3058
        %v3113 = vpack.c.bf16 %v3064, %v3062
        %v3114 = vpack.c.bf16 %v3068, %v3066
        %v3115 = vpack.c.bf16 %v3072, %v3070
        %v3116 = vpack.c.bf16 %v3076, %v3074
        %3117 = vmatprep.subr.bf16.mxu0 0
        %3118 = vmatpush1.bf16.msra.mxu0 %v2843
        %3119 = vmatprep.subr.bf16.mxu0 0
        %3120 = vmatpush1.bf16.msra.mxu0 %v2844
        %3121 = vmatprep.subr.bf16.mxu0 0
        %3122 = vmatpush1.bf16.msra.mxu0 %v2845
        %3123 = vmatprep.subr.bf16.mxu0 0
        %3124 = vmatpush1.bf16.msra.mxu0 %v2846
        %3125 = vmatprep.subr.bf16.mxu0 0
        %3126 = vmatpush1.bf16.msra.mxu0 %v2847
        %3127 = vmatprep.subr.bf16.mxu0 0
        %3128 = vmatpush1.bf16.msra.mxu0 %v2848
        %3129 = vmatprep.subr.bf16.mxu0 0
        %3130 = vmatpush1.bf16.msra.mxu0 %v2849
        %3131 = vmatprep.subr.bf16.mxu0 0
        %3132 = vmatpush1.bf16.msra.mxu0 %v2850
        %3133 = vmatprep.subr.bf16.mxu0 0
        %3134 = vmatpush1.bf16.msra.mxu0 0
        %3135 = vmatprep.subr.bf16.mxu0 0
        %3136 = vmatpush1.bf16.msra.mxu0 0
        %3137 = vmatprep.subr.bf16.mxu0 0
        %3138 = vmatpush1.bf16.msra.mxu0 0
        %3139 = vmatprep.subr.bf16.mxu0 0
        %3140 = vmatpush1.bf16.msra.mxu0 0
        %3141 = vmatprep.subr.bf16.mxu0 0
        %3142 = vmatpush1.bf16.msra.mxu0 0
        %3143 = vmatprep.subr.bf16.mxu0 0
        %3144 = vmatpush1.bf16.msra.mxu0 0
        %3145 = vmatprep.subr.bf16.mxu0 0
        %3146 = vmatpush1.bf16.msra.mxu0 0
        %3147 = vmatprep.subr.bf16.mxu0 0
        %3148 = vmatpush1.bf16.msra.mxu0 0
        %3149 = vmatprep.mubr.bf16.mxu0 0
        %3150 = vmatmul.mubr.bf16.gmra.mrb[0].mxu0 %v3109
        %v3151 = vpop.f32.mrb[0].mxu0
        %v3152 = vadd.f32 0.0, %v3151
        %v3153 = vpop.f32.mrb[0].mxu0
        %v3154 = vpop.f32.mrb[0].mxu0
        %v3155 = vadd.f32 0.0, %v3154
        %v3156 = vpop.f32.mrb[0].mxu0
        %3157 = vmatprep.mubr.bf16.mxu0 0
        %3158 = vmatmul.mubr.bf16.gmra.mrb[0].mxu0 %v3110
        %v3159 = vpop.f32.mrb[0].mxu0
        %v3160 = vadd.f32 0.0, %v3159
        %v3161 = vpop.f32.mrb[0].mxu0
        %v3162 = vpop.f32.mrb[0].mxu0
        %v3163 = vadd.f32 0.0, %v3162
        %v3164 = vpop.f32.mrb[0].mxu0
        %3165 = vmatprep.mubr.bf16.mxu0 0
        %3166 = vmatmul.mubr.bf16.gmra.mrb[0].mxu0 %v3111
        %v3167 = vpop.f32.mrb[0].mxu0
        %v3168 = vadd.f32 0.0, %v3167
        %v3169 = vpop.f32.mrb[0].mxu0
        %v3170 = vpop.f32.mrb[0].mxu0
        %v3171 = vadd.f32 0.0, %v3170
        %v3172 = vpop.f32.mrb[0].mxu0
        %3173 = vmatprep.mubr.bf16.mxu0 0
        %3174 = vmatmul.mubr.bf16.gmra.mrb[0].mxu0 %v3112
        %v3175 = vpop.f32.mrb[0].mxu0
        %v3176 = vadd.f32 0.0, %v3175
        %v3177 = vpop.f32.mrb[0].mxu0
        %v3178 = vpop.f32.mrb[0].mxu0
        %v3179 = vadd.f32 0.0, %v3178
        %v3180 = vpop.f32.mrb[0].mxu0
        %3181 = vmatprep.mubr.bf16.mxu0 0
        %3182 = vmatmul.mubr.bf16.gmra.mrb[0].mxu0 %v3113
        %v3183 = vpop.f32.mrb[0].mxu0
        %v3184 = vadd.f32 0.0, %v3183
        %v3185 = vpop.f32.mrb[0].mxu0
        %v3186 = vpop.f32.mrb[0].mxu0
        %v3187 = vadd.f32 0.0, %v3186
        %v3188 = vpop.f32.mrb[0].mxu0
        %3189 = vmatprep.mubr.bf16.mxu0 0
        %3190 = vmatmul.mubr.bf16.gmra.mrb[0].mxu0 %v3114
        %v3191 = vpop.f32.mrb[0].mxu0
        %v3192 = vadd.f32 0.0, %v3191
        %v3193 = vpop.f32.mrb[0].mxu0
        %v3194 = vpop.f32.mrb[0].mxu0
        %v3195 = vadd.f32 0.0, %v3194
        %v3196 = vpop.f32.mrb[0].mxu0
        %3197 = vmatprep.mubr.bf16.mxu0 0
        %3198 = vmatmul.mubr.bf16.gmra.mrb[0].mxu0 %v3115
        %v3199 = vpop.f32.mrb[0].mxu0
        %v3200 = vadd.f32 0.0, %v3199
        %v3201 = vpop.f32.mrb[0].mxu0
        %v3202 = vpop.f32.mrb[0].mxu0
        %v3203 = vadd.f32 0.0, %v3202
        %v3204 = vpop.f32.mrb[0].mxu0
        %3205 = vmatprep.mubr.bf16.mxu0 0
        %3206 = vmatmul.mubr.bf16.gmra.mrb[0].mxu0 %v3116
        %v3207 = vpop.f32.mrb[0].mxu0
        %v3208 = vadd.f32 0.0, %v3207
        %v3209 = vpop.f32.mrb[0].mxu0
        %v3210 = vpop.f32.mrb[0].mxu0
        %v3211 = vadd.f32 0.0, %v3210
        %v3212 = vpop.f32.mrb[0].mxu0
        %3213 = vdwg.mxu0
        %v3214 = vrcp.pop %v3078
        %v3215 = vrcp.pop %v3080
        %v3216 = vrcp.pop %v3082
        %v3217 = vrcp.pop %v3084
        %v3218 = vrcp.pop %v3086
        %v3219 = vrcp.pop %v3088
        %v3220 = vrcp.pop %v3090
        %v3221 = vrcp.pop %v3092
        %v3222 = vrcp.pop %v3094
        %v3223 = vrcp.pop %v3096
        %v3224 = vrcp.pop %v3098
        %v3225 = vrcp.pop %v3100
        %v3226 = vrcp.pop %v3102
        %v3227 = vrcp.pop %v3104
        %v3228 = vrcp.pop %v3106
        %v3229 = vrcp.pop %v3108
        %v3230 = vmul.f32 %v3152, %v3214
        %v3231 = vmul.f32 %v3155, %v3215
        %v3232 = vmul.f32 %v3160, %v3216
        %v3233 = vmul.f32 %v3163, %v3217
        %v3234 = vmul.f32 %v3168, %v3218
        %v3235 = vmul.f32 %v3171, %v3219
        %v3236 = vmul.f32 %v3176, %v3220
        %v3237 = vmul.f32 %v3179, %v3221
        %v3238 = vmul.f32 %v3184, %v3222
        %v3239 = vmul.f32 %v3187, %v3223
        %v3240 = vmul.f32 %v3192, %v3224
        %v3241 = vmul.f32 %v3195, %v3225
        %v3242 = vmul.f32 %v3200, %v3226
        %v3243 = vmul.f32 %v3203, %v3227
        %v3244 = vmul.f32 %v3208, %v3228
        %v3245 = vmul.f32 %v3211, %v3229
        %3246 = vst.msk [vmem:[#allocation2] sm:$0xff] %vm2851, %v3230
        %3247 = vst.msk [vmem:[#allocation2 + $0x18] sm:$0xff] %vm2851, %v3231
        %3248 = vst.msk [vmem:[#allocation2 + $0x30] sm:$0xff] %vm2851, %v3232
        %3249 = vst.msk [vmem:[#allocation2 + $0x48] sm:$0xff] %vm2851, %v3233
        %3250 = vst.msk [vmem:[#allocation2 + $0x60] sm:$0xff] %vm2851, %v3234
        %3251 = vst.msk [vmem:[#allocation2 + $0x78] sm:$0xff] %vm2851, %v3235
        %3252 = vst.msk [vmem:[#allocation2 + $0x90] sm:$0xff] %vm2851, %v3236
        %3253 = vst.msk [vmem:[#allocation2 + $0xa8] sm:$0xff] %vm2851, %v3237
        %3254 = vst.msk [vmem:[#allocation2 + $0xc0] sm:$0xff] %vm2851, %v3238
        %3255 = vst.msk [vmem:[#allocation2 + $0xd8] sm:$0xff] %vm2851, %v3239
        %3256 = vst.msk [vmem:[#allocation2 + $0xf0] sm:$0xff] %vm2851, %v3240
        %3257 = vst.msk [vmem:[#allocation2 + $0x108] sm:$0xff] %vm2851, %v3241
        %3258 = vst.msk [vmem:[#allocation2 + $0x120] sm:$0xff] %vm2851, %v3242
        %3259 = vst.msk [vmem:[#allocation2 + $0x138] sm:$0xff] %vm2851, %v3243
        %3260 = vst.msk [vmem:[#allocation2 + $0x150] sm:$0xff] %vm2851, %v3244
        %3261 = vst.msk [vmem:[#allocation2 + $0x168] sm:$0xff] %vm2851, %v3245
        %3270 = vrot.lane.b32.xlu0 %v2827, 64
        %v3271 = vpop.permute.xlu0 %3270
        %3272 = vrot.lane.b32.xlu0 %v2828, 64
        %v3273 = vpop.permute.xlu0 %3272
        %3274 = vrot.lane.b32.xlu0 %v2829, 64
        %v3275 = vpop.permute.xlu0 %3274
        %3276 = vrot.lane.b32.xlu0 %v2830, 64
        %v3277 = vpop.permute.xlu0 %3276
        %3278 = vrot.lane.b32.xlu0 %v2831, 64
        %v3279 = vpop.permute.xlu0 %3278
        %3280 = vrot.lane.b32.xlu0 %v2832, 64
        %v3281 = vpop.permute.xlu0 %3280
        %3282 = vrot.lane.b32.xlu0 %v2833, 64
        %v3283 = vpop.permute.xlu0 %3282
        %3284 = vrot.lane.b32.xlu0 %v2834, 64
        %v3285 = vpop.permute.xlu0 %3284
        %3294 = vrot.lane.b32.xlu0 %v2835, 64
        %v3295 = vpop.permute.xlu0 %3294
        %3296 = vrot.lane.b32.xlu0 %v2836, 64
        %v3297 = vpop.permute.xlu0 %3296
        %3298 = vrot.lane.b32.xlu0 %v2837, 64
        %v3299 = vpop.permute.xlu0 %3298
        %3300 = vrot.lane.b32.xlu0 %v2838, 64
        %v3301 = vpop.permute.xlu0 %3300
        %3302 = vrot.lane.b32.xlu0 %v2839, 64
        %v3303 = vpop.permute.xlu0 %3302
        %3304 = vrot.lane.b32.xlu0 %v2840, 64
        %v3305 = vpop.permute.xlu0 %3304
        %3306 = vrot.lane.b32.xlu0 %v2841, 64
        %v3307 = vpop.permute.xlu0 %3306
        %3308 = vrot.lane.b32.xlu0 %v2842, 64
        %v3309 = vpop.permute.xlu0 %3308
        %v3311 = vsel %vm2851, %v3271, 0
        %v3314 = vsel %vm2851, %v3273, 0
        %v3317 = vsel %vm2851, %v3275, 0
        %v3320 = vsel %vm2851, %v3277, 0
        %v3323 = vsel %vm2851, %v3279, 0
        %v3326 = vsel %vm2851, %v3281, 0
        %v3329 = vsel %vm2851, %v3283, 0
        %v3332 = vsel %vm2851, %v3285, 0
        %v3335 = vsel %vm2851, %v3295, 0
        %v3338 = vsel %vm2851, %v3297, 0
        %v3341 = vsel %vm2851, %v3299, 0
        %v3344 = vsel %vm2851, %v3301, 0
        %v3347 = vsel %vm2851, %v3303, 0
        %v3350 = vsel %vm2851, %v3305, 0
        %v3353 = vsel %vm2851, %v3307, 0
        %v3356 = vsel %vm2851, %v3309, 0
        %3358 = vmatprep.subr.bf16.mxu0 0
        %3359 = vmatpush1.bf16.xpose.msra.mxu0 %v3335
        %3360 = vmatprep.subr.bf16.mxu0 0
        %3361 = vmatpush1.bf16.xpose.msra.mxu0 %v3338
        %3362 = vmatprep.subr.bf16.mxu0 0
        %3363 = vmatpush1.bf16.xpose.msra.mxu0 %v3341
        %3364 = vmatprep.subr.bf16.mxu0 0
        %3365 = vmatpush1.bf16.xpose.msra.mxu0 %v3344
        %3366 = vmatprep.subr.bf16.mxu0 0
        %3367 = vmatpush1.bf16.xpose.msra.mxu0 %v3347
        %3368 = vmatprep.subr.bf16.mxu0 0
        %3369 = vmatpush1.bf16.xpose.msra.mxu0 %v3350
        %3370 = vmatprep.subr.bf16.mxu0 0
        %3371 = vmatpush1.bf16.xpose.msra.mxu0 %v3353
        %3372 = vmatprep.subr.bf16.mxu0 0
        %3373 = vmatpush1.bf16.xpose.msra.mxu0 %v3356
        %3374 = vmatprep.subr.bf16.mxu0 0
        %3375 = vmatpush1.bf16.xpose.msra.mxu0 0
        %3376 = vmatprep.subr.bf16.mxu0 0
        %3377 = vmatpush1.bf16.xpose.msra.mxu0 0
        %3378 = vmatprep.subr.bf16.mxu0 0
        %3379 = vmatpush1.bf16.xpose.msra.mxu0 0
        %3380 = vmatprep.subr.bf16.mxu0 0
        %3381 = vmatpush1.bf16.xpose.msra.mxu0 0
        %3382 = vmatprep.subr.bf16.mxu0 0
        %3383 = vmatpush1.bf16.xpose.msra.mxu0 0
        %3384 = vmatprep.subr.bf16.mxu0 0
        %3385 = vmatpush1.bf16.xpose.msra.mxu0 0
        %3386 = vmatprep.subr.bf16.mxu0 0
        %3387 = vmatpush1.bf16.xpose.msra.mxu0 0
        %3388 = vmatprep.subr.bf16.mxu0 0
        %3389 = vmatpush1.bf16.xpose.msra.mxu0 0
        %3390 = vmatprep.mubr.bf16.mxu0 0
        %3391 = vmatmul.mubr.bf16.gmra.mrb[0].mxu0 %v3311
        %v3392 = vpop.f32.mrb[0].mxu0
        %v3393 = vadd.f32 %v2795, %v3392
        %v3394 = vpop.f32.mrb[0].mxu0
        %v3395 = vpop.f32.mrb[0].mxu0
        %v3396 = vadd.f32 %v2796, %v3395
        %v3397 = vpop.f32.mrb[0].mxu0
        %3398 = vmatprep.mubr.bf16.mxu0 0
        %3399 = vmatmul.mubr.bf16.gmra.mrb[0].mxu0 %v3314
        %v3400 = vpop.f32.mrb[0].mxu0
        %v3401 = vadd.f32 %v2797, %v3400
        %v3402 = vpop.f32.mrb[0].mxu0
        %v3403 = vpop.f32.mrb[0].mxu0
        %v3404 = vadd.f32 %v2798, %v3403
        %v3405 = vpop.f32.mrb[0].mxu0
        %3406 = vmatprep.mubr.bf16.mxu0 0
        %3407 = vmatmul.mubr.bf16.gmra.mrb[0].mxu0 %v3317
        %v3408 = vpop.f32.mrb[0].mxu0
        %v3409 = vadd.f32 %v2799, %v3408
        %v3410 = vpop.f32.mrb[0].mxu0
        %v3411 = vpop.f32.mrb[0].mxu0
        %v3412 = vadd.f32 %v2800, %v3411
        %v3413 = vpop.f32.mrb[0].mxu0
        %3414 = vmatprep.mubr.bf16.mxu0 0
        %3415 = vmatmul.mubr.bf16.gmra.mrb[0].mxu0 %v3320
        %v3416 = vpop.f32.mrb[0].mxu0
        %v3417 = vadd.f32 %v2801, %v3416
        %v3418 = vpop.f32.mrb[0].mxu0
        %v3419 = vpop.f32.mrb[0].mxu0
        %v3420 = vadd.f32 %v2802, %v3419
        %v3421 = vpop.f32.mrb[0].mxu0
        %3422 = vmatprep.mubr.bf16.mxu0 0
        %3423 = vmatmul.mubr.bf16.gmra.mrb[0].mxu0 %v3323
        %v3424 = vpop.f32.mrb[0].mxu0
        %v3425 = vadd.f32 %v2803, %v3424
        %v3426 = vpop.f32.mrb[0].mxu0
        %v3427 = vpop.f32.mrb[0].mxu0
        %v3428 = vadd.f32 %v2804, %v3427
        %v3429 = vpop.f32.mrb[0].mxu0
        %3430 = vmatprep.mubr.bf16.mxu0 0
        %3431 = vmatmul.mubr.bf16.gmra.mrb[0].mxu0 %v3326
        %v3432 = vpop.f32.mrb[0].mxu0
        %v3433 = vadd.f32 %v2805, %v3432
        %v3434 = vpop.f32.mrb[0].mxu0
        %v3435 = vpop.f32.mrb[0].mxu0
        %v3436 = vadd.f32 %v2806, %v3435
        %v3437 = vpop.f32.mrb[0].mxu0
        %3438 = vmatprep.mubr.bf16.mxu0 0
        %3439 = vmatmul.mubr.bf16.gmra.mrb[0].mxu0 %v3329
        %v3440 = vpop.f32.mrb[0].mxu0
        %v3441 = vadd.f32 %v2807, %v3440
        %v3442 = vpop.f32.mrb[0].mxu0
        %v3443 = vpop.f32.mrb[0].mxu0
        %v3444 = vadd.f32 %v2808, %v3443
        %v3445 = vpop.f32.mrb[0].mxu0
        %3446 = vmatprep.mubr.bf16.mxu0 0
        %3447 = vmatmul.mubr.bf16.gmra.mrb[0].mxu0 %v3332
        %v3448 = vpop.f32.mrb[0].mxu0
        %v3449 = vadd.f32 %v2809, %v3448
        %v3450 = vpop.f32.mrb[0].mxu0
        %v3451 = vpop.f32.mrb[0].mxu0
        %v3452 = vadd.f32 %v2810, %v3451
        %v3453 = vpop.f32.mrb[0].mxu0
        %3454 = vdwg.mxu0
        %3455 = vmax.xlane.f32.xlu0 %v3393
        %v3456 = vpop.xlane.xlu0 %3455
        %3457 = vmax.xlane.f32.xlu0 %v3396
        %v3458 = vpop.xlane.xlu0 %3457
        %3459 = vmax.xlane.f32.xlu0 %v3401
        %v3460 = vpop.xlane.xlu0 %3459
        %3461 = vmax.xlane.f32.xlu0 %v3404
        %v3462 = vpop.xlane.xlu0 %3461
        %3463 = vmax.xlane.f32.xlu0 %v3409
        %v3464 = vpop.xlane.xlu0 %3463
        %3465 = vmax.xlane.f32.xlu0 %v3412
        %v3466 = vpop.xlane.xlu0 %3465
        %3467 = vmax.xlane.f32.xlu0 %v3417
        %v3468 = vpop.xlane.xlu0 %3467
        %3469 = vmax.xlane.f32.xlu0 %v3420
        %v3470 = vpop.xlane.xlu0 %3469
        %3471 = vmax.xlane.f32.xlu0 %v3425
        %v3472 = vpop.xlane.xlu0 %3471
        %3473 = vmax.xlane.f32.xlu0 %v3428
        %v3474 = vpop.xlane.xlu0 %3473
        %3475 = vmax.xlane.f32.xlu0 %v3433
        %v3476 = vpop.xlane.xlu0 %3475
        %3477 = vmax.xlane.f32.xlu0 %v3436
        %v3478 = vpop.xlane.xlu0 %3477
        %3479 = vmax.xlane.f32.xlu0 %v3441
        %v3480 = vpop.xlane.xlu0 %3479
        %3481 = vmax.xlane.f32.xlu0 %v3444
        %v3482 = vpop.xlane.xlu0 %3481
        %3483 = vmax.xlane.f32.xlu0 %v3449
        %v3484 = vpop.xlane.xlu0 %3483
        %3485 = vmax.xlane.f32.xlu0 %v3452
        %v3486 = vpop.xlane.xlu0 %3485
        %v3487 = vsub.f32 %v3393, %v3456
        %v3488 = vsub.f32 %v3396, %v3458
        %v3489 = vsub.f32 %v3401, %v3460
        %v3490 = vsub.f32 %v3404, %v3462
        %v3491 = vsub.f32 %v3409, %v3464
        %v3492 = vsub.f32 %v3412, %v3466
        %v3493 = vsub.f32 %v3417, %v3468
        %v3494 = vsub.f32 %v3420, %v3470
        %v3495 = vsub.f32 %v3425, %v3472
        %v3496 = vsub.f32 %v3428, %v3474
        %v3497 = vsub.f32 %v3433, %v3476
        %v3498 = vsub.f32 %v3436, %v3478
        %v3499 = vsub.f32 %v3441, %v3480
        %v3500 = vsub.f32 %v3444, %v3482
        %v3501 = vsub.f32 %v3449, %v3484
        %v3502 = vsub.f32 %v3452, %v3486
        %v3503 = vmul.f32 %v3487, 1.442695
        %v3504 = vpow.pop %v3503
        %v3505 = vmul.f32 %v3488, 1.442695
        %v3506 = vpow.pop %v3505
        %v3507 = vmul.f32 %v3489, 1.442695
        %v3508 = vpow.pop %v3507
        %v3509 = vmul.f32 %v3490, 1.442695
        %v3510 = vpow.pop %v3509
        %v3511 = vmul.f32 %v3491, 1.442695
        %v3512 = vpow.pop %v3511
        %v3513 = vmul.f32 %v3492, 1.442695
        %v3514 = vpow.pop %v3513
        %v3515 = vmul.f32 %v3493, 1.442695
        %v3516 = vpow.pop %v3515
        %v3517 = vmul.f32 %v3494, 1.442695
        %v3518 = vpow.pop %v3517
        %v3519 = vmul.f32 %v3495, 1.442695
        %v3520 = vpow.pop %v3519
        %v3521 = vmul.f32 %v3496, 1.442695
        %v3522 = vpow.pop %v3521
        %v3523 = vmul.f32 %v3497, 1.442695
        %v3524 = vpow.pop %v3523
        %v3525 = vmul.f32 %v3498, 1.442695
        %v3526 = vpow.pop %v3525
        %v3527 = vmul.f32 %v3499, 1.442695
        %v3528 = vpow.pop %v3527
        %v3529 = vmul.f32 %v3500, 1.442695
        %v3530 = vpow.pop %v3529
        %v3531 = vmul.f32 %v3501, 1.442695
        %v3532 = vpow.pop %v3531
        %v3533 = vmul.f32 %v3502, 1.442695
        %v3534 = vpow.pop %v3533
        %3535 = vadd.xlane.f32.xlu0 %v3504
        %v3536 = vpop.xlane.xlu0 %3535
        %3537 = vadd.xlane.f32.xlu0 %v3506
        %v3538 = vpop.xlane.xlu0 %3537
        %3539 = vadd.xlane.f32.xlu0 %v3508
        %v3540 = vpop.xlane.xlu0 %3539
        %3541 = vadd.xlane.f32.xlu0 %v3510
        %v3542 = vpop.xlane.xlu0 %3541
        %3543 = vadd.xlane.f32.xlu0 %v3512
        %v3544 = vpop.xlane.xlu0 %3543
        %3545 = vadd.xlane.f32.xlu0 %v3514
        %v3546 = vpop.xlane.xlu0 %3545
        %3547 = vadd.xlane.f32.xlu0 %v3516
        %v3548 = vpop.xlane.xlu0 %3547
        %3549 = vadd.xlane.f32.xlu0 %v3518
        %v3550 = vpop.xlane.xlu0 %3549
        %3551 = vadd.xlane.f32.xlu0 %v3520
        %v3552 = vpop.xlane.xlu0 %3551
        %3553 = vadd.xlane.f32.xlu0 %v3522
        %v3554 = vpop.xlane.xlu0 %3553
        %3555 = vadd.xlane.f32.xlu0 %v3524
        %v3556 = vpop.xlane.xlu0 %3555
        %3557 = vadd.xlane.f32.xlu0 %v3526
        %v3558 = vpop.xlane.xlu0 %3557
        %3559 = vadd.xlane.f32.xlu0 %v3528
        %v3560 = vpop.xlane.xlu0 %3559
        %3561 = vadd.xlane.f32.xlu0 %v3530
        %v3562 = vpop.xlane.xlu0 %3561
        %3563 = vadd.xlane.f32.xlu0 %v3532
        %v3564 = vpop.xlane.xlu0 %3563
        %3565 = vadd.xlane.f32.xlu0 %v3534
        %v3566 = vpop.xlane.xlu0 %3565
        %v3567 = vpack.c.bf16 %v3506, %v3504
        %v3568 = vpack.c.bf16 %v3510, %v3508
        %v3569 = vpack.c.bf16 %v3514, %v3512
        %v3570 = vpack.c.bf16 %v3518, %v3516
        %v3571 = vpack.c.bf16 %v3522, %v3520
        %v3572 = vpack.c.bf16 %v3526, %v3524
        %v3573 = vpack.c.bf16 %v3530, %v3528
        %v3574 = vpack.c.bf16 %v3534, %v3532
        %3583 = vrot.lane.b32.xlu0 %v2843, 64
        %v3584 = vpop.permute.xlu0 %3583
        %3585 = vrot.lane.b32.xlu0 %v2844, 64
        %v3586 = vpop.permute.xlu0 %3585
        %3587 = vrot.lane.b32.xlu0 %v2845, 64
        %v3588 = vpop.permute.xlu0 %3587
        %3589 = vrot.lane.b32.xlu0 %v2846, 64
        %v3590 = vpop.permute.xlu0 %3589
        %3591 = vrot.lane.b32.xlu0 %v2847, 64
        %v3592 = vpop.permute.xlu0 %3591
        %3593 = vrot.lane.b32.xlu0 %v2848, 64
        %v3594 = vpop.permute.xlu0 %3593
        %3595 = vrot.lane.b32.xlu0 %v2849, 64
        %v3596 = vpop.permute.xlu0 %3595
        %3597 = vrot.lane.b32.xlu0 %v2850, 64
        %v3598 = vpop.permute.xlu0 %3597
        %3607 = vmatprep.subr.bf16.mxu0 0
        %3608 = vmatpush1.bf16.msra.mxu0 %v3584
        %3609 = vmatprep.subr.bf16.mxu0 0
        %3610 = vmatpush1.bf16.msra.mxu0 %v3586
        %3611 = vmatprep.subr.bf16.mxu0 0
        %3612 = vmatpush1.bf16.msra.mxu0 %v3588
        %3613 = vmatprep.subr.bf16.mxu0 0
        %3614 = vmatpush1.bf16.msra.mxu0 %v3590
        %3615 = vmatprep.subr.bf16.mxu0 0
        %3616 = vmatpush1.bf16.msra.mxu0 %v3592
        %3617 = vmatprep.subr.bf16.mxu0 0
        %3618 = vmatpush1.bf16.msra.mxu0 %v3594
        %3619 = vmatprep.subr.bf16.mxu0 0
        %3620 = vmatpush1.bf16.msra.mxu0 %v3596
        %3621 = vmatprep.subr.bf16.mxu0 0
        %3622 = vmatpush1.bf16.msra.mxu0 %v3598
        %3623 = vmatprep.subr.bf16.mxu0 0
        %3624 = vmatpush1.bf16.msra.mxu0 0
        %3625 = vmatprep.subr.bf16.mxu0 0
        %3626 = vmatpush1.bf16.msra.mxu0 0
        %3627 = vmatprep.subr.bf16.mxu0 0
        %3628 = vmatpush1.bf16.msra.mxu0 0
        %3629 = vmatprep.subr.bf16.mxu0 0
        %3630 = vmatpush1.bf16.msra.mxu0 0
        %3631 = vmatprep.subr.bf16.mxu0 0
        %3632 = vmatpush1.bf16.msra.mxu0 0
        %3633 = vmatprep.subr.bf16.mxu0 0
        %3634 = vmatpush1.bf16.msra.mxu0 0
        %3635 = vmatprep.subr.bf16.mxu0 0
        %3636 = vmatpush1.bf16.msra.mxu0 0
        %3637 = vmatprep.subr.bf16.mxu0 0
        %3638 = vmatpush1.bf16.msra.mxu0 0
        %3639 = vmatprep.mubr.bf16.mxu0 0
        %3640 = vmatmul.mubr.bf16.gmra.mrb[0].mxu0 %v3567
        %v3641 = vpop.f32.mrb[0].mxu0
        %v3642 = vadd.f32 0.0, %v3641
        %v3643 = vpop.f32.mrb[0].mxu0
        %v3644 = vpop.f32.mrb[0].mxu0
        %v3645 = vadd.f32 0.0, %v3644
        %v3646 = vpop.f32.mrb[0].mxu0
        %3647 = vmatprep.mubr.bf16.mxu0 0
        %3648 = vmatmul.mubr.bf16.gmra.mrb[0].mxu0 %v3568
        %v3649 = vpop.f32.mrb[0].mxu0
        %v3650 = vadd.f32 0.0, %v3649
        %v3651 = vpop.f32.mrb[0].mxu0
        %v3652 = vpop.f32.mrb[0].mxu0
        %v3653 = vadd.f32 0.0, %v3652
        %v3654 = vpop.f32.mrb[0].mxu0
        %3655 = vmatprep.mubr.bf16.mxu0 0
        %3656 = vmatmul.mubr.bf16.gmra.mrb[0].mxu0 %v3569
        %v3657 = vpop.f32.mrb[0].mxu0
        %v3658 = vadd.f32 0.0, %v3657
        %v3659 = vpop.f32.mrb[0].mxu0
        %v3660 = vpop.f32.mrb[0].mxu0
        %v3661 = vadd.f32 0.0, %v3660
        %v3662 = vpop.f32.mrb[0].mxu0
        %3663 = vmatprep.mubr.bf16.mxu0 0
        %3664 = vmatmul.mubr.bf16.gmra.mrb[0].mxu0 %v3570
        %v3665 = vpop.f32.mrb[0].mxu0
        %v3666 = vadd.f32 0.0, %v3665
        %v3667 = vpop.f32.mrb[0].mxu0
        %v3668 = vpop.f32.mrb[0].mxu0
        %v3669 = vadd.f32 0.0, %v3668
        %v3670 = vpop.f32.mrb[0].mxu0
        %3671 = vmatprep.mubr.bf16.mxu0 0
        %3672 = vmatmul.mubr.bf16.gmra.mrb[0].mxu0 %v3571
        %v3673 = vpop.f32.mrb[0].mxu0
        %v3674 = vadd.f32 0.0, %v3673
        %v3675 = vpop.f32.mrb[0].mxu0
        %v3676 = vpop.f32.mrb[0].mxu0
        %v3677 = vadd.f32 0.0, %v3676
        %v3678 = vpop.f32.mrb[0].mxu0
        %3679 = vmatprep.mubr.bf16.mxu0 0
        %3680 = vmatmul.mubr.bf16.gmra.mrb[0].mxu0 %v3572
        %v3681 = vpop.f32.mrb[0].mxu0
        %v3682 = vadd.f32 0.0, %v3681
        %v3683 = vpop.f32.mrb[0].mxu0
        %v3684 = vpop.f32.mrb[0].mxu0
        %v3685 = vadd.f32 0.0, %v3684
        %v3686 = vpop.f32.mrb[0].mxu0
        %3687 = vmatprep.mubr.bf16.mxu0 0
        %3688 = vmatmul.mubr.bf16.gmra.mrb[0].mxu0 %v3573
        %v3689 = vpop.f32.mrb[0].mxu0
        %v3690 = vadd.f32 0.0, %v3689
        %v3691 = vpop.f32.mrb[0].mxu0
        %v3692 = vpop.f32.mrb[0].mxu0
        %v3693 = vadd.f32 0.0, %v3692
        %v3694 = vpop.f32.mrb[0].mxu0
        %3695 = vmatprep.mubr.bf16.mxu0 0
        %3696 = vmatmul.mubr.bf16.gmra.mrb[0].mxu0 %v3574
        %v3697 = vpop.f32.mrb[0].mxu0
        %v3698 = vadd.f32 0.0, %v3697
        %v3699 = vpop.f32.mrb[0].mxu0
        %v3700 = vpop.f32.mrb[0].mxu0
        %v3701 = vadd.f32 0.0, %v3700
        %v3702 = vpop.f32.mrb[0].mxu0
        %3703 = vdwg.mxu0
        %v3704 = vrcp.pop %v3536
        %v3705 = vrcp.pop %v3538
        %v3706 = vrcp.pop %v3540
        %v3707 = vrcp.pop %v3542
        %v3708 = vrcp.pop %v3544
        %v3709 = vrcp.pop %v3546
        %v3710 = vrcp.pop %v3548
        %v3711 = vrcp.pop %v3550
        %v3712 = vrcp.pop %v3552
        %v3713 = vrcp.pop %v3554
        %v3714 = vrcp.pop %v3556
        %v3715 = vrcp.pop %v3558
        %v3716 = vrcp.pop %v3560
        %v3717 = vrcp.pop %v3562
        %v3718 = vrcp.pop %v3564
        %v3719 = vrcp.pop %v3566
        %v3720 = vmul.f32 %v3642, %v3704
        %v3721 = vmul.f32 %v3645, %v3705
        %v3722 = vmul.f32 %v3650, %v3706
        %v3723 = vmul.f32 %v3653, %v3707
        %v3724 = vmul.f32 %v3658, %v3708
        %v3725 = vmul.f32 %v3661, %v3709
        %v3726 = vmul.f32 %v3666, %v3710
        %v3727 = vmul.f32 %v3669, %v3711
        %v3728 = vmul.f32 %v3674, %v3712
        %v3729 = vmul.f32 %v3677, %v3713
        %v3730 = vmul.f32 %v3682, %v3714
        %v3731 = vmul.f32 %v3685, %v3715
        %v3732 = vmul.f32 %v3690, %v3716
        %v3733 = vmul.f32 %v3693, %v3717
        %v3734 = vmul.f32 %v3698, %v3718
        %v3735 = vmul.f32 %v3701, %v3719
        %3752 = vrot.lane.b32.xlu0 %v3720, 64
        %v3753 = vpop.permute.xlu0 %3752
        %3754 = vrot.lane.b32.xlu0 %v3721, 64
        %v3755 = vpop.permute.xlu0 %3754
        %3756 = vrot.lane.b32.xlu0 %v3722, 64
        %v3757 = vpop.permute.xlu0 %3756
        %3758 = vrot.lane.b32.xlu0 %v3723, 64
        %v3759 = vpop.permute.xlu0 %3758
        %3760 = vrot.lane.b32.xlu0 %v3724, 64
        %v3761 = vpop.permute.xlu0 %3760
        %3762 = vrot.lane.b32.xlu0 %v3725, 64
        %v3763 = vpop.permute.xlu0 %3762
        %3764 = vrot.lane.b32.xlu0 %v3726, 64
        %v3765 = vpop.permute.xlu0 %3764
        %3766 = vrot.lane.b32.xlu0 %v3727, 64
        %v3767 = vpop.permute.xlu0 %3766
        %3768 = vrot.lane.b32.xlu0 %v3728, 64
        %v3769 = vpop.permute.xlu0 %3768
        %3770 = vrot.lane.b32.xlu0 %v3729, 64
        %v3771 = vpop.permute.xlu0 %3770
        %3772 = vrot.lane.b32.xlu0 %v3730, 64
        %v3773 = vpop.permute.xlu0 %3772
        %3774 = vrot.lane.b32.xlu0 %v3731, 64
        %v3775 = vpop.permute.xlu0 %3774
        %3776 = vrot.lane.b32.xlu0 %v3732, 64
        %v3777 = vpop.permute.xlu0 %3776
        %3778 = vrot.lane.b32.xlu0 %v3733, 64
        %v3779 = vpop.permute.xlu0 %3778
        %3780 = vrot.lane.b32.xlu0 %v3734, 64
        %v3781 = vpop.permute.xlu0 %3780
        %3782 = vrot.lane.b32.xlu0 %v3735, 64
        %v3783 = vpop.permute.xlu0 %3782
        %vm3800 = vcmask 1048064
        %3801 = vst.msk [vmem:[#allocation2] sm:$0xff] %vm3800, %v3753
        %3802 = vst.msk [vmem:[#allocation2 + $0x18] sm:$0xff] %vm3800, %v3755
        %3803 = vst.msk [vmem:[#allocation2 + $0x30] sm:$0xff] %vm3800, %v3757
        %3804 = vst.msk [vmem:[#allocation2 + $0x48] sm:$0xff] %vm3800, %v3759
        %3805 = vst.msk [vmem:[#allocation2 + $0x60] sm:$0xff] %vm3800, %v3761
        %3806 = vst.msk [vmem:[#allocation2 + $0x78] sm:$0xff] %vm3800, %v3763
        %3807 = vst.msk [vmem:[#allocation2 + $0x90] sm:$0xff] %vm3800, %v3765
        %3808 = vst.msk [vmem:[#allocation2 + $0xa8] sm:$0xff] %vm3800, %v3767
        %3809 = vst.msk [vmem:[#allocation2 + $0xc0] sm:$0xff] %vm3800, %v3769
        %3810 = vst.msk [vmem:[#allocation2 + $0xd8] sm:$0xff] %vm3800, %v3771
        %3811 = vst.msk [vmem:[#allocation2 + $0xf0] sm:$0xff] %vm3800, %v3773
        %3812 = vst.msk [vmem:[#allocation2 + $0x108] sm:$0xff] %vm3800, %v3775
        %3813 = vst.msk [vmem:[#allocation2 + $0x120] sm:$0xff] %vm3800, %v3777
        %3814 = vst.msk [vmem:[#allocation2 + $0x138] sm:$0xff] %vm3800, %v3779
        %3815 = vst.msk [vmem:[#allocation2 + $0x150] sm:$0xff] %vm3800, %v3781
        %3816 = vst.msk [vmem:[#allocation2 + $0x168] sm:$0xff] %vm3800, %v3783
        %v3817 = vmul.f32 %v1812, 0.125
        %v3818 = vmul.f32 %v1816, 0.125
        %v3819 = vmul.f32 %v1822, 0.125
        %v3820 = vmul.f32 %v1826, 0.125
        %v3821 = vmul.f32 %v1832, 0.125
        %v3822 = vmul.f32 %v1836, 0.125
        %v3823 = vmul.f32 %v1842, 0.125
        %v3824 = vmul.f32 %v1846, 0.125
        %v3825 = vmul.f32 %v1852, 0.125
        %v3826 = vmul.f32 %v1856, 0.125
        %v3827 = vmul.f32 %v1862, 0.125
        %v3828 = vmul.f32 %v1866, 0.125
        %v3829 = vmul.f32 %v1872, 0.125
        %v3830 = vmul.f32 %v1876, 0.125
        %v3831 = vmul.f32 %v1882, 0.125
        %v3832 = vmul.f32 %v1886, 0.125
        %v3833 = vpack.c.bf16 %v3818, %v3817
        %v3834 = vpack.c.bf16 %v3820, %v3819
        %v3835 = vpack.c.bf16 %v3822, %v3821
        %v3836 = vpack.c.bf16 %v3824, %v3823
        %v3837 = vpack.c.bf16 %v3826, %v3825
        %v3838 = vpack.c.bf16 %v3828, %v3827
        %v3839 = vpack.c.bf16 %v3830, %v3829
        %v3840 = vpack.c.bf16 %v3832, %v3831
        %v3841 = vpack.c.bf16 %v2266, %v2262
        %v3842 = vpack.c.bf16 %v2276, %v2272
        %v3843 = vpack.c.bf16 %v2286, %v2282
        %v3844 = vpack.c.bf16 %v2296, %v2292
        %v3845 = vpack.c.bf16 %v2306, %v2302
        %v3846 = vpack.c.bf16 %v2316, %v2312
        %v3847 = vpack.c.bf16 %v2326, %v2322
        %v3848 = vpack.c.bf16 %v2336, %v2332
        %v3849 = vpack.c.bf16 %v2494, %v2490
        %v3850 = vpack.c.bf16 %v2504, %v2500
        %v3851 = vpack.c.bf16 %v2514, %v2510
        %v3852 = vpack.c.bf16 %v2524, %v2520
        %v3853 = vpack.c.bf16 %v2534, %v2530
        %v3854 = vpack.c.bf16 %v2544, %v2540
        %v3855 = vpack.c.bf16 %v2554, %v2550
        %v3856 = vpack.c.bf16 %v2564, %v2560
        %v3858 = vsel %vm2851, %v3833, 0
        %v3861 = vsel %vm2851, %v3834, 0
        %v3864 = vsel %vm2851, %v3835, 0
        %v3867 = vsel %vm2851, %v3836, 0
        %v3870 = vsel %vm2851, %v3837, 0
        %v3873 = vsel %vm2851, %v3838, 0
        %v3876 = vsel %vm2851, %v3839, 0
        %v3879 = vsel %vm2851, %v3840, 0
        %v3882 = vsel %vm2851, %v3841, 0
        %v3885 = vsel %vm2851, %v3842, 0
        %v3888 = vsel %vm2851, %v3843, 0
        %v3891 = vsel %vm2851, %v3844, 0
        %v3894 = vsel %vm2851, %v3845, 0
        %v3897 = vsel %vm2851, %v3846, 0
        %v3900 = vsel %vm2851, %v3847, 0
        %v3903 = vsel %vm2851, %v3848, 0
        %3905 = vmatprep.subr.bf16.mxu0 0
        %3906 = vmatpush1.bf16.xpose.msra.mxu0 %v3882
        %3907 = vmatprep.subr.bf16.mxu0 0
        %3908 = vmatpush1.bf16.xpose.msra.mxu0 %v3885
        %3909 = vmatprep.subr.bf16.mxu0 0
        %3910 = vmatpush1.bf16.xpose.msra.mxu0 %v3888
        %3911 = vmatprep.subr.bf16.mxu0 0
        %3912 = vmatpush1.bf16.xpose.msra.mxu0 %v3891
        %3913 = vmatprep.subr.bf16.mxu0 0
        %3914 = vmatpush1.bf16.xpose.msra.mxu0 %v3894
        %3915 = vmatprep.subr.bf16.mxu0 0
        %3916 = vmatpush1.bf16.xpose.msra.mxu0 %v3897
        %3917 = vmatprep.subr.bf16.mxu0 0
        %3918 = vmatpush1.bf16.xpose.msra.mxu0 %v3900
        %3919 = vmatprep.subr.bf16.mxu0 0
        %3920 = vmatpush1.bf16.xpose.msra.mxu0 %v3903
        %3921 = vmatprep.subr.bf16.mxu0 0
        %3922 = vmatpush1.bf16.xpose.msra.mxu0 0
        %3923 = vmatprep.subr.bf16.mxu0 0
        %3924 = vmatpush1.bf16.xpose.msra.mxu0 0
        %3925 = vmatprep.subr.bf16.mxu0 0
        %3926 = vmatpush1.bf16.xpose.msra.mxu0 0
        %3927 = vmatprep.subr.bf16.mxu0 0
        %3928 = vmatpush1.bf16.xpose.msra.mxu0 0
        %3929 = vmatprep.subr.bf16.mxu0 0
        %3930 = vmatpush1.bf16.xpose.msra.mxu0 0
        %3931 = vmatprep.subr.bf16.mxu0 0
        %3932 = vmatpush1.bf16.xpose.msra.mxu0 0
        %3933 = vmatprep.subr.bf16.mxu0 0
        %3934 = vmatpush1.bf16.xpose.msra.mxu0 0
        %3935 = vmatprep.subr.bf16.mxu0 0
        %3936 = vmatpush1.bf16.xpose.msra.mxu0 0
        %3937 = vmatprep.mubr.bf16.mxu0 0
        %3938 = vmatmul.mubr.bf16.gmra.mrb[0].mxu0 %v3858
        %v3939 = vpop.f32.mrb[0].mxu0
        %v3940 = vadd.f32 %v2795, %v3939
        %v3941 = vpop.f32.mrb[0].mxu0
        %v3942 = vpop.f32.mrb[0].mxu0
        %v3943 = vadd.f32 %v2796, %v3942
        %v3944 = vpop.f32.mrb[0].mxu0
        %3945 = vmatprep.mubr.bf16.mxu0 0
        %3946 = vmatmul.mubr.bf16.gmra.mrb[0].mxu0 %v3861
        %v3947 = vpop.f32.mrb[0].mxu0
        %v3948 = vadd.f32 %v2797, %v3947
        %v3949 = vpop.f32.mrb[0].mxu0
        %v3950 = vpop.f32.mrb[0].mxu0
        %v3951 = vadd.f32 %v2798, %v3950
        %v3952 = vpop.f32.mrb[0].mxu0
        %3953 = vmatprep.mubr.bf16.mxu0 0
        %3954 = vmatmul.mubr.bf16.gmra.mrb[0].mxu0 %v3864
        %v3955 = vpop.f32.mrb[0].mxu0
        %v3956 = vadd.f32 %v2799, %v3955
        %v3957 = vpop.f32.mrb[0].mxu0
        %v3958 = vpop.f32.mrb[0].mxu0
        %v3959 = vadd.f32 %v2800, %v3958
        %v3960 = vpop.f32.mrb[0].mxu0
        %3961 = vmatprep.mubr.bf16.mxu0 0
        %3962 = vmatmul.mubr.bf16.gmra.mrb[0].mxu0 %v3867
        %v3963 = vpop.f32.mrb[0].mxu0
        %v3964 = vadd.f32 %v2801, %v3963
        %v3965 = vpop.f32.mrb[0].mxu0
        %v3966 = vpop.f32.mrb[0].mxu0
        %v3967 = vadd.f32 %v2802, %v3966
        %v3968 = vpop.f32.mrb[0].mxu0
        %3969 = vmatprep.mubr.bf16.mxu0 0
        %3970 = vmatmul.mubr.bf16.gmra.mrb[0].mxu0 %v3870
        %v3971 = vpop.f32.mrb[0].mxu0
        %v3972 = vadd.f32 %v2803, %v3971
        %v3973 = vpop.f32.mrb[0].mxu0
        %v3974 = vpop.f32.mrb[0].mxu0
        %v3975 = vadd.f32 %v2804, %v3974
        %v3976 = vpop.f32.mrb[0].mxu0
        %3977 = vmatprep.mubr.bf16.mxu0 0
        %3978 = vmatmul.mubr.bf16.gmra.mrb[0].mxu0 %v3873
        %v3979 = vpop.f32.mrb[0].mxu0
        %v3980 = vadd.f32 %v2805, %v3979
        %v3981 = vpop.f32.mrb[0].mxu0
        %v3982 = vpop.f32.mrb[0].mxu0
        %v3983 = vadd.f32 %v2806, %v3982
        %v3984 = vpop.f32.mrb[0].mxu0
        %3985 = vmatprep.mubr.bf16.mxu0 0
        %3986 = vmatmul.mubr.bf16.gmra.mrb[0].mxu0 %v3876
        %v3987 = vpop.f32.mrb[0].mxu0
        %v3988 = vadd.f32 %v2807, %v3987
        %v3989 = vpop.f32.mrb[0].mxu0
        %v3990 = vpop.f32.mrb[0].mxu0
        %v3991 = vadd.f32 %v2808, %v3990
        %v3992 = vpop.f32.mrb[0].mxu0
        %3993 = vmatprep.mubr.bf16.mxu0 0
        %3994 = vmatmul.mubr.bf16.gmra.mrb[0].mxu0 %v3879
        %v3995 = vpop.f32.mrb[0].mxu0
        %v3996 = vadd.f32 %v2809, %v3995
        %v3997 = vpop.f32.mrb[0].mxu0
        %v3998 = vpop.f32.mrb[0].mxu0
        %v3999 = vadd.f32 %v2810, %v3998
        %v4000 = vpop.f32.mrb[0].mxu0
        %4001 = vdwg.mxu0
        %4002 = vmax.xlane.f32.xlu0 %v3940
        %v4003 = vpop.xlane.xlu0 %4002
        %4004 = vmax.xlane.f32.xlu0 %v3943
        %v4005 = vpop.xlane.xlu0 %4004
        %4006 = vmax.xlane.f32.xlu0 %v3948
        %v4007 = vpop.xlane.xlu0 %4006
        %4008 = vmax.xlane.f32.xlu0 %v3951
        %v4009 = vpop.xlane.xlu0 %4008
        %4010 = vmax.xlane.f32.xlu0 %v3956
        %v4011 = vpop.xlane.xlu0 %4010
        %4012 = vmax.xlane.f32.xlu0 %v3959
        %v4013 = vpop.xlane.xlu0 %4012
        %4014 = vmax.xlane.f32.xlu0 %v3964
        %v4015 = vpop.xlane.xlu0 %4014
        %4016 = vmax.xlane.f32.xlu0 %v3967
        %v4017 = vpop.xlane.xlu0 %4016
        %4018 = vmax.xlane.f32.xlu0 %v3972
        %v4019 = vpop.xlane.xlu0 %4018
        %4020 = vmax.xlane.f32.xlu0 %v3975
        %v4021 = vpop.xlane.xlu0 %4020
        %4022 = vmax.xlane.f32.xlu0 %v3980
        %v4023 = vpop.xlane.xlu0 %4022
        %4024 = vmax.xlane.f32.xlu0 %v3983
        %v4025 = vpop.xlane.xlu0 %4024
        %4026 = vmax.xlane.f32.xlu0 %v3988
        %v4027 = vpop.xlane.xlu0 %4026
        %4028 = vmax.xlane.f32.xlu0 %v3991
        %v4029 = vpop.xlane.xlu0 %4028
        %4030 = vmax.xlane.f32.xlu0 %v3996
        %v4031 = vpop.xlane.xlu0 %4030
        %4032 = vmax.xlane.f32.xlu0 %v3999
        %v4033 = vpop.xlane.xlu0 %4032
        %v4034 = vsub.f32 %v3940, %v4003
        %v4035 = vsub.f32 %v3943, %v4005
        %v4036 = vsub.f32 %v3948, %v4007
        %v4037 = vsub.f32 %v3951, %v4009
        %v4038 = vsub.f32 %v3956, %v4011
        %v4039 = vsub.f32 %v3959, %v4013
        %v4040 = vsub.f32 %v3964, %v4015
        %v4041 = vsub.f32 %v3967, %v4017
        %v4042 = vsub.f32 %v3972, %v4019
        %v4043 = vsub.f32 %v3975, %v4021
        %v4044 = vsub.f32 %v3980, %v4023
        %v4045 = vsub.f32 %v3983, %v4025
        %v4046 = vsub.f32 %v3988, %v4027
        %v4047 = vsub.f32 %v3991, %v4029
        %v4048 = vsub.f32 %v3996, %v4031
        %v4049 = vsub.f32 %v3999, %v4033
        %v4050 = vmul.f32 %v4034, 1.442695
        %v4051 = vpow.pop %v4050
        %v4052 = vmul.f32 %v4035, 1.442695
        %v4053 = vpow.pop %v4052
        %v4054 = vmul.f32 %v4036, 1.442695
        %v4055 = vpow.pop %v4054
        %v4056 = vmul.f32 %v4037, 1.442695
        %v4057 = vpow.pop %v4056
        %v4058 = vmul.f32 %v4038, 1.442695
        %v4059 = vpow.pop %v4058
        %v4060 = vmul.f32 %v4039, 1.442695
        %v4061 = vpow.pop %v4060
        %v4062 = vmul.f32 %v4040, 1.442695
        %v4063 = vpow.pop %v4062
        %v4064 = vmul.f32 %v4041, 1.442695
        %v4065 = vpow.pop %v4064
        %v4066 = vmul.f32 %v4042, 1.442695
        %v4067 = vpow.pop %v4066
        %v4068 = vmul.f32 %v4043, 1.442695
        %v4069 = vpow.pop %v4068
        %v4070 = vmul.f32 %v4044, 1.442695
        %v4071 = vpow.pop %v4070
        %v4072 = vmul.f32 %v4045, 1.442695
        %v4073 = vpow.pop %v4072
        %v4074 = vmul.f32 %v4046, 1.442695
        %v4075 = vpow.pop %v4074
        %v4076 = vmul.f32 %v4047, 1.442695
        %v4077 = vpow.pop %v4076
        %v4078 = vmul.f32 %v4048, 1.442695
        %v4079 = vpow.pop %v4078
        %v4080 = vmul.f32 %v4049, 1.442695
        %v4081 = vpow.pop %v4080
        %4082 = vadd.xlane.f32.xlu0 %v4051
        %v4083 = vpop.xlane.xlu0 %4082
        %4084 = vadd.xlane.f32.xlu0 %v4053
        %v4085 = vpop.xlane.xlu0 %4084
        %4086 = vadd.xlane.f32.xlu0 %v4055
        %v4087 = vpop.xlane.xlu0 %4086
        %4088 = vadd.xlane.f32.xlu0 %v4057
        %v4089 = vpop.xlane.xlu0 %4088
        %4090 = vadd.xlane.f32.xlu0 %v4059
        %v4091 = vpop.xlane.xlu0 %4090
        %4092 = vadd.xlane.f32.xlu0 %v4061
        %v4093 = vpop.xlane.xlu0 %4092
        %4094 = vadd.xlane.f32.xlu0 %v4063
        %v4095 = vpop.xlane.xlu0 %4094
        %4096 = vadd.xlane.f32.xlu0 %v4065
        %v4097 = vpop.xlane.xlu0 %4096
        %4098 = vadd.xlane.f32.xlu0 %v4067
        %v4099 = vpop.xlane.xlu0 %4098
        %4100 = vadd.xlane.f32.xlu0 %v4069
        %v4101 = vpop.xlane.xlu0 %4100
        %4102 = vadd.xlane.f32.xlu0 %v4071
        %v4103 = vpop.xlane.xlu0 %4102
        %4104 = vadd.xlane.f32.xlu0 %v4073
        %v4105 = vpop.xlane.xlu0 %4104
        %4106 = vadd.xlane.f32.xlu0 %v4075
        %v4107 = vpop.xlane.xlu0 %4106
        %4108 = vadd.xlane.f32.xlu0 %v4077
        %v4109 = vpop.xlane.xlu0 %4108
        %4110 = vadd.xlane.f32.xlu0 %v4079
        %v4111 = vpop.xlane.xlu0 %4110
        %4112 = vadd.xlane.f32.xlu0 %v4081
        %v4113 = vpop.xlane.xlu0 %4112
        %v4114 = vpack.c.bf16 %v4053, %v4051
        %v4115 = vpack.c.bf16 %v4057, %v4055
        %v4116 = vpack.c.bf16 %v4061, %v4059
        %v4117 = vpack.c.bf16 %v4065, %v4063
        %v4118 = vpack.c.bf16 %v4069, %v4067
        %v4119 = vpack.c.bf16 %v4073, %v4071
        %v4120 = vpack.c.bf16 %v4077, %v4075
        %v4121 = vpack.c.bf16 %v4081, %v4079
        %4122 = vmatprep.subr.bf16.mxu0 0
        %4123 = vmatpush1.bf16.msra.mxu0 %v3849
        %4124 = vmatprep.subr.bf16.mxu0 0
        %4125 = vmatpush1.bf16.msra.mxu0 %v3850
        %4126 = vmatprep.subr.bf16.mxu0 0
        %4127 = vmatpush1.bf16.msra.mxu0 %v3851
        %4128 = vmatprep.subr.bf16.mxu0 0
        %4129 = vmatpush1.bf16.msra.mxu0 %v3852
        %4130 = vmatprep.subr.bf16.mxu0 0
        %4131 = vmatpush1.bf16.msra.mxu0 %v3853
        %4132 = vmatprep.subr.bf16.mxu0 0
        %4133 = vmatpush1.bf16.msra.mxu0 %v3854
        %4134 = vmatprep.subr.bf16.mxu0 0
        %4135 = vmatpush1.bf16.msra.mxu0 %v3855
        %4136 = vmatprep.subr.bf16.mxu0 0
        %4137 = vmatpush1.bf16.msra.mxu0 %v3856
        %4138 = vmatprep.subr.bf16.mxu0 0
        %4139 = vmatpush1.bf16.msra.mxu0 0
        %4140 = vmatprep.subr.bf16.mxu0 0
        %4141 = vmatpush1.bf16.msra.mxu0 0
        %4142 = vmatprep.subr.bf16.mxu0 0
        %4143 = vmatpush1.bf16.msra.mxu0 0
        %4144 = vmatprep.subr.bf16.mxu0 0
        %4145 = vmatpush1.bf16.msra.mxu0 0
        %4146 = vmatprep.subr.bf16.mxu0 0
        %4147 = vmatpush1.bf16.msra.mxu0 0
        %4148 = vmatprep.subr.bf16.mxu0 0
        %4149 = vmatpush1.bf16.msra.mxu0 0
        %4150 = vmatprep.subr.bf16.mxu0 0
        %4151 = vmatpush1.bf16.msra.mxu0 0
        %4152 = vmatprep.subr.bf16.mxu0 0
        %4153 = vmatpush1.bf16.msra.mxu0 0
        %4154 = vmatprep.mubr.bf16.mxu0 0
        %4155 = vmatmul.mubr.bf16.gmra.mrb[0].mxu0 %v4114
        %v4156 = vpop.f32.mrb[0].mxu0
        %v4157 = vadd.f32 0.0, %v4156
        %v4158 = vpop.f32.mrb[0].mxu0
        %v4159 = vpop.f32.mrb[0].mxu0
        %v4160 = vadd.f32 0.0, %v4159
        %v4161 = vpop.f32.mrb[0].mxu0
        %4162 = vmatprep.mubr.bf16.mxu0 0
        %4163 = vmatmul.mubr.bf16.gmra.mrb[0].mxu0 %v4115
        %v4164 = vpop.f32.mrb[0].mxu0
        %v4165 = vadd.f32 0.0, %v4164
        %v4166 = vpop.f32.mrb[0].mxu0
        %v4167 = vpop.f32.mrb[0].mxu0
        %v4168 = vadd.f32 0.0, %v4167
        %v4169 = vpop.f32.mrb[0].mxu0
        %4170 = vmatprep.mubr.bf16.mxu0 0
        %4171 = vmatmul.mubr.bf16.gmra.mrb[0].mxu0 %v4116
        %v4172 = vpop.f32.mrb[0].mxu0
        %v4173 = vadd.f32 0.0, %v4172
        %v4174 = vpop.f32.mrb[0].mxu0
        %v4175 = vpop.f32.mrb[0].mxu0
        %v4176 = vadd.f32 0.0, %v4175
        %v4177 = vpop.f32.mrb[0].mxu0
        %4178 = vmatprep.mubr.bf16.mxu0 0
        %4179 = vmatmul.mubr.bf16.gmra.mrb[0].mxu0 %v4117
        %v4180 = vpop.f32.mrb[0].mxu0
        %v4181 = vadd.f32 0.0, %v4180
        %v4182 = vpop.f32.mrb[0].mxu0
        %v4183 = vpop.f32.mrb[0].mxu0
        %v4184 = vadd.f32 0.0, %v4183
        %v4185 = vpop.f32.mrb[0].mxu0
        %4186 = vmatprep.mubr.bf16.mxu0 0
        %4187 = vmatmul.mubr.bf16.gmra.mrb[0].mxu0 %v4118
        %v4188 = vpop.f32.mrb[0].mxu0
        %v4189 = vadd.f32 0.0, %v4188
        %v4190 = vpop.f32.mrb[0].mxu0
        %v4191 = vpop.f32.mrb[0].mxu0
        %v4192 = vadd.f32 0.0, %v4191
        %v4193 = vpop.f32.mrb[0].mxu0
        %4194 = vmatprep.mubr.bf16.mxu0 0
        %4195 = vmatmul.mubr.bf16.gmra.mrb[0].mxu0 %v4119
        %v4196 = vpop.f32.mrb[0].mxu0
        %v4197 = vadd.f32 0.0, %v4196
        %v4198 = vpop.f32.mrb[0].mxu0
        %v4199 = vpop.f32.mrb[0].mxu0
        %v4200 = vadd.f32 0.0, %v4199
        %v4201 = vpop.f32.mrb[0].mxu0
        %4202 = vmatprep.mubr.bf16.mxu0 0
        %4203 = vmatmul.mubr.bf16.gmra.mrb[0].mxu0 %v4120
        %v4204 = vpop.f32.mrb[0].mxu0
        %v4205 = vadd.f32 0.0, %v4204
        %v4206 = vpop.f32.mrb[0].mxu0
        %v4207 = vpop.f32.mrb[0].mxu0
        %v4208 = vadd.f32 0.0, %v4207
        %v4209 = vpop.f32.mrb[0].mxu0
        %4210 = vmatprep.mubr.bf16.mxu0 0
        %4211 = vmatmul.mubr.bf16.gmra.mrb[0].mxu0 %v4121
        %v4212 = vpop.f32.mrb[0].mxu0
        %v4213 = vadd.f32 0.0, %v4212
        %v4214 = vpop.f32.mrb[0].mxu0
        %v4215 = vpop.f32.mrb[0].mxu0
        %v4216 = vadd.f32 0.0, %v4215
        %v4217 = vpop.f32.mrb[0].mxu0
        %4218 = vdwg.mxu0
        %v4219 = vrcp.pop %v4083
        %v4220 = vrcp.pop %v4085
        %v4221 = vrcp.pop %v4087
        %v4222 = vrcp.pop %v4089
        %v4223 = vrcp.pop %v4091
        %v4224 = vrcp.pop %v4093
        %v4225 = vrcp.pop %v4095
        %v4226 = vrcp.pop %v4097
        %v4227 = vrcp.pop %v4099
        %v4228 = vrcp.pop %v4101
        %v4229 = vrcp.pop %v4103
        %v4230 = vrcp.pop %v4105
        %v4231 = vrcp.pop %v4107
        %v4232 = vrcp.pop %v4109
        %v4233 = vrcp.pop %v4111
        %v4234 = vrcp.pop %v4113
        %v4235 = vmul.f32 %v4157, %v4219
        %v4236 = vmul.f32 %v4160, %v4220
        %v4237 = vmul.f32 %v4165, %v4221
        %v4238 = vmul.f32 %v4168, %v4222
        %v4239 = vmul.f32 %v4173, %v4223
        %v4240 = vmul.f32 %v4176, %v4224
        %v4241 = vmul.f32 %v4181, %v4225
        %v4242 = vmul.f32 %v4184, %v4226
        %v4243 = vmul.f32 %v4189, %v4227
        %v4244 = vmul.f32 %v4192, %v4228
        %v4245 = vmul.f32 %v4197, %v4229
        %v4246 = vmul.f32 %v4200, %v4230
        %v4247 = vmul.f32 %v4205, %v4231
        %v4248 = vmul.f32 %v4208, %v4232
        %v4249 = vmul.f32 %v4213, %v4233
        %v4250 = vmul.f32 %v4216, %v4234
        %4251 = vst.msk [vmem:[#allocation2 + $0x8] sm:$0xff] %vm2851, %v4235
        %4252 = vst.msk [vmem:[#allocation2 + $0x20] sm:$0xff] %vm2851, %v4236
        %4253 = vst.msk [vmem:[#allocation2 + $0x38] sm:$0xff] %vm2851, %v4237
        %4254 = vst.msk [vmem:[#allocation2 + $0x50] sm:$0xff] %vm2851, %v4238
        %4255 = vst.msk [vmem:[#allocation2 + $0x68] sm:$0xff] %vm2851, %v4239
        %4256 = vst.msk [vmem:[#allocation2 + $0x80] sm:$0xff] %vm2851, %v4240
        %4257 = vst.msk [vmem:[#allocation2 + $0x98] sm:$0xff] %vm2851, %v4241
        %4258 = vst.msk [vmem:[#allocation2 + $0xb0] sm:$0xff] %vm2851, %v4242
        %4259 = vst.msk [vmem:[#allocation2 + $0xc8] sm:$0xff] %vm2851, %v4243
        %4260 = vst.msk [vmem:[#allocation2 + $0xe0] sm:$0xff] %vm2851, %v4244
        %4261 = vst.msk [vmem:[#allocation2 + $0xf8] sm:$0xff] %vm2851, %v4245
        %4262 = vst.msk [vmem:[#allocation2 + $0x110] sm:$0xff] %vm2851, %v4246
        %4263 = vst.msk [vmem:[#allocation2 + $0x128] sm:$0xff] %vm2851, %v4247
        %4264 = vst.msk [vmem:[#allocation2 + $0x140] sm:$0xff] %vm2851, %v4248
        %4265 = vst.msk [vmem:[#allocation2 + $0x158] sm:$0xff] %vm2851, %v4249
        %4266 = vst.msk [vmem:[#allocation2 + $0x170] sm:$0xff] %vm2851, %v4250
        %4275 = vrot.lane.b32.xlu0 %v3833, 64
        %v4276 = vpop.permute.xlu0 %4275
        %4277 = vrot.lane.b32.xlu0 %v3834, 64
        %v4278 = vpop.permute.xlu0 %4277
        %4279 = vrot.lane.b32.xlu0 %v3835, 64
        %v4280 = vpop.permute.xlu0 %4279
        %4281 = vrot.lane.b32.xlu0 %v3836, 64
        %v4282 = vpop.permute.xlu0 %4281
        %4283 = vrot.lane.b32.xlu0 %v3837, 64
        %v4284 = vpop.permute.xlu0 %4283
        %4285 = vrot.lane.b32.xlu0 %v3838, 64
        %v4286 = vpop.permute.xlu0 %4285
        %4287 = vrot.lane.b32.xlu0 %v3839, 64
        %v4288 = vpop.permute.xlu0 %4287
        %4289 = vrot.lane.b32.xlu0 %v3840, 64
        %v4290 = vpop.permute.xlu0 %4289
        %4299 = vrot.lane.b32.xlu0 %v3841, 64
        %v4300 = vpop.permute.xlu0 %4299
        %4301 = vrot.lane.b32.xlu0 %v3842, 64
        %v4302 = vpop.permute.xlu0 %4301
        %4303 = vrot.lane.b32.xlu0 %v3843, 64
        %v4304 = vpop.permute.xlu0 %4303
        %4305 = vrot.lane.b32.xlu0 %v3844, 64
        %v4306 = vpop.permute.xlu0 %4305
        %4307 = vrot.lane.b32.xlu0 %v3845, 64
        %v4308 = vpop.permute.xlu0 %4307
        %4309 = vrot.lane.b32.xlu0 %v3846, 64
        %v4310 = vpop.permute.xlu0 %4309
        %4311 = vrot.lane.b32.xlu0 %v3847, 64
        %v4312 = vpop.permute.xlu0 %4311
        %4313 = vrot.lane.b32.xlu0 %v3848, 64
        %v4314 = vpop.permute.xlu0 %4313
        %v4316 = vsel %vm2851, %v4276, 0
        %v4319 = vsel %vm2851, %v4278, 0
        %v4322 = vsel %vm2851, %v4280, 0
        %v4325 = vsel %vm2851, %v4282, 0
        %v4328 = vsel %vm2851, %v4284, 0
        %v4331 = vsel %vm2851, %v4286, 0
        %v4334 = vsel %vm2851, %v4288, 0
        %v4337 = vsel %vm2851, %v4290, 0
        %v4340 = vsel %vm2851, %v4300, 0
        %v4343 = vsel %vm2851, %v4302, 0
        %v4346 = vsel %vm2851, %v4304, 0
        %v4349 = vsel %vm2851, %v4306, 0
        %v4352 = vsel %vm2851, %v4308, 0
        %v4355 = vsel %vm2851, %v4310, 0
        %v4358 = vsel %vm2851, %v4312, 0
        %v4361 = vsel %vm2851, %v4314, 0
        %4363 = vmatprep.subr.bf16.mxu0 0
        %4364 = vmatpush1.bf16.xpose.msra.mxu0 %v4340
        %4365 = vmatprep.subr.bf16.mxu0 0
        %4366 = vmatpush1.bf16.xpose.msra.mxu0 %v4343
        %4367 = vmatprep.subr.bf16.mxu0 0
        %4368 = vmatpush1.bf16.xpose.msra.mxu0 %v4346
        %4369 = vmatprep.subr.bf16.mxu0 0
        %4370 = vmatpush1.bf16.xpose.msra.mxu0 %v4349
        %4371 = vmatprep.subr.bf16.mxu0 0
        %4372 = vmatpush1.bf16.xpose.msra.mxu0 %v4352
        %4373 = vmatprep.subr.bf16.mxu0 0
        %4374 = vmatpush1.bf16.xpose.msra.mxu0 %v4355
        %4375 = vmatprep.subr.bf16.mxu0 0
        %4376 = vmatpush1.bf16.xpose.msra.mxu0 %v4358
        %4377 = vmatprep.subr.bf16.mxu0 0
        %4378 = vmatpush1.bf16.xpose.msra.mxu0 %v4361
        %4379 = vmatprep.subr.bf16.mxu0 0
        %4380 = vmatpush1.bf16.xpose.msra.mxu0 0
        %4381 = vmatprep.subr.bf16.mxu0 0
        %4382 = vmatpush1.bf16.xpose.msra.mxu0 0
        %4383 = vmatprep.subr.bf16.mxu0 0
        %4384 = vmatpush1.bf16.xpose.msra.mxu0 0
        %4385 = vmatprep.subr.bf16.mxu0 0
        %4386 = vmatpush1.bf16.xpose.msra.mxu0 0
        %4387 = vmatprep.subr.bf16.mxu0 0
        %4388 = vmatpush1.bf16.xpose.msra.mxu0 0
        %4389 = vmatprep.subr.bf16.mxu0 0
        %4390 = vmatpush1.bf16.xpose.msra.mxu0 0
        %4391 = vmatprep.subr.bf16.mxu0 0
        %4392 = vmatpush1.bf16.xpose.msra.mxu0 0
        %4393 = vmatprep.subr.bf16.mxu0 0
        %4394 = vmatpush1.bf16.xpose.msra.mxu0 0
        %4395 = vmatprep.mubr.bf16.mxu0 0
        %4396 = vmatmul.mubr.bf16.gmra.mrb[0].mxu0 %v4316
        %v4397 = vpop.f32.mrb[0].mxu0
        %v4398 = vadd.f32 %v2795, %v4397
        %v4399 = vpop.f32.mrb[0].mxu0
        %v4400 = vpop.f32.mrb[0].mxu0
        %v4401 = vadd.f32 %v2796, %v4400
        %v4402 = vpop.f32.mrb[0].mxu0
        %4403 = vmatprep.mubr.bf16.mxu0 0
        %4404 = vmatmul.mubr.bf16.gmra.mrb[0].mxu0 %v4319
        %v4405 = vpop.f32.mrb[0].mxu0
        %v4406 = vadd.f32 %v2797, %v4405
        %v4407 = vpop.f32.mrb[0].mxu0
        %v4408 = vpop.f32.mrb[0].mxu0
        %v4409 = vadd.f32 %v2798, %v4408
        %v4410 = vpop.f32.mrb[0].mxu0
        %4411 = vmatprep.mubr.bf16.mxu0 0
        %4412 = vmatmul.mubr.bf16.gmra.mrb[0].mxu0 %v4322
        %v4413 = vpop.f32.mrb[0].mxu0
        %v4414 = vadd.f32 %v2799, %v4413
        %v4415 = vpop.f32.mrb[0].mxu0
        %v4416 = vpop.f32.mrb[0].mxu0
        %v4417 = vadd.f32 %v2800, %v4416
        %v4418 = vpop.f32.mrb[0].mxu0
        %4419 = vmatprep.mubr.bf16.mxu0 0
        %4420 = vmatmul.mubr.bf16.gmra.mrb[0].mxu0 %v4325
        %v4421 = vpop.f32.mrb[0].mxu0
        %v4422 = vadd.f32 %v2801, %v4421
        %v4423 = vpop.f32.mrb[0].mxu0
        %v4424 = vpop.f32.mrb[0].mxu0
        %v4425 = vadd.f32 %v2802, %v4424
        %v4426 = vpop.f32.mrb[0].mxu0
        %4427 = vmatprep.mubr.bf16.mxu0 0
        %4428 = vmatmul.mubr.bf16.gmra.mrb[0].mxu0 %v4328
        %v4429 = vpop.f32.mrb[0].mxu0
        %v4430 = vadd.f32 %v2803, %v4429
        %v4431 = vpop.f32.mrb[0].mxu0
        %v4432 = vpop.f32.mrb[0].mxu0
        %v4433 = vadd.f32 %v2804, %v4432
        %v4434 = vpop.f32.mrb[0].mxu0
        %4435 = vmatprep.mubr.bf16.mxu0 0
        %4436 = vmatmul.mubr.bf16.gmra.mrb[0].mxu0 %v4331
        %v4437 = vpop.f32.mrb[0].mxu0
        %v4438 = vadd.f32 %v2805, %v4437
        %v4439 = vpop.f32.mrb[0].mxu0
        %v4440 = vpop.f32.mrb[0].mxu0
        %v4441 = vadd.f32 %v2806, %v4440
        %v4442 = vpop.f32.mrb[0].mxu0
        %4443 = vmatprep.mubr.bf16.mxu0 0
        %4444 = vmatmul.mubr.bf16.gmra.mrb[0].mxu0 %v4334
        %v4445 = vpop.f32.mrb[0].mxu0
        %v4446 = vadd.f32 %v2807, %v4445
        %v4447 = vpop.f32.mrb[0].mxu0
        %v4448 = vpop.f32.mrb[0].mxu0
        %v4449 = vadd.f32 %v2808, %v4448
        %v4450 = vpop.f32.mrb[0].mxu0
        %4451 = vmatprep.mubr.bf16.mxu0 0
        %4452 = vmatmul.mubr.bf16.gmra.mrb[0].mxu0 %v4337
        %v4453 = vpop.f32.mrb[0].mxu0
        %v4454 = vadd.f32 %v2809, %v4453
        %v4455 = vpop.f32.mrb[0].mxu0
        %v4456 = vpop.f32.mrb[0].mxu0
        %v4457 = vadd.f32 %v2810, %v4456
        %v4458 = vpop.f32.mrb[0].mxu0
        %4459 = vdwg.mxu0
        %4460 = vmax.xlane.f32.xlu0 %v4398
        %v4461 = vpop.xlane.xlu0 %4460
        %4462 = vmax.xlane.f32.xlu0 %v4401
        %v4463 = vpop.xlane.xlu0 %4462
        %4464 = vmax.xlane.f32.xlu0 %v4406
        %v4465 = vpop.xlane.xlu0 %4464
        %4466 = vmax.xlane.f32.xlu0 %v4409
        %v4467 = vpop.xlane.xlu0 %4466
        %4468 = vmax.xlane.f32.xlu0 %v4414
        %v4469 = vpop.xlane.xlu0 %4468
        %4470 = vmax.xlane.f32.xlu0 %v4417
        %v4471 = vpop.xlane.xlu0 %4470
        %4472 = vmax.xlane.f32.xlu0 %v4422
        %v4473 = vpop.xlane.xlu0 %4472
        %4474 = vmax.xlane.f32.xlu0 %v4425
        %v4475 = vpop.xlane.xlu0 %4474
        %4476 = vmax.xlane.f32.xlu0 %v4430
        %v4477 = vpop.xlane.xlu0 %4476
        %4478 = vmax.xlane.f32.xlu0 %v4433
        %v4479 = vpop.xlane.xlu0 %4478
        %4480 = vmax.xlane.f32.xlu0 %v4438
        %v4481 = vpop.xlane.xlu0 %4480
        %4482 = vmax.xlane.f32.xlu0 %v4441
        %v4483 = vpop.xlane.xlu0 %4482
        %4484 = vmax.xlane.f32.xlu0 %v4446
        %v4485 = vpop.xlane.xlu0 %4484
        %4486 = vmax.xlane.f32.xlu0 %v4449
        %v4487 = vpop.xlane.xlu0 %4486
        %4488 = vmax.xlane.f32.xlu0 %v4454
        %v4489 = vpop.xlane.xlu0 %4488
        %4490 = vmax.xlane.f32.xlu0 %v4457
        %v4491 = vpop.xlane.xlu0 %4490
        %v4492 = vsub.f32 %v4398, %v4461
        %v4493 = vsub.f32 %v4401, %v4463
        %v4494 = vsub.f32 %v4406, %v4465
        %v4495 = vsub.f32 %v4409, %v4467
        %v4496 = vsub.f32 %v4414, %v4469
        %v4497 = vsub.f32 %v4417, %v4471
        %v4498 = vsub.f32 %v4422, %v4473
        %v4499 = vsub.f32 %v4425, %v4475
        %v4500 = vsub.f32 %v4430, %v4477
        %v4501 = vsub.f32 %v4433, %v4479
        %v4502 = vsub.f32 %v4438, %v4481
        %v4503 = vsub.f32 %v4441, %v4483
        %v4504 = vsub.f32 %v4446, %v4485
        %v4505 = vsub.f32 %v4449, %v4487
        %v4506 = vsub.f32 %v4454, %v4489
        %v4507 = vsub.f32 %v4457, %v4491
        %v4508 = vmul.f32 %v4492, 1.442695
        %v4509 = vpow.pop %v4508
        %v4510 = vmul.f32 %v4493, 1.442695
        %v4511 = vpow.pop %v4510
        %v4512 = vmul.f32 %v4494, 1.442695
        %v4513 = vpow.pop %v4512
        %v4514 = vmul.f32 %v4495, 1.442695
        %v4515 = vpow.pop %v4514
        %v4516 = vmul.f32 %v4496, 1.442695
        %v4517 = vpow.pop %v4516
        %v4518 = vmul.f32 %v4497, 1.442695
        %v4519 = vpow.pop %v4518
        %v4520 = vmul.f32 %v4498, 1.442695
        %v4521 = vpow.pop %v4520
        %v4522 = vmul.f32 %v4499, 1.442695
        %v4523 = vpow.pop %v4522
        %v4524 = vmul.f32 %v4500, 1.442695
        %v4525 = vpow.pop %v4524
        %v4526 = vmul.f32 %v4501, 1.442695
        %v4527 = vpow.pop %v4526
        %v4528 = vmul.f32 %v4502, 1.442695
        %v4529 = vpow.pop %v4528
        %v4530 = vmul.f32 %v4503, 1.442695
        %v4531 = vpow.pop %v4530
        %v4532 = vmul.f32 %v4504, 1.442695
        %v4533 = vpow.pop %v4532
        %v4534 = vmul.f32 %v4505, 1.442695
        %v4535 = vpow.pop %v4534
        %v4536 = vmul.f32 %v4506, 1.442695
        %v4537 = vpow.pop %v4536
        %v4538 = vmul.f32 %v4507, 1.442695
        %v4539 = vpow.pop %v4538
        %4540 = vadd.xlane.f32.xlu0 %v4509
        %v4541 = vpop.xlane.xlu0 %4540
        %4542 = vadd.xlane.f32.xlu0 %v4511
        %v4543 = vpop.xlane.xlu0 %4542
        %4544 = vadd.xlane.f32.xlu0 %v4513
        %v4545 = vpop.xlane.xlu0 %4544
        %4546 = vadd.xlane.f32.xlu0 %v4515
        %v4547 = vpop.xlane.xlu0 %4546
        %4548 = vadd.xlane.f32.xlu0 %v4517
        %v4549 = vpop.xlane.xlu0 %4548
        %4550 = vadd.xlane.f32.xlu0 %v4519
        %v4551 = vpop.xlane.xlu0 %4550
        %4552 = vadd.xlane.f32.xlu0 %v4521
        %v4553 = vpop.xlane.xlu0 %4552
        %4554 = vadd.xlane.f32.xlu0 %v4523
        %v4555 = vpop.xlane.xlu0 %4554
        %4556 = vadd.xlane.f32.xlu0 %v4525
        %v4557 = vpop.xlane.xlu0 %4556
        %4558 = vadd.xlane.f32.xlu0 %v4527
        %v4559 = vpop.xlane.xlu0 %4558
        %4560 = vadd.xlane.f32.xlu0 %v4529
        %v4561 = vpop.xlane.xlu0 %4560
        %4562 = vadd.xlane.f32.xlu0 %v4531
        %v4563 = vpop.xlane.xlu0 %4562
        %4564 = vadd.xlane.f32.xlu0 %v4533
        %v4565 = vpop.xlane.xlu0 %4564
        %4566 = vadd.xlane.f32.xlu0 %v4535
        %v4567 = vpop.xlane.xlu0 %4566
        %4568 = vadd.xlane.f32.xlu0 %v4537
        %v4569 = vpop.xlane.xlu0 %4568
        %4570 = vadd.xlane.f32.xlu0 %v4539
        %v4571 = vpop.xlane.xlu0 %4570
        %v4572 = vpack.c.bf16 %v4511, %v4509
        %v4573 = vpack.c.bf16 %v4515, %v4513
        %v4574 = vpack.c.bf16 %v4519, %v4517
        %v4575 = vpack.c.bf16 %v4523, %v4521
        %v4576 = vpack.c.bf16 %v4527, %v4525
        %v4577 = vpack.c.bf16 %v4531, %v4529
        %v4578 = vpack.c.bf16 %v4535, %v4533
        %v4579 = vpack.c.bf16 %v4539, %v4537
        %4588 = vrot.lane.b32.xlu0 %v3849, 64
        %v4589 = vpop.permute.xlu0 %4588
        %4590 = vrot.lane.b32.xlu0 %v3850, 64
        %v4591 = vpop.permute.xlu0 %4590
        %4592 = vrot.lane.b32.xlu0 %v3851, 64
        %v4593 = vpop.permute.xlu0 %4592
        %4594 = vrot.lane.b32.xlu0 %v3852, 64
        %v4595 = vpop.permute.xlu0 %4594
        %4596 = vrot.lane.b32.xlu0 %v3853, 64
        %v4597 = vpop.permute.xlu0 %4596
        %4598 = vrot.lane.b32.xlu0 %v3854, 64
        %v4599 = vpop.permute.xlu0 %4598
        %4600 = vrot.lane.b32.xlu0 %v3855, 64
        %v4601 = vpop.permute.xlu0 %4600
        %4602 = vrot.lane.b32.xlu0 %v3856, 64
        %v4603 = vpop.permute.xlu0 %4602
        %4612 = vmatprep.subr.bf16.mxu0 0
        %4613 = vmatpush1.bf16.msra.mxu0 %v4589
        %4614 = vmatprep.subr.bf16.mxu0 0
        %4615 = vmatpush1.bf16.msra.mxu0 %v4591
        %4616 = vmatprep.subr.bf16.mxu0 0
        %4617 = vmatpush1.bf16.msra.mxu0 %v4593
        %4618 = vmatprep.subr.bf16.mxu0 0
        %4619 = vmatpush1.bf16.msra.mxu0 %v4595
        %4620 = vmatprep.subr.bf16.mxu0 0
        %4621 = vmatpush1.bf16.msra.mxu0 %v4597
        %4622 = vmatprep.subr.bf16.mxu0 0
        %4623 = vmatpush1.bf16.msra.mxu0 %v4599
        %4624 = vmatprep.subr.bf16.mxu0 0
        %4625 = vmatpush1.bf16.msra.mxu0 %v4601
        %4626 = vmatprep.subr.bf16.mxu0 0
        %4627 = vmatpush1.bf16.msra.mxu0 %v4603
        %4628 = vmatprep.subr.bf16.mxu0 0
        %4629 = vmatpush1.bf16.msra.mxu0 0
        %4630 = vmatprep.subr.bf16.mxu0 0
        %4631 = vmatpush1.bf16.msra.mxu0 0
        %4632 = vmatprep.subr.bf16.mxu0 0
        %4633 = vmatpush1.bf16.msra.mxu0 0
        %4634 = vmatprep.subr.bf16.mxu0 0
        %4635 = vmatpush1.bf16.msra.mxu0 0
        %4636 = vmatprep.subr.bf16.mxu0 0
        %4637 = vmatpush1.bf16.msra.mxu0 0
        %4638 = vmatprep.subr.bf16.mxu0 0
        %4639 = vmatpush1.bf16.msra.mxu0 0
        %4640 = vmatprep.subr.bf16.mxu0 0
        %4641 = vmatpush1.bf16.msra.mxu0 0
        %4642 = vmatprep.subr.bf16.mxu0 0
        %4643 = vmatpush1.bf16.msra.mxu0 0
        %4644 = vmatprep.mubr.bf16.mxu0 0
        %4645 = vmatmul.mubr.bf16.gmra.mrb[0].mxu0 %v4572
        %v4646 = vpop.f32.mrb[0].mxu0
        %v4647 = vadd.f32 0.0, %v4646
        %v4648 = vpop.f32.mrb[0].mxu0
        %v4649 = vpop.f32.mrb[0].mxu0
        %v4650 = vadd.f32 0.0, %v4649
        %v4651 = vpop.f32.mrb[0].mxu0
        %4652 = vmatprep.mubr.bf16.mxu0 0
        %4653 = vmatmul.mubr.bf16.gmra.mrb[0].mxu0 %v4573
        %v4654 = vpop.f32.mrb[0].mxu0
        %v4655 = vadd.f32 0.0, %v4654
        %v4656 = vpop.f32.mrb[0].mxu0
        %v4657 = vpop.f32.mrb[0].mxu0
        %v4658 = vadd.f32 0.0, %v4657
        %v4659 = vpop.f32.mrb[0].mxu0
        %4660 = vmatprep.mubr.bf16.mxu0 0
        %4661 = vmatmul.mubr.bf16.gmra.mrb[0].mxu0 %v4574
        %v4662 = vpop.f32.mrb[0].mxu0
        %v4663 = vadd.f32 0.0, %v4662
        %v4664 = vpop.f32.mrb[0].mxu0
        %v4665 = vpop.f32.mrb[0].mxu0
        %v4666 = vadd.f32 0.0, %v4665
        %v4667 = vpop.f32.mrb[0].mxu0
        %4668 = vmatprep.mubr.bf16.mxu0 0
        %4669 = vmatmul.mubr.bf16.gmra.mrb[0].mxu0 %v4575
        %v4670 = vpop.f32.mrb[0].mxu0
        %v4671 = vadd.f32 0.0, %v4670
        %v4672 = vpop.f32.mrb[0].mxu0
        %v4673 = vpop.f32.mrb[0].mxu0
        %v4674 = vadd.f32 0.0, %v4673
        %v4675 = vpop.f32.mrb[0].mxu0
        %4676 = vmatprep.mubr.bf16.mxu0 0
        %4677 = vmatmul.mubr.bf16.gmra.mrb[0].mxu0 %v4576
        %v4678 = vpop.f32.mrb[0].mxu0
        %v4679 = vadd.f32 0.0, %v4678
        %v4680 = vpop.f32.mrb[0].mxu0
        %v4681 = vpop.f32.mrb[0].mxu0
        %v4682 = vadd.f32 0.0, %v4681
        %v4683 = vpop.f32.mrb[0].mxu0
        %4684 = vmatprep.mubr.bf16.mxu0 0
        %4685 = vmatmul.mubr.bf16.gmra.mrb[0].mxu0 %v4577
        %v4686 = vpop.f32.mrb[0].mxu0
        %v4687 = vadd.f32 0.0, %v4686
        %v4688 = vpop.f32.mrb[0].mxu0
        %v4689 = vpop.f32.mrb[0].mxu0
        %v4690 = vadd.f32 0.0, %v4689
        %v4691 = vpop.f32.mrb[0].mxu0
        %4692 = vmatprep.mubr.bf16.mxu0 0
        %4693 = vmatmul.mubr.bf16.gmra.mrb[0].mxu0 %v4578
        %v4694 = vpop.f32.mrb[0].mxu0
        %v4695 = vadd.f32 0.0, %v4694
        %v4696 = vpop.f32.mrb[0].mxu0
        %v4697 = vpop.f32.mrb[0].mxu0
        %v4698 = vadd.f32 0.0, %v4697
        %v4699 = vpop.f32.mrb[0].mxu0
        %4700 = vmatprep.mubr.bf16.mxu0 0
        %4701 = vmatmul.mubr.bf16.gmra.mrb[0].mxu0 %v4579
        %v4702 = vpop.f32.mrb[0].mxu0
        %v4703 = vadd.f32 0.0, %v4702
        %v4704 = vpop.f32.mrb[0].mxu0
        %v4705 = vpop.f32.mrb[0].mxu0
        %v4706 = vadd.f32 0.0, %v4705
        %v4707 = vpop.f32.mrb[0].mxu0
        %4708 = vdwg.mxu0
        %v4709 = vrcp.pop %v4541
        %v4710 = vrcp.pop %v4543
        %v4711 = vrcp.pop %v4545
        %v4712 = vrcp.pop %v4547
        %v4713 = vrcp.pop %v4549
        %v4714 = vrcp.pop %v4551
        %v4715 = vrcp.pop %v4553
        %v4716 = vrcp.pop %v4555
        %v4717 = vrcp.pop %v4557
        %v4718 = vrcp.pop %v4559
        %v4719 = vrcp.pop %v4561
        %v4720 = vrcp.pop %v4563
        %v4721 = vrcp.pop %v4565
        %v4722 = vrcp.pop %v4567
        %v4723 = vrcp.pop %v4569
        %v4724 = vrcp.pop %v4571
        %v4725 = vmul.f32 %v4647, %v4709
        %v4726 = vmul.f32 %v4650, %v4710
        %v4727 = vmul.f32 %v4655, %v4711
        %v4728 = vmul.f32 %v4658, %v4712
        %v4729 = vmul.f32 %v4663, %v4713
        %v4730 = vmul.f32 %v4666, %v4714
        %v4731 = vmul.f32 %v4671, %v4715
        %v4732 = vmul.f32 %v4674, %v4716
        %v4733 = vmul.f32 %v4679, %v4717
        %v4734 = vmul.f32 %v4682, %v4718
        %v4735 = vmul.f32 %v4687, %v4719
        %v4736 = vmul.f32 %v4690, %v4720
        %v4737 = vmul.f32 %v4695, %v4721
        %v4738 = vmul.f32 %v4698, %v4722
        %v4739 = vmul.f32 %v4703, %v4723
        %v4740 = vmul.f32 %v4706, %v4724
        %4757 = vrot.lane.b32.xlu0 %v4725, 64
        %v4758 = vpop.permute.xlu0 %4757
        %4759 = vrot.lane.b32.xlu0 %v4726, 64
        %v4760 = vpop.permute.xlu0 %4759
        %4761 = vrot.lane.b32.xlu0 %v4727, 64
        %v4762 = vpop.permute.xlu0 %4761
        %4763 = vrot.lane.b32.xlu0 %v4728, 64
        %v4764 = vpop.permute.xlu0 %4763
        %4765 = vrot.lane.b32.xlu0 %v4729, 64
        %v4766 = vpop.permute.xlu0 %4765
        %4767 = vrot.lane.b32.xlu0 %v4730, 64
        %v4768 = vpop.permute.xlu0 %4767
        %4769 = vrot.lane.b32.xlu0 %v4731, 64
        %v4770 = vpop.permute.xlu0 %4769
        %4771 = vrot.lane.b32.xlu0 %v4732, 64
        %v4772 = vpop.permute.xlu0 %4771
        %4773 = vrot.lane.b32.xlu0 %v4733, 64
        %v4774 = vpop.permute.xlu0 %4773
        %4775 = vrot.lane.b32.xlu0 %v4734, 64
        %v4776 = vpop.permute.xlu0 %4775
        %4777 = vrot.lane.b32.xlu0 %v4735, 64
        %v4778 = vpop.permute.xlu0 %4777
        %4779 = vrot.lane.b32.xlu0 %v4736, 64
        %v4780 = vpop.permute.xlu0 %4779
        %4781 = vrot.lane.b32.xlu0 %v4737, 64
        %v4782 = vpop.permute.xlu0 %4781
        %4783 = vrot.lane.b32.xlu0 %v4738, 64
        %v4784 = vpop.permute.xlu0 %4783
        %4785 = vrot.lane.b32.xlu0 %v4739, 64
        %v4786 = vpop.permute.xlu0 %4785
        %4787 = vrot.lane.b32.xlu0 %v4740, 64
        %v4788 = vpop.permute.xlu0 %4787
        %4805 = vst.msk [vmem:[#allocation2 + $0x8] sm:$0xff] %vm3800, %v4758
        %4806 = vst.msk [vmem:[#allocation2 + $0x20] sm:$0xff] %vm3800, %v4760
        %4807 = vst.msk [vmem:[#allocation2 + $0x38] sm:$0xff] %vm3800, %v4762
        %4808 = vst.msk [vmem:[#allocation2 + $0x50] sm:$0xff] %vm3800, %v4764
        %4809 = vst.msk [vmem:[#allocation2 + $0x68] sm:$0xff] %vm3800, %v4766
        %4810 = vst.msk [vmem:[#allocation2 + $0x80] sm:$0xff] %vm3800, %v4768
        %4811 = vst.msk [vmem:[#allocation2 + $0x98] sm:$0xff] %vm3800, %v4770
        %4812 = vst.msk [vmem:[#allocation2 + $0xb0] sm:$0xff] %vm3800, %v4772
        %4813 = vst.msk [vmem:[#allocation2 + $0xc8] sm:$0xff] %vm3800, %v4774
        %4814 = vst.msk [vmem:[#allocation2 + $0xe0] sm:$0xff] %vm3800, %v4776
        %4815 = vst.msk [vmem:[#allocation2 + $0xf8] sm:$0xff] %vm3800, %v4778
        %4816 = vst.msk [vmem:[#allocation2 + $0x110] sm:$0xff] %vm3800, %v4780
        %4817 = vst.msk [vmem:[#allocation2 + $0x128] sm:$0xff] %vm3800, %v4782
        %4818 = vst.msk [vmem:[#allocation2 + $0x140] sm:$0xff] %vm3800, %v4784
        %4819 = vst.msk [vmem:[#allocation2 + $0x158] sm:$0xff] %vm3800, %v4786
        %4820 = vst.msk [vmem:[#allocation2 + $0x170] sm:$0xff] %vm3800, %v4788
        %v4821 = vmul.f32 %v2036, 0.125
        %v4822 = vmul.f32 %v2040, 0.125
        %v4823 = vmul.f32 %v2046, 0.125
        %v4824 = vmul.f32 %v2050, 0.125
        %v4825 = vmul.f32 %v2056, 0.125
        %v4826 = vmul.f32 %v2060, 0.125
        %v4827 = vmul.f32 %v2066, 0.125
        %v4828 = vmul.f32 %v2070, 0.125
        %v4829 = vmul.f32 %v2076, 0.125
        %v4830 = vmul.f32 %v2080, 0.125
        %v4831 = vmul.f32 %v2086, 0.125
        %v4832 = vmul.f32 %v2090, 0.125
        %v4833 = vmul.f32 %v2096, 0.125
        %v4834 = vmul.f32 %v2100, 0.125
        %v4835 = vmul.f32 %v2106, 0.125
        %v4836 = vmul.f32 %v2110, 0.125
        %v4837 = vpack.c.bf16 %v4822, %v4821
        %v4838 = vpack.c.bf16 %v4824, %v4823
        %v4839 = vpack.c.bf16 %v4826, %v4825
        %v4840 = vpack.c.bf16 %v4828, %v4827
        %v4841 = vpack.c.bf16 %v4830, %v4829
        %v4842 = vpack.c.bf16 %v4832, %v4831
        %v4843 = vpack.c.bf16 %v4834, %v4833
        %v4844 = vpack.c.bf16 %v4836, %v4835
        %v4845 = vpack.c.bf16 %v2268, %v2264
        %v4846 = vpack.c.bf16 %v2278, %v2274
        %v4847 = vpack.c.bf16 %v2288, %v2284
        %v4848 = vpack.c.bf16 %v2298, %v2294
        %v4849 = vpack.c.bf16 %v2308, %v2304
        %v4850 = vpack.c.bf16 %v2318, %v2314
        %v4851 = vpack.c.bf16 %v2328, %v2324
        %v4852 = vpack.c.bf16 %v2338, %v2334
        %v4853 = vpack.c.bf16 %v2701, %v2698
        %v4854 = vpack.c.bf16 %v2709, %v2706
        %v4855 = vpack.c.bf16 %v2717, %v2714
        %v4856 = vpack.c.bf16 %v2725, %v2722
        %v4857 = vpack.c.bf16 %v2733, %v2730
        %v4858 = vpack.c.bf16 %v2741, %v2738
        %v4859 = vpack.c.bf16 %v2749, %v2746
        %v4860 = vpack.c.bf16 %v2757, %v2754
        %v4862 = vsel %vm2851, %v4837, 0
        %v4865 = vsel %vm2851, %v4838, 0
        %v4868 = vsel %vm2851, %v4839, 0
        %v4871 = vsel %vm2851, %v4840, 0
        %v4874 = vsel %vm2851, %v4841, 0
        %v4877 = vsel %vm2851, %v4842, 0
        %v4880 = vsel %vm2851, %v4843, 0
        %v4883 = vsel %vm2851, %v4844, 0
        %v4886 = vsel %vm2851, %v4845, 0
        %v4889 = vsel %vm2851, %v4846, 0
        %v4892 = vsel %vm2851, %v4847, 0
        %v4895 = vsel %vm2851, %v4848, 0
        %v4898 = vsel %vm2851, %v4849, 0
        %v4901 = vsel %vm2851, %v4850, 0
        %v4904 = vsel %vm2851, %v4851, 0
        %v4907 = vsel %vm2851, %v4852, 0
        %4909 = vmatprep.subr.bf16.mxu0 0
        %4910 = vmatpush1.bf16.xpose.msra.mxu0 %v4886
        %4911 = vmatprep.subr.bf16.mxu0 0
        %4912 = vmatpush1.bf16.xpose.msra.mxu0 %v4889
        %4913 = vmatprep.subr.bf16.mxu0 0
        %4914 = vmatpush1.bf16.xpose.msra.mxu0 %v4892
        %4915 = vmatprep.subr.bf16.mxu0 0
        %4916 = vmatpush1.bf16.xpose.msra.mxu0 %v4895
        %4917 = vmatprep.subr.bf16.mxu0 0
        %4918 = vmatpush1.bf16.xpose.msra.mxu0 %v4898
        %4919 = vmatprep.subr.bf16.mxu0 0
        %4920 = vmatpush1.bf16.xpose.msra.mxu0 %v4901
        %4921 = vmatprep.subr.bf16.mxu0 0
        %4922 = vmatpush1.bf16.xpose.msra.mxu0 %v4904
        %4923 = vmatprep.subr.bf16.mxu0 0
        %4924 = vmatpush1.bf16.xpose.msra.mxu0 %v4907
        %4925 = vmatprep.subr.bf16.mxu0 0
        %4926 = vmatpush1.bf16.xpose.msra.mxu0 0
        %4927 = vmatprep.subr.bf16.mxu0 0
        %4928 = vmatpush1.bf16.xpose.msra.mxu0 0
        %4929 = vmatprep.subr.bf16.mxu0 0
        %4930 = vmatpush1.bf16.xpose.msra.mxu0 0
        %4931 = vmatprep.subr.bf16.mxu0 0
        %4932 = vmatpush1.bf16.xpose.msra.mxu0 0
        %4933 = vmatprep.subr.bf16.mxu0 0
        %4934 = vmatpush1.bf16.xpose.msra.mxu0 0
        %4935 = vmatprep.subr.bf16.mxu0 0
        %4936 = vmatpush1.bf16.xpose.msra.mxu0 0
        %4937 = vmatprep.subr.bf16.mxu0 0
        %4938 = vmatpush1.bf16.xpose.msra.mxu0 0
        %4939 = vmatprep.subr.bf16.mxu0 0
        %4940 = vmatpush1.bf16.xpose.msra.mxu0 0
        %4941 = vmatprep.mubr.bf16.mxu0 0
        %4942 = vmatmul.mubr.bf16.gmra.mrb[0].mxu0 %v4862
        %v4943 = vpop.f32.mrb[0].mxu0
        %v4944 = vadd.f32 %v2795, %v4943
        %v4945 = vpop.f32.mrb[0].mxu0
        %v4946 = vpop.f32.mrb[0].mxu0
        %v4947 = vadd.f32 %v2796, %v4946
        %v4948 = vpop.f32.mrb[0].mxu0
        %4949 = vmatprep.mubr.bf16.mxu0 0
        %4950 = vmatmul.mubr.bf16.gmra.mrb[0].mxu0 %v4865
        %v4951 = vpop.f32.mrb[0].mxu0
        %v4952 = vadd.f32 %v2797, %v4951
        %v4953 = vpop.f32.mrb[0].mxu0
        %v4954 = vpop.f32.mrb[0].mxu0
        %v4955 = vadd.f32 %v2798, %v4954
        %v4956 = vpop.f32.mrb[0].mxu0
        %4957 = vmatprep.mubr.bf16.mxu0 0
        %4958 = vmatmul.mubr.bf16.gmra.mrb[0].mxu0 %v4868
        %v4959 = vpop.f32.mrb[0].mxu0
        %v4960 = vadd.f32 %v2799, %v4959
        %v4961 = vpop.f32.mrb[0].mxu0
        %v4962 = vpop.f32.mrb[0].mxu0
        %v4963 = vadd.f32 %v2800, %v4962
        %v4964 = vpop.f32.mrb[0].mxu0
        %4965 = vmatprep.mubr.bf16.mxu0 0
        %4966 = vmatmul.mubr.bf16.gmra.mrb[0].mxu0 %v4871
        %v4967 = vpop.f32.mrb[0].mxu0
        %v4968 = vadd.f32 %v2801, %v4967
        %v4969 = vpop.f32.mrb[0].mxu0
        %v4970 = vpop.f32.mrb[0].mxu0
        %v4971 = vadd.f32 %v2802, %v4970
        %v4972 = vpop.f32.mrb[0].mxu0
        %4973 = vmatprep.mubr.bf16.mxu0 0
        %4974 = vmatmul.mubr.bf16.gmra.mrb[0].mxu0 %v4874
        %v4975 = vpop.f32.mrb[0].mxu0
        %v4976 = vadd.f32 %v2803, %v4975
        %v4977 = vpop.f32.mrb[0].mxu0
        %v4978 = vpop.f32.mrb[0].mxu0
        %v4979 = vadd.f32 %v2804, %v4978
        %v4980 = vpop.f32.mrb[0].mxu0
        %4981 = vmatprep.mubr.bf16.mxu0 0
        %4982 = vmatmul.mubr.bf16.gmra.mrb[0].mxu0 %v4877
        %v4983 = vpop.f32.mrb[0].mxu0
        %v4984 = vadd.f32 %v2805, %v4983
        %v4985 = vpop.f32.mrb[0].mxu0
        %v4986 = vpop.f32.mrb[0].mxu0
        %v4987 = vadd.f32 %v2806, %v4986
        %v4988 = vpop.f32.mrb[0].mxu0
        %4989 = vmatprep.mubr.bf16.mxu0 0
        %4990 = vmatmul.mubr.bf16.gmra.mrb[0].mxu0 %v4880
        %v4991 = vpop.f32.mrb[0].mxu0
        %v4992 = vadd.f32 %v2807, %v4991
        %v4993 = vpop.f32.mrb[0].mxu0
        %v4994 = vpop.f32.mrb[0].mxu0
        %v4995 = vadd.f32 %v2808, %v4994
        %v4996 = vpop.f32.mrb[0].mxu0
        %4997 = vmatprep.mubr.bf16.mxu0 0
        %4998 = vmatmul.mubr.bf16.gmra.mrb[0].mxu0 %v4883
        %v4999 = vpop.f32.mrb[0].mxu0
        %v5000 = vadd.f32 %v2809, %v4999
        %v5001 = vpop.f32.mrb[0].mxu0
        %v5002 = vpop.f32.mrb[0].mxu0
        %v5003 = vadd.f32 %v2810, %v5002
        %v5004 = vpop.f32.mrb[0].mxu0
        %5005 = vdwg.mxu0
        %5006 = vmax.xlane.f32.xlu0 %v4944
        %v5007 = vpop.xlane.xlu0 %5006
        %5008 = vmax.xlane.f32.xlu0 %v4947
        %v5009 = vpop.xlane.xlu0 %5008
        %5010 = vmax.xlane.f32.xlu0 %v4952
        %v5011 = vpop.xlane.xlu0 %5010
        %5012 = vmax.xlane.f32.xlu0 %v4955
        %v5013 = vpop.xlane.xlu0 %5012
        %5014 = vmax.xlane.f32.xlu0 %v4960
        %v5015 = vpop.xlane.xlu0 %5014
        %5016 = vmax.xlane.f32.xlu0 %v4963
        %v5017 = vpop.xlane.xlu0 %5016
        %5018 = vmax.xlane.f32.xlu0 %v4968
        %v5019 = vpop.xlane.xlu0 %5018
        %5020 = vmax.xlane.f32.xlu0 %v4971
        %v5021 = vpop.xlane.xlu0 %5020
        %5022 = vmax.xlane.f32.xlu0 %v4976
        %v5023 = vpop.xlane.xlu0 %5022
        %5024 = vmax.xlane.f32.xlu0 %v4979
        %v5025 = vpop.xlane.xlu0 %5024
        %5026 = vmax.xlane.f32.xlu0 %v4984
        %v5027 = vpop.xlane.xlu0 %5026
        %5028 = vmax.xlane.f32.xlu0 %v4987
        %v5029 = vpop.xlane.xlu0 %5028
        %5030 = vmax.xlane.f32.xlu0 %v4992
        %v5031 = vpop.xlane.xlu0 %5030
        %5032 = vmax.xlane.f32.xlu0 %v4995
        %v5033 = vpop.xlane.xlu0 %5032
        %5034 = vmax.xlane.f32.xlu0 %v5000
        %v5035 = vpop.xlane.xlu0 %5034
        %5036 = vmax.xlane.f32.xlu0 %v5003
        %v5037 = vpop.xlane.xlu0 %5036
        %v5038 = vsub.f32 %v4944, %v5007
        %v5039 = vsub.f32 %v4947, %v5009
        %v5040 = vsub.f32 %v4952, %v5011
        %v5041 = vsub.f32 %v4955, %v5013
        %v5042 = vsub.f32 %v4960, %v5015
        %v5043 = vsub.f32 %v4963, %v5017
        %v5044 = vsub.f32 %v4968, %v5019
        %v5045 = vsub.f32 %v4971, %v5021
        %v5046 = vsub.f32 %v4976, %v5023
        %v5047 = vsub.f32 %v4979, %v5025
        %v5048 = vsub.f32 %v4984, %v5027
        %v5049 = vsub.f32 %v4987, %v5029
        %v5050 = vsub.f32 %v4992, %v5031
        %v5051 = vsub.f32 %v4995, %v5033
        %v5052 = vsub.f32 %v5000, %v5035
        %v5053 = vsub.f32 %v5003, %v5037
        %v5054 = vmul.f32 %v5038, 1.442695
        %v5055 = vpow.pop %v5054
        %v5056 = vmul.f32 %v5039, 1.442695
        %v5057 = vpow.pop %v5056
        %v5058 = vmul.f32 %v5040, 1.442695
        %v5059 = vpow.pop %v5058
        %v5060 = vmul.f32 %v5041, 1.442695
        %v5061 = vpow.pop %v5060
        %v5062 = vmul.f32 %v5042, 1.442695
        %v5063 = vpow.pop %v5062
        %v5064 = vmul.f32 %v5043, 1.442695
        %v5065 = vpow.pop %v5064
        %v5066 = vmul.f32 %v5044, 1.442695
        %v5067 = vpow.pop %v5066
        %v5068 = vmul.f32 %v5045, 1.442695
        %v5069 = vpow.pop %v5068
        %v5070 = vmul.f32 %v5046, 1.442695
        %v5071 = vpow.pop %v5070
        %v5072 = vmul.f32 %v5047, 1.442695
        %v5073 = vpow.pop %v5072
        %v5074 = vmul.f32 %v5048, 1.442695
        %v5075 = vpow.pop %v5074
        %v5076 = vmul.f32 %v5049, 1.442695
        %v5077 = vpow.pop %v5076
        %v5078 = vmul.f32 %v5050, 1.442695
        %v5079 = vpow.pop %v5078
        %v5080 = vmul.f32 %v5051, 1.442695
        %v5081 = vpow.pop %v5080
        %v5082 = vmul.f32 %v5052, 1.442695
        %v5083 = vpow.pop %v5082
        %v5084 = vmul.f32 %v5053, 1.442695
        %v5085 = vpow.pop %v5084
        %5086 = vadd.xlane.f32.xlu0 %v5055
        %v5087 = vpop.xlane.xlu0 %5086
        %5088 = vadd.xlane.f32.xlu0 %v5057
        %v5089 = vpop.xlane.xlu0 %5088
        %5090 = vadd.xlane.f32.xlu0 %v5059
        %v5091 = vpop.xlane.xlu0 %5090
        %5092 = vadd.xlane.f32.xlu0 %v5061
        %v5093 = vpop.xlane.xlu0 %5092
        %5094 = vadd.xlane.f32.xlu0 %v5063
        %v5095 = vpop.xlane.xlu0 %5094
        %5096 = vadd.xlane.f32.xlu0 %v5065
        %v5097 = vpop.xlane.xlu0 %5096
        %5098 = vadd.xlane.f32.xlu0 %v5067
        %v5099 = vpop.xlane.xlu0 %5098
        %5100 = vadd.xlane.f32.xlu0 %v5069
        %v5101 = vpop.xlane.xlu0 %5100
        %5102 = vadd.xlane.f32.xlu0 %v5071
        %v5103 = vpop.xlane.xlu0 %5102
        %5104 = vadd.xlane.f32.xlu0 %v5073
        %v5105 = vpop.xlane.xlu0 %5104
        %5106 = vadd.xlane.f32.xlu0 %v5075
        %v5107 = vpop.xlane.xlu0 %5106
        %5108 = vadd.xlane.f32.xlu0 %v5077
        %v5109 = vpop.xlane.xlu0 %5108
        %5110 = vadd.xlane.f32.xlu0 %v5079
        %v5111 = vpop.xlane.xlu0 %5110
        %5112 = vadd.xlane.f32.xlu0 %v5081
        %v5113 = vpop.xlane.xlu0 %5112
        %5114 = vadd.xlane.f32.xlu0 %v5083
        %v5115 = vpop.xlane.xlu0 %5114
        %5116 = vadd.xlane.f32.xlu0 %v5085
        %v5117 = vpop.xlane.xlu0 %5116
        %v5118 = vpack.c.bf16 %v5057, %v5055
        %v5119 = vpack.c.bf16 %v5061, %v5059
        %v5120 = vpack.c.bf16 %v5065, %v5063
        %v5121 = vpack.c.bf16 %v5069, %v5067
        %v5122 = vpack.c.bf16 %v5073, %v5071
        %v5123 = vpack.c.bf16 %v5077, %v5075
        %v5124 = vpack.c.bf16 %v5081, %v5079
        %v5125 = vpack.c.bf16 %v5085, %v5083
        %5126 = vmatprep.subr.bf16.mxu0 0
        %5127 = vmatpush1.bf16.msra.mxu0 %v4853
        %5128 = vmatprep.subr.bf16.mxu0 0
        %5129 = vmatpush1.bf16.msra.mxu0 %v4854
        %5130 = vmatprep.subr.bf16.mxu0 0
        %5131 = vmatpush1.bf16.msra.mxu0 %v4855
        %5132 = vmatprep.subr.bf16.mxu0 0
        %5133 = vmatpush1.bf16.msra.mxu0 %v4856
        %5134 = vmatprep.subr.bf16.mxu0 0
        %5135 = vmatpush1.bf16.msra.mxu0 %v4857
        %5136 = vmatprep.subr.bf16.mxu0 0
        %5137 = vmatpush1.bf16.msra.mxu0 %v4858
        %5138 = vmatprep.subr.bf16.mxu0 0
        %5139 = vmatpush1.bf16.msra.mxu0 %v4859
        %5140 = vmatprep.subr.bf16.mxu0 0
        %5141 = vmatpush1.bf16.msra.mxu0 %v4860
        %5142 = vmatprep.subr.bf16.mxu0 0
        %5143 = vmatpush1.bf16.msra.mxu0 0
        %5144 = vmatprep.subr.bf16.mxu0 0
        %5145 = vmatpush1.bf16.msra.mxu0 0
        %5146 = vmatprep.subr.bf16.mxu0 0
        %5147 = vmatpush1.bf16.msra.mxu0 0
        %5148 = vmatprep.subr.bf16.mxu0 0
        %5149 = vmatpush1.bf16.msra.mxu0 0
        %5150 = vmatprep.subr.bf16.mxu0 0
        %5151 = vmatpush1.bf16.msra.mxu0 0
        %5152 = vmatprep.subr.bf16.mxu0 0
        %5153 = vmatpush1.bf16.msra.mxu0 0
        %5154 = vmatprep.subr.bf16.mxu0 0
        %5155 = vmatpush1.bf16.msra.mxu0 0
        %5156 = vmatprep.subr.bf16.mxu0 0
        %5157 = vmatpush1.bf16.msra.mxu0 0
        %5158 = vmatprep.mubr.bf16.mxu0 0
        %5159 = vmatmul.mubr.bf16.gmra.mrb[0].mxu0 %v5118
        %v5160 = vpop.f32.mrb[0].mxu0
        %v5161 = vadd.f32 0.0, %v5160
        %v5162 = vpop.f32.mrb[0].mxu0
        %v5163 = vpop.f32.mrb[0].mxu0
        %v5164 = vadd.f32 0.0, %v5163
        %v5165 = vpop.f32.mrb[0].mxu0
        %5166 = vmatprep.mubr.bf16.mxu0 0
        %5167 = vmatmul.mubr.bf16.gmra.mrb[0].mxu0 %v5119
        %v5168 = vpop.f32.mrb[0].mxu0
        %v5169 = vadd.f32 0.0, %v5168
        %v5170 = vpop.f32.mrb[0].mxu0
        %v5171 = vpop.f32.mrb[0].mxu0
        %v5172 = vadd.f32 0.0, %v5171
        %v5173 = vpop.f32.mrb[0].mxu0
        %5174 = vmatprep.mubr.bf16.mxu0 0
        %5175 = vmatmul.mubr.bf16.gmra.mrb[0].mxu0 %v5120
        %v5176 = vpop.f32.mrb[0].mxu0
        %v5177 = vadd.f32 0.0, %v5176
        %v5178 = vpop.f32.mrb[0].mxu0
        %v5179 = vpop.f32.mrb[0].mxu0
        %v5180 = vadd.f32 0.0, %v5179
        %v5181 = vpop.f32.mrb[0].mxu0
        %5182 = vmatprep.mubr.bf16.mxu0 0
        %5183 = vmatmul.mubr.bf16.gmra.mrb[0].mxu0 %v5121
        %v5184 = vpop.f32.mrb[0].mxu0
        %v5185 = vadd.f32 0.0, %v5184
        %v5186 = vpop.f32.mrb[0].mxu0
        %v5187 = vpop.f32.mrb[0].mxu0
        %v5188 = vadd.f32 0.0, %v5187
        %v5189 = vpop.f32.mrb[0].mxu0
        %5190 = vmatprep.mubr.bf16.mxu0 0
        %5191 = vmatmul.mubr.bf16.gmra.mrb[0].mxu0 %v5122
        %v5192 = vpop.f32.mrb[0].mxu0
        %v5193 = vadd.f32 0.0, %v5192
        %v5194 = vpop.f32.mrb[0].mxu0
        %v5195 = vpop.f32.mrb[0].mxu0
        %v5196 = vadd.f32 0.0, %v5195
        %v5197 = vpop.f32.mrb[0].mxu0
        %5198 = vmatprep.mubr.bf16.mxu0 0
        %5199 = vmatmul.mubr.bf16.gmra.mrb[0].mxu0 %v5123
        %v5200 = vpop.f32.mrb[0].mxu0
        %v5201 = vadd.f32 0.0, %v5200
        %v5202 = vpop.f32.mrb[0].mxu0
        %v5203 = vpop.f32.mrb[0].mxu0
        %v5204 = vadd.f32 0.0, %v5203
        %v5205 = vpop.f32.mrb[0].mxu0
        %5206 = vmatprep.mubr.bf16.mxu0 0
        %5207 = vmatmul.mubr.bf16.gmra.mrb[0].mxu0 %v5124
        %v5208 = vpop.f32.mrb[0].mxu0
        %v5209 = vadd.f32 0.0, %v5208
        %v5210 = vpop.f32.mrb[0].mxu0
        %v5211 = vpop.f32.mrb[0].mxu0
        %v5212 = vadd.f32 0.0, %v5211
        %v5213 = vpop.f32.mrb[0].mxu0
        %5214 = vmatprep.mubr.bf16.mxu0 0
        %5215 = vmatmul.mubr.bf16.gmra.mrb[0].mxu0 %v5125
        %v5216 = vpop.f32.mrb[0].mxu0
        %v5217 = vadd.f32 0.0, %v5216
        %v5218 = vpop.f32.mrb[0].mxu0
        %v5219 = vpop.f32.mrb[0].mxu0
        %v5220 = vadd.f32 0.0, %v5219
        %v5221 = vpop.f32.mrb[0].mxu0
        %5222 = vdwg.mxu0
        %v5223 = vrcp.pop %v5087
        %v5224 = vrcp.pop %v5089
        %v5225 = vrcp.pop %v5091
        %v5226 = vrcp.pop %v5093
        %v5227 = vrcp.pop %v5095
        %v5228 = vrcp.pop %v5097
        %v5229 = vrcp.pop %v5099
        %v5230 = vrcp.pop %v5101
        %v5231 = vrcp.pop %v5103
        %v5232 = vrcp.pop %v5105
        %v5233 = vrcp.pop %v5107
        %v5234 = vrcp.pop %v5109
        %v5235 = vrcp.pop %v5111
        %v5236 = vrcp.pop %v5113
        %v5237 = vrcp.pop %v5115
        %v5238 = vrcp.pop %v5117
        %v5239 = vmul.f32 %v5161, %v5223
        %v5240 = vmul.f32 %v5164, %v5224
        %v5241 = vmul.f32 %v5169, %v5225
        %v5242 = vmul.f32 %v5172, %v5226
        %v5243 = vmul.f32 %v5177, %v5227
        %v5244 = vmul.f32 %v5180, %v5228
        %v5245 = vmul.f32 %v5185, %v5229
        %v5246 = vmul.f32 %v5188, %v5230
        %v5247 = vmul.f32 %v5193, %v5231
        %v5248 = vmul.f32 %v5196, %v5232
        %v5249 = vmul.f32 %v5201, %v5233
        %v5250 = vmul.f32 %v5204, %v5234
        %v5251 = vmul.f32 %v5209, %v5235
        %v5252 = vmul.f32 %v5212, %v5236
        %v5253 = vmul.f32 %v5217, %v5237
        %v5254 = vmul.f32 %v5220, %v5238
        %5255 = vst.msk [vmem:[#allocation2 + $0x10] sm:$0xff] %vm2851, %v5239
        %5256 = vst.msk [vmem:[#allocation2 + $0x28] sm:$0xff] %vm2851, %v5240
        %5257 = vst.msk [vmem:[#allocation2 + $0x40] sm:$0xff] %vm2851, %v5241
        %5258 = vst.msk [vmem:[#allocation2 + $0x58] sm:$0xff] %vm2851, %v5242
        %5259 = vst.msk [vmem:[#allocation2 + $0x70] sm:$0xff] %vm2851, %v5243
        %5260 = vst.msk [vmem:[#allocation2 + $0x88] sm:$0xff] %vm2851, %v5244
        %5261 = vst.msk [vmem:[#allocation2 + $0xa0] sm:$0xff] %vm2851, %v5245
        %5262 = vst.msk [vmem:[#allocation2 + $0xb8] sm:$0xff] %vm2851, %v5246
        %5263 = vst.msk [vmem:[#allocation2 + $0xd0] sm:$0xff] %vm2851, %v5247
        %5264 = vst.msk [vmem:[#allocation2 + $0xe8] sm:$0xff] %vm2851, %v5248
        %5265 = vst.msk [vmem:[#allocation2 + $0x100] sm:$0xff] %vm2851, %v5249
        %5266 = vst.msk [vmem:[#allocation2 + $0x118] sm:$0xff] %vm2851, %v5250
        %5267 = vst.msk [vmem:[#allocation2 + $0x130] sm:$0xff] %vm2851, %v5251
        %5268 = vst.msk [vmem:[#allocation2 + $0x148] sm:$0xff] %vm2851, %v5252
        %5269 = vst.msk [vmem:[#allocation2 + $0x160] sm:$0xff] %vm2851, %v5253
        %5270 = vst.msk [vmem:[#allocation2 + $0x178] sm:$0xff] %vm2851, %v5254
        %5279 = vrot.lane.b32.xlu0 %v4837, 64
        %v5280 = vpop.permute.xlu0 %5279
        %5281 = vrot.lane.b32.xlu0 %v4838, 64
        %v5282 = vpop.permute.xlu0 %5281
        %5283 = vrot.lane.b32.xlu0 %v4839, 64
        %v5284 = vpop.permute.xlu0 %5283
        %5285 = vrot.lane.b32.xlu0 %v4840, 64
        %v5286 = vpop.permute.xlu0 %5285
        %5287 = vrot.lane.b32.xlu0 %v4841, 64
        %v5288 = vpop.permute.xlu0 %5287
        %5289 = vrot.lane.b32.xlu0 %v4842, 64
        %v5290 = vpop.permute.xlu0 %5289
        %5291 = vrot.lane.b32.xlu0 %v4843, 64
        %v5292 = vpop.permute.xlu0 %5291
        %5293 = vrot.lane.b32.xlu0 %v4844, 64
        %v5294 = vpop.permute.xlu0 %5293
        %5303 = vrot.lane.b32.xlu0 %v4845, 64
        %v5304 = vpop.permute.xlu0 %5303
        %5305 = vrot.lane.b32.xlu0 %v4846, 64
        %v5306 = vpop.permute.xlu0 %5305
        %5307 = vrot.lane.b32.xlu0 %v4847, 64
        %v5308 = vpop.permute.xlu0 %5307
        %5309 = vrot.lane.b32.xlu0 %v4848, 64
        %v5310 = vpop.permute.xlu0 %5309
        %5311 = vrot.lane.b32.xlu0 %v4849, 64
        %v5312 = vpop.permute.xlu0 %5311
        %5313 = vrot.lane.b32.xlu0 %v4850, 64
        %v5314 = vpop.permute.xlu0 %5313
        %5315 = vrot.lane.b32.xlu0 %v4851, 64
        %v5316 = vpop.permute.xlu0 %5315
        %5317 = vrot.lane.b32.xlu0 %v4852, 64
        %v5318 = vpop.permute.xlu0 %5317
        %v5320 = vsel %vm2851, %v5280, 0
        %v5323 = vsel %vm2851, %v5282, 0
        %v5326 = vsel %vm2851, %v5284, 0
        %v5329 = vsel %vm2851, %v5286, 0
        %v5332 = vsel %vm2851, %v5288, 0
        %v5335 = vsel %vm2851, %v5290, 0
        %v5338 = vsel %vm2851, %v5292, 0
        %v5341 = vsel %vm2851, %v5294, 0
        %v5344 = vsel %vm2851, %v5304, 0
        %v5347 = vsel %vm2851, %v5306, 0
        %v5350 = vsel %vm2851, %v5308, 0
        %v5353 = vsel %vm2851, %v5310, 0
        %v5356 = vsel %vm2851, %v5312, 0
        %v5359 = vsel %vm2851, %v5314, 0
        %v5362 = vsel %vm2851, %v5316, 0
        %v5365 = vsel %vm2851, %v5318, 0
        %5367 = vmatprep.subr.bf16.mxu0 0
        %5368 = vmatpush1.bf16.xpose.msra.mxu0 %v5344
        %5369 = vmatprep.subr.bf16.mxu0 0
        %5370 = vmatpush1.bf16.xpose.msra.mxu0 %v5347
        %5371 = vmatprep.subr.bf16.mxu0 0
        %5372 = vmatpush1.bf16.xpose.msra.mxu0 %v5350
        %5373 = vmatprep.subr.bf16.mxu0 0
        %5374 = vmatpush1.bf16.xpose.msra.mxu0 %v5353
        %5375 = vmatprep.subr.bf16.mxu0 0
        %5376 = vmatpush1.bf16.xpose.msra.mxu0 %v5356
        %5377 = vmatprep.subr.bf16.mxu0 0
        %5378 = vmatpush1.bf16.xpose.msra.mxu0 %v5359
        %5379 = vmatprep.subr.bf16.mxu0 0
        %5380 = vmatpush1.bf16.xpose.msra.mxu0 %v5362
        %5381 = vmatprep.subr.bf16.mxu0 0
        %5382 = vmatpush1.bf16.xpose.msra.mxu0 %v5365
        %5383 = vmatprep.subr.bf16.mxu0 0
        %5384 = vmatpush1.bf16.xpose.msra.mxu0 0
        %5385 = vmatprep.subr.bf16.mxu0 0
        %5386 = vmatpush1.bf16.xpose.msra.mxu0 0
        %5387 = vmatprep.subr.bf16.mxu0 0
        %5388 = vmatpush1.bf16.xpose.msra.mxu0 0
        %5389 = vmatprep.subr.bf16.mxu0 0
        %5390 = vmatpush1.bf16.xpose.msra.mxu0 0
        %5391 = vmatprep.subr.bf16.mxu0 0
        %5392 = vmatpush1.bf16.xpose.msra.mxu0 0
        %5393 = vmatprep.subr.bf16.mxu0 0
        %5394 = vmatpush1.bf16.xpose.msra.mxu0 0
        %5395 = vmatprep.subr.bf16.mxu0 0
        %5396 = vmatpush1.bf16.xpose.msra.mxu0 0
        %5397 = vmatprep.subr.bf16.mxu0 0
        %5398 = vmatpush1.bf16.xpose.msra.mxu0 0
        %5399 = vmatprep.mubr.bf16.mxu0 0
        %5400 = vmatmul.mubr.bf16.gmra.mrb[0].mxu0 %v5320
        %v5401 = vpop.f32.mrb[0].mxu0
        %v5402 = vadd.f32 %v2795, %v5401
        %v5403 = vpop.f32.mrb[0].mxu0
        %v5404 = vpop.f32.mrb[0].mxu0
        %v5405 = vadd.f32 %v2796, %v5404
        %v5406 = vpop.f32.mrb[0].mxu0
        %5407 = vmatprep.mubr.bf16.mxu0 0
        %5408 = vmatmul.mubr.bf16.gmra.mrb[0].mxu0 %v5323
        %v5409 = vpop.f32.mrb[0].mxu0
        %v5410 = vadd.f32 %v2797, %v5409
        %v5411 = vpop.f32.mrb[0].mxu0
        %v5412 = vpop.f32.mrb[0].mxu0
        %v5413 = vadd.f32 %v2798, %v5412
        %v5414 = vpop.f32.mrb[0].mxu0
        %5415 = vmatprep.mubr.bf16.mxu0 0
        %5416 = vmatmul.mubr.bf16.gmra.mrb[0].mxu0 %v5326
        %v5417 = vpop.f32.mrb[0].mxu0
        %v5418 = vadd.f32 %v2799, %v5417
        %v5419 = vpop.f32.mrb[0].mxu0
        %v5420 = vpop.f32.mrb[0].mxu0
        %v5421 = vadd.f32 %v2800, %v5420
        %v5422 = vpop.f32.mrb[0].mxu0
        %5423 = vmatprep.mubr.bf16.mxu0 0
        %5424 = vmatmul.mubr.bf16.gmra.mrb[0].mxu0 %v5329
        %v5425 = vpop.f32.mrb[0].mxu0
        %v5426 = vadd.f32 %v2801, %v5425
        %v5427 = vpop.f32.mrb[0].mxu0
        %v5428 = vpop.f32.mrb[0].mxu0
        %v5429 = vadd.f32 %v2802, %v5428
        %v5430 = vpop.f32.mrb[0].mxu0
        %5431 = vmatprep.mubr.bf16.mxu0 0
        %5432 = vmatmul.mubr.bf16.gmra.mrb[0].mxu0 %v5332
        %v5433 = vpop.f32.mrb[0].mxu0
        %v5434 = vadd.f32 %v2803, %v5433
        %v5435 = vpop.f32.mrb[0].mxu0
        %v5436 = vpop.f32.mrb[0].mxu0
        %v5437 = vadd.f32 %v2804, %v5436
        %v5438 = vpop.f32.mrb[0].mxu0
        %5439 = vmatprep.mubr.bf16.mxu0 0
        %5440 = vmatmul.mubr.bf16.gmra.mrb[0].mxu0 %v5335
        %v5441 = vpop.f32.mrb[0].mxu0
        %v5442 = vadd.f32 %v2805, %v5441
        %v5443 = vpop.f32.mrb[0].mxu0
        %v5444 = vpop.f32.mrb[0].mxu0
        %v5445 = vadd.f32 %v2806, %v5444
        %v5446 = vpop.f32.mrb[0].mxu0
        %5447 = vmatprep.mubr.bf16.mxu0 0
        %5448 = vmatmul.mubr.bf16.gmra.mrb[0].mxu0 %v5338
        %v5449 = vpop.f32.mrb[0].mxu0
        %v5450 = vadd.f32 %v2807, %v5449
        %v5451 = vpop.f32.mrb[0].mxu0
        %v5452 = vpop.f32.mrb[0].mxu0
        %v5453 = vadd.f32 %v2808, %v5452
        %v5454 = vpop.f32.mrb[0].mxu0
        %5455 = vmatprep.mubr.bf16.mxu0 0
        %5456 = vmatmul.mubr.bf16.gmra.mrb[0].mxu0 %v5341
        %v5457 = vpop.f32.mrb[0].mxu0
        %v5458 = vadd.f32 %v2809, %v5457
        %v5459 = vpop.f32.mrb[0].mxu0
        %v5460 = vpop.f32.mrb[0].mxu0
        %v5461 = vadd.f32 %v2810, %v5460
        %v5462 = vpop.f32.mrb[0].mxu0
        %5463 = vdwg.mxu0
        %5464 = vmax.xlane.f32.xlu0 %v5402
        %v5465 = vpop.xlane.xlu0 %5464
        %5466 = vmax.xlane.f32.xlu0 %v5405
        %v5467 = vpop.xlane.xlu0 %5466
        %5468 = vmax.xlane.f32.xlu0 %v5410
        %v5469 = vpop.xlane.xlu0 %5468
        %5470 = vmax.xlane.f32.xlu0 %v5413
        %v5471 = vpop.xlane.xlu0 %5470
        %5472 = vmax.xlane.f32.xlu0 %v5418
        %v5473 = vpop.xlane.xlu0 %5472
        %5474 = vmax.xlane.f32.xlu0 %v5421
        %v5475 = vpop.xlane.xlu0 %5474
        %5476 = vmax.xlane.f32.xlu0 %v5426
        %v5477 = vpop.xlane.xlu0 %5476
        %5478 = vmax.xlane.f32.xlu0 %v5429
        %v5479 = vpop.xlane.xlu0 %5478
        %5480 = vmax.xlane.f32.xlu0 %v5434
        %v5481 = vpop.xlane.xlu0 %5480
        %5482 = vmax.xlane.f32.xlu0 %v5437
        %v5483 = vpop.xlane.xlu0 %5482
        %5484 = vmax.xlane.f32.xlu0 %v5442
        %v5485 = vpop.xlane.xlu0 %5484
        %5486 = vmax.xlane.f32.xlu0 %v5445
        %v5487 = vpop.xlane.xlu0 %5486
        %5488 = vmax.xlane.f32.xlu0 %v5450
        %v5489 = vpop.xlane.xlu0 %5488
        %5490 = vmax.xlane.f32.xlu0 %v5453
        %v5491 = vpop.xlane.xlu0 %5490
        %5492 = vmax.xlane.f32.xlu0 %v5458
        %v5493 = vpop.xlane.xlu0 %5492
        %5494 = vmax.xlane.f32.xlu0 %v5461
        %v5495 = vpop.xlane.xlu0 %5494
        %v5496 = vsub.f32 %v5402, %v5465
        %v5497 = vsub.f32 %v5405, %v5467
        %v5498 = vsub.f32 %v5410, %v5469
        %v5499 = vsub.f32 %v5413, %v5471
        %v5500 = vsub.f32 %v5418, %v5473
        %v5501 = vsub.f32 %v5421, %v5475
        %v5502 = vsub.f32 %v5426, %v5477
        %v5503 = vsub.f32 %v5429, %v5479
        %v5504 = vsub.f32 %v5434, %v5481
        %v5505 = vsub.f32 %v5437, %v5483
        %v5506 = vsub.f32 %v5442, %v5485
        %v5507 = vsub.f32 %v5445, %v5487
        %v5508 = vsub.f32 %v5450, %v5489
        %v5509 = vsub.f32 %v5453, %v5491
        %v5510 = vsub.f32 %v5458, %v5493
        %v5511 = vsub.f32 %v5461, %v5495
        %v5512 = vmul.f32 %v5496, 1.442695
        %v5513 = vpow.pop %v5512
        %v5514 = vmul.f32 %v5497, 1.442695
        %v5515 = vpow.pop %v5514
        %v5516 = vmul.f32 %v5498, 1.442695
        %v5517 = vpow.pop %v5516
        %v5518 = vmul.f32 %v5499, 1.442695
        %v5519 = vpow.pop %v5518
        %v5520 = vmul.f32 %v5500, 1.442695
        %v5521 = vpow.pop %v5520
        %v5522 = vmul.f32 %v5501, 1.442695
        %v5523 = vpow.pop %v5522
        %v5524 = vmul.f32 %v5502, 1.442695
        %v5525 = vpow.pop %v5524
        %v5526 = vmul.f32 %v5503, 1.442695
        %v5527 = vpow.pop %v5526
        %v5528 = vmul.f32 %v5504, 1.442695
        %v5529 = vpow.pop %v5528
        %v5530 = vmul.f32 %v5505, 1.442695
        %v5531 = vpow.pop %v5530
        %v5532 = vmul.f32 %v5506, 1.442695
        %v5533 = vpow.pop %v5532
        %v5534 = vmul.f32 %v5507, 1.442695
        %v5535 = vpow.pop %v5534
        %v5536 = vmul.f32 %v5508, 1.442695
        %v5537 = vpow.pop %v5536
        %v5538 = vmul.f32 %v5509, 1.442695
        %v5539 = vpow.pop %v5538
        %v5540 = vmul.f32 %v5510, 1.442695
        %v5541 = vpow.pop %v5540
        %v5542 = vmul.f32 %v5511, 1.442695
        %v5543 = vpow.pop %v5542
        %5544 = vadd.xlane.f32.xlu0 %v5513
        %v5545 = vpop.xlane.xlu0 %5544
        %5546 = vadd.xlane.f32.xlu0 %v5515
        %v5547 = vpop.xlane.xlu0 %5546
        %5548 = vadd.xlane.f32.xlu0 %v5517
        %v5549 = vpop.xlane.xlu0 %5548
        %5550 = vadd.xlane.f32.xlu0 %v5519
        %v5551 = vpop.xlane.xlu0 %5550
        %5552 = vadd.xlane.f32.xlu0 %v5521
        %v5553 = vpop.xlane.xlu0 %5552
        %5554 = vadd.xlane.f32.xlu0 %v5523
        %v5555 = vpop.xlane.xlu0 %5554
        %5556 = vadd.xlane.f32.xlu0 %v5525
        %v5557 = vpop.xlane.xlu0 %5556
        %5558 = vadd.xlane.f32.xlu0 %v5527
        %v5559 = vpop.xlane.xlu0 %5558
        %5560 = vadd.xlane.f32.xlu0 %v5529
        %v5561 = vpop.xlane.xlu0 %5560
        %5562 = vadd.xlane.f32.xlu0 %v5531
        %v5563 = vpop.xlane.xlu0 %5562
        %5564 = vadd.xlane.f32.xlu0 %v5533
        %v5565 = vpop.xlane.xlu0 %5564
        %5566 = vadd.xlane.f32.xlu0 %v5535
        %v5567 = vpop.xlane.xlu0 %5566
        %5568 = vadd.xlane.f32.xlu0 %v5537
        %v5569 = vpop.xlane.xlu0 %5568
        %5570 = vadd.xlane.f32.xlu0 %v5539
        %v5571 = vpop.xlane.xlu0 %5570
        %5572 = vadd.xlane.f32.xlu0 %v5541
        %v5573 = vpop.xlane.xlu0 %5572
        %5574 = vadd.xlane.f32.xlu0 %v5543
        %v5575 = vpop.xlane.xlu0 %5574
        %v5576 = vpack.c.bf16 %v5515, %v5513
        %v5577 = vpack.c.bf16 %v5519, %v5517
        %v5578 = vpack.c.bf16 %v5523, %v5521
        %v5579 = vpack.c.bf16 %v5527, %v5525
        %v5580 = vpack.c.bf16 %v5531, %v5529
        %v5581 = vpack.c.bf16 %v5535, %v5533
        %v5582 = vpack.c.bf16 %v5539, %v5537
        %v5583 = vpack.c.bf16 %v5543, %v5541
        %5592 = vrot.lane.b32.xlu0 %v4853, 64
        %v5593 = vpop.permute.xlu0 %5592
        %5594 = vrot.lane.b32.xlu0 %v4854, 64
        %v5595 = vpop.permute.xlu0 %5594
        %5596 = vrot.lane.b32.xlu0 %v4855, 64
        %v5597 = vpop.permute.xlu0 %5596
        %5598 = vrot.lane.b32.xlu0 %v4856, 64
        %v5599 = vpop.permute.xlu0 %5598
        %5600 = vrot.lane.b32.xlu0 %v4857, 64
        %v5601 = vpop.permute.xlu0 %5600
        %5602 = vrot.lane.b32.xlu0 %v4858, 64
        %v5603 = vpop.permute.xlu0 %5602
        %5604 = vrot.lane.b32.xlu0 %v4859, 64
        %v5605 = vpop.permute.xlu0 %5604
        %5606 = vrot.lane.b32.xlu0 %v4860, 64
        %v5607 = vpop.permute.xlu0 %5606
        %5616 = vmatprep.subr.bf16.mxu0 0
        %5617 = vmatpush1.bf16.msra.mxu0 %v5593
        %5618 = vmatprep.subr.bf16.mxu0 0
        %5619 = vmatpush1.bf16.msra.mxu0 %v5595
        %5620 = vmatprep.subr.bf16.mxu0 0
        %5621 = vmatpush1.bf16.msra.mxu0 %v5597
        %5622 = vmatprep.subr.bf16.mxu0 0
        %5623 = vmatpush1.bf16.msra.mxu0 %v5599
        %5624 = vmatprep.subr.bf16.mxu0 0
        %5625 = vmatpush1.bf16.msra.mxu0 %v5601
        %5626 = vmatprep.subr.bf16.mxu0 0
        %5627 = vmatpush1.bf16.msra.mxu0 %v5603
        %5628 = vmatprep.subr.bf16.mxu0 0
        %5629 = vmatpush1.bf16.msra.mxu0 %v5605
        %5630 = vmatprep.subr.bf16.mxu0 0
        %5631 = vmatpush1.bf16.msra.mxu0 %v5607
        %5632 = vmatprep.subr.bf16.mxu0 0
        %5633 = vmatpush1.bf16.msra.mxu0 0
        %5634 = vmatprep.subr.bf16.mxu0 0
        %5635 = vmatpush1.bf16.msra.mxu0 0
        %5636 = vmatprep.subr.bf16.mxu0 0
        %5637 = vmatpush1.bf16.msra.mxu0 0
        %5638 = vmatprep.subr.bf16.mxu0 0
        %5639 = vmatpush1.bf16.msra.mxu0 0
        %5640 = vmatprep.subr.bf16.mxu0 0
        %5641 = vmatpush1.bf16.msra.mxu0 0
        %5642 = vmatprep.subr.bf16.mxu0 0
        %5643 = vmatpush1.bf16.msra.mxu0 0
        %5644 = vmatprep.subr.bf16.mxu0 0
        %5645 = vmatpush1.bf16.msra.mxu0 0
        %5646 = vmatprep.subr.bf16.mxu0 0
        %5647 = vmatpush1.bf16.msra.mxu0 0
        %5648 = vmatprep.mubr.bf16.mxu0 0
        %5649 = vmatmul.mubr.bf16.gmra.mrb[0].mxu0 %v5576
        %v5650 = vpop.f32.mrb[0].mxu0
        %v5651 = vadd.f32 0.0, %v5650
        %v5652 = vpop.f32.mrb[0].mxu0
        %v5653 = vpop.f32.mrb[0].mxu0
        %v5654 = vadd.f32 0.0, %v5653
        %v5655 = vpop.f32.mrb[0].mxu0
        %5656 = vmatprep.mubr.bf16.mxu0 0
        %5657 = vmatmul.mubr.bf16.gmra.mrb[0].mxu0 %v5577
        %v5658 = vpop.f32.mrb[0].mxu0
        %v5659 = vadd.f32 0.0, %v5658
        %v5660 = vpop.f32.mrb[0].mxu0
        %v5661 = vpop.f32.mrb[0].mxu0
        %v5662 = vadd.f32 0.0, %v5661
        %v5663 = vpop.f32.mrb[0].mxu0
        %5664 = vmatprep.mubr.bf16.mxu0 0
        %5665 = vmatmul.mubr.bf16.gmra.mrb[0].mxu0 %v5578
        %v5666 = vpop.f32.mrb[0].mxu0
        %v5667 = vadd.f32 0.0, %v5666
        %v5668 = vpop.f32.mrb[0].mxu0
        %v5669 = vpop.f32.mrb[0].mxu0
        %v5670 = vadd.f32 0.0, %v5669
        %v5671 = vpop.f32.mrb[0].mxu0
        %5672 = vmatprep.mubr.bf16.mxu0 0
        %5673 = vmatmul.mubr.bf16.gmra.mrb[0].mxu0 %v5579
        %v5674 = vpop.f32.mrb[0].mxu0
        %v5675 = vadd.f32 0.0, %v5674
        %v5676 = vpop.f32.mrb[0].mxu0
        %v5677 = vpop.f32.mrb[0].mxu0
        %v5678 = vadd.f32 0.0, %v5677
        %v5679 = vpop.f32.mrb[0].mxu0
        %5680 = vmatprep.mubr.bf16.mxu0 0
        %5681 = vmatmul.mubr.bf16.gmra.mrb[0].mxu0 %v5580
        %v5682 = vpop.f32.mrb[0].mxu0
        %v5683 = vadd.f32 0.0, %v5682
        %v5684 = vpop.f32.mrb[0].mxu0
        %v5685 = vpop.f32.mrb[0].mxu0
        %v5686 = vadd.f32 0.0, %v5685
        %v5687 = vpop.f32.mrb[0].mxu0
        %5688 = vmatprep.mubr.bf16.mxu0 0
        %5689 = vmatmul.mubr.bf16.gmra.mrb[0].mxu0 %v5581
        %v5690 = vpop.f32.mrb[0].mxu0
        %v5691 = vadd.f32 0.0, %v5690
        %v5692 = vpop.f32.mrb[0].mxu0
        %v5693 = vpop.f32.mrb[0].mxu0
        %v5694 = vadd.f32 0.0, %v5693
        %v5695 = vpop.f32.mrb[0].mxu0
        %5696 = vmatprep.mubr.bf16.mxu0 0
        %5697 = vmatmul.mubr.bf16.gmra.mrb[0].mxu0 %v5582
        %v5698 = vpop.f32.mrb[0].mxu0
        %v5699 = vadd.f32 0.0, %v5698
        %v5700 = vpop.f32.mrb[0].mxu0
        %v5701 = vpop.f32.mrb[0].mxu0
        %v5702 = vadd.f32 0.0, %v5701
        %v5703 = vpop.f32.mrb[0].mxu0
        %5704 = vmatprep.mubr.bf16.mxu0 0
        %5705 = vmatmul.mubr.bf16.gmra.mrb[0].mxu0 %v5583
        %v5706 = vpop.f32.mrb[0].mxu0
        %v5707 = vadd.f32 0.0, %v5706
        %v5708 = vpop.f32.mrb[0].mxu0
        %v5709 = vpop.f32.mrb[0].mxu0
        %v5710 = vadd.f32 0.0, %v5709
        %v5711 = vpop.f32.mrb[0].mxu0
        %5712 = vdwg.mxu0
        %v5713 = vrcp.pop %v5545
        %v5714 = vrcp.pop %v5547
        %v5715 = vrcp.pop %v5549
        %v5716 = vrcp.pop %v5551
        %v5717 = vrcp.pop %v5553
        %v5718 = vrcp.pop %v5555
        %v5719 = vrcp.pop %v5557
        %v5720 = vrcp.pop %v5559
        %v5721 = vrcp.pop %v5561
        %v5722 = vrcp.pop %v5563
        %v5723 = vrcp.pop %v5565
        %v5724 = vrcp.pop %v5567
        %v5725 = vrcp.pop %v5569
        %v5726 = vrcp.pop %v5571
        %v5727 = vrcp.pop %v5573
        %v5728 = vrcp.pop %v5575
        %v5729 = vmul.f32 %v5651, %v5713
        %v5730 = vmul.f32 %v5654, %v5714
        %v5731 = vmul.f32 %v5659, %v5715
        %v5732 = vmul.f32 %v5662, %v5716
        %v5733 = vmul.f32 %v5667, %v5717
        %v5734 = vmul.f32 %v5670, %v5718
        %v5735 = vmul.f32 %v5675, %v5719
        %v5736 = vmul.f32 %v5678, %v5720
        %v5737 = vmul.f32 %v5683, %v5721
        %v5738 = vmul.f32 %v5686, %v5722
        %v5739 = vmul.f32 %v5691, %v5723
        %v5740 = vmul.f32 %v5694, %v5724
        %v5741 = vmul.f32 %v5699, %v5725
        %v5742 = vmul.f32 %v5702, %v5726
        %v5743 = vmul.f32 %v5707, %v5727
        %v5744 = vmul.f32 %v5710, %v5728
        %5761 = vrot.lane.b32.xlu0 %v5729, 64
        %v5762 = vpop.permute.xlu0 %5761
        %5763 = vrot.lane.b32.xlu0 %v5730, 64
        %v5764 = vpop.permute.xlu0 %5763
        %5765 = vrot.lane.b32.xlu0 %v5731, 64
        %v5766 = vpop.permute.xlu0 %5765
        %5767 = vrot.lane.b32.xlu0 %v5732, 64
        %v5768 = vpop.permute.xlu0 %5767
        %5769 = vrot.lane.b32.xlu0 %v5733, 64
        %v5770 = vpop.permute.xlu0 %5769
        %5771 = vrot.lane.b32.xlu0 %v5734, 64
        %v5772 = vpop.permute.xlu0 %5771
        %5773 = vrot.lane.b32.xlu0 %v5735, 64
        %v5774 = vpop.permute.xlu0 %5773
        %5775 = vrot.lane.b32.xlu0 %v5736, 64
        %v5776 = vpop.permute.xlu0 %5775
        %5777 = vrot.lane.b32.xlu0 %v5737, 64
        %v5778 = vpop.permute.xlu0 %5777
        %5779 = vrot.lane.b32.xlu0 %v5738, 64
        %v5780 = vpop.permute.xlu0 %5779
        %5781 = vrot.lane.b32.xlu0 %v5739, 64
        %v5782 = vpop.permute.xlu0 %5781
        %5783 = vrot.lane.b32.xlu0 %v5740, 64
        %v5784 = vpop.permute.xlu0 %5783
        %5785 = vrot.lane.b32.xlu0 %v5741, 64
        %v5786 = vpop.permute.xlu0 %5785
        %5787 = vrot.lane.b32.xlu0 %v5742, 64
        %v5788 = vpop.permute.xlu0 %5787
        %5789 = vrot.lane.b32.xlu0 %v5743, 64
        %v5790 = vpop.permute.xlu0 %5789
        %5791 = vrot.lane.b32.xlu0 %v5744, 64
        %v5792 = vpop.permute.xlu0 %5791
        %5809 = vst.msk [vmem:[#allocation2 + $0x10] sm:$0xff] %vm3800, %v5762
        %5810 = vst.msk [vmem:[#allocation2 + $0x28] sm:$0xff] %vm3800, %v5764
        %5811 = vst.msk [vmem:[#allocation2 + $0x40] sm:$0xff] %vm3800, %v5766
        %5812 = vst.msk [vmem:[#allocation2 + $0x58] sm:$0xff] %vm3800, %v5768
        %5813 = vst.msk [vmem:[#allocation2 + $0x70] sm:$0xff] %vm3800, %v5770
        %5814 = vst.msk [vmem:[#allocation2 + $0x88] sm:$0xff] %vm3800, %v5772
        %5815 = vst.msk [vmem:[#allocation2 + $0xa0] sm:$0xff] %vm3800, %v5774
        %5816 = vst.msk [vmem:[#allocation2 + $0xb8] sm:$0xff] %vm3800, %v5776
        %5817 = vst.msk [vmem:[#allocation2 + $0xd0] sm:$0xff] %vm3800, %v5778
        %5818 = vst.msk [vmem:[#allocation2 + $0xe8] sm:$0xff] %vm3800, %v5780
        %5819 = vst.msk [vmem:[#allocation2 + $0x100] sm:$0xff] %vm3800, %v5782
        %5820 = vst.msk [vmem:[#allocation2 + $0x118] sm:$0xff] %vm3800, %v5784
        %5821 = vst.msk [vmem:[#allocation2 + $0x130] sm:$0xff] %vm3800, %v5786
        %5822 = vst.msk [vmem:[#allocation2 + $0x148] sm:$0xff] %vm3800, %v5788
        %5823 = vst.msk [vmem:[#allocation2 + $0x160] sm:$0xff] %vm3800, %v5790
        %5824 = vst.msk [vmem:[#allocation2 + $0x178] sm:$0xff] %vm3800, %v5792
        %v5825 = vld [vmem:[#allocation2] sm:$0xff]
        %v5826 = vld [vmem:[#allocation2 + $0x8] sm:$0xff]
        %v5827 = vld [vmem:[#allocation2 + $0x10] sm:$0xff]
        %v5828 = vld [vmem:[#allocation2 + $0x18] sm:$0xff]
        %v5829 = vld [vmem:[#allocation2 + $0x20] sm:$0xff]
        %v5830 = vld [vmem:[#allocation2 + $0x28] sm:$0xff]
        %v5831 = vld [vmem:[#allocation2 + $0x30] sm:$0xff]
        %v5832 = vld [vmem:[#allocation2 + $0x38] sm:$0xff]
        %v5833 = vld [vmem:[#allocation2 + $0x40] sm:$0xff]
        %v5834 = vld [vmem:[#allocation2 + $0x48] sm:$0xff]
        %v5835 = vld [vmem:[#allocation2 + $0x50] sm:$0xff]
        %v5836 = vld [vmem:[#allocation2 + $0x58] sm:$0xff]
        %v5837 = vld [vmem:[#allocation2 + $0x60] sm:$0xff]
        %v5838 = vld [vmem:[#allocation2 + $0x68] sm:$0xff]
        %v5839 = vld [vmem:[#allocation2 + $0x70] sm:$0xff]
        %v5840 = vld [vmem:[#allocation2 + $0x78] sm:$0xff]
        %v5841 = vld [vmem:[#allocation2 + $0x80] sm:$0xff]
        %v5842 = vld [vmem:[#allocation2 + $0x88] sm:$0xff]
        %v5843 = vld [vmem:[#allocation2 + $0x90] sm:$0xff]
        %v5844 = vld [vmem:[#allocation2 + $0x98] sm:$0xff]
        %v5845 = vld [vmem:[#allocation2 + $0xa0] sm:$0xff]
        %v5846 = vld [vmem:[#allocation2 + $0xa8] sm:$0xff]
        %v5847 = vld [vmem:[#allocation2 + $0xb0] sm:$0xff]
        %v5848 = vld [vmem:[#allocation2 + $0xb8] sm:$0xff]
        %v5849 = vld [vmem:[#allocation2 + $0xc0] sm:$0xff]
        %v5850 = vld [vmem:[#allocation2 + $0xc8] sm:$0xff]
        %v5851 = vld [vmem:[#allocation2 + $0xd0] sm:$0xff]
        %v5852 = vld [vmem:[#allocation2 + $0xd8] sm:$0xff]
        %v5853 = vld [vmem:[#allocation2 + $0xe0] sm:$0xff]
        %v5854 = vld [vmem:[#allocation2 + $0xe8] sm:$0xff]
        %v5855 = vld [vmem:[#allocation2 + $0xf0] sm:$0xff]
        %v5856 = vld [vmem:[#allocation2 + $0xf8] sm:$0xff]
        %v5857 = vld [vmem:[#allocation2 + $0x100] sm:$0xff]
        %v5858 = vld [vmem:[#allocation2 + $0x108] sm:$0xff]
        %v5859 = vld [vmem:[#allocation2 + $0x110] sm:$0xff]
        %v5860 = vld [vmem:[#allocation2 + $0x118] sm:$0xff]
        %v5861 = vld [vmem:[#allocation2 + $0x120] sm:$0xff]
        %v5862 = vld [vmem:[#allocation2 + $0x128] sm:$0xff]
        %v5863 = vld [vmem:[#allocation2 + $0x130] sm:$0xff]
        %v5864 = vld [vmem:[#allocation2 + $0x138] sm:$0xff]
        %v5865 = vld [vmem:[#allocation2 + $0x140] sm:$0xff]
        %v5866 = vld [vmem:[#allocation2 + $0x148] sm:$0xff]
        %v5867 = vld [vmem:[#allocation2 + $0x150] sm:$0xff]
        %v5868 = vld [vmem:[#allocation2 + $0x158] sm:$0xff]
        %v5869 = vld [vmem:[#allocation2 + $0x160] sm:$0xff]
        %v5870 = vld [vmem:[#allocation2 + $0x168] sm:$0xff]
        %v5871 = vld [vmem:[#allocation2 + $0x170] sm:$0xff]
        %v5872 = vld [vmem:[#allocation2 + $0x178] sm:$0xff]
        %v5873 = vpack.c.bf16 %v5828, %v5825
        %v5874 = vpack.c.bf16 %v5829, %v5826
        %v5875 = vpack.c.bf16 %v5830, %v5827
        %v5876 = vpack.c.bf16 %v5834, %v5831
        %v5877 = vpack.c.bf16 %v5835, %v5832
        %v5878 = vpack.c.bf16 %v5836, %v5833
        %v5879 = vpack.c.bf16 %v5840, %v5837
        %v5880 = vpack.c.bf16 %v5841, %v5838
        %v5881 = vpack.c.bf16 %v5842, %v5839
        %v5882 = vpack.c.bf16 %v5846, %v5843
        %v5883 = vpack.c.bf16 %v5847, %v5844
        %v5884 = vpack.c.bf16 %v5848, %v5845
        %v5885 = vpack.c.bf16 %v5852, %v5849
        %v5886 = vpack.c.bf16 %v5853, %v5850
        %v5887 = vpack.c.bf16 %v5854, %v5851
        %v5888 = vpack.c.bf16 %v5858, %v5855
        %v5889 = vpack.c.bf16 %v5859, %v5856
        %v5890 = vpack.c.bf16 %v5860, %v5857
        %v5891 = vpack.c.bf16 %v5864, %v5861
        %v5892 = vpack.c.bf16 %v5865, %v5862
        %v5893 = vpack.c.bf16 %v5866, %v5863
        %v5894 = vpack.c.bf16 %v5870, %v5867
        %v5895 = vpack.c.bf16 %v5871, %v5868
        %v5896 = vpack.c.bf16 %v5872, %v5869
        %v5897 = vld [vmem:[#allocation8] sm:$0xff]
        %v5898 = vld [vmem:[#allocation8 + $0x8] sm:$0xf]
        %v5899 = vld [vmem:[#allocation8 + $0xc] sm:$0xff]
        %v5900 = vld [vmem:[#allocation8 + $0x14] sm:$0xf]
        %v5901 = vld [vmem:[#allocation8 + $0x18] sm:$0xff]
        %v5902 = vld [vmem:[#allocation8 + $0x20] sm:$0xf]
        %v5903 = vld [vmem:[#allocation8 + $0x24] sm:$0xff]
        %v5904 = vld [vmem:[#allocation8 + $0x2c] sm:$0xf]
        %v5905 = vld [vmem:[#allocation8 + $0x30] sm:$0xff]
        %v5906 = vld [vmem:[#allocation8 + $0x38] sm:$0xf]
        %v5907 = vld [vmem:[#allocation8 + $0x3c] sm:$0xff]
        %v5908 = vld [vmem:[#allocation8 + $0x44] sm:$0xf]
        %v5909 = vld [vmem:[#allocation8 + $0x48] sm:$0xff]
        %v5910 = vld [vmem:[#allocation8 + $0x50] sm:$0xf]
        %v5911 = vld [vmem:[#allocation8 + $0x54] sm:$0xff]
        %v5912 = vld [vmem:[#allocation8 + $0x5c] sm:$0xf]
        %v5913 = vld [vmem:[#allocation8 + $0x60] sm:$0xff]
        %v5914 = vld [vmem:[#allocation8 + $0x68] sm:$0xf]
        %v5915 = vld [vmem:[#allocation8 + $0x6c] sm:$0xff]
        %v5916 = vld [vmem:[#allocation8 + $0x74] sm:$0xf]
        %v5917 = vld [vmem:[#allocation8 + $0x78] sm:$0xff]
        %v5918 = vld [vmem:[#allocation8 + $0x80] sm:$0xf]
        %v5919 = vld [vmem:[#allocation8 + $0x84] sm:$0xff]
        %v5920 = vld [vmem:[#allocation8 + $0x8c] sm:$0xf]
        %v5921 = vld [vmem:[#allocation8 + $0x90] sm:$0xff]
        %v5922 = vld [vmem:[#allocation8 + $0x98] sm:$0xf]
        %v5923 = vld [vmem:[#allocation8 + $0x9c] sm:$0xff]
        %v5924 = vld [vmem:[#allocation8 + $0xa4] sm:$0xf]
        %v5925 = vld [vmem:[#allocation8 + $0xa8] sm:$0xff]
        %v5926 = vld [vmem:[#allocation8 + $0xb0] sm:$0xf]
        %v5927 = vld [vmem:[#allocation8 + $0xb4] sm:$0xff]
        %v5928 = vld [vmem:[#allocation8 + $0xbc] sm:$0xf]
        %v5929 = vld [vmem:[#allocation8 + $0xc0] sm:$0xff]
        %v5930 = vld [vmem:[#allocation8 + $0xc8] sm:$0xf]
        %v5931 = vld [vmem:[#allocation8 + $0xcc] sm:$0xff]
        %v5932 = vld [vmem:[#allocation8 + $0xd4] sm:$0xf]
        %v5933 = vld [vmem:[#allocation8 + $0xd8] sm:$0xff]
        %v5934 = vld [vmem:[#allocation8 + $0xe0] sm:$0xf]
        %v5935 = vld [vmem:[#allocation8 + $0xe4] sm:$0xff]
        %v5936 = vld [vmem:[#allocation8 + $0xec] sm:$0xf]
        %v5937 = vld [vmem:[#allocation8 + $0xf0] sm:$0xff]
        %v5938 = vld [vmem:[#allocation8 + $0xf8] sm:$0xf]
        %v5939 = vld [vmem:[#allocation8 + $0xfc] sm:$0xff]
        %v5940 = vld [vmem:[#allocation8 + $0x104] sm:$0xf]
        %v5941 = vld [vmem:[#allocation8 + $0x108] sm:$0xff]
        %v5942 = vld [vmem:[#allocation8 + $0x110] sm:$0xf]
        %v5943 = vld [vmem:[#allocation8 + $0x114] sm:$0xff]
        %v5944 = vld [vmem:[#allocation8 + $0x11c] sm:$0xf]
        %v5945 = vld [vmem:[#allocation8 + $0x120] sm:$0xff]
        %v5946 = vld [vmem:[#allocation8 + $0x128] sm:$0xf]
        %v5947 = vld [vmem:[#allocation8 + $0x12c] sm:$0xff]
        %v5948 = vld [vmem:[#allocation8 + $0x134] sm:$0xf]
        %v5949 = vld [vmem:[#allocation8 + $0x138] sm:$0xff]
        %v5950 = vld [vmem:[#allocation8 + $0x140] sm:$0xf]
        %v5951 = vld [vmem:[#allocation8 + $0x144] sm:$0xff]
        %v5952 = vld [vmem:[#allocation8 + $0x14c] sm:$0xf]
        %v5953 = vld [vmem:[#allocation8 + $0x150] sm:$0xff]
        %v5954 = vld [vmem:[#allocation8 + $0x158] sm:$0xf]
        %v5955 = vld [vmem:[#allocation8 + $0x15c] sm:$0xff]
        %v5956 = vld [vmem:[#allocation8 + $0x164] sm:$0xf]
        %v5957 = vld [vmem:[#allocation8 + $0x168] sm:$0xff]
        %v5958 = vld [vmem:[#allocation8 + $0x170] sm:$0xf]
        %v5959 = vld [vmem:[#allocation8 + $0x174] sm:$0xff]
        %v5960 = vld [vmem:[#allocation8 + $0x17c] sm:$0xf]
        %v5961 = vld [vmem:[#allocation8 + $0x180] sm:$0xff]
        %v5962 = vld [vmem:[#allocation8 + $0x188] sm:$0xf]
        %v5963 = vld [vmem:[#allocation8 + $0x18c] sm:$0xff]
        %v5964 = vld [vmem:[#allocation8 + $0x194] sm:$0xf]
        %v5965 = vld [vmem:[#allocation8 + $0x198] sm:$0xff]
        %v5966 = vld [vmem:[#allocation8 + $0x1a0] sm:$0xf]
        %v5967 = vld [vmem:[#allocation8 + $0x1a4] sm:$0xff]
        %v5968 = vld [vmem:[#allocation8 + $0x1ac] sm:$0xf]
        %v5969 = vld [vmem:[#allocation8 + $0x1b0] sm:$0xff]
        %v5970 = vld [vmem:[#allocation8 + $0x1b8] sm:$0xf]
        %v5971 = vld [vmem:[#allocation8 + $0x1bc] sm:$0xff]
        %v5972 = vld [vmem:[#allocation8 + $0x1c4] sm:$0xf]
        %v5973 = vld [vmem:[#allocation8 + $0x1c8] sm:$0xff]
        %v5974 = vld [vmem:[#allocation8 + $0x1d0] sm:$0xf]
        %v5975 = vld [vmem:[#allocation8 + $0x1d4] sm:$0xff]
        %v5976 = vld [vmem:[#allocation8 + $0x1dc] sm:$0xf]
        %v5977 = vld [vmem:[#allocation8 + $0x1e0] sm:$0xff]
        %v5978 = vld [vmem:[#allocation8 + $0x1e8] sm:$0xf]
        %v5979 = vld [vmem:[#allocation8 + $0x1ec] sm:$0xff]
        %v5980 = vld [vmem:[#allocation8 + $0x1f4] sm:$0xf]
        %v5981 = vld [vmem:[#allocation8 + $0x1f8] sm:$0xff]
        %v5982 = vld [vmem:[#allocation8 + $0x200] sm:$0xf]
        %v5983 = vld [vmem:[#allocation8 + $0x204] sm:$0xff]
        %v5984 = vld [vmem:[#allocation8 + $0x20c] sm:$0xf]
        %v5985 = vld [vmem:[#allocation8 + $0x210] sm:$0xff]
        %v5986 = vld [vmem:[#allocation8 + $0x218] sm:$0xf]
        %v5987 = vld [vmem:[#allocation8 + $0x21c] sm:$0xff]
        %v5988 = vld [vmem:[#allocation8 + $0x224] sm:$0xf]
        %v5989 = vld [vmem:[#allocation8 + $0x228] sm:$0xff]
        %v5990 = vld [vmem:[#allocation8 + $0x230] sm:$0xf]
        %v5991 = vld [vmem:[#allocation8 + $0x234] sm:$0xff]
        %v5992 = vld [vmem:[#allocation8 + $0x23c] sm:$0xf]
        %v5993 = vld [vmem:[%s3] sm:$0x7]
        %v5995 = vlaneseq
        %v5996 = vshrl.u32 %v5995, 7
        %v5997 = vsub.s32 0, %v5996
        %v5998 = vrot.slane %v5993, %v5997
        %v5999 = vlaneseq
        %v6000 = vshrl.u32 %v5999, 7
        %v6001 = vsub.s32 1, %v6000
        %v6002 = vrot.slane %v5993, %v6001
        %v6003 = vlaneseq
        %v6004 = vshrl.u32 %v6003, 7
        %v6005 = vsub.s32 2, %v6004
        %v6006 = vrot.slane %v5993, %v6005
        %v6106 = vunpack.c.l.b16 %v5897
        %v6107 = vunpack.c.h.b16 %v5897
        %v6108 = vunpack.c.l.b16 %v5898
        %v6109 = vunpack.c.l.b16 %v5899
        %v6110 = vunpack.c.h.b16 %v5899
        %v6111 = vunpack.c.l.b16 %v5900
        %v6112 = vunpack.c.l.b16 %v5901
        %v6113 = vunpack.c.h.b16 %v5901
        %v6114 = vunpack.c.l.b16 %v5902
        %v6115 = vunpack.c.l.b16 %v5903
        %v6116 = vunpack.c.h.b16 %v5903
        %v6117 = vunpack.c.l.b16 %v5904
        %v6118 = vunpack.c.l.b16 %v5905
        %v6119 = vunpack.c.h.b16 %v5905
        %v6120 = vunpack.c.l.b16 %v5906
        %v6121 = vunpack.c.l.b16 %v5907
        %v6122 = vunpack.c.h.b16 %v5907
        %v6123 = vunpack.c.l.b16 %v5908
        %v6124 = vunpack.c.l.b16 %v5909
        %v6125 = vunpack.c.h.b16 %v5909
        %v6126 = vunpack.c.l.b16 %v5910
        %v6127 = vunpack.c.l.b16 %v5911
        %v6128 = vunpack.c.h.b16 %v5911
        %v6129 = vunpack.c.l.b16 %v5912
        %v6130 = vunpack.c.l.b16 %v5913
        %v6131 = vunpack.c.h.b16 %v5913
        %v6132 = vunpack.c.l.b16 %v5914
        %v6133 = vunpack.c.l.b16 %v5915
        %v6134 = vunpack.c.h.b16 %v5915
        %v6135 = vunpack.c.l.b16 %v5916
        %v6136 = vunpack.c.l.b16 %v5917
        %v6137 = vunpack.c.h.b16 %v5917
        %v6138 = vunpack.c.l.b16 %v5918
        %v6139 = vunpack.c.l.b16 %v5919
        %v6140 = vunpack.c.h.b16 %v5919
        %v6141 = vunpack.c.l.b16 %v5920
        %v6142 = vunpack.c.l.b16 %v5921
        %v6143 = vunpack.c.h.b16 %v5921
        %v6144 = vunpack.c.l.b16 %v5922
        %v6145 = vunpack.c.l.b16 %v5923
        %v6146 = vunpack.c.h.b16 %v5923
        %v6147 = vunpack.c.l.b16 %v5924
        %v6148 = vunpack.c.l.b16 %v5925
        %v6149 = vunpack.c.h.b16 %v5925
        %v6150 = vunpack.c.l.b16 %v5926
        %v6151 = vunpack.c.l.b16 %v5927
        %v6152 = vunpack.c.h.b16 %v5927
        %v6153 = vunpack.c.l.b16 %v5928
        %v6154 = vunpack.c.l.b16 %v5929
        %v6155 = vunpack.c.h.b16 %v5929
        %v6156 = vunpack.c.l.b16 %v5930
        %v6157 = vunpack.c.l.b16 %v5931
        %v6158 = vunpack.c.h.b16 %v5931
        %v6159 = vunpack.c.l.b16 %v5932
        %v6160 = vunpack.c.l.b16 %v5933
        %v6161 = vunpack.c.h.b16 %v5933
        %v6162 = vunpack.c.l.b16 %v5934
        %v6163 = vunpack.c.l.b16 %v5935
        %v6164 = vunpack.c.h.b16 %v5935
        %v6165 = vunpack.c.l.b16 %v5936
        %v6166 = vunpack.c.l.b16 %v5937
        %v6167 = vunpack.c.h.b16 %v5937
        %v6168 = vunpack.c.l.b16 %v5938
        %v6169 = vunpack.c.l.b16 %v5939
        %v6170 = vunpack.c.h.b16 %v5939
        %v6171 = vunpack.c.l.b16 %v5940
        %v6172 = vunpack.c.l.b16 %v5941
        %v6173 = vunpack.c.h.b16 %v5941
        %v6174 = vunpack.c.l.b16 %v5942
        %v6175 = vunpack.c.l.b16 %v5943
        %v6176 = vunpack.c.h.b16 %v5943
        %v6177 = vunpack.c.l.b16 %v5944
        %v6178 = vunpack.c.l.b16 %v5945
        %v6179 = vunpack.c.h.b16 %v5945
        %v6180 = vunpack.c.l.b16 %v5946
        %v6181 = vunpack.c.l.b16 %v5947
        %v6182 = vunpack.c.h.b16 %v5947
        %v6183 = vunpack.c.l.b16 %v5948
        %v6184 = vunpack.c.l.b16 %v5949
        %v6185 = vunpack.c.h.b16 %v5949
        %v6186 = vunpack.c.l.b16 %v5950
        %v6187 = vunpack.c.l.b16 %v5951
        %v6188 = vunpack.c.h.b16 %v5951
        %v6189 = vunpack.c.l.b16 %v5952
        %v6190 = vunpack.c.l.b16 %v5953
        %v6191 = vunpack.c.h.b16 %v5953
        %v6192 = vunpack.c.l.b16 %v5954
        %v6193 = vunpack.c.l.b16 %v5955
        %v6194 = vunpack.c.h.b16 %v5955
        %v6195 = vunpack.c.l.b16 %v5956
        %v6196 = vunpack.c.l.b16 %v5957
        %v6197 = vunpack.c.h.b16 %v5957
        %v6198 = vunpack.c.l.b16 %v5958
        %v6199 = vunpack.c.l.b16 %v5959
        %v6200 = vunpack.c.h.b16 %v5959
        %v6201 = vunpack.c.l.b16 %v5960
        %v6202 = vunpack.c.l.b16 %v5961
        %v6203 = vunpack.c.h.b16 %v5961
        %v6204 = vunpack.c.l.b16 %v5962
        %v6205 = vunpack.c.l.b16 %v5963
        %v6206 = vunpack.c.h.b16 %v5963
        %v6207 = vunpack.c.l.b16 %v5964
        %v6208 = vunpack.c.l.b16 %v5965
        %v6209 = vunpack.c.h.b16 %v5965
        %v6210 = vunpack.c.l.b16 %v5966
        %v6211 = vunpack.c.l.b16 %v5967
        %v6212 = vunpack.c.h.b16 %v5967
        %v6213 = vunpack.c.l.b16 %v5968
        %v6214 = vunpack.c.l.b16 %v5969
        %v6215 = vunpack.c.h.b16 %v5969
        %v6216 = vunpack.c.l.b16 %v5970
        %v6217 = vunpack.c.l.b16 %v5971
        %v6218 = vunpack.c.h.b16 %v5971
        %v6219 = vunpack.c.l.b16 %v5972
        %v6220 = vunpack.c.l.b16 %v5973
        %v6221 = vunpack.c.h.b16 %v5973
        %v6222 = vunpack.c.l.b16 %v5974
        %v6223 = vunpack.c.l.b16 %v5975
        %v6224 = vunpack.c.h.b16 %v5975
        %v6225 = vunpack.c.l.b16 %v5976
        %v6226 = vunpack.c.l.b16 %v5977
        %v6227 = vunpack.c.h.b16 %v5977
        %v6228 = vunpack.c.l.b16 %v5978
        %v6229 = vunpack.c.l.b16 %v5979
        %v6230 = vunpack.c.h.b16 %v5979
        %v6231 = vunpack.c.l.b16 %v5980
        %v6232 = vunpack.c.l.b16 %v5981
        %v6233 = vunpack.c.h.b16 %v5981
        %v6234 = vunpack.c.l.b16 %v5982
        %v6235 = vunpack.c.l.b16 %v5983
        %v6236 = vunpack.c.h.b16 %v5983
        %v6237 = vunpack.c.l.b16 %v5984
        %v6238 = vunpack.c.l.b16 %v5985
        %v6239 = vunpack.c.h.b16 %v5985
        %v6240 = vunpack.c.l.b16 %v5986
        %v6241 = vunpack.c.l.b16 %v5987
        %v6242 = vunpack.c.h.b16 %v5987
        %v6243 = vunpack.c.l.b16 %v5988
        %v6244 = vunpack.c.l.b16 %v5989
        %v6245 = vunpack.c.h.b16 %v5989
        %v6246 = vunpack.c.l.b16 %v5990
        %v6247 = vunpack.c.l.b16 %v5991
        %v6248 = vunpack.c.h.b16 %v5991
        %v6249 = vunpack.c.l.b16 %v5992
        %v6250 = vpack.c.b16 %v6109, %v6106
        %v6251 = vpack.c.b16 %v6110, %v6107
        %v6252 = vpack.c.b16 %v6111, %v6108
        %v6253 = vpack.c.b16 %v6115, %v6112
        %v6254 = vpack.c.b16 %v6116, %v6113
        %v6255 = vpack.c.b16 %v6117, %v6114
        %v6256 = vpack.c.b16 %v6121, %v6118
        %v6257 = vpack.c.b16 %v6122, %v6119
        %v6258 = vpack.c.b16 %v6123, %v6120
        %v6259 = vpack.c.b16 %v6127, %v6124
        %v6260 = vpack.c.b16 %v6128, %v6125
        %v6261 = vpack.c.b16 %v6129, %v6126
        %v6262 = vpack.c.b16 %v6133, %v6130
        %v6263 = vpack.c.b16 %v6134, %v6131
        %v6264 = vpack.c.b16 %v6135, %v6132
        %v6265 = vpack.c.b16 %v6139, %v6136
        %v6266 = vpack.c.b16 %v6140, %v6137
        %v6267 = vpack.c.b16 %v6141, %v6138
        %v6268 = vpack.c.b16 %v6145, %v6142
        %v6269 = vpack.c.b16 %v6146, %v6143
        %v6270 = vpack.c.b16 %v6147, %v6144
        %v6271 = vpack.c.b16 %v6151, %v6148
        %v6272 = vpack.c.b16 %v6152, %v6149
        %v6273 = vpack.c.b16 %v6153, %v6150
        %v6274 = vpack.c.b16 %v6157, %v6154
        %v6275 = vpack.c.b16 %v6158, %v6155
        %v6276 = vpack.c.b16 %v6159, %v6156
        %v6277 = vpack.c.b16 %v6163, %v6160
        %v6278 = vpack.c.b16 %v6164, %v6161
        %v6279 = vpack.c.b16 %v6165, %v6162
        %v6280 = vpack.c.b16 %v6169, %v6166
        %v6281 = vpack.c.b16 %v6170, %v6167
        %v6282 = vpack.c.b16 %v6171, %v6168
        %v6283 = vpack.c.b16 %v6175, %v6172
        %v6284 = vpack.c.b16 %v6176, %v6173
        %v6285 = vpack.c.b16 %v6177, %v6174
        %v6286 = vpack.c.b16 %v6181, %v6178
        %v6287 = vpack.c.b16 %v6182, %v6179
        %v6288 = vpack.c.b16 %v6183, %v6180
        %v6289 = vpack.c.b16 %v6187, %v6184
        %v6290 = vpack.c.b16 %v6188, %v6185
        %v6291 = vpack.c.b16 %v6189, %v6186
        %v6292 = vpack.c.b16 %v6193, %v6190
        %v6293 = vpack.c.b16 %v6194, %v6191
        %v6294 = vpack.c.b16 %v6195, %v6192
        %v6295 = vpack.c.b16 %v6199, %v6196
        %v6296 = vpack.c.b16 %v6200, %v6197
        %v6297 = vpack.c.b16 %v6201, %v6198
        %v6298 = vpack.c.b16 %v6205, %v6202
        %v6299 = vpack.c.b16 %v6206, %v6203
        %v6300 = vpack.c.b16 %v6207, %v6204
        %v6301 = vpack.c.b16 %v6211, %v6208
        %v6302 = vpack.c.b16 %v6212, %v6209
        %v6303 = vpack.c.b16 %v6213, %v6210
        %v6304 = vpack.c.b16 %v6217, %v6214
        %v6305 = vpack.c.b16 %v6218, %v6215
        %v6306 = vpack.c.b16 %v6219, %v6216
        %v6307 = vpack.c.b16 %v6223, %v6220
        %v6308 = vpack.c.b16 %v6224, %v6221
        %v6309 = vpack.c.b16 %v6225, %v6222
        %v6310 = vpack.c.b16 %v6229, %v6226
        %v6311 = vpack.c.b16 %v6230, %v6227
        %v6312 = vpack.c.b16 %v6231, %v6228
        %v6313 = vpack.c.b16 %v6235, %v6232
        %v6314 = vpack.c.b16 %v6236, %v6233
        %v6315 = vpack.c.b16 %v6237, %v6234
        %v6316 = vpack.c.b16 %v6241, %v6238
        %v6317 = vpack.c.b16 %v6242, %v6239
        %v6318 = vpack.c.b16 %v6243, %v6240
        %v6319 = vpack.c.b16 %v6247, %v6244
        %v6320 = vpack.c.b16 %v6248, %v6245
        %v6321 = vpack.c.b16 %v6249, %v6246
        %6394 = vmatprep.subr.bf16.mxu0 %v6251
        %6395 = vmatpush1.bf16.msra.mxu0 %v6250
        %6396 = vmatprep.subr.bf16.mxu0 %v6254
        %6397 = vmatpush1.bf16.msra.mxu0 %v6253
        %6398 = vmatprep.subr.bf16.mxu0 %v6257
        %6399 = vmatpush1.bf16.msra.mxu0 %v6256
        %6400 = vmatprep.subr.bf16.mxu0 %v6260
        %6401 = vmatpush1.bf16.msra.mxu0 %v6259
        %6402 = vmatprep.subr.bf16.mxu0 %v6263
        %6403 = vmatpush1.bf16.msra.mxu0 %v6262
        %6404 = vmatprep.subr.bf16.mxu0 %v6266
        %6405 = vmatpush1.bf16.msra.mxu0 %v6265
        %6406 = vmatprep.subr.bf16.mxu0 %v6269
        %6407 = vmatpush1.bf16.msra.mxu0 %v6268
        %6408 = vmatprep.subr.bf16.mxu0 %v6272
        %6409 = vmatpush1.bf16.msra.mxu0 %v6271
        %6410 = vmatprep.subr.bf16.mxu0 %v6275
        %6411 = vmatpush1.bf16.msra.mxu0 %v6274
        %6412 = vmatprep.subr.bf16.mxu0 %v6278
        %6413 = vmatpush1.bf16.msra.mxu0 %v6277
        %6414 = vmatprep.subr.bf16.mxu0 %v6281
        %6415 = vmatpush1.bf16.msra.mxu0 %v6280
        %6416 = vmatprep.subr.bf16.mxu0 %v6284
        %6417 = vmatpush1.bf16.msra.mxu0 %v6283
        %6418 = vmatprep.subr.bf16.mxu0 %v6287
        %6419 = vmatpush1.bf16.msra.mxu0 %v6286
        %6420 = vmatprep.subr.bf16.mxu0 %v6290
        %6421 = vmatpush1.bf16.msra.mxu0 %v6289
        %6422 = vmatprep.subr.bf16.mxu0 %v6293
        %6423 = vmatpush1.bf16.msra.mxu0 %v6292
        %6424 = vmatprep.subr.bf16.mxu0 %v6296
        %6425 = vmatpush1.bf16.msra.mxu0 %v6295
        %6426 = vmatprep.mubr.bf16.mxu0 %v5874
        %6427 = vmatmul.mubr.bf16.gmra.mrb[0].mxu0 %v5873
        %v6428 = vpop.f32.mrb[0].mxu0
        %v6429 = vadd.f32 %v5998, %v6428
        %v6430 = vpop.f32.mrb[0].mxu0
        %v6431 = vadd.f32 %v6002, %v6430
        %v6432 = vpop.f32.mrb[0].mxu0
        %v6433 = vadd.f32 %v5998, %v6432
        %v6434 = vpop.f32.mrb[0].mxu0
        %v6435 = vadd.f32 %v6002, %v6434
        %6436 = vmatprep.mubr.bf16.mxu0 %v5877
        %6437 = vmatmul.mubr.bf16.gmra.mrb[0].mxu0 %v5876
        %v6438 = vpop.f32.mrb[0].mxu0
        %v6439 = vadd.f32 %v5998, %v6438
        %v6440 = vpop.f32.mrb[0].mxu0
        %v6441 = vadd.f32 %v6002, %v6440
        %v6442 = vpop.f32.mrb[0].mxu0
        %v6443 = vadd.f32 %v5998, %v6442
        %v6444 = vpop.f32.mrb[0].mxu0
        %v6445 = vadd.f32 %v6002, %v6444
        %6446 = vmatprep.mubr.bf16.mxu0 %v5880
        %6447 = vmatmul.mubr.bf16.gmra.mrb[0].mxu0 %v5879
        %v6448 = vpop.f32.mrb[0].mxu0
        %v6449 = vadd.f32 %v5998, %v6448
        %v6450 = vpop.f32.mrb[0].mxu0
        %v6451 = vadd.f32 %v6002, %v6450
        %v6452 = vpop.f32.mrb[0].mxu0
        %v6453 = vadd.f32 %v5998, %v6452
        %v6454 = vpop.f32.mrb[0].mxu0
        %v6455 = vadd.f32 %v6002, %v6454
        %6456 = vmatprep.mubr.bf16.mxu0 %v5883
        %6457 = vmatmul.mubr.bf16.gmra.mrb[0].mxu0 %v5882
        %v6458 = vpop.f32.mrb[0].mxu0
        %v6459 = vadd.f32 %v5998, %v6458
        %v6460 = vpop.f32.mrb[0].mxu0
        %v6461 = vadd.f32 %v6002, %v6460
        %v6462 = vpop.f32.mrb[0].mxu0
        %v6463 = vadd.f32 %v5998, %v6462
        %v6464 = vpop.f32.mrb[0].mxu0
        %v6465 = vadd.f32 %v6002, %v6464
        %6466 = vmatprep.mubr.bf16.mxu0 %v5886
        %6467 = vmatmul.mubr.bf16.gmra.mrb[0].mxu0 %v5885
        %v6468 = vpop.f32.mrb[0].mxu0
        %v6469 = vadd.f32 %v5998, %v6468
        %v6470 = vpop.f32.mrb[0].mxu0
        %v6471 = vadd.f32 %v6002, %v6470
        %v6472 = vpop.f32.mrb[0].mxu0
        %v6473 = vadd.f32 %v5998, %v6472
        %v6474 = vpop.f32.mrb[0].mxu0
        %v6475 = vadd.f32 %v6002, %v6474
        %6476 = vmatprep.mubr.bf16.mxu0 %v5889
        %6477 = vmatmul.mubr.bf16.gmra.mrb[0].mxu0 %v5888
        %v6478 = vpop.f32.mrb[0].mxu0
        %v6479 = vadd.f32 %v5998, %v6478
        %v6480 = vpop.f32.mrb[0].mxu0
        %v6481 = vadd.f32 %v6002, %v6480
        %v6482 = vpop.f32.mrb[0].mxu0
        %v6483 = vadd.f32 %v5998, %v6482
        %v6484 = vpop.f32.mrb[0].mxu0
        %v6485 = vadd.f32 %v6002, %v6484
        %6486 = vmatprep.mubr.bf16.mxu0 %v5892
        %6487 = vmatmul.mubr.bf16.gmra.mrb[0].mxu0 %v5891
        %v6488 = vpop.f32.mrb[0].mxu0
        %v6489 = vadd.f32 %v5998, %v6488
        %v6490 = vpop.f32.mrb[0].mxu0
        %v6491 = vadd.f32 %v6002, %v6490
        %v6492 = vpop.f32.mrb[0].mxu0
        %v6493 = vadd.f32 %v5998, %v6492
        %v6494 = vpop.f32.mrb[0].mxu0
        %v6495 = vadd.f32 %v6002, %v6494
        %6496 = vmatprep.mubr.bf16.mxu0 %v5895
        %6497 = vmatmul.mubr.bf16.gmra.mrb[0].mxu0 %v5894
        %v6498 = vpop.f32.mrb[0].mxu0
        %v6499 = vadd.f32 %v5998, %v6498
        %v6500 = vpop.f32.mrb[0].mxu0
        %v6501 = vadd.f32 %v6002, %v6500
        %v6502 = vpop.f32.mrb[0].mxu0
        %v6503 = vadd.f32 %v5998, %v6502
        %v6504 = vpop.f32.mrb[0].mxu0
        %v6505 = vadd.f32 %v6002, %v6504
        %6506 = vdwg.mxu0
        %6507 = vmatprep.subr.bf16.mxu0 %v6299
        %6508 = vmatpush1.bf16.msra.mxu0 %v6298
        %6509 = vmatprep.subr.bf16.mxu0 %v6302
        %6510 = vmatpush1.bf16.msra.mxu0 %v6301
        %6511 = vmatprep.subr.bf16.mxu0 %v6305
        %6512 = vmatpush1.bf16.msra.mxu0 %v6304
        %6513 = vmatprep.subr.bf16.mxu0 %v6308
        %6514 = vmatpush1.bf16.msra.mxu0 %v6307
        %6515 = vmatprep.subr.bf16.mxu0 %v6311
        %6516 = vmatpush1.bf16.msra.mxu0 %v6310
        %6517 = vmatprep.subr.bf16.mxu0 %v6314
        %6518 = vmatpush1.bf16.msra.mxu0 %v6313
        %6519 = vmatprep.subr.bf16.mxu0 %v6317
        %6520 = vmatpush1.bf16.msra.mxu0 %v6316
        %6521 = vmatprep.subr.bf16.mxu0 %v6320
        %6522 = vmatpush1.bf16.msra.mxu0 %v6319
        %6523 = vmatprep.subr.bf16.mxu0 0
        %6524 = vmatpush1.bf16.msra.mxu0 0
        %6525 = vmatprep.subr.bf16.mxu0 0
        %6526 = vmatpush1.bf16.msra.mxu0 0
        %6527 = vmatprep.subr.bf16.mxu0 0
        %6528 = vmatpush1.bf16.msra.mxu0 0
        %6529 = vmatprep.subr.bf16.mxu0 0
        %6530 = vmatpush1.bf16.msra.mxu0 0
        %6531 = vmatprep.subr.bf16.mxu0 0
        %6532 = vmatpush1.bf16.msra.mxu0 0
        %6533 = vmatprep.subr.bf16.mxu0 0
        %6534 = vmatpush1.bf16.msra.mxu0 0
        %6535 = vmatprep.subr.bf16.mxu0 0
        %6536 = vmatpush1.bf16.msra.mxu0 0
        %6537 = vmatprep.subr.bf16.mxu0 0
        %6538 = vmatpush1.bf16.msra.mxu0 0
        %6539 = vmatprep.mubr.bf16.mxu0 0
        %6540 = vmatmul.mubr.bf16.gmra.mrb[0].mxu0 %v5875
        %v6541 = vpop.f32.mrb[0].mxu0
        %v6542 = vadd.f32 %v6429, %v6541
        %v6543 = vpop.f32.mrb[0].mxu0
        %v6544 = vadd.f32 %v6431, %v6543
        %v6545 = vpop.f32.mrb[0].mxu0
        %v6546 = vadd.f32 %v6433, %v6545
        %v6547 = vpop.f32.mrb[0].mxu0
        %v6548 = vadd.f32 %v6435, %v6547
        %6549 = vmatprep.mubr.bf16.mxu0 0
        %6550 = vmatmul.mubr.bf16.gmra.mrb[0].mxu0 %v5878
        %v6551 = vpop.f32.mrb[0].mxu0
        %v6552 = vadd.f32 %v6439, %v6551
        %v6553 = vpop.f32.mrb[0].mxu0
        %v6554 = vadd.f32 %v6441, %v6553
        %v6555 = vpop.f32.mrb[0].mxu0
        %v6556 = vadd.f32 %v6443, %v6555
        %v6557 = vpop.f32.mrb[0].mxu0
        %v6558 = vadd.f32 %v6445, %v6557
        %6559 = vmatprep.mubr.bf16.mxu0 0
        %6560 = vmatmul.mubr.bf16.gmra.mrb[0].mxu0 %v5881
        %v6561 = vpop.f32.mrb[0].mxu0
        %v6562 = vadd.f32 %v6449, %v6561
        %v6563 = vpop.f32.mrb[0].mxu0
        %v6564 = vadd.f32 %v6451, %v6563
        %v6565 = vpop.f32.mrb[0].mxu0
        %v6566 = vadd.f32 %v6453, %v6565
        %v6567 = vpop.f32.mrb[0].mxu0
        %v6568 = vadd.f32 %v6455, %v6567
        %6569 = vmatprep.mubr.bf16.mxu0 0
        %6570 = vmatmul.mubr.bf16.gmra.mrb[0].mxu0 %v5884
        %v6571 = vpop.f32.mrb[0].mxu0
        %v6572 = vadd.f32 %v6459, %v6571
        %v6573 = vpop.f32.mrb[0].mxu0
        %v6574 = vadd.f32 %v6461, %v6573
        %v6575 = vpop.f32.mrb[0].mxu0
        %v6576 = vadd.f32 %v6463, %v6575
        %v6577 = vpop.f32.mrb[0].mxu0
        %v6578 = vadd.f32 %v6465, %v6577
        %6579 = vmatprep.mubr.bf16.mxu0 0
        %6580 = vmatmul.mubr.bf16.gmra.mrb[0].mxu0 %v5887
        %v6581 = vpop.f32.mrb[0].mxu0
        %v6582 = vadd.f32 %v6469, %v6581
        %v6583 = vpop.f32.mrb[0].mxu0
        %v6584 = vadd.f32 %v6471, %v6583
        %v6585 = vpop.f32.mrb[0].mxu0
        %v6586 = vadd.f32 %v6473, %v6585
        %v6587 = vpop.f32.mrb[0].mxu0
        %v6588 = vadd.f32 %v6475, %v6587
        %6589 = vmatprep.mubr.bf16.mxu0 0
        %6590 = vmatmul.mubr.bf16.gmra.mrb[0].mxu0 %v5890
        %v6591 = vpop.f32.mrb[0].mxu0
        %v6592 = vadd.f32 %v6479, %v6591
        %v6593 = vpop.f32.mrb[0].mxu0
        %v6594 = vadd.f32 %v6481, %v6593
        %v6595 = vpop.f32.mrb[0].mxu0
        %v6596 = vadd.f32 %v6483, %v6595
        %v6597 = vpop.f32.mrb[0].mxu0
        %v6598 = vadd.f32 %v6485, %v6597
        %6599 = vmatprep.mubr.bf16.mxu0 0
        %6600 = vmatmul.mubr.bf16.gmra.mrb[0].mxu0 %v5893
        %v6601 = vpop.f32.mrb[0].mxu0
        %v6602 = vadd.f32 %v6489, %v6601
        %v6603 = vpop.f32.mrb[0].mxu0
        %v6604 = vadd.f32 %v6491, %v6603
        %v6605 = vpop.f32.mrb[0].mxu0
        %v6606 = vadd.f32 %v6493, %v6605
        %v6607 = vpop.f32.mrb[0].mxu0
        %v6608 = vadd.f32 %v6495, %v6607
        %6609 = vmatprep.mubr.bf16.mxu0 0
        %6610 = vmatmul.mubr.bf16.gmra.mrb[0].mxu0 %v5896
        %v6611 = vpop.f32.mrb[0].mxu0
        %v6612 = vadd.f32 %v6499, %v6611
        %v6613 = vpop.f32.mrb[0].mxu0
        %v6614 = vadd.f32 %v6501, %v6613
        %v6615 = vpop.f32.mrb[0].mxu0
        %v6616 = vadd.f32 %v6503, %v6615
        %v6617 = vpop.f32.mrb[0].mxu0
        %v6618 = vadd.f32 %v6505, %v6617
        %6619 = vdwg.mxu0
        %6620 = vmatprep.subr.bf16.mxu0 0
        %6621 = vmatpush1.bf16.msra.mxu0 %v6252
        %6622 = vmatprep.subr.bf16.mxu0 0
        %6623 = vmatpush1.bf16.msra.mxu0 %v6255
        %6624 = vmatprep.subr.bf16.mxu0 0
        %6625 = vmatpush1.bf16.msra.mxu0 %v6258
        %6626 = vmatprep.subr.bf16.mxu0 0
        %6627 = vmatpush1.bf16.msra.mxu0 %v6261
        %6628 = vmatprep.subr.bf16.mxu0 0
        %6629 = vmatpush1.bf16.msra.mxu0 %v6264
        %6630 = vmatprep.subr.bf16.mxu0 0
        %6631 = vmatpush1.bf16.msra.mxu0 %v6267
        %6632 = vmatprep.subr.bf16.mxu0 0
        %6633 = vmatpush1.bf16.msra.mxu0 %v6270
        %6634 = vmatprep.subr.bf16.mxu0 0
        %6635 = vmatpush1.bf16.msra.mxu0 %v6273
        %6636 = vmatprep.subr.bf16.mxu0 0
        %6637 = vmatpush1.bf16.msra.mxu0 %v6276
        %6638 = vmatprep.subr.bf16.mxu0 0
        %6639 = vmatpush1.bf16.msra.mxu0 %v6279
        %6640 = vmatprep.subr.bf16.mxu0 0
        %6641 = vmatpush1.bf16.msra.mxu0 %v6282
        %6642 = vmatprep.subr.bf16.mxu0 0
        %6643 = vmatpush1.bf16.msra.mxu0 %v6285
        %6644 = vmatprep.subr.bf16.mxu0 0
        %6645 = vmatpush1.bf16.msra.mxu0 %v6288
        %6646 = vmatprep.subr.bf16.mxu0 0
        %6647 = vmatpush1.bf16.msra.mxu0 %v6291
        %6648 = vmatprep.subr.bf16.mxu0 0
        %6649 = vmatpush1.bf16.msra.mxu0 %v6294
        %6650 = vmatprep.subr.bf16.mxu0 0
        %6651 = vmatpush1.bf16.msra.mxu0 %v6297
        %6652 = vmatprep.mubr.bf16.mxu0 %v5874
        %6653 = vmatmul.mubr.bf16.gmra.mrb[0].mxu0 %v5873
        %v6654 = vpop.f32.mrb[0].mxu0
        %v6655 = vadd.f32 %v6006, %v6654
        %v6656 = vpop.f32.mrb[0].mxu0
        %v6657 = vpop.f32.mrb[0].mxu0
        %v6658 = vadd.f32 %v6006, %v6657
        %v6659 = vpop.f32.mrb[0].mxu0
        %6660 = vmatprep.mubr.bf16.mxu0 %v5877
        %6661 = vmatmul.mubr.bf16.gmra.mrb[0].mxu0 %v5876
        %v6662 = vpop.f32.mrb[0].mxu0
        %v6663 = vadd.f32 %v6006, %v6662
        %v6664 = vpop.f32.mrb[0].mxu0
        %v6665 = vpop.f32.mrb[0].mxu0
        %v6666 = vadd.f32 %v6006, %v6665
        %v6667 = vpop.f32.mrb[0].mxu0
        %6668 = vmatprep.mubr.bf16.mxu0 %v5880
        %6669 = vmatmul.mubr.bf16.gmra.mrb[0].mxu0 %v5879
        %v6670 = vpop.f32.mrb[0].mxu0
        %v6671 = vadd.f32 %v6006, %v6670
        %v6672 = vpop.f32.mrb[0].mxu0
        %v6673 = vpop.f32.mrb[0].mxu0
        %v6674 = vadd.f32 %v6006, %v6673
        %v6675 = vpop.f32.mrb[0].mxu0
        %6676 = vmatprep.mubr.bf16.mxu0 %v5883
        %6677 = vmatmul.mubr.bf16.gmra.mrb[0].mxu0 %v5882
        %v6678 = vpop.f32.mrb[0].mxu0
        %v6679 = vadd.f32 %v6006, %v6678
        %v6680 = vpop.f32.mrb[0].mxu0
        %v6681 = vpop.f32.mrb[0].mxu0
        %v6682 = vadd.f32 %v6006, %v6681
        %v6683 = vpop.f32.mrb[0].mxu0
        %6684 = vmatprep.mubr.bf16.mxu0 %v5886
        %6685 = vmatmul.mubr.bf16.gmra.mrb[0].mxu0 %v5885
        %v6686 = vpop.f32.mrb[0].mxu0
        %v6687 = vadd.f32 %v6006, %v6686
        %v6688 = vpop.f32.mrb[0].mxu0
        %v6689 = vpop.f32.mrb[0].mxu0
        %v6690 = vadd.f32 %v6006, %v6689
        %v6691 = vpop.f32.mrb[0].mxu0
        %6692 = vmatprep.mubr.bf16.mxu0 %v5889
        %6693 = vmatmul.mubr.bf16.gmra.mrb[0].mxu0 %v5888
        %v6694 = vpop.f32.mrb[0].mxu0
        %v6695 = vadd.f32 %v6006, %v6694
        %v6696 = vpop.f32.mrb[0].mxu0
        %v6697 = vpop.f32.mrb[0].mxu0
        %v6698 = vadd.f32 %v6006, %v6697
        %v6699 = vpop.f32.mrb[0].mxu0
        %6700 = vmatprep.mubr.bf16.mxu0 %v5892
        %6701 = vmatmul.mubr.bf16.gmra.mrb[0].mxu0 %v5891
        %v6702 = vpop.f32.mrb[0].mxu0
        %v6703 = vadd.f32 %v6006, %v6702
        %v6704 = vpop.f32.mrb[0].mxu0
        %v6705 = vpop.f32.mrb[0].mxu0
        %v6706 = vadd.f32 %v6006, %v6705
        %v6707 = vpop.f32.mrb[0].mxu0
        %6708 = vmatprep.mubr.bf16.mxu0 %v5895
        %6709 = vmatmul.mubr.bf16.gmra.mrb[0].mxu0 %v5894
        %v6710 = vpop.f32.mrb[0].mxu0
        %v6711 = vadd.f32 %v6006, %v6710
        %v6712 = vpop.f32.mrb[0].mxu0
        %v6713 = vpop.f32.mrb[0].mxu0
        %v6714 = vadd.f32 %v6006, %v6713
        %v6715 = vpop.f32.mrb[0].mxu0
        %6716 = vdwg.mxu0
        %6717 = vmatprep.subr.bf16.mxu0 0
        %6718 = vmatpush1.bf16.msra.mxu0 %v6300
        %6719 = vmatprep.subr.bf16.mxu0 0
        %6720 = vmatpush1.bf16.msra.mxu0 %v6303
        %6721 = vmatprep.subr.bf16.mxu0 0
        %6722 = vmatpush1.bf16.msra.mxu0 %v6306
        %6723 = vmatprep.subr.bf16.mxu0 0
        %6724 = vmatpush1.bf16.msra.mxu0 %v6309
        %6725 = vmatprep.subr.bf16.mxu0 0
        %6726 = vmatpush1.bf16.msra.mxu0 %v6312
        %6727 = vmatprep.subr.bf16.mxu0 0
        %6728 = vmatpush1.bf16.msra.mxu0 %v6315
        %6729 = vmatprep.subr.bf16.mxu0 0
        %6730 = vmatpush1.bf16.msra.mxu0 %v6318
        %6731 = vmatprep.subr.bf16.mxu0 0
        %6732 = vmatpush1.bf16.msra.mxu0 %v6321
        %6733 = vmatprep.subr.bf16.mxu0 0
        %6734 = vmatpush1.bf16.msra.mxu0 0
        %6735 = vmatprep.subr.bf16.mxu0 0
        %6736 = vmatpush1.bf16.msra.mxu0 0
        %6737 = vmatprep.subr.bf16.mxu0 0
        %6738 = vmatpush1.bf16.msra.mxu0 0
        %6739 = vmatprep.subr.bf16.mxu0 0
        %6740 = vmatpush1.bf16.msra.mxu0 0
        %6741 = vmatprep.subr.bf16.mxu0 0
        %6742 = vmatpush1.bf16.msra.mxu0 0
        %6743 = vmatprep.subr.bf16.mxu0 0
        %6744 = vmatpush1.bf16.msra.mxu0 0
        %6745 = vmatprep.subr.bf16.mxu0 0
        %6746 = vmatpush1.bf16.msra.mxu0 0
        %6747 = vmatprep.subr.bf16.mxu0 0
        %6748 = vmatpush1.bf16.msra.mxu0 0
        %6749 = vmatprep.mubr.bf16.mxu0 0
        %6750 = vmatmul.mubr.bf16.gmra.mrb[0].mxu0 %v5875
        %v6751 = vpop.f32.mrb[0].mxu0
        %v6752 = vadd.f32 %v6655, %v6751
        %v6753 = vpop.f32.mrb[0].mxu0
        %v6754 = vpop.f32.mrb[0].mxu0
        %v6755 = vadd.f32 %v6658, %v6754
        %v6756 = vpop.f32.mrb[0].mxu0
        %6757 = vmatprep.mubr.bf16.mxu0 0
        %6758 = vmatmul.mubr.bf16.gmra.mrb[0].mxu0 %v5878
        %v6759 = vpop.f32.mrb[0].mxu0
        %v6760 = vadd.f32 %v6663, %v6759
        %v6761 = vpop.f32.mrb[0].mxu0
        %v6762 = vpop.f32.mrb[0].mxu0
        %v6763 = vadd.f32 %v6666, %v6762
        %v6764 = vpop.f32.mrb[0].mxu0
        %6765 = vmatprep.mubr.bf16.mxu0 0
        %6766 = vmatmul.mubr.bf16.gmra.mrb[0].mxu0 %v5881
        %v6767 = vpop.f32.mrb[0].mxu0
        %v6768 = vadd.f32 %v6671, %v6767
        %v6769 = vpop.f32.mrb[0].mxu0
        %v6770 = vpop.f32.mrb[0].mxu0
        %v6771 = vadd.f32 %v6674, %v6770
        %v6772 = vpop.f32.mrb[0].mxu0
        %6773 = vmatprep.mubr.bf16.mxu0 0
        %6774 = vmatmul.mubr.bf16.gmra.mrb[0].mxu0 %v5884
        %v6775 = vpop.f32.mrb[0].mxu0
        %v6776 = vadd.f32 %v6679, %v6775
        %v6777 = vpop.f32.mrb[0].mxu0
        %v6778 = vpop.f32.mrb[0].mxu0
        %v6779 = vadd.f32 %v6682, %v6778
        %v6780 = vpop.f32.mrb[0].mxu0
        %6781 = vmatprep.mubr.bf16.mxu0 0
        %6782 = vmatmul.mubr.bf16.gmra.mrb[0].mxu0 %v5887
        %v6783 = vpop.f32.mrb[0].mxu0
        %v6784 = vadd.f32 %v6687, %v6783
        %v6785 = vpop.f32.mrb[0].mxu0
        %v6786 = vpop.f32.mrb[0].mxu0
        %v6787 = vadd.f32 %v6690, %v6786
        %v6788 = vpop.f32.mrb[0].mxu0
        %6789 = vmatprep.mubr.bf16.mxu0 0
        %6790 = vmatmul.mubr.bf16.gmra.mrb[0].mxu0 %v5890
        %v6791 = vpop.f32.mrb[0].mxu0
        %v6792 = vadd.f32 %v6695, %v6791
        %v6793 = vpop.f32.mrb[0].mxu0
        %v6794 = vpop.f32.mrb[0].mxu0
        %v6795 = vadd.f32 %v6698, %v6794
        %v6796 = vpop.f32.mrb[0].mxu0
        %6797 = vmatprep.mubr.bf16.mxu0 0
        %6798 = vmatmul.mubr.bf16.gmra.mrb[0].mxu0 %v5893
        %v6799 = vpop.f32.mrb[0].mxu0
        %v6800 = vadd.f32 %v6703, %v6799
        %v6801 = vpop.f32.mrb[0].mxu0
        %v6802 = vpop.f32.mrb[0].mxu0
        %v6803 = vadd.f32 %v6706, %v6802
        %v6804 = vpop.f32.mrb[0].mxu0
        %6805 = vmatprep.mubr.bf16.mxu0 0
        %6806 = vmatmul.mubr.bf16.gmra.mrb[0].mxu0 %v5896
        %v6807 = vpop.f32.mrb[0].mxu0
        %v6808 = vadd.f32 %v6711, %v6807
        %v6809 = vpop.f32.mrb[0].mxu0
        %v6810 = vpop.f32.mrb[0].mxu0
        %v6811 = vadd.f32 %v6714, %v6810
        %v6812 = vpop.f32.mrb[0].mxu0
        %6813 = vdwg.mxu0
        %6814 = vst [vmem:[%s244] sm:$0xff] %v6542
        %6815 = vst [vmem:[%s244 + $0x8] sm:$0xff] %v6544
        %6816 = vst [vmem:[%s244 + $0x10] sm:$0xff] %v6752
        %6817 = vst [vmem:[%s244 + $0x18] sm:$0xff] %v6546
        %6818 = vst [vmem:[%s244 + $0x20] sm:$0xff] %v6548
        %6819 = vst [vmem:[%s244 + $0x28] sm:$0xff] %v6755
        %6820 = vst [vmem:[%s244 + $0x30] sm:$0xff] %v6552
        %6821 = vst [vmem:[%s244 + $0x38] sm:$0xff] %v6554
        %6822 = vst [vmem:[%s244 + $0x40] sm:$0xff] %v6760
        %6823 = vst [vmem:[%s244 + $0x48] sm:$0xff] %v6556
        %6824 = vst [vmem:[%s244 + $0x50] sm:$0xff] %v6558
        %6825 = vst [vmem:[%s244 + $0x58] sm:$0xff] %v6763
        %6826 = vst [vmem:[%s244 + $0x60] sm:$0xff] %v6562
        %6827 = vst [vmem:[%s244 + $0x68] sm:$0xff] %v6564
        %6828 = vst [vmem:[%s244 + $0x70] sm:$0xff] %v6768
        %6829 = vst [vmem:[%s244 + $0x78] sm:$0xff] %v6566
        %6830 = vst [vmem:[%s244 + $0x80] sm:$0xff] %v6568
        %6831 = vst [vmem:[%s244 + $0x88] sm:$0xff] %v6771
        %6832 = vst [vmem:[%s244 + $0x90] sm:$0xff] %v6572
        %6833 = vst [vmem:[%s244 + $0x98] sm:$0xff] %v6574
        %6834 = vst [vmem:[%s244 + $0xa0] sm:$0xff] %v6776
        %6835 = vst [vmem:[%s244 + $0xa8] sm:$0xff] %v6576
        %6836 = vst [vmem:[%s244 + $0xb0] sm:$0xff] %v6578
        %6837 = vst [vmem:[%s244 + $0xb8] sm:$0xff] %v6779
        %6838 = vst [vmem:[%s244 + $0xc0] sm:$0xff] %v6582
        %6839 = vst [vmem:[%s244 + $0xc8] sm:$0xff] %v6584
        %6840 = vst [vmem:[%s244 + $0xd0] sm:$0xff] %v6784
        %6841 = vst [vmem:[%s244 + $0xd8] sm:$0xff] %v6586
        %6842 = vst [vmem:[%s244 + $0xe0] sm:$0xff] %v6588
        %6843 = vst [vmem:[%s244 + $0xe8] sm:$0xff] %v6787
        %6844 = vst [vmem:[%s244 + $0xf0] sm:$0xff] %v6592
        %6845 = vst [vmem:[%s244 + $0xf8] sm:$0xff] %v6594
        %6846 = vst [vmem:[%s244 + $0x100] sm:$0xff] %v6792
        %6847 = vst [vmem:[%s244 + $0x108] sm:$0xff] %v6596
        %6848 = vst [vmem:[%s244 + $0x110] sm:$0xff] %v6598
        %6849 = vst [vmem:[%s244 + $0x118] sm:$0xff] %v6795
        %6850 = vst [vmem:[%s244 + $0x120] sm:$0xff] %v6602
        %6851 = vst [vmem:[%s244 + $0x128] sm:$0xff] %v6604
        %6852 = vst [vmem:[%s244 + $0x130] sm:$0xff] %v6800
        %6853 = vst [vmem:[%s244 + $0x138] sm:$0xff] %v6606
        %6854 = vst [vmem:[%s244 + $0x140] sm:$0xff] %v6608
        %6855 = vst [vmem:[%s244 + $0x148] sm:$0xff] %v6803
        %6856 = vst [vmem:[%s244 + $0x150] sm:$0xff] %v6612
        %6857 = vst [vmem:[%s244 + $0x158] sm:$0xff] %v6614
        %6858 = vst [vmem:[%s244 + $0x160] sm:$0xff] %v6808
        %6859 = vst [vmem:[%s244 + $0x168] sm:$0xff] %v6616
        %6860 = vst [vmem:[%s244 + $0x170] sm:$0xff] %v6618
        %6861 = vst [vmem:[%s244 + $0x178] sm:$0xff] %v6811
        %s6862 = sand.u32 %s119, 1
        %s6863 = scalar_lea.sflag [#allocation5], %s6862
        %s6864 = sand.u32 %s119, 1
        %s6865 = smul.addr %s6864, 384
        %s6866 = scalar_lea.vmem [#allocation9], %s6865
        // Predicated region
        $region49: #{tpu_custom_call.1} parent=35 // pred_check
          %p6867 = pneg %p129
        $region50: #{tpu_custom_call.1} parent=35 // pred_check_branch
          %6869 = sbr.rel (%p6867) target = $region52
        $region51: #{tpu_custom_call.1} parent=35 // pred_region
          %s6871 = ssub.s32 6144, 6144
          %6872 = vsyncadd %s6863, %s6871
          %s6873 = smul.addr %s22, 48
          %s6874 = smul.addr %s6873, 128
          %s6875 = scalar_lea.hbm %s4, %s6874
          %s6876 = sshll.u32 %s6866, 4
          %s6877 = int_to_ptr.vmem [resolvable:$true] %s6876
          %6882 = dma.vmem_to_hbm [thread:$0]  %s6877, 6144, %s6875, %s6863, 384, 384, 24
        $region52: #{tpu_custom_call.1} parent=35 // pred_fallthru
          _
      $region36: #{tpu_custom_call.1} parent=5 // pred_fallthru
        _
      %p6883 = scmp.le.s32.totalorder 2, %s17
      // Predicated region
      $region53: #{tpu_custom_call.1} parent=5 // pred_check
        %p6884 = pneg %p6883
      $region54: #{tpu_custom_call.1} parent=5 // pred_check_branch
        %6886 = sbr.rel (%p6884) target = $region56
      $region55: #{tpu_custom_call.1} parent=5 // pred_region
        %s6887 = ssub.s32 %s17, 2
        // Predicated region
        $region57: #{tpu_custom_call.1} parent=55 // pred_check
          %p6888 = pneg %p135
        $region58: #{tpu_custom_call.1} parent=55 // pred_check_branch
          %6890 = sbr.rel (%p6888) target = $region60
        $region59: #{tpu_custom_call.1} parent=55 // pred_region
          %s6891 = sand.u32 %s120, 1
          %s6892 = scalar_lea.sflag [#allocation5], %s6891
          %s6893 = sand.u32 %s120, 1
          %s6894 = smul.addr %s6893, 384
          %s6895 = scalar_lea.vmem [#allocation9], %s6894
          %6896 = dma.done %s6892, 6144
        $region60: #{tpu_custom_call.1} parent=55 // pred_fallthru
          _
      $region56: #{tpu_custom_call.1} parent=5 // pred_fallthru
        _
    $region6: #{tpu_custom_call.1} parent=1 // loop_footer
      %s21 = sadd.s32 1, %s17
    $region7: #{tpu_custom_call.1} parent=1 // loop_footer_branch
      %16 = sbr.rel target = $region3
    $region8: #{tpu_custom_call.1} parent=1 // loop_exit
      _
    %6897 = vsyncpa [#allocation4], 1
    %s6898 = scalar_lea.sflag [#allocation4], 1
    %6899 = vsyncpa %s6898, 1
    %6900 = vsyncpa [#allocation7], 1
    %6901 = vsyncpa [#allocation5], 1
    %s6902 = scalar_lea.sflag [#allocation5], 1
    %6903 = vsyncpa %s6902, 1

</llo_original>
